<compile_context>
chip_gen: v7x
topology: tpu7x:2x2x1
jax: 0.10.0
libtpu: 0.0.40
codegen_flags: <defaults>
</compile_context>

<pallas_src>
import numpy as np
import jax
import jax.numpy as jnp
from jax.experimental import pallas as pl
from jax.experimental.pallas import tpu as pltpu

# ----------------------------- configuration --------------------------------
D_MODEL = 32
NHEAD = 4
HEAD_DIM = D_MODEL // NHEAD
DIM_FF = 64
NUM_LAYERS = 2
LQ = 8              # number of object queries (tgt length)
LM = 16             # memory length (H*W of encoder features)
BATCH = 2
BQ = BATCH * LQ     # batch-stacked query rows   (16)
BM = BATCH * LM     # batch-stacked memory rows  (32)
EPS = 1e-5
SCALE = float(HEAD_DIM) ** -0.5

# Row layout of the packed per-layer vector table (biases + LayerNorm params).
_SA_BQ, _SA_BK, _SA_BV, _SA_BO = 0, 1, 2, 3
_CA_BQ, _CA_BK, _CA_BV, _CA_BO = 4, 5, 6, 7
_L2_B = 8
_N1_G, _N1_B, _N2_G, _N2_B, _N3_G, _N3_B = 9, 10, 11, 12, 13, 14
_N_VEC = 15


# ----------------------- shared math (kernel & reference) -------------------
def _layer_norm(x, g, b):
    mu = jnp.mean(x, axis=-1, keepdims=True)
    var = jnp.mean((x - mu) ** 2, axis=-1, keepdims=True)
    return (x - mu) * jax.lax.rsqrt(var + EPS) * g + b


# ------------------------------ attention core --------------------------------
def _split_heads(t, length):
    """(BATCH*length, D) with heads lane-packed -> (BATCH*NHEAD, length, HEAD_DIM).

    Implemented with static slices + stack only (guaranteed Mosaic lowering);
    this is the one unavoidable relayout of the lane-packed projection output."""
    return jnp.stack(
        [t[b * length:(b + 1) * length, h * HEAD_DIM:(h + 1) * HEAD_DIM]
         for b in range(BATCH) for h in range(NHEAD)], axis=0)


def _mha(q, k, v, lq, lk):
    """Head-batched multi-head attention core for BOTH batches at once.

    q: (BATCH*lq, D), k/v: (BATCH*lk, D), biases already added.
    Returns merged heads (BATCH*lq, D)."""
    qh = _split_heads(q * SCALE, lq)                      # (B*H, lq, hd)
    kh = _split_heads(k, lk)                              # (B*H, lk, hd)
    vh = _split_heads(v, lk)                              # (B*H, lk, hd)

    # scores: one batched NT matmul over the (batch*head) axis
    s = jax.lax.dot_general(qh, kh, (((2,), (2,)), ((0,), (0,))),
                            preferred_element_type=jnp.float32)     # (B*H, lq, lk)
    # single vectorised softmax (exact divide: keeps the 1e-3 tolerance safe)
    s = s - jnp.max(s, axis=-1, keepdims=True)
    p = jnp.exp(s)
    p = p / jnp.sum(p, axis=-1, keepdims=True)

    o = jax.lax.dot_general(p, vh, (((2,), (1,)), ((0,), (0,))),
                            preferred_element_type=jnp.float32)     # (B*H, lq, hd)

    # merge heads back: (B*H, lq, hd) -> (BATCH*lq, D) lane-packed
    return jnp.concatenate(
        [jnp.concatenate([o[b * NHEAD + h] for h in range(NHEAD)], axis=1)
         for b in range(BATCH)], axis=0)


# --------------------------------- kernel ------------------------------------
def decoder_kernel(x_ref, qp_ref, memkv_ref,
                   w_sa_qkv_ref, w_sa_out_ref, w_ca_qkv_ref, w_ca_out_ref,
                   w_ff1_ref, w_ff2_ref, b_ff1_ref, vec_ref, fnorm_ref,
                   out_norm_ref, out_raw_ref):
    D = D_MODEL
    x = x_ref[...]            # (BQ, D)     decoder state, both batches on sublanes
    qp = qp_ref[...]          # (BQ, D)     query positional embedding
    mkv = memkv_ref[...]      # (2*BM, D)   rows = [memory+pos (BM) ; memory (BM)]

    for l in range(NUM_LAYERS):                           # static unroll
        bl = vec_ref[l]                                   # (_N_VEC, D)

        # ---- self attention: q = k = x + query_pos, v = x -------------------
        # ONE matmul for Q, K, V of both batches: rows [x+qp ; x] (32, 32).
        sa_in = jnp.concatenate([x + qp, x], axis=0)
        r = jnp.dot(sa_in, w_sa_qkv_ref[l], preferred_element_type=jnp.float32)  # (2*BQ, 3D)
        q = r[0:BQ, 0:D] + bl[_SA_BQ]
        k = r[0:BQ, D:2 * D] + bl[_SA_BK]
        v = r[BQ:2 * BQ, 2 * D:3 * D] + bl[_SA_BV]
        att = _mha(q, k, v, LQ, LQ)
        sa = jnp.dot(att, w_sa_out_ref[l], preferred_element_type=jnp.float32) + bl[_SA_BO]
        x = _layer_norm(x + sa, bl[_N1_G], bl[_N1_B])

        # ---- cross attention: q = x + query_pos, k = memory+pos, v = memory --
        # ONE matmul for Q, K, V of both batches: rows [x+qp ; memory+pos ; memory].
        ca_in = jnp.concatenate([x + qp, mkv], axis=0)                           # (BQ+2*BM, D)
        r = jnp.dot(ca_in, w_ca_qkv_ref[l], preferred_element_type=jnp.float32)  # (BQ+2*BM, 3D)
        q = r[0:BQ, 0:D] + bl[_CA_BQ]
        k = r[BQ:BQ + BM, D:2 * D] + bl[_CA_BK]
        v = r[BQ + BM:BQ + 2 * BM, 2 * D:3 * D] + bl[_CA_BV]
        att = _mha(q, k, v, LQ, LM)
        ca = jnp.dot(att, w_ca_out_ref[l], preferred_element_type=jnp.float32) + bl[_CA_BO]
        x = _layer_norm(x + ca, bl[_N2_G], bl[_N2_B])

        # ---- feed forward ----------------------------------------------------
        h = jnp.maximum(
            jnp.dot(x, w_ff1_ref[l], preferred_element_type=jnp.float32) + b_ff1_ref[l], 0.0)
        ff = jnp.dot(h, w_ff2_ref[l], preferred_element_type=jnp.float32) + bl[_L2_B]
        x = _layer_norm(x + ff, bl[_N3_G], bl[_N3_B])

    out_raw_ref[...] = x
    out_norm_ref[...] = _layer_norm(x, fnorm_ref[0], fnorm_ref[1])


# ------------------------------ parameter packing -----------------------------
def pack_params(p):
    """Pack the natural (PyTorch-layout) parameter dict into a few pre-transposed,
    VMEM-resident arrays (done once offline in a real deployment)."""
    D = D_MODEL
    vecs = []
    for l in range(NUM_LAYERS):
        sib, cib = p['sa_in_b'][l, 0], p['ca_in_b'][l, 0]      # (3D,)
        vecs.append(jnp.stack([
            sib[0:D], sib[D:2 * D], sib[2 * D:], p['sa_out_b'][l, 0],
            cib[0:D], cib[D:2 * D], cib[2 * D:], p['ca_out_b'][l, 0],
            p['l2_b'][l, 0],
            p['n1_g'][l, 0], p['n1_b'][l, 0],
            p['n2_g'][l, 0], p['n2_b'][l, 0],
            p['n3_g'][l, 0], p['n3_b'][l, 0],
        ], axis=0))                                            # (_N_VEC, D)
    return dict(
        w_sa_qkv=jnp.transpose(p['sa_in_w'], (0, 2, 1)),       # (L, D, 3D)  [Wq^T|Wk^T|Wv^T]
        w_ca_qkv=jnp.transpose(p['ca_in_w'], (0, 2, 1)),       # (L, D, 3D)
        w_sa_out=jnp.transpose(p['sa_out_w'], (0, 2, 1)),      # (L, D, D)   pre-transposed
        w_ca_out=jnp.transpose(p['ca_out_w'], (0, 2, 1)),      # (L, D, D)
        w_ff1=jnp.transpose(p['l1_w'], (0, 2, 1)),             # (L, D, FF)  pre-transposed
        w_ff2=jnp.transpose(p['l2_w'], (0, 2, 1)),             # (L, FF, D)  pre-transposed
        b_ff1=p['l1_b'],                                       # (L, 1, FF)
        vec=jnp.stack(vecs),                                   # (L, _N_VEC, D)
        fnorm=jnp.stack([p['fn_g'][0], p['fn_b'][0]], 0),      # (2, D)
    )


# --------------------------------- wrapper -----------------------------------
def transformer_decoder(tgt, memory, query_pos, pos, params):
    """tgt/query_pos: (LQ, B, D); memory/pos: (LM, B, D).
    Returns (norm(output), output), each (LQ, B, D) — matching the PyTorch module."""
    packed = pack_params(params)

    # (L, B, D) -> (B*L, D): batches stacked along sublanes (batch-major rows).
    to_rows = lambda a, L: jnp.transpose(a, (1, 0, 2)).reshape(BATCH * L, D_MODEL)
    x0 = to_rows(tgt, LQ)
    qp = to_rows(query_pos, LQ)
    mem = to_rows(memory, LM)
    memp = mem + to_rows(pos, LM)                              # hoisted memory + pos
    mem_kv = jnp.concatenate([memp, mem], axis=0)              # (2*BM, D)

    full2 = lambda shape: pl.BlockSpec(shape, lambda i: (0, 0))
    full3 = lambda shape: pl.BlockSpec(shape, lambda i: (0, 0, 0))

    in_specs = [
        full2((BQ, D_MODEL)),                                  # x0
        full2((BQ, D_MODEL)),                                  # query_pos
        full2((2 * BM, D_MODEL)),                              # [memory+pos ; memory]
        full3((NUM_LAYERS, D_MODEL, 3 * D_MODEL)),             # self-attn QKV weights
        full3((NUM_LAYERS, D_MODEL, D_MODEL)),                 # self-attn out-proj
        full3((NUM_LAYERS, D_MODEL, 3 * D_MODEL)),             # cross-attn QKV weights
        full3((NUM_LAYERS, D_MODEL, D_MODEL)),                 # cross-attn out-proj
        full3((NUM_LAYERS, D_MODEL, DIM_FF)),                  # linear1 weight^T
        full3((NUM_LAYERS, DIM_FF, D_MODEL)),                  # linear2 weight^T
        full3((NUM_LAYERS, 1, DIM_FF)),                        # linear1 bias
        full3((NUM_LAYERS, _N_VEC, D_MODEL)),                  # biases + LN params
        full2((2, D_MODEL)),                                   # final LayerNorm (g; b)
    ]
    out_specs = [full2((BQ, D_MODEL)), full2((BQ, D_MODEL))]
    out_shape = (jax.ShapeDtypeStruct((BQ, D_MODEL), jnp.float32),
                 jax.ShapeDtypeStruct((BQ, D_MODEL), jnp.float32))

    call = pl.pallas_call(
        decoder_kernel,
        out_shape=out_shape,
        grid_spec=pl.GridSpec(grid=(1,), in_specs=in_specs, out_specs=out_specs),
        compiler_params=pltpu.CompilerParams(dimension_semantics=("arbitrary",)),
    )
    norm_r, raw_r = call(x0, qp, mem_kv,
                         packed['w_sa_qkv'], packed['w_sa_out'],
                         packed['w_ca_qkv'], packed['w_ca_out'],
                         packed['w_ff1'], packed['w_ff2'], packed['b_ff1'],
                         packed['vec'], packed['fnorm'])

    to_sbd = lambda a: jnp.transpose(a.reshape(BATCH, LQ, D_MODEL), (1, 0, 2))
    return to_sbd(norm_r), to_sbd(raw_r)


# ------------------------------ pure-JAX reference ---------------------------
def _mha_ref(q_in, k_in, v_in, in_w, in_b, out_w, out_b):
    D = D_MODEL
    q = q_in @ in_w[0:D].T + in_b[0:D]
    k = k_in @ in_w[D:2 * D].T + in_b[D:2 * D]
    v = v_in @ in_w[2 * D:].T + in_b[2 * D:]
    outs = []
    for h in range(NHEAD):
        sl = slice(h * HEAD_DIM, (h + 1) * HEAD_DIM)
        s = (q[:, sl] * SCALE) @ k[:, sl].T
        s = s - jnp.max(s, axis=-1, keepdims=True)
        p = jnp.exp(s)
        p = p / jnp.sum(p, axis=-1, keepdims=True)
        outs.append(p @ v[:, sl])
    return jnp.concatenate(outs, axis=-1) @ out_w.T + out_b


def reference(tgt, memory, query_pos, pos, p):
    outs_norm, outs_raw = [], []
    for b in range(BATCH):
        x, qp, mem, mp = tgt[:, b], query_pos[:, b], memory[:, b], pos[:, b]
        for l in range(NUM_LAYERS):
            sa = _mha_ref(x + qp, x + qp, x, p['sa_in_w'][l], p['sa_in_b'][l, 0],
                          p['sa_out_w'][l], p['sa_out_b'][l, 0])
            x = _layer_norm(x + sa, p['n1_g'][l, 0], p['n1_b'][l, 0])
            ca = _mha_ref(x + qp, mem + mp, mem, p['ca_in_w'][l], p['ca_in_b'][l, 0],
                          p['ca_out_w'][l], p['ca_out_b'][l, 0])
            x = _layer_norm(x + ca, p['n2_g'][l, 0], p['n2_b'][l, 0])
            h = jnp.maximum(x @ p['l1_w'][l].T + p['l1_b'][l, 0], 0.0)
            ff = h @ p['l2_w'][l].T + p['l2_b'][l, 0]
            x = _layer_norm(x + ff, p['n3_g'][l, 0], p['n3_b'][l, 0])
        outs_raw.append(x)
        outs_norm.append(_layer_norm(x, p['fn_g'][0], p['fn_b'][0]))
    return jnp.stack(outs_norm, axis=1), jnp.stack(outs_raw, axis=1)


# ------------------------------ parameter init --------------------------------
def init_params(key):
    keys = jax.random.split(key, 16)
    s = 0.05
    return {
        'sa_in_w':  s * jax.random.normal(keys[0], (NUM_LAYERS, 3 * D_MODEL, D_MODEL), jnp.float32),
        'sa_in_b':  s * jax.random.normal(keys[1], (NUM_LAYERS, 1, 3 * D_MODEL), jnp.float32),
        'sa_out_w': s * jax.random.normal(keys[2], (NUM_LAYERS, D_MODEL, D_MODEL), jnp.float32),
        'sa_out_b': s * jax.random.normal(keys[3], (NUM_LAYERS, 1, D_MODEL), jnp.float32),
        'ca_in_w':  s * jax.random.normal(keys[4], (NUM_LAYERS, 3 * D_MODEL, D_MODEL), jnp.float32),
        'ca_in_b':  s * jax.random.normal(keys[5], (NUM_LAYERS, 1, 3 * D_MODEL), jnp.float32),
        'ca_out_w': s * jax.random.normal(keys[6], (NUM_LAYERS, D_MODEL, D_MODEL), jnp.float32),
        'ca_out_b': s * jax.random.normal(keys[7], (NUM_LAYERS, 1, D_MODEL), jnp.float32),
        'l1_w':     s * jax.random.normal(keys[8], (NUM_LAYERS, DIM_FF, D_MODEL), jnp.float32),
        'l1_b':     s * jax.random.normal(keys[9], (NUM_LAYERS, 1, DIM_FF), jnp.float32),
        'l2_w':     s * jax.random.normal(keys[10], (NUM_LAYERS, D_MODEL, DIM_FF), jnp.float32),
        'l2_b':     s * jax.random.normal(keys[11], (NUM_LAYERS, 1, D_MODEL), jnp.float32),
        'n1_g': jnp.ones((NUM_LAYERS, 1, D_MODEL), jnp.float32),
        'n1_b': jnp.zeros((NUM_LAYERS, 1, D_MODEL), jnp.float32),
        'n2_g': jnp.ones((NUM_LAYERS, 1, D_MODEL), jnp.float32),
        'n2_b': jnp.zeros((NUM_LAYERS, 1, D_MODEL), jnp.float32),
        'n3_g': jnp.ones((NUM_LAYERS, 1, D_MODEL), jnp.float32),
        'n3_b': jnp.zeros((NUM_LAYERS, 1, D_MODEL), jnp.float32),
        'fn_g': jnp.ones((1, D_MODEL), jnp.float32),
        'fn_b': jnp.zeros((1, D_MODEL), jnp.float32),
    }


# ----------------------------------- main -------------------------------------
if __name__ == "__main__":
    key = jax.random.PRNGKey(0)
    k1, k2, k3, k4, kp = jax.random.split(key, 5)

    tgt = jax.random.normal(k1, (LQ, BATCH, D_MODEL), jnp.float32)
    memory = jax.random.normal(k2, (LM, BATCH, D_MODEL), jnp.float32)
    query_pos = jax.random.normal(k3, (LQ, BATCH, D_MODEL), jnp.float32)
    pos = jax.random.normal(k4, (LM, BATCH, D_MODEL), jnp.float32)
    params = init_params(kp)

    out_norm, out_raw = transformer_decoder(tgt, memory, query_pos, pos, params)
    out_norm = jax.block_until_ready(out_norm)
    out_raw = jax.block_until_ready(out_raw)

    # Reference at full f32 matmul precision so the comparison is tight: the
    # in-kernel MXU matmuls accumulate in f32, so 1e-3 (10x tighter than the
    # previous 1e-2) catches any real repacking/slicing regression.
    with jax.default_matmul_precision("float32"):
        ref_norm, ref_raw = reference(tgt, memory, query_pos, pos, params)

    np.testing.assert_allclose(np.asarray(out_raw), np.asarray(ref_raw), rtol=1e-3, atol=1e-3)
    np.testing.assert_allclose(np.asarray(out_norm), np.asarray(ref_norm), rtol=1e-3, atol=1e-3)

    print("KERNEL_OK")
</pallas_src>

<mosaic_0001>
module attributes {stable_mosaic.version = 11 : i64} {
  func.func @decoder_kernel(%arg0: i32, %arg1: memref<16x32xf32, #tpu.memory_space<vmem>>, %arg2: memref<16x32xf32, #tpu.memory_space<vmem>>, %arg3: memref<64x32xf32, #tpu.memory_space<vmem>>, %arg4: memref<2x32x96xf32, #tpu.memory_space<vmem>>, %arg5: memref<2x32x32xf32, #tpu.memory_space<vmem>>, %arg6: memref<2x32x96xf32, #tpu.memory_space<vmem>>, %arg7: memref<2x32x32xf32, #tpu.memory_space<vmem>>, %arg8: memref<2x32x64xf32, #tpu.memory_space<vmem>>, %arg9: memref<2x64x32xf32, #tpu.memory_space<vmem>>, %arg10: memref<2x1x64xf32, #tpu.memory_space<vmem>>, %arg11: memref<2x15x32xf32, #tpu.memory_space<vmem>>, %arg12: memref<2x32xf32, #tpu.memory_space<vmem>>, %arg13: memref<16x32xf32, #tpu.memory_space<vmem>>, %arg14: memref<16x32xf32, #tpu.memory_space<vmem>>) attributes {dimension_semantics = [#tpu.dimension_semantics<arbitrary>], iteration_bounds = array<i64: 1>, scalar_prefetch = 0 : i64, scratch_operands = 0 : i64, tpu.core_type = #tpu.core_type<tc>, window_params = [{pipeline_mode = #tpu.pipeline_mode<synchronous>, transform_indices = @transform_0, window_bounds = array<i64: 16, 32>}, {pipeline_mode = #tpu.pipeline_mode<synchronous>, transform_indices = @transform_1, window_bounds = array<i64: 16, 32>}, {pipeline_mode = #tpu.pipeline_mode<synchronous>, transform_indices = @transform_2, window_bounds = array<i64: 64, 32>}, {pipeline_mode = #tpu.pipeline_mode<synchronous>, transform_indices = @transform_3, window_bounds = array<i64: 2, 32, 96>}, {pipeline_mode = #tpu.pipeline_mode<synchronous>, transform_indices = @transform_4, window_bounds = array<i64: 2, 32, 32>}, {pipeline_mode = #tpu.pipeline_mode<synchronous>, transform_indices = @transform_5, window_bounds = array<i64: 2, 32, 96>}, {pipeline_mode = #tpu.pipeline_mode<synchronous>, transform_indices = @transform_6, window_bounds = array<i64: 2, 32, 32>}, {pipeline_mode = #tpu.pipeline_mode<synchronous>, transform_indices = @transform_7, window_bounds = array<i64: 2, 32, 64>}, {pipeline_mode = #tpu.pipeline_mode<synchronous>, transform_indices = @transform_8, window_bounds = array<i64: 2, 64, 32>}, {pipeline_mode = #tpu.pipeline_mode<synchronous>, transform_indices = @transform_9, window_bounds = array<i64: 2, 1, 64>}, {pipeline_mode = #tpu.pipeline_mode<synchronous>, transform_indices = @transform_10, window_bounds = array<i64: 2, 15, 32>}, {pipeline_mode = #tpu.pipeline_mode<synchronous>, transform_indices = @transform_11, window_bounds = array<i64: 2, 32>}, {pipeline_mode = #tpu.pipeline_mode<synchronous>, transform_indices = @transform_12, window_bounds = array<i64: 16, 32>}, {pipeline_mode = #tpu.pipeline_mode<synchronous>, transform_indices = @transform_13, window_bounds = array<i64: 16, 32>}]} {
    %c0 = arith.constant 0 : index
    %c0_0 = arith.constant 0 : index
    %0 = vector.load %arg1[%c0, %c0_0] : memref<16x32xf32, #tpu.memory_space<vmem>>, vector<16x32xf32>
    %c0_1 = arith.constant 0 : index
    %c0_2 = arith.constant 0 : index
    %1 = vector.load %arg2[%c0_1, %c0_2] : memref<16x32xf32, #tpu.memory_space<vmem>>, vector<16x32xf32>
    %c0_3 = arith.constant 0 : index
    %c0_4 = arith.constant 0 : index
    %2 = vector.load %arg3[%c0_3, %c0_4] : memref<64x32xf32, #tpu.memory_space<vmem>>, vector<64x32xf32>
    %c0_5 = arith.constant 0 : index
    %c0_6 = arith.constant 0 : index
    %c0_7 = arith.constant 0 : index
    %3 = vector.load %arg11[%c0_5, %c0_6, %c0_7] : memref<2x15x32xf32, #tpu.memory_space<vmem>>, vector<1x15x32xf32>
    %4 = vector.shape_cast %3 : vector<1x15x32xf32> to vector<15x32xf32>
    %5 = arith.addf %0, %1 : vector<16x32xf32>
    %6 = tpu.concatenate %5, %0 in 0 : vector<16x32xf32>, vector<16x32xf32> -> vector<32x32xf32>
    %c0_8 = arith.constant 0 : index
    %c0_9 = arith.constant 0 : index
    %c0_10 = arith.constant 0 : index
    %7 = vector.load %arg4[%c0_8, %c0_9, %c0_10] : memref<2x32x96xf32, #tpu.memory_space<vmem>>, vector<1x32x96xf32>
    %8 = vector.shape_cast %7 : vector<1x32x96xf32> to vector<32x96xf32>
    %cst = arith.constant dense<0.000000e+00> : vector<32x96xf32>
    %9 = tpu.matmul %6, %8, %cst {dimension_numbers = #tpu.dot_dimension_numbers<[1], [0], [0], [1], [0, 0, 1, 1], [], []>} : vector<32x32xf32>, vector<32x96xf32>, vector<32x96xf32> -> vector<32x96xf32>
    %10 = vector.extract_strided_slice %9 {offsets = [0, 0], sizes = [16, 32], strides = [1, 1]} : vector<32x96xf32> to vector<16x32xf32>
    %11 = vector.extract_strided_slice %4 {offsets = [0, 0], sizes = [1, 32], strides = [1, 1]} : vector<15x32xf32> to vector<1x32xf32>
    %12 = vector.shape_cast %11 : vector<1x32xf32> to vector<32xf32>
    %13 = vector.shape_cast %12 : vector<32xf32> to vector<1x32xf32>
    %14 = vector.broadcast %13 : vector<1x32xf32> to vector<16x32xf32>
    %15 = arith.addf %10, %14 : vector<16x32xf32>
    %16 = vector.extract_strided_slice %9 {offsets = [0, 32], sizes = [16, 32], strides = [1, 1]} : vector<32x96xf32> to vector<16x32xf32>
    %17 = vector.extract_strided_slice %4 {offsets = [1, 0], sizes = [1, 32], strides = [1, 1]} : vector<15x32xf32> to vector<1x32xf32>
    %18 = vector.shape_cast %17 : vector<1x32xf32> to vector<32xf32>
    %19 = vector.shape_cast %18 : vector<32xf32> to vector<1x32xf32>
    %20 = vector.broadcast %19 : vector<1x32xf32> to vector<16x32xf32>
    %21 = arith.addf %16, %20 : vector<16x32xf32>
    %22 = vector.extract_strided_slice %9 {offsets = [16, 64], sizes = [16, 32], strides = [1, 1]} : vector<32x96xf32> to vector<16x32xf32>
    %23 = vector.extract_strided_slice %4 {offsets = [2, 0], sizes = [1, 32], strides = [1, 1]} : vector<15x32xf32> to vector<1x32xf32>
    %24 = vector.shape_cast %23 : vector<1x32xf32> to vector<32xf32>
    %25 = vector.shape_cast %24 : vector<32xf32> to vector<1x32xf32>
    %26 = vector.broadcast %25 : vector<1x32xf32> to vector<16x32xf32>
    %27 = arith.addf %22, %26 : vector<16x32xf32>
    %cst_11 = arith.constant 0.353553385 : f32
    %28 = vector.broadcast %cst_11 : f32 to vector<16x32xf32>
    %29 = arith.mulf %15, %28 : vector<16x32xf32>
    %30 = vector.extract_strided_slice %29 {offsets = [0, 0], sizes = [8, 8], strides = [1, 1]} : vector<16x32xf32> to vector<8x8xf32>
    %31 = vector.extract_strided_slice %29 {offsets = [0, 8], sizes = [8, 8], strides = [1, 1]} : vector<16x32xf32> to vector<8x8xf32>
    %32 = vector.extract_strided_slice %29 {offsets = [0, 16], sizes = [8, 8], strides = [1, 1]} : vector<16x32xf32> to vector<8x8xf32>
    %33 = vector.extract_strided_slice %29 {offsets = [0, 24], sizes = [8, 8], strides = [1, 1]} : vector<16x32xf32> to vector<8x8xf32>
    %34 = vector.extract_strided_slice %29 {offsets = [8, 0], sizes = [8, 8], strides = [1, 1]} : vector<16x32xf32> to vector<8x8xf32>
    %35 = vector.extract_strided_slice %29 {offsets = [8, 8], sizes = [8, 8], strides = [1, 1]} : vector<16x32xf32> to vector<8x8xf32>
    %36 = vector.extract_strided_slice %29 {offsets = [8, 16], sizes = [8, 8], strides = [1, 1]} : vector<16x32xf32> to vector<8x8xf32>
    %37 = vector.extract_strided_slice %29 {offsets = [8, 24], sizes = [8, 8], strides = [1, 1]} : vector<16x32xf32> to vector<8x8xf32>
    %38 = vector.shape_cast %30 : vector<8x8xf32> to vector<1x8x8xf32>
    %39 = vector.shape_cast %31 : vector<8x8xf32> to vector<1x8x8xf32>
    %40 = vector.shape_cast %32 : vector<8x8xf32> to vector<1x8x8xf32>
    %41 = vector.shape_cast %33 : vector<8x8xf32> to vector<1x8x8xf32>
    %42 = vector.shape_cast %34 : vector<8x8xf32> to vector<1x8x8xf32>
    %43 = vector.shape_cast %35 : vector<8x8xf32> to vector<1x8x8xf32>
    %44 = vector.shape_cast %36 : vector<8x8xf32> to vector<1x8x8xf32>
    %45 = vector.shape_cast %37 : vector<8x8xf32> to vector<1x8x8xf32>
    %46 = tpu.concatenate %38, %39, %40, %41, %42, %43, %44, %45 in 0 : vector<1x8x8xf32>, vector<1x8x8xf32>, vector<1x8x8xf32>, vector<1x8x8xf32>, vector<1x8x8xf32>, vector<1x8x8xf32>, vector<1x8x8xf32>, vector<1x8x8xf32> -> vector<8x8x8xf32>
    %47 = vector.extract_strided_slice %21 {offsets = [0, 0], sizes = [8, 8], strides = [1, 1]} : vector<16x32xf32> to vector<8x8xf32>
    %48 = vector.extract_strided_slice %21 {offsets = [0, 8], sizes = [8, 8], strides = [1, 1]} : vector<16x32xf32> to vector<8x8xf32>
    %49 = vector.extract_strided_slice %21 {offsets = [0, 16], sizes = [8, 8], strides = [1, 1]} : vector<16x32xf32> to vector<8x8xf32>
    %50 = vector.extract_strided_slice %21 {offsets = [0, 24], sizes = [8, 8], strides = [1, 1]} : vector<16x32xf32> to vector<8x8xf32>
    %51 = vector.extract_strided_slice %21 {offsets = [8, 0], sizes = [8, 8], strides = [1, 1]} : vector<16x32xf32> to vector<8x8xf32>
    %52 = vector.extract_strided_slice %21 {offsets = [8, 8], sizes = [8, 8], strides = [1, 1]} : vector<16x32xf32> to vector<8x8xf32>
    %53 = vector.extract_strided_slice %21 {offsets = [8, 16], sizes = [8, 8], strides = [1, 1]} : vector<16x32xf32> to vector<8x8xf32>
    %54 = vector.extract_strided_slice %21 {offsets = [8, 24], sizes = [8, 8], strides = [1, 1]} : vector<16x32xf32> to vector<8x8xf32>
    %55 = vector.shape_cast %47 : vector<8x8xf32> to vector<1x8x8xf32>
    %56 = vector.shape_cast %48 : vector<8x8xf32> to vector<1x8x8xf32>
    %57 = vector.shape_cast %49 : vector<8x8xf32> to vector<1x8x8xf32>
    %58 = vector.shape_cast %50 : vector<8x8xf32> to vector<1x8x8xf32>
    %59 = vector.shape_cast %51 : vector<8x8xf32> to vector<1x8x8xf32>
    %60 = vector.shape_cast %52 : vector<8x8xf32> to vector<1x8x8xf32>
    %61 = vector.shape_cast %53 : vector<8x8xf32> to vector<1x8x8xf32>
    %62 = vector.shape_cast %54 : vector<8x8xf32> to vector<1x8x8xf32>
    %63 = tpu.concatenate %55, %56, %57, %58, %59, %60, %61, %62 in 0 : vector<1x8x8xf32>, vector<1x8x8xf32>, vector<1x8x8xf32>, vector<1x8x8xf32>, vector<1x8x8xf32>, vector<1x8x8xf32>, vector<1x8x8xf32>, vector<1x8x8xf32> -> vector<8x8x8xf32>
    %64 = vector.extract_strided_slice %27 {offsets = [0, 0], sizes = [8, 8], strides = [1, 1]} : vector<16x32xf32> to vector<8x8xf32>
    %65 = vector.extract_strided_slice %27 {offsets = [0, 8], sizes = [8, 8], strides = [1, 1]} : vector<16x32xf32> to vector<8x8xf32>
    %66 = vector.extract_strided_slice %27 {offsets = [0, 16], sizes = [8, 8], strides = [1, 1]} : vector<16x32xf32> to vector<8x8xf32>
    %67 = vector.extract_strided_slice %27 {offsets = [0, 24], sizes = [8, 8], strides = [1, 1]} : vector<16x32xf32> to vector<8x8xf32>
    %68 = vector.extract_strided_slice %27 {offsets = [8, 0], sizes = [8, 8], strides = [1, 1]} : vector<16x32xf32> to vector<8x8xf32>
    %69 = vector.extract_strided_slice %27 {offsets = [8, 8], sizes = [8, 8], strides = [1, 1]} : vector<16x32xf32> to vector<8x8xf32>
    %70 = vector.extract_strided_slice %27 {offsets = [8, 16], sizes = [8, 8], strides = [1, 1]} : vector<16x32xf32> to vector<8x8xf32>
    %71 = vector.extract_strided_slice %27 {offsets = [8, 24], sizes = [8, 8], strides = [1, 1]} : vector<16x32xf32> to vector<8x8xf32>
    %72 = vector.shape_cast %64 : vector<8x8xf32> to vector<1x8x8xf32>
    %73 = vector.shape_cast %65 : vector<8x8xf32> to vector<1x8x8xf32>
    %74 = vector.shape_cast %66 : vector<8x8xf32> to vector<1x8x8xf32>
    %75 = vector.shape_cast %67 : vector<8x8xf32> to vector<1x8x8xf32>
    %76 = vector.shape_cast %68 : vector<8x8xf32> to vector<1x8x8xf32>
    %77 = vector.shape_cast %69 : vector<8x8xf32> to vector<1x8x8xf32>
    %78 = vector.shape_cast %70 : vector<8x8xf32> to vector<1x8x8xf32>
    %79 = vector.shape_cast %71 : vector<8x8xf32> to vector<1x8x8xf32>
    %80 = tpu.concatenate %72, %73, %74, %75, %76, %77, %78, %79 in 0 : vector<1x8x8xf32>, vector<1x8x8xf32>, vector<1x8x8xf32>, vector<1x8x8xf32>, vector<1x8x8xf32>, vector<1x8x8xf32>, vector<1x8x8xf32>, vector<1x8x8xf32> -> vector<8x8x8xf32>
    %cst_12 = arith.constant dense<0.000000e+00> : vector<8x8x8xf32>
    %81 = tpu.matmul %46, %63, %cst_12 {dimension_numbers = #tpu.dot_dimension_numbers<[2], [2], [1], [1], [0, 0, 0, 1, 1, 1], [0], [0]>} : vector<8x8x8xf32>, vector<8x8x8xf32>, vector<8x8x8xf32> -> vector<8x8x8xf32>
    %cst_13 = arith.constant dense<0xFF800000> : vector<8x8xf32>
    %82 = vector.multi_reduction <maximumf>, %81, %cst_13 [2] : vector<8x8x8xf32> to vector<8x8xf32>
    %83 = vector.shape_cast %82 : vector<8x8xf32> to vector<8x8x1xf32>
    %84 = vector.broadcast %83 : vector<8x8x1xf32> to vector<8x8x8xf32>
    %85 = arith.subf %81, %84 : vector<8x8x8xf32>
    %86 = math.exp %85 : vector<8x8x8xf32>
    %cst_14 = arith.constant dense<0.000000e+00> : vector<8x8xf32>
    %87 = vector.multi_reduction <add>, %86, %cst_14 [2] : vector<8x8x8xf32> to vector<8x8xf32>
    %88 = vector.shape_cast %87 : vector<8x8xf32> to vector<8x8x1xf32>
    %89 = vector.broadcast %88 : vector<8x8x1xf32> to vector<8x8x8xf32>
    %90 = arith.divf %86, %89 : vector<8x8x8xf32>
    %cst_15 = arith.constant dense<0.000000e+00> : vector<8x8x8xf32>
    %91 = tpu.matmul %90, %80, %cst_15 {dimension_numbers = #tpu.dot_dimension_numbers<[2], [1], [1], [2], [0, 0, 0, 1, 1, 2], [0], [0]>} : vector<8x8x8xf32>, vector<8x8x8xf32>, vector<8x8x8xf32> -> vector<8x8x8xf32>
    %92 = vector.extract_strided_slice %91 {offsets = [0, 0, 0], sizes = [1, 8, 8], strides = [1, 1, 1]} : vector<8x8x8xf32> to vector<1x8x8xf32>
    %93 = vector.shape_cast %92 : vector<1x8x8xf32> to vector<8x8xf32>
    %94 = vector.extract_strided_slice %91 {offsets = [1, 0, 0], sizes = [1, 8, 8], strides = [1, 1, 1]} : vector<8x8x8xf32> to vector<1x8x8xf32>
    %95 = vector.shape_cast %94 : vector<1x8x8xf32> to vector<8x8xf32>
    %96 = vector.extract_strided_slice %91 {offsets = [2, 0, 0], sizes = [1, 8, 8], strides = [1, 1, 1]} : vector<8x8x8xf32> to vector<1x8x8xf32>
    %97 = vector.shape_cast %96 : vector<1x8x8xf32> to vector<8x8xf32>
    %98 = vector.extract_strided_slice %91 {offsets = [3, 0, 0], sizes = [1, 8, 8], strides = [1, 1, 1]} : vector<8x8x8xf32> to vector<1x8x8xf32>
    %99 = vector.shape_cast %98 : vector<1x8x8xf32> to vector<8x8xf32>
    %100 = tpu.concatenate %93, %95, %97, %99 in 1 : vector<8x8xf32>, vector<8x8xf32>, vector<8x8xf32>, vector<8x8xf32> -> vector<8x32xf32>
    %101 = vector.extract_strided_slice %91 {offsets = [4, 0, 0], sizes = [1, 8, 8], strides = [1, 1, 1]} : vector<8x8x8xf32> to vector<1x8x8xf32>
    %102 = vector.shape_cast %101 : vector<1x8x8xf32> to vector<8x8xf32>
    %103 = vector.extract_strided_slice %91 {offsets = [5, 0, 0], sizes = [1, 8, 8], strides = [1, 1, 1]} : vector<8x8x8xf32> to vector<1x8x8xf32>
    %104 = vector.shape_cast %103 : vector<1x8x8xf32> to vector<8x8xf32>
    %105 = vector.extract_strided_slice %91 {offsets = [6, 0, 0], sizes = [1, 8, 8], strides = [1, 1, 1]} : vector<8x8x8xf32> to vector<1x8x8xf32>
    %106 = vector.shape_cast %105 : vector<1x8x8xf32> to vector<8x8xf32>
    %107 = vector.extract_strided_slice %91 {offsets = [7, 0, 0], sizes = [1, 8, 8], strides = [1, 1, 1]} : vector<8x8x8xf32> to vector<1x8x8xf32>
    %108 = vector.shape_cast %107 : vector<1x8x8xf32> to vector<8x8xf32>
    %109 = tpu.concatenate %102, %104, %106, %108 in 1 : vector<8x8xf32>, vector<8x8xf32>, vector<8x8xf32>, vector<8x8xf32> -> vector<8x32xf32>
    %110 = tpu.concatenate %100, %109 in 0 : vector<8x32xf32>, vector<8x32xf32> -> vector<16x32xf32>
    %c0_16 = arith.constant 0 : index
    %c0_17 = arith.constant 0 : index
    %c0_18 = arith.constant 0 : index
    %111 = vector.load %arg5[%c0_16, %c0_17, %c0_18] : memref<2x32x32xf32, #tpu.memory_space<vmem>>, vector<1x32x32xf32>
    %112 = vector.shape_cast %111 : vector<1x32x32xf32> to vector<32x32xf32>
    %cst_19 = arith.constant dense<0.000000e+00> : vector<16x32xf32>
    %113 = tpu.matmul %110, %112, %cst_19 {dimension_numbers = #tpu.dot_dimension_numbers<[1], [0], [0], [1], [0, 0, 1, 1], [], []>} : vector<16x32xf32>, vector<32x32xf32>, vector<16x32xf32> -> vector<16x32xf32>
    %114 = vector.extract_strided_slice %4 {offsets = [3, 0], sizes = [1, 32], strides = [1, 1]} : vector<15x32xf32> to vector<1x32xf32>
    %115 = vector.shape_cast %114 : vector<1x32xf32> to vector<32xf32>
    %116 = vector.shape_cast %115 : vector<32xf32> to vector<1x32xf32>
    %117 = vector.broadcast %116 : vector<1x32xf32> to vector<16x32xf32>
    %118 = arith.addf %113, %117 : vector<16x32xf32>
    %119 = arith.addf %0, %118 : vector<16x32xf32>
    %120 = vector.extract_strided_slice %4 {offsets = [9, 0], sizes = [1, 32], strides = [1, 1]} : vector<15x32xf32> to vector<1x32xf32>
    %121 = vector.shape_cast %120 : vector<1x32xf32> to vector<32xf32>
    %122 = vector.extract_strided_slice %4 {offsets = [10, 0], sizes = [1, 32], strides = [1, 1]} : vector<15x32xf32> to vector<1x32xf32>
    %123 = vector.shape_cast %122 : vector<1x32xf32> to vector<32xf32>
    %cst_20 = arith.constant dense<0.000000e+00> : vector<16xf32>
    %124 = vector.multi_reduction <add>, %119, %cst_20 [1] : vector<16x32xf32> to vector<16xf32>
    %125 = vector.shape_cast %124 : vector<16xf32> to vector<16x1xf32>
    %cst_21 = arith.constant 3.200000e+01 : f32
    %126 = vector.broadcast %cst_21 : f32 to vector<16x1xf32>
    %127 = arith.divf %125, %126 : vector<16x1xf32>
    %128 = vector.broadcast %127 : vector<16x1xf32> to vector<16x32xf32>
    %129 = arith.subf %119, %128 : vector<16x32xf32>
    %130 = arith.mulf %129, %129 : vector<16x32xf32>
    %cst_22 = arith.constant dense<0.000000e+00> : vector<16xf32>
    %131 = vector.multi_reduction <add>, %130, %cst_22 [1] : vector<16x32xf32> to vector<16xf32>
    %132 = vector.shape_cast %131 : vector<16xf32> to vector<16x1xf32>
    %cst_23 = arith.constant 3.200000e+01 : f32
    %133 = vector.broadcast %cst_23 : f32 to vector<16x1xf32>
    %134 = arith.divf %132, %133 : vector<16x1xf32>
    %135 = vector.broadcast %127 : vector<16x1xf32> to vector<16x32xf32>
    %136 = arith.subf %119, %135 : vector<16x32xf32>
    %cst_24 = arith.constant 9.99999974E-6 : f32
    %137 = vector.broadcast %cst_24 : f32 to vector<16x1xf32>
    %138 = arith.addf %134, %137 : vector<16x1xf32>
    %139 = math.rsqrt %138 : vector<16x1xf32>
    %140 = vector.broadcast %139 : vector<16x1xf32> to vector<16x32xf32>
    %141 = arith.mulf %136, %140 : vector<16x32xf32>
    %142 = vector.shape_cast %121 : vector<32xf32> to vector<1x32xf32>
    %143 = vector.broadcast %142 : vector<1x32xf32> to vector<16x32xf32>
    %144 = arith.mulf %141, %143 : vector<16x32xf32>
    %145 = vector.shape_cast %123 : vector<32xf32> to vector<1x32xf32>
    %146 = vector.broadcast %145 : vector<1x32xf32> to vector<16x32xf32>
    %147 = arith.addf %144, %146 : vector<16x32xf32>
    %148 = arith.addf %147, %1 : vector<16x32xf32>
    %149 = tpu.concatenate %148, %2 in 0 : vector<16x32xf32>, vector<64x32xf32> -> vector<80x32xf32>
    %c0_25 = arith.constant 0 : index
    %c0_26 = arith.constant 0 : index
    %c0_27 = arith.constant 0 : index
    %150 = vector.load %arg6[%c0_25, %c0_26, %c0_27] : memref<2x32x96xf32, #tpu.memory_space<vmem>>, vector<1x32x96xf32>
    %151 = vector.shape_cast %150 : vector<1x32x96xf32> to vector<32x96xf32>
    %cst_28 = arith.constant dense<0.000000e+00> : vector<80x96xf32>
    %152 = tpu.matmul %149, %151, %cst_28 {dimension_numbers = #tpu.dot_dimension_numbers<[1], [0], [0], [1], [0, 0, 1, 1], [], []>} : vector<80x32xf32>, vector<32x96xf32>, vector<80x96xf32> -> vector<80x96xf32>
    %153 = vector.extract_strided_slice %152 {offsets = [0, 0], sizes = [16, 32], strides = [1, 1]} : vector<80x96xf32> to vector<16x32xf32>
    %154 = vector.extract_strided_slice %4 {offsets = [4, 0], sizes = [1, 32], strides = [1, 1]} : vector<15x32xf32> to vector<1x32xf32>
    %155 = vector.shape_cast %154 : vector<1x32xf32> to vector<32xf32>
    %156 = vector.shape_cast %155 : vector<32xf32> to vector<1x32xf32>
    %157 = vector.broadcast %156 : vector<1x32xf32> to vector<16x32xf32>
    %158 = arith.addf %153, %157 : vector<16x32xf32>
    %159 = vector.extract_strided_slice %152 {offsets = [16, 32], sizes = [32, 32], strides = [1, 1]} : vector<80x96xf32> to vector<32x32xf32>
    %160 = vector.extract_strided_slice %4 {offsets = [5, 0], sizes = [1, 32], strides = [1, 1]} : vector<15x32xf32> to vector<1x32xf32>
    %161 = vector.shape_cast %160 : vector<1x32xf32> to vector<32xf32>
    %162 = vector.shape_cast %161 : vector<32xf32> to vector<1x32xf32>
    %163 = vector.broadcast %162 : vector<1x32xf32> to vector<32x32xf32>
    %164 = arith.addf %159, %163 : vector<32x32xf32>
    %165 = vector.extract_strided_slice %152 {offsets = [48, 64], sizes = [32, 32], strides = [1, 1]} : vector<80x96xf32> to vector<32x32xf32>
    %166 = vector.extract_strided_slice %4 {offsets = [6, 0], sizes = [1, 32], strides = [1, 1]} : vector<15x32xf32> to vector<1x32xf32>
    %167 = vector.shape_cast %166 : vector<1x32xf32> to vector<32xf32>
    %168 = vector.shape_cast %167 : vector<32xf32> to vector<1x32xf32>
    %169 = vector.broadcast %168 : vector<1x32xf32> to vector<32x32xf32>
    %170 = arith.addf %165, %169 : vector<32x32xf32>
    %cst_29 = arith.constant 0.353553385 : f32
    %171 = vector.broadcast %cst_29 : f32 to vector<16x32xf32>
    %172 = arith.mulf %158, %171 : vector<16x32xf32>
    %173 = vector.extract_strided_slice %172 {offsets = [0, 0], sizes = [8, 8], strides = [1, 1]} : vector<16x32xf32> to vector<8x8xf32>
    %174 = vector.extract_strided_slice %172 {offsets = [0, 8], sizes = [8, 8], strides = [1, 1]} : vector<16x32xf32> to vector<8x8xf32>
    %175 = vector.extract_strided_slice %172 {offsets = [0, 16], sizes = [8, 8], strides = [1, 1]} : vector<16x32xf32> to vector<8x8xf32>
    %176 = vector.extract_strided_slice %172 {offsets = [0, 24], sizes = [8, 8], strides = [1, 1]} : vector<16x32xf32> to vector<8x8xf32>
    %177 = vector.extract_strided_slice %172 {offsets = [8, 0], sizes = [8, 8], strides = [1, 1]} : vector<16x32xf32> to vector<8x8xf32>
    %178 = vector.extract_strided_slice %172 {offsets = [8, 8], sizes = [8, 8], strides = [1, 1]} : vector<16x32xf32> to vector<8x8xf32>
    %179 = vector.extract_strided_slice %172 {offsets = [8, 16], sizes = [8, 8], strides = [1, 1]} : vector<16x32xf32> to vector<8x8xf32>
    %180 = vector.extract_strided_slice %172 {offsets = [8, 24], sizes = [8, 8], strides = [1, 1]} : vector<16x32xf32> to vector<8x8xf32>
    %181 = vector.shape_cast %173 : vector<8x8xf32> to vector<1x8x8xf32>
    %182 = vector.shape_cast %174 : vector<8x8xf32> to vector<1x8x8xf32>
    %183 = vector.shape_cast %175 : vector<8x8xf32> to vector<1x8x8xf32>
    %184 = vector.shape_cast %176 : vector<8x8xf32> to vector<1x8x8xf32>
    %185 = vector.shape_cast %177 : vector<8x8xf32> to vector<1x8x8xf32>
    %186 = vector.shape_cast %178 : vector<8x8xf32> to vector<1x8x8xf32>
    %187 = vector.shape_cast %179 : vector<8x8xf32> to vector<1x8x8xf32>
    %188 = vector.shape_cast %180 : vector<8x8xf32> to vector<1x8x8xf32>
    %189 = tpu.concatenate %181, %182, %183, %184, %185, %186, %187, %188 in 0 : vector<1x8x8xf32>, vector<1x8x8xf32>, vector<1x8x8xf32>, vector<1x8x8xf32>, vector<1x8x8xf32>, vector<1x8x8xf32>, vector<1x8x8xf32>, vector<1x8x8xf32> -> vector<8x8x8xf32>
    %190 = vector.extract_strided_slice %164 {offsets = [0, 0], sizes = [16, 8], strides = [1, 1]} : vector<32x32xf32> to vector<16x8xf32>
    %191 = vector.extract_strided_slice %164 {offsets = [0, 8], sizes = [16, 8], strides = [1, 1]} : vector<32x32xf32> to vector<16x8xf32>
    %192 = vector.extract_strided_slice %164 {offsets = [0, 16], sizes = [16, 8], strides = [1, 1]} : vector<32x32xf32> to vector<16x8xf32>
    %193 = vector.extract_strided_slice %164 {offsets = [0, 24], sizes = [16, 8], strides = [1, 1]} : vector<32x32xf32> to vector<16x8xf32>
    %194 = vector.extract_strided_slice %164 {offsets = [16, 0], sizes = [16, 8], strides = [1, 1]} : vector<32x32xf32> to vector<16x8xf32>
    %195 = vector.extract_strided_slice %164 {offsets = [16, 8], sizes = [16, 8], strides = [1, 1]} : vector<32x32xf32> to vector<16x8xf32>
    %196 = vector.extract_strided_slice %164 {offsets = [16, 16], sizes = [16, 8], strides = [1, 1]} : vector<32x32xf32> to vector<16x8xf32>
    %197 = vector.extract_strided_slice %164 {offsets = [16, 24], sizes = [16, 8], strides = [1, 1]} : vector<32x32xf32> to vector<16x8xf32>
    %198 = vector.shape_cast %190 : vector<16x8xf32> to vector<1x16x8xf32>
    %199 = vector.shape_cast %191 : vector<16x8xf32> to vector<1x16x8xf32>
    %200 = vector.shape_cast %192 : vector<16x8xf32> to vector<1x16x8xf32>
    %201 = vector.shape_cast %193 : vector<16x8xf32> to vector<1x16x8xf32>
    %202 = vector.shape_cast %194 : vector<16x8xf32> to vector<1x16x8xf32>
    %203 = vector.shape_cast %195 : vector<16x8xf32> to vector<1x16x8xf32>
    %204 = vector.shape_cast %196 : vector<16x8xf32> to vector<1x16x8xf32>
    %205 = vector.shape_cast %197 : vector<16x8xf32> to vector<1x16x8xf32>
    %206 = tpu.concatenate %198, %199, %200, %201, %202, %203, %204, %205 in 0 : vector<1x16x8xf32>, vector<1x16x8xf32>, vector<1x16x8xf32>, vector<1x16x8xf32>, vector<1x16x8xf32>, vector<1x16x8xf32>, vector<1x16x8xf32>, vector<1x16x8xf32> -> vector<8x16x8xf32>
    %207 = vector.extract_strided_slice %170 {offsets = [0, 0], sizes = [16, 8], strides = [1, 1]} : vector<32x32xf32> to vector<16x8xf32>
    %208 = vector.extract_strided_slice %170 {offsets = [0, 8], sizes = [16, 8], strides = [1, 1]} : vector<32x32xf32> to vector<16x8xf32>
    %209 = vector.extract_strided_slice %170 {offsets = [0, 16], sizes = [16, 8], strides = [1, 1]} : vector<32x32xf32> to vector<16x8xf32>
    %210 = vector.extract_strided_slice %170 {offsets = [0, 24], sizes = [16, 8], strides = [1, 1]} : vector<32x32xf32> to vector<16x8xf32>
    %211 = vector.extract_strided_slice %170 {offsets = [16, 0], sizes = [16, 8], strides = [1, 1]} : vector<32x32xf32> to vector<16x8xf32>
    %212 = vector.extract_strided_slice %170 {offsets = [16, 8], sizes = [16, 8], strides = [1, 1]} : vector<32x32xf32> to vector<16x8xf32>
    %213 = vector.extract_strided_slice %170 {offsets = [16, 16], sizes = [16, 8], strides = [1, 1]} : vector<32x32xf32> to vector<16x8xf32>
    %214 = vector.extract_strided_slice %170 {offsets = [16, 24], sizes = [16, 8], strides = [1, 1]} : vector<32x32xf32> to vector<16x8xf32>
    %215 = vector.shape_cast %207 : vector<16x8xf32> to vector<1x16x8xf32>
    %216 = vector.shape_cast %208 : vector<16x8xf32> to vector<1x16x8xf32>
    %217 = vector.shape_cast %209 : vector<16x8xf32> to vector<1x16x8xf32>
    %218 = vector.shape_cast %210 : vector<16x8xf32> to vector<1x16x8xf32>
    %219 = vector.shape_cast %211 : vector<16x8xf32> to vector<1x16x8xf32>
    %220 = vector.shape_cast %212 : vector<16x8xf32> to vector<1x16x8xf32>
    %221 = vector.shape_cast %213 : vector<16x8xf32> to vector<1x16x8xf32>
    %222 = vector.shape_cast %214 : vector<16x8xf32> to vector<1x16x8xf32>
    %223 = tpu.concatenate %215, %216, %217, %218, %219, %220, %221, %222 in 0 : vector<1x16x8xf32>, vector<1x16x8xf32>, vector<1x16x8xf32>, vector<1x16x8xf32>, vector<1x16x8xf32>, vector<1x16x8xf32>, vector<1x16x8xf32>, vector<1x16x8xf32> -> vector<8x16x8xf32>
    %cst_30 = arith.constant dense<0.000000e+00> : vector<8x8x16xf32>
    %224 = tpu.matmul %189, %206, %cst_30 {dimension_numbers = #tpu.dot_dimension_numbers<[2], [2], [1], [1], [0, 0, 0, 1, 1, 1], [0], [0]>} : vector<8x8x8xf32>, vector<8x16x8xf32>, vector<8x8x16xf32> -> vector<8x8x16xf32>
    %cst_31 = arith.constant dense<0xFF800000> : vector<8x8xf32>
    %225 = vector.multi_reduction <maximumf>, %224, %cst_31 [2] : vector<8x8x16xf32> to vector<8x8xf32>
    %226 = vector.shape_cast %225 : vector<8x8xf32> to vector<8x8x1xf32>
    %227 = vector.broadcast %226 : vector<8x8x1xf32> to vector<8x8x16xf32>
    %228 = arith.subf %224, %227 : vector<8x8x16xf32>
    %229 = math.exp %228 : vector<8x8x16xf32>
    %cst_32 = arith.constant dense<0.000000e+00> : vector<8x8xf32>
    %230 = vector.multi_reduction <add>, %229, %cst_32 [2] : vector<8x8x16xf32> to vector<8x8xf32>
    %231 = vector.shape_cast %230 : vector<8x8xf32> to vector<8x8x1xf32>
    %232 = vector.broadcast %231 : vector<8x8x1xf32> to vector<8x8x16xf32>
    %233 = arith.divf %229, %232 : vector<8x8x16xf32>
    %cst_33 = arith.constant dense<0.000000e+00> : vector<8x8x8xf32>
    %234 = tpu.matmul %233, %223, %cst_33 {dimension_numbers = #tpu.dot_dimension_numbers<[2], [1], [1], [2], [0, 0, 0, 1, 1, 2], [0], [0]>} : vector<8x8x16xf32>, vector<8x16x8xf32>, vector<8x8x8xf32> -> vector<8x8x8xf32>
    %235 = vector.extract_strided_slice %234 {offsets = [0, 0, 0], sizes = [1, 8, 8], strides = [1, 1, 1]} : vector<8x8x8xf32> to vector<1x8x8xf32>
    %236 = vector.shape_cast %235 : vector<1x8x8xf32> to vector<8x8xf32>
    %237 = vector.extract_strided_slice %234 {offsets = [1, 0, 0], sizes = [1, 8, 8], strides = [1, 1, 1]} : vector<8x8x8xf32> to vector<1x8x8xf32>
    %238 = vector.shape_cast %237 : vector<1x8x8xf32> to vector<8x8xf32>
    %239 = vector.extract_strided_slice %234 {offsets = [2, 0, 0], sizes = [1, 8, 8], strides = [1, 1, 1]} : vector<8x8x8xf32> to vector<1x8x8xf32>
    %240 = vector.shape_cast %239 : vector<1x8x8xf32> to vector<8x8xf32>
    %241 = vector.extract_strided_slice %234 {offsets = [3, 0, 0], sizes = [1, 8, 8], strides = [1, 1, 1]} : vector<8x8x8xf32> to vector<1x8x8xf32>
    %242 = vector.shape_cast %241 : vector<1x8x8xf32> to vector<8x8xf32>
    %243 = tpu.concatenate %236, %238, %240, %242 in 1 : vector<8x8xf32>, vector<8x8xf32>, vector<8x8xf32>, vector<8x8xf32> -> vector<8x32xf32>
    %244 = vector.extract_strided_slice %234 {offsets = [4, 0, 0], sizes = [1, 8, 8], strides = [1, 1, 1]} : vector<8x8x8xf32> to vector<1x8x8xf32>
    %245 = vector.shape_cast %244 : vector<1x8x8xf32> to vector<8x8xf32>
    %246 = vector.extract_strided_slice %234 {offsets = [5, 0, 0], sizes = [1, 8, 8], strides = [1, 1, 1]} : vector<8x8x8xf32> to vector<1x8x8xf32>
    %247 = vector.shape_cast %246 : vector<1x8x8xf32> to vector<8x8xf32>
    %248 = vector.extract_strided_slice %234 {offsets = [6, 0, 0], sizes = [1, 8, 8], strides = [1, 1, 1]} : vector<8x8x8xf32> to vector<1x8x8xf32>
    %249 = vector.shape_cast %248 : vector<1x8x8xf32> to vector<8x8xf32>
    %250 = vector.extract_strided_slice %234 {offsets = [7, 0, 0], sizes = [1, 8, 8], strides = [1, 1, 1]} : vector<8x8x8xf32> to vector<1x8x8xf32>
    %251 = vector.shape_cast %250 : vector<1x8x8xf32> to vector<8x8xf32>
    %252 = tpu.concatenate %245, %247, %249, %251 in 1 : vector<8x8xf32>, vector<8x8xf32>, vector<8x8xf32>, vector<8x8xf32> -> vector<8x32xf32>
    %253 = tpu.concatenate %243, %252 in 0 : vector<8x32xf32>, vector<8x32xf32> -> vector<16x32xf32>
    %c0_34 = arith.constant 0 : index
    %c0_35 = arith.constant 0 : index
    %c0_36 = arith.constant 0 : index
    %254 = vector.load %arg7[%c0_34, %c0_35, %c0_36] : memref<2x32x32xf32, #tpu.memory_space<vmem>>, vector<1x32x32xf32>
    %255 = vector.shape_cast %254 : vector<1x32x32xf32> to vector<32x32xf32>
    %cst_37 = arith.constant dense<0.000000e+00> : vector<16x32xf32>
    %256 = tpu.matmul %253, %255, %cst_37 {dimension_numbers = #tpu.dot_dimension_numbers<[1], [0], [0], [1], [0, 0, 1, 1], [], []>} : vector<16x32xf32>, vector<32x32xf32>, vector<16x32xf32> -> vector<16x32xf32>
    %257 = vector.extract_strided_slice %4 {offsets = [7, 0], sizes = [1, 32], strides = [1, 1]} : vector<15x32xf32> to vector<1x32xf32>
    %258 = vector.shape_cast %257 : vector<1x32xf32> to vector<32xf32>
    %259 = vector.shape_cast %258 : vector<32xf32> to vector<1x32xf32>
    %260 = vector.broadcast %259 : vector<1x32xf32> to vector<16x32xf32>
    %261 = arith.addf %256, %260 : vector<16x32xf32>
    %262 = arith.addf %147, %261 : vector<16x32xf32>
    %263 = vector.extract_strided_slice %4 {offsets = [11, 0], sizes = [1, 32], strides = [1, 1]} : vector<15x32xf32> to vector<1x32xf32>
    %264 = vector.shape_cast %263 : vector<1x32xf32> to vector<32xf32>
    %265 = vector.extract_strided_slice %4 {offsets = [12, 0], sizes = [1, 32], strides = [1, 1]} : vector<15x32xf32> to vector<1x32xf32>
    %266 = vector.shape_cast %265 : vector<1x32xf32> to vector<32xf32>
    %cst_38 = arith.constant dense<0.000000e+00> : vector<16xf32>
    %267 = vector.multi_reduction <add>, %262, %cst_38 [1] : vector<16x32xf32> to vector<16xf32>
    %268 = vector.shape_cast %267 : vector<16xf32> to vector<16x1xf32>
    %cst_39 = arith.constant 3.200000e+01 : f32
    %269 = vector.broadcast %cst_39 : f32 to vector<16x1xf32>
    %270 = arith.divf %268, %269 : vector<16x1xf32>
    %271 = vector.broadcast %270 : vector<16x1xf32> to vector<16x32xf32>
    %272 = arith.subf %262, %271 : vector<16x32xf32>
    %273 = arith.mulf %272, %272 : vector<16x32xf32>
    %cst_40 = arith.constant dense<0.000000e+00> : vector<16xf32>
    %274 = vector.multi_reduction <add>, %273, %cst_40 [1] : vector<16x32xf32> to vector<16xf32>
    %275 = vector.shape_cast %274 : vector<16xf32> to vector<16x1xf32>
    %cst_41 = arith.constant 3.200000e+01 : f32
    %276 = vector.broadcast %cst_41 : f32 to vector<16x1xf32>
    %277 = arith.divf %275, %276 : vector<16x1xf32>
    %278 = vector.broadcast %270 : vector<16x1xf32> to vector<16x32xf32>
    %279 = arith.subf %262, %278 : vector<16x32xf32>
    %cst_42 = arith.constant 9.99999974E-6 : f32
    %280 = vector.broadcast %cst_42 : f32 to vector<16x1xf32>
    %281 = arith.addf %277, %280 : vector<16x1xf32>
    %282 = math.rsqrt %281 : vector<16x1xf32>
    %283 = vector.broadcast %282 : vector<16x1xf32> to vector<16x32xf32>
    %284 = arith.mulf %279, %283 : vector<16x32xf32>
    %285 = vector.shape_cast %264 : vector<32xf32> to vector<1x32xf32>
    %286 = vector.broadcast %285 : vector<1x32xf32> to vector<16x32xf32>
    %287 = arith.mulf %284, %286 : vector<16x32xf32>
    %288 = vector.shape_cast %266 : vector<32xf32> to vector<1x32xf32>
    %289 = vector.broadcast %288 : vector<1x32xf32> to vector<16x32xf32>
    %290 = arith.addf %287, %289 : vector<16x32xf32>
    %c0_43 = arith.constant 0 : index
    %c0_44 = arith.constant 0 : index
    %c0_45 = arith.constant 0 : index
    %291 = vector.load %arg8[%c0_43, %c0_44, %c0_45] : memref<2x32x64xf32, #tpu.memory_space<vmem>>, vector<1x32x64xf32>
    %292 = vector.shape_cast %291 : vector<1x32x64xf32> to vector<32x64xf32>
    %cst_46 = arith.constant dense<0.000000e+00> : vector<16x64xf32>
    %293 = tpu.matmul %290, %292, %cst_46 {dimension_numbers = #tpu.dot_dimension_numbers<[1], [0], [0], [1], [0, 0, 1, 1], [], []>} : vector<16x32xf32>, vector<32x64xf32>, vector<16x64xf32> -> vector<16x64xf32>
    %c0_47 = arith.constant 0 : index
    %c0_48 = arith.constant 0 : index
    %c0_49 = arith.constant 0 : index
    %294 = vector.load %arg10[%c0_47, %c0_48, %c0_49] : memref<2x1x64xf32, #tpu.memory_space<vmem>>, vector<1x1x64xf32>
    %295 = vector.shape_cast %294 : vector<1x1x64xf32> to vector<1x64xf32>
    %296 = vector.broadcast %295 : vector<1x64xf32> to vector<16x64xf32>
    %297 = arith.addf %293, %296 : vector<16x64xf32>
    %cst_50 = arith.constant 0.000000e+00 : f32
    %298 = vector.broadcast %cst_50 : f32 to vector<16x64xf32>
    %299 = arith.maximumf %297, %298 : vector<16x64xf32>
    %c0_51 = arith.constant 0 : index
    %c0_52 = arith.constant 0 : index
    %c0_53 = arith.constant 0 : index
    %300 = vector.load %arg9[%c0_51, %c0_52, %c0_53] : memref<2x64x32xf32, #tpu.memory_space<vmem>>, vector<1x64x32xf32>
    %301 = vector.shape_cast %300 : vector<1x64x32xf32> to vector<64x32xf32>
    %cst_54 = arith.constant dense<0.000000e+00> : vector<16x32xf32>
    %302 = tpu.matmul %299, %301, %cst_54 {dimension_numbers = #tpu.dot_dimension_numbers<[1], [0], [0], [1], [0, 0, 1, 1], [], []>} : vector<16x64xf32>, vector<64x32xf32>, vector<16x32xf32> -> vector<16x32xf32>
    %303 = vector.extract_strided_slice %4 {offsets = [8, 0], sizes = [1, 32], strides = [1, 1]} : vector<15x32xf32> to vector<1x32xf32>
    %304 = vector.shape_cast %303 : vector<1x32xf32> to vector<32xf32>
    %305 = vector.shape_cast %304 : vector<32xf32> to vector<1x32xf32>
    %306 = vector.broadcast %305 : vector<1x32xf32> to vector<16x32xf32>
    %307 = arith.addf %302, %306 : vector<16x32xf32>
    %308 = arith.addf %290, %307 : vector<16x32xf32>
    %309 = vector.extract_strided_slice %4 {offsets = [13, 0], sizes = [1, 32], strides = [1, 1]} : vector<15x32xf32> to vector<1x32xf32>
    %310 = vector.shape_cast %309 : vector<1x32xf32> to vector<32xf32>
    %311 = vector.extract_strided_slice %4 {offsets = [14, 0], sizes = [1, 32], strides = [1, 1]} : vector<15x32xf32> to vector<1x32xf32>
    %312 = vector.shape_cast %311 : vector<1x32xf32> to vector<32xf32>
    %cst_55 = arith.constant dense<0.000000e+00> : vector<16xf32>
    %313 = vector.multi_reduction <add>, %308, %cst_55 [1] : vector<16x32xf32> to vector<16xf32>
    %314 = vector.shape_cast %313 : vector<16xf32> to vector<16x1xf32>
    %cst_56 = arith.constant 3.200000e+01 : f32
    %315 = vector.broadcast %cst_56 : f32 to vector<16x1xf32>
    %316 = arith.divf %314, %315 : vector<16x1xf32>
    %317 = vector.broadcast %316 : vector<16x1xf32> to vector<16x32xf32>
    %318 = arith.subf %308, %317 : vector<16x32xf32>
    %319 = arith.mulf %318, %318 : vector<16x32xf32>
    %cst_57 = arith.constant dense<0.000000e+00> : vector<16xf32>
    %320 = vector.multi_reduction <add>, %319, %cst_57 [1] : vector<16x32xf32> to vector<16xf32>
    %321 = vector.shape_cast %320 : vector<16xf32> to vector<16x1xf32>
    %cst_58 = arith.constant 3.200000e+01 : f32
    %322 = vector.broadcast %cst_58 : f32 to vector<16x1xf32>
    %323 = arith.divf %321, %322 : vector<16x1xf32>
    %324 = vector.broadcast %316 : vector<16x1xf32> to vector<16x32xf32>
    %325 = arith.subf %308, %324 : vector<16x32xf32>
    %cst_59 = arith.constant 9.99999974E-6 : f32
    %326 = vector.broadcast %cst_59 : f32 to vector<16x1xf32>
    %327 = arith.addf %323, %326 : vector<16x1xf32>
    %328 = math.rsqrt %327 : vector<16x1xf32>
    %329 = vector.broadcast %328 : vector<16x1xf32> to vector<16x32xf32>
    %330 = arith.mulf %325, %329 : vector<16x32xf32>
    %331 = vector.shape_cast %310 : vector<32xf32> to vector<1x32xf32>
    %332 = vector.broadcast %331 : vector<1x32xf32> to vector<16x32xf32>
    %333 = arith.mulf %330, %332 : vector<16x32xf32>
    %334 = vector.shape_cast %312 : vector<32xf32> to vector<1x32xf32>
    %335 = vector.broadcast %334 : vector<1x32xf32> to vector<16x32xf32>
    %336 = arith.addf %333, %335 : vector<16x32xf32>
    %c1 = arith.constant 1 : index
    %c0_60 = arith.constant 0 : index
    %c0_61 = arith.constant 0 : index
    %337 = vector.load %arg11[%c1, %c0_60, %c0_61] : memref<2x15x32xf32, #tpu.memory_space<vmem>>, vector<1x15x32xf32>
    %338 = vector.shape_cast %337 : vector<1x15x32xf32> to vector<15x32xf32>
    %339 = arith.addf %336, %1 : vector<16x32xf32>
    %340 = tpu.concatenate %339, %336 in 0 : vector<16x32xf32>, vector<16x32xf32> -> vector<32x32xf32>
    %c1_62 = arith.constant 1 : index
    %c0_63 = arith.constant 0 : index
    %c0_64 = arith.constant 0 : index
    %341 = vector.load %arg4[%c1_62, %c0_63, %c0_64] : memref<2x32x96xf32, #tpu.memory_space<vmem>>, vector<1x32x96xf32>
    %342 = vector.shape_cast %341 : vector<1x32x96xf32> to vector<32x96xf32>
    %cst_65 = arith.constant dense<0.000000e+00> : vector<32x96xf32>
    %343 = tpu.matmul %340, %342, %cst_65 {dimension_numbers = #tpu.dot_dimension_numbers<[1], [0], [0], [1], [0, 0, 1, 1], [], []>} : vector<32x32xf32>, vector<32x96xf32>, vector<32x96xf32> -> vector<32x96xf32>
    %344 = vector.extract_strided_slice %343 {offsets = [0, 0], sizes = [16, 32], strides = [1, 1]} : vector<32x96xf32> to vector<16x32xf32>
    %345 = vector.extract_strided_slice %338 {offsets = [0, 0], sizes = [1, 32], strides = [1, 1]} : vector<15x32xf32> to vector<1x32xf32>
    %346 = vector.shape_cast %345 : vector<1x32xf32> to vector<32xf32>
    %347 = vector.shape_cast %346 : vector<32xf32> to vector<1x32xf32>
    %348 = vector.broadcast %347 : vector<1x32xf32> to vector<16x32xf32>
    %349 = arith.addf %344, %348 : vector<16x32xf32>
    %350 = vector.extract_strided_slice %343 {offsets = [0, 32], sizes = [16, 32], strides = [1, 1]} : vector<32x96xf32> to vector<16x32xf32>
    %351 = vector.extract_strided_slice %338 {offsets = [1, 0], sizes = [1, 32], strides = [1, 1]} : vector<15x32xf32> to vector<1x32xf32>
    %352 = vector.shape_cast %351 : vector<1x32xf32> to vector<32xf32>
    %353 = vector.shape_cast %352 : vector<32xf32> to vector<1x32xf32>
    %354 = vector.broadcast %353 : vector<1x32xf32> to vector<16x32xf32>
    %355 = arith.addf %350, %354 : vector<16x32xf32>
    %356 = vector.extract_strided_slice %343 {offsets = [16, 64], sizes = [16, 32], strides = [1, 1]} : vector<32x96xf32> to vector<16x32xf32>
    %357 = vector.extract_strided_slice %338 {offsets = [2, 0], sizes = [1, 32], strides = [1, 1]} : vector<15x32xf32> to vector<1x32xf32>
    %358 = vector.shape_cast %357 : vector<1x32xf32> to vector<32xf32>
    %359 = vector.shape_cast %358 : vector<32xf32> to vector<1x32xf32>
    %360 = vector.broadcast %359 : vector<1x32xf32> to vector<16x32xf32>
    %361 = arith.addf %356, %360 : vector<16x32xf32>
    %cst_66 = arith.constant 0.353553385 : f32
    %362 = vector.broadcast %cst_66 : f32 to vector<16x32xf32>
    %363 = arith.mulf %349, %362 : vector<16x32xf32>
    %364 = vector.extract_strided_slice %363 {offsets = [0, 0], sizes = [8, 8], strides = [1, 1]} : vector<16x32xf32> to vector<8x8xf32>
    %365 = vector.extract_strided_slice %363 {offsets = [0, 8], sizes = [8, 8], strides = [1, 1]} : vector<16x32xf32> to vector<8x8xf32>
    %366 = vector.extract_strided_slice %363 {offsets = [0, 16], sizes = [8, 8], strides = [1, 1]} : vector<16x32xf32> to vector<8x8xf32>
    %367 = vector.extract_strided_slice %363 {offsets = [0, 24], sizes = [8, 8], strides = [1, 1]} : vector<16x32xf32> to vector<8x8xf32>
    %368 = vector.extract_strided_slice %363 {offsets = [8, 0], sizes = [8, 8], strides = [1, 1]} : vector<16x32xf32> to vector<8x8xf32>
    %369 = vector.extract_strided_slice %363 {offsets = [8, 8], sizes = [8, 8], strides = [1, 1]} : vector<16x32xf32> to vector<8x8xf32>
    %370 = vector.extract_strided_slice %363 {offsets = [8, 16], sizes = [8, 8], strides = [1, 1]} : vector<16x32xf32> to vector<8x8xf32>
    %371 = vector.extract_strided_slice %363 {offsets = [8, 24], sizes = [8, 8], strides = [1, 1]} : vector<16x32xf32> to vector<8x8xf32>
    %372 = vector.shape_cast %364 : vector<8x8xf32> to vector<1x8x8xf32>
    %373 = vector.shape_cast %365 : vector<8x8xf32> to vector<1x8x8xf32>
    %374 = vector.shape_cast %366 : vector<8x8xf32> to vector<1x8x8xf32>
    %375 = vector.shape_cast %367 : vector<8x8xf32> to vector<1x8x8xf32>
    %376 = vector.shape_cast %368 : vector<8x8xf32> to vector<1x8x8xf32>
    %377 = vector.shape_cast %369 : vector<8x8xf32> to vector<1x8x8xf32>
    %378 = vector.shape_cast %370 : vector<8x8xf32> to vector<1x8x8xf32>
    %379 = vector.shape_cast %371 : vector<8x8xf32> to vector<1x8x8xf32>
    %380 = tpu.concatenate %372, %373, %374, %375, %376, %377, %378, %379 in 0 : vector<1x8x8xf32>, vector<1x8x8xf32>, vector<1x8x8xf32>, vector<1x8x8xf32>, vector<1x8x8xf32>, vector<1x8x8xf32>, vector<1x8x8xf32>, vector<1x8x8xf32> -> vector<8x8x8xf32>
    %381 = vector.extract_strided_slice %355 {offsets = [0, 0], sizes = [8, 8], strides = [1, 1]} : vector<16x32xf32> to vector<8x8xf32>
    %382 = vector.extract_strided_slice %355 {offsets = [0, 8], sizes = [8, 8], strides = [1, 1]} : vector<16x32xf32> to vector<8x8xf32>
    %383 = vector.extract_strided_slice %355 {offsets = [0, 16], sizes = [8, 8], strides = [1, 1]} : vector<16x32xf32> to vector<8x8xf32>
    %384 = vector.extract_strided_slice %355 {offsets = [0, 24], sizes = [8, 8], strides = [1, 1]} : vector<16x32xf32> to vector<8x8xf32>
    %385 = vector.extract_strided_slice %355 {offsets = [8, 0], sizes = [8, 8], strides = [1, 1]} : vector<16x32xf32> to vector<8x8xf32>
    %386 = vector.extract_strided_slice %355 {offsets = [8, 8], sizes = [8, 8], strides = [1, 1]} : vector<16x32xf32> to vector<8x8xf32>
    %387 = vector.extract_strided_slice %355 {offsets = [8, 16], sizes = [8, 8], strides = [1, 1]} : vector<16x32xf32> to vector<8x8xf32>
    %388 = vector.extract_strided_slice %355 {offsets = [8, 24], sizes = [8, 8], strides = [1, 1]} : vector<16x32xf32> to vector<8x8xf32>
    %389 = vector.shape_cast %381 : vector<8x8xf32> to vector<1x8x8xf32>
    %390 = vector.shape_cast %382 : vector<8x8xf32> to vector<1x8x8xf32>
    %391 = vector.shape_cast %383 : vector<8x8xf32> to vector<1x8x8xf32>
    %392 = vector.shape_cast %384 : vector<8x8xf32> to vector<1x8x8xf32>
    %393 = vector.shape_cast %385 : vector<8x8xf32> to vector<1x8x8xf32>
    %394 = vector.shape_cast %386 : vector<8x8xf32> to vector<1x8x8xf32>
    %395 = vector.shape_cast %387 : vector<8x8xf32> to vector<1x8x8xf32>
    %396 = vector.shape_cast %388 : vector<8x8xf32> to vector<1x8x8xf32>
    %397 = tpu.concatenate %389, %390, %391, %392, %393, %394, %395, %396 in 0 : vector<1x8x8xf32>, vector<1x8x8xf32>, vector<1x8x8xf32>, vector<1x8x8xf32>, vector<1x8x8xf32>, vector<1x8x8xf32>, vector<1x8x8xf32>, vector<1x8x8xf32> -> vector<8x8x8xf32>
    %398 = vector.extract_strided_slice %361 {offsets = [0, 0], sizes = [8, 8], strides = [1, 1]} : vector<16x32xf32> to vector<8x8xf32>
    %399 = vector.extract_strided_slice %361 {offsets = [0, 8], sizes = [8, 8], strides = [1, 1]} : vector<16x32xf32> to vector<8x8xf32>
    %400 = vector.extract_strided_slice %361 {offsets = [0, 16], sizes = [8, 8], strides = [1, 1]} : vector<16x32xf32> to vector<8x8xf32>
    %401 = vector.extract_strided_slice %361 {offsets = [0, 24], sizes = [8, 8], strides = [1, 1]} : vector<16x32xf32> to vector<8x8xf32>
    %402 = vector.extract_strided_slice %361 {offsets = [8, 0], sizes = [8, 8], strides = [1, 1]} : vector<16x32xf32> to vector<8x8xf32>
    %403 = vector.extract_strided_slice %361 {offsets = [8, 8], sizes = [8, 8], strides = [1, 1]} : vector<16x32xf32> to vector<8x8xf32>
    %404 = vector.extract_strided_slice %361 {offsets = [8, 16], sizes = [8, 8], strides = [1, 1]} : vector<16x32xf32> to vector<8x8xf32>
    %405 = vector.extract_strided_slice %361 {offsets = [8, 24], sizes = [8, 8], strides = [1, 1]} : vector<16x32xf32> to vector<8x8xf32>
    %406 = vector.shape_cast %398 : vector<8x8xf32> to vector<1x8x8xf32>
    %407 = vector.shape_cast %399 : vector<8x8xf32> to vector<1x8x8xf32>
    %408 = vector.shape_cast %400 : vector<8x8xf32> to vector<1x8x8xf32>
    %409 = vector.shape_cast %401 : vector<8x8xf32> to vector<1x8x8xf32>
    %410 = vector.shape_cast %402 : vector<8x8xf32> to vector<1x8x8xf32>
    %411 = vector.shape_cast %403 : vector<8x8xf32> to vector<1x8x8xf32>
    %412 = vector.shape_cast %404 : vector<8x8xf32> to vector<1x8x8xf32>
    %413 = vector.shape_cast %405 : vector<8x8xf32> to vector<1x8x8xf32>
    %414 = tpu.concatenate %406, %407, %408, %409, %410, %411, %412, %413 in 0 : vector<1x8x8xf32>, vector<1x8x8xf32>, vector<1x8x8xf32>, vector<1x8x8xf32>, vector<1x8x8xf32>, vector<1x8x8xf32>, vector<1x8x8xf32>, vector<1x8x8xf32> -> vector<8x8x8xf32>
    %cst_67 = arith.constant dense<0.000000e+00> : vector<8x8x8xf32>
    %415 = tpu.matmul %380, %397, %cst_67 {dimension_numbers = #tpu.dot_dimension_numbers<[2], [2], [1], [1], [0, 0, 0, 1, 1, 1], [0], [0]>} : vector<8x8x8xf32>, vector<8x8x8xf32>, vector<8x8x8xf32> -> vector<8x8x8xf32>
    %cst_68 = arith.constant dense<0xFF800000> : vector<8x8xf32>
    %416 = vector.multi_reduction <maximumf>, %415, %cst_68 [2] : vector<8x8x8xf32> to vector<8x8xf32>
    %417 = vector.shape_cast %416 : vector<8x8xf32> to vector<8x8x1xf32>
    %418 = vector.broadcast %417 : vector<8x8x1xf32> to vector<8x8x8xf32>
    %419 = arith.subf %415, %418 : vector<8x8x8xf32>
    %420 = math.exp %419 : vector<8x8x8xf32>
    %cst_69 = arith.constant dense<0.000000e+00> : vector<8x8xf32>
    %421 = vector.multi_reduction <add>, %420, %cst_69 [2] : vector<8x8x8xf32> to vector<8x8xf32>
    %422 = vector.shape_cast %421 : vector<8x8xf32> to vector<8x8x1xf32>
    %423 = vector.broadcast %422 : vector<8x8x1xf32> to vector<8x8x8xf32>
    %424 = arith.divf %420, %423 : vector<8x8x8xf32>
    %cst_70 = arith.constant dense<0.000000e+00> : vector<8x8x8xf32>
    %425 = tpu.matmul %424, %414, %cst_70 {dimension_numbers = #tpu.dot_dimension_numbers<[2], [1], [1], [2], [0, 0, 0, 1, 1, 2], [0], [0]>} : vector<8x8x8xf32>, vector<8x8x8xf32>, vector<8x8x8xf32> -> vector<8x8x8xf32>
    %426 = vector.extract_strided_slice %425 {offsets = [0, 0, 0], sizes = [1, 8, 8], strides = [1, 1, 1]} : vector<8x8x8xf32> to vector<1x8x8xf32>
    %427 = vector.shape_cast %426 : vector<1x8x8xf32> to vector<8x8xf32>
    %428 = vector.extract_strided_slice %425 {offsets = [1, 0, 0], sizes = [1, 8, 8], strides = [1, 1, 1]} : vector<8x8x8xf32> to vector<1x8x8xf32>
    %429 = vector.shape_cast %428 : vector<1x8x8xf32> to vector<8x8xf32>
    %430 = vector.extract_strided_slice %425 {offsets = [2, 0, 0], sizes = [1, 8, 8], strides = [1, 1, 1]} : vector<8x8x8xf32> to vector<1x8x8xf32>
    %431 = vector.shape_cast %430 : vector<1x8x8xf32> to vector<8x8xf32>
    %432 = vector.extract_strided_slice %425 {offsets = [3, 0, 0], sizes = [1, 8, 8], strides = [1, 1, 1]} : vector<8x8x8xf32> to vector<1x8x8xf32>
    %433 = vector.shape_cast %432 : vector<1x8x8xf32> to vector<8x8xf32>
    %434 = tpu.concatenate %427, %429, %431, %433 in 1 : vector<8x8xf32>, vector<8x8xf32>, vector<8x8xf32>, vector<8x8xf32> -> vector<8x32xf32>
    %435 = vector.extract_strided_slice %425 {offsets = [4, 0, 0], sizes = [1, 8, 8], strides = [1, 1, 1]} : vector<8x8x8xf32> to vector<1x8x8xf32>
    %436 = vector.shape_cast %435 : vector<1x8x8xf32> to vector<8x8xf32>
    %437 = vector.extract_strided_slice %425 {offsets = [5, 0, 0], sizes = [1, 8, 8], strides = [1, 1, 1]} : vector<8x8x8xf32> to vector<1x8x8xf32>
    %438 = vector.shape_cast %437 : vector<1x8x8xf32> to vector<8x8xf32>
    %439 = vector.extract_strided_slice %425 {offsets = [6, 0, 0], sizes = [1, 8, 8], strides = [1, 1, 1]} : vector<8x8x8xf32> to vector<1x8x8xf32>
    %440 = vector.shape_cast %439 : vector<1x8x8xf32> to vector<8x8xf32>
    %441 = vector.extract_strided_slice %425 {offsets = [7, 0, 0], sizes = [1, 8, 8], strides = [1, 1, 1]} : vector<8x8x8xf32> to vector<1x8x8xf32>
    %442 = vector.shape_cast %441 : vector<1x8x8xf32> to vector<8x8xf32>
    %443 = tpu.concatenate %436, %438, %440, %442 in 1 : vector<8x8xf32>, vector<8x8xf32>, vector<8x8xf32>, vector<8x8xf32> -> vector<8x32xf32>
    %444 = tpu.concatenate %434, %443 in 0 : vector<8x32xf32>, vector<8x32xf32> -> vector<16x32xf32>
    %c1_71 = arith.constant 1 : index
    %c0_72 = arith.constant 0 : index
    %c0_73 = arith.constant 0 : index
    %445 = vector.load %arg5[%c1_71, %c0_72, %c0_73] : memref<2x32x32xf32, #tpu.memory_space<vmem>>, vector<1x32x32xf32>
    %446 = vector.shape_cast %445 : vector<1x32x32xf32> to vector<32x32xf32>
    %cst_74 = arith.constant dense<0.000000e+00> : vector<16x32xf32>
    %447 = tpu.matmul %444, %446, %cst_74 {dimension_numbers = #tpu.dot_dimension_numbers<[1], [0], [0], [1], [0, 0, 1, 1], [], []>} : vector<16x32xf32>, vector<32x32xf32>, vector<16x32xf32> -> vector<16x32xf32>
    %448 = vector.extract_strided_slice %338 {offsets = [3, 0], sizes = [1, 32], strides = [1, 1]} : vector<15x32xf32> to vector<1x32xf32>
    %449 = vector.shape_cast %448 : vector<1x32xf32> to vector<32xf32>
    %450 = vector.shape_cast %449 : vector<32xf32> to vector<1x32xf32>
    %451 = vector.broadcast %450 : vector<1x32xf32> to vector<16x32xf32>
    %452 = arith.addf %447, %451 : vector<16x32xf32>
    %453 = arith.addf %336, %452 : vector<16x32xf32>
    %454 = vector.extract_strided_slice %338 {offsets = [9, 0], sizes = [1, 32], strides = [1, 1]} : vector<15x32xf32> to vector<1x32xf32>
    %455 = vector.shape_cast %454 : vector<1x32xf32> to vector<32xf32>
    %456 = vector.extract_strided_slice %338 {offsets = [10, 0], sizes = [1, 32], strides = [1, 1]} : vector<15x32xf32> to vector<1x32xf32>
    %457 = vector.shape_cast %456 : vector<1x32xf32> to vector<32xf32>
    %cst_75 = arith.constant dense<0.000000e+00> : vector<16xf32>
    %458 = vector.multi_reduction <add>, %453, %cst_75 [1] : vector<16x32xf32> to vector<16xf32>
    %459 = vector.shape_cast %458 : vector<16xf32> to vector<16x1xf32>
    %cst_76 = arith.constant 3.200000e+01 : f32
    %460 = vector.broadcast %cst_76 : f32 to vector<16x1xf32>
    %461 = arith.divf %459, %460 : vector<16x1xf32>
    %462 = vector.broadcast %461 : vector<16x1xf32> to vector<16x32xf32>
    %463 = arith.subf %453, %462 : vector<16x32xf32>
    %464 = arith.mulf %463, %463 : vector<16x32xf32>
    %cst_77 = arith.constant dense<0.000000e+00> : vector<16xf32>
    %465 = vector.multi_reduction <add>, %464, %cst_77 [1] : vector<16x32xf32> to vector<16xf32>
    %466 = vector.shape_cast %465 : vector<16xf32> to vector<16x1xf32>
    %cst_78 = arith.constant 3.200000e+01 : f32
    %467 = vector.broadcast %cst_78 : f32 to vector<16x1xf32>
    %468 = arith.divf %466, %467 : vector<16x1xf32>
    %469 = vector.broadcast %461 : vector<16x1xf32> to vector<16x32xf32>
    %470 = arith.subf %453, %469 : vector<16x32xf32>
    %cst_79 = arith.constant 9.99999974E-6 : f32
    %471 = vector.broadcast %cst_79 : f32 to vector<16x1xf32>
    %472 = arith.addf %468, %471 : vector<16x1xf32>
    %473 = math.rsqrt %472 : vector<16x1xf32>
    %474 = vector.broadcast %473 : vector<16x1xf32> to vector<16x32xf32>
    %475 = arith.mulf %470, %474 : vector<16x32xf32>
    %476 = vector.shape_cast %455 : vector<32xf32> to vector<1x32xf32>
    %477 = vector.broadcast %476 : vector<1x32xf32> to vector<16x32xf32>
    %478 = arith.mulf %475, %477 : vector<16x32xf32>
    %479 = vector.shape_cast %457 : vector<32xf32> to vector<1x32xf32>
    %480 = vector.broadcast %479 : vector<1x32xf32> to vector<16x32xf32>
    %481 = arith.addf %478, %480 : vector<16x32xf32>
    %482 = arith.addf %481, %1 : vector<16x32xf32>
    %483 = tpu.concatenate %482, %2 in 0 : vector<16x32xf32>, vector<64x32xf32> -> vector<80x32xf32>
    %c1_80 = arith.constant 1 : index
    %c0_81 = arith.constant 0 : index
    %c0_82 = arith.constant 0 : index
    %484 = vector.load %arg6[%c1_80, %c0_81, %c0_82] : memref<2x32x96xf32, #tpu.memory_space<vmem>>, vector<1x32x96xf32>
    %485 = vector.shape_cast %484 : vector<1x32x96xf32> to vector<32x96xf32>
    %cst_83 = arith.constant dense<0.000000e+00> : vector<80x96xf32>
    %486 = tpu.matmul %483, %485, %cst_83 {dimension_numbers = #tpu.dot_dimension_numbers<[1], [0], [0], [1], [0, 0, 1, 1], [], []>} : vector<80x32xf32>, vector<32x96xf32>, vector<80x96xf32> -> vector<80x96xf32>
    %487 = vector.extract_strided_slice %486 {offsets = [0, 0], sizes = [16, 32], strides = [1, 1]} : vector<80x96xf32> to vector<16x32xf32>
    %488 = vector.extract_strided_slice %338 {offsets = [4, 0], sizes = [1, 32], strides = [1, 1]} : vector<15x32xf32> to vector<1x32xf32>
    %489 = vector.shape_cast %488 : vector<1x32xf32> to vector<32xf32>
    %490 = vector.shape_cast %489 : vector<32xf32> to vector<1x32xf32>
    %491 = vector.broadcast %490 : vector<1x32xf32> to vector<16x32xf32>
    %492 = arith.addf %487, %491 : vector<16x32xf32>
    %493 = vector.extract_strided_slice %486 {offsets = [16, 32], sizes = [32, 32], strides = [1, 1]} : vector<80x96xf32> to vector<32x32xf32>
    %494 = vector.extract_strided_slice %338 {offsets = [5, 0], sizes = [1, 32], strides = [1, 1]} : vector<15x32xf32> to vector<1x32xf32>
    %495 = vector.shape_cast %494 : vector<1x32xf32> to vector<32xf32>
    %496 = vector.shape_cast %495 : vector<32xf32> to vector<1x32xf32>
    %497 = vector.broadcast %496 : vector<1x32xf32> to vector<32x32xf32>
    %498 = arith.addf %493, %497 : vector<32x32xf32>
    %499 = vector.extract_strided_slice %486 {offsets = [48, 64], sizes = [32, 32], strides = [1, 1]} : vector<80x96xf32> to vector<32x32xf32>
    %500 = vector.extract_strided_slice %338 {offsets = [6, 0], sizes = [1, 32], strides = [1, 1]} : vector<15x32xf32> to vector<1x32xf32>
    %501 = vector.shape_cast %500 : vector<1x32xf32> to vector<32xf32>
    %502 = vector.shape_cast %501 : vector<32xf32> to vector<1x32xf32>
    %503 = vector.broadcast %502 : vector<1x32xf32> to vector<32x32xf32>
    %504 = arith.addf %499, %503 : vector<32x32xf32>
    %cst_84 = arith.constant 0.353553385 : f32
    %505 = vector.broadcast %cst_84 : f32 to vector<16x32xf32>
    %506 = arith.mulf %492, %505 : vector<16x32xf32>
    %507 = vector.extract_strided_slice %506 {offsets = [0, 0], sizes = [8, 8], strides = [1, 1]} : vector<16x32xf32> to vector<8x8xf32>
    %508 = vector.extract_strided_slice %506 {offsets = [0, 8], sizes = [8, 8], strides = [1, 1]} : vector<16x32xf32> to vector<8x8xf32>
    %509 = vector.extract_strided_slice %506 {offsets = [0, 16], sizes = [8, 8], strides = [1, 1]} : vector<16x32xf32> to vector<8x8xf32>
    %510 = vector.extract_strided_slice %506 {offsets = [0, 24], sizes = [8, 8], strides = [1, 1]} : vector<16x32xf32> to vector<8x8xf32>
    %511 = vector.extract_strided_slice %506 {offsets = [8, 0], sizes = [8, 8], strides = [1, 1]} : vector<16x32xf32> to vector<8x8xf32>
    %512 = vector.extract_strided_slice %506 {offsets = [8, 8], sizes = [8, 8], strides = [1, 1]} : vector<16x32xf32> to vector<8x8xf32>
    %513 = vector.extract_strided_slice %506 {offsets = [8, 16], sizes = [8, 8], strides = [1, 1]} : vector<16x32xf32> to vector<8x8xf32>
    %514 = vector.extract_strided_slice %506 {offsets = [8, 24], sizes = [8, 8], strides = [1, 1]} : vector<16x32xf32> to vector<8x8xf32>
    %515 = vector.shape_cast %507 : vector<8x8xf32> to vector<1x8x8xf32>
    %516 = vector.shape_cast %508 : vector<8x8xf32> to vector<1x8x8xf32>
    %517 = vector.shape_cast %509 : vector<8x8xf32> to vector<1x8x8xf32>
    %518 = vector.shape_cast %510 : vector<8x8xf32> to vector<1x8x8xf32>
    %519 = vector.shape_cast %511 : vector<8x8xf32> to vector<1x8x8xf32>
    %520 = vector.shape_cast %512 : vector<8x8xf32> to vector<1x8x8xf32>
    %521 = vector.shape_cast %513 : vector<8x8xf32> to vector<1x8x8xf32>
    %522 = vector.shape_cast %514 : vector<8x8xf32> to vector<1x8x8xf32>
    %523 = tpu.concatenate %515, %516, %517, %518, %519, %520, %521, %522 in 0 : vector<1x8x8xf32>, vector<1x8x8xf32>, vector<1x8x8xf32>, vector<1x8x8xf32>, vector<1x8x8xf32>, vector<1x8x8xf32>, vector<1x8x8xf32>, vector<1x8x8xf32> -> vector<8x8x8xf32>
    %524 = vector.extract_strided_slice %498 {offsets = [0, 0], sizes = [16, 8], strides = [1, 1]} : vector<32x32xf32> to vector<16x8xf32>
    %525 = vector.extract_strided_slice %498 {offsets = [0, 8], sizes = [16, 8], strides = [1, 1]} : vector<32x32xf32> to vector<16x8xf32>
    %526 = vector.extract_strided_slice %498 {offsets = [0, 16], sizes = [16, 8], strides = [1, 1]} : vector<32x32xf32> to vector<16x8xf32>
    %527 = vector.extract_strided_slice %498 {offsets = [0, 24], sizes = [16, 8], strides = [1, 1]} : vector<32x32xf32> to vector<16x8xf32>
    %528 = vector.extract_strided_slice %498 {offsets = [16, 0], sizes = [16, 8], strides = [1, 1]} : vector<32x32xf32> to vector<16x8xf32>
    %529 = vector.extract_strided_slice %498 {offsets = [16, 8], sizes = [16, 8], strides = [1, 1]} : vector<32x32xf32> to vector<16x8xf32>
    %530 = vector.extract_strided_slice %498 {offsets = [16, 16], sizes = [16, 8], strides = [1, 1]} : vector<32x32xf32> to vector<16x8xf32>
    %531 = vector.extract_strided_slice %498 {offsets = [16, 24], sizes = [16, 8], strides = [1, 1]} : vector<32x32xf32> to vector<16x8xf32>
    %532 = vector.shape_cast %524 : vector<16x8xf32> to vector<1x16x8xf32>
    %533 = vector.shape_cast %525 : vector<16x8xf32> to vector<1x16x8xf32>
    %534 = vector.shape_cast %526 : vector<16x8xf32> to vector<1x16x8xf32>
    %535 = vector.shape_cast %527 : vector<16x8xf32> to vector<1x16x8xf32>
    %536 = vector.shape_cast %528 : vector<16x8xf32> to vector<1x16x8xf32>
    %537 = vector.shape_cast %529 : vector<16x8xf32> to vector<1x16x8xf32>
    %538 = vector.shape_cast %530 : vector<16x8xf32> to vector<1x16x8xf32>
    %539 = vector.shape_cast %531 : vector<16x8xf32> to vector<1x16x8xf32>
    %540 = tpu.concatenate %532, %533, %534, %535, %536, %537, %538, %539 in 0 : vector<1x16x8xf32>, vector<1x16x8xf32>, vector<1x16x8xf32>, vector<1x16x8xf32>, vector<1x16x8xf32>, vector<1x16x8xf32>, vector<1x16x8xf32>, vector<1x16x8xf32> -> vector<8x16x8xf32>
    %541 = vector.extract_strided_slice %504 {offsets = [0, 0], sizes = [16, 8], strides = [1, 1]} : vector<32x32xf32> to vector<16x8xf32>
    %542 = vector.extract_strided_slice %504 {offsets = [0, 8], sizes = [16, 8], strides = [1, 1]} : vector<32x32xf32> to vector<16x8xf32>
    %543 = vector.extract_strided_slice %504 {offsets = [0, 16], sizes = [16, 8], strides = [1, 1]} : vector<32x32xf32> to vector<16x8xf32>
    %544 = vector.extract_strided_slice %504 {offsets = [0, 24], sizes = [16, 8], strides = [1, 1]} : vector<32x32xf32> to vector<16x8xf32>
    %545 = vector.extract_strided_slice %504 {offsets = [16, 0], sizes = [16, 8], strides = [1, 1]} : vector<32x32xf32> to vector<16x8xf32>
    %546 = vector.extract_strided_slice %504 {offsets = [16, 8], sizes = [16, 8], strides = [1, 1]} : vector<32x32xf32> to vector<16x8xf32>
    %547 = vector.extract_strided_slice %504 {offsets = [16, 16], sizes = [16, 8], strides = [1, 1]} : vector<32x32xf32> to vector<16x8xf32>
    %548 = vector.extract_strided_slice %504 {offsets = [16, 24], sizes = [16, 8], strides = [1, 1]} : vector<32x32xf32> to vector<16x8xf32>
    %549 = vector.shape_cast %541 : vector<16x8xf32> to vector<1x16x8xf32>
    %550 = vector.shape_cast %542 : vector<16x8xf32> to vector<1x16x8xf32>
    %551 = vector.shape_cast %543 : vector<16x8xf32> to vector<1x16x8xf32>
    %552 = vector.shape_cast %544 : vector<16x8xf32> to vector<1x16x8xf32>
    %553 = vector.shape_cast %545 : vector<16x8xf32> to vector<1x16x8xf32>
    %554 = vector.shape_cast %546 : vector<16x8xf32> to vector<1x16x8xf32>
    %555 = vector.shape_cast %547 : vector<16x8xf32> to vector<1x16x8xf32>
    %556 = vector.shape_cast %548 : vector<16x8xf32> to vector<1x16x8xf32>
    %557 = tpu.concatenate %549, %550, %551, %552, %553, %554, %555, %556 in 0 : vector<1x16x8xf32>, vector<1x16x8xf32>, vector<1x16x8xf32>, vector<1x16x8xf32>, vector<1x16x8xf32>, vector<1x16x8xf32>, vector<1x16x8xf32>, vector<1x16x8xf32> -> vector<8x16x8xf32>
    %cst_85 = arith.constant dense<0.000000e+00> : vector<8x8x16xf32>
    %558 = tpu.matmul %523, %540, %cst_85 {dimension_numbers = #tpu.dot_dimension_numbers<[2], [2], [1], [1], [0, 0, 0, 1, 1, 1], [0], [0]>} : vector<8x8x8xf32>, vector<8x16x8xf32>, vector<8x8x16xf32> -> vector<8x8x16xf32>
    %cst_86 = arith.constant dense<0xFF800000> : vector<8x8xf32>
    %559 = vector.multi_reduction <maximumf>, %558, %cst_86 [2] : vector<8x8x16xf32> to vector<8x8xf32>
    %560 = vector.shape_cast %559 : vector<8x8xf32> to vector<8x8x1xf32>
    %561 = vector.broadcast %560 : vector<8x8x1xf32> to vector<8x8x16xf32>
    %562 = arith.subf %558, %561 : vector<8x8x16xf32>
    %563 = math.exp %562 : vector<8x8x16xf32>
    %cst_87 = arith.constant dense<0.000000e+00> : vector<8x8xf32>
    %564 = vector.multi_reduction <add>, %563, %cst_87 [2] : vector<8x8x16xf32> to vector<8x8xf32>
    %565 = vector.shape_cast %564 : vector<8x8xf32> to vector<8x8x1xf32>
    %566 = vector.broadcast %565 : vector<8x8x1xf32> to vector<8x8x16xf32>
    %567 = arith.divf %563, %566 : vector<8x8x16xf32>
    %cst_88 = arith.constant dense<0.000000e+00> : vector<8x8x8xf32>
    %568 = tpu.matmul %567, %557, %cst_88 {dimension_numbers = #tpu.dot_dimension_numbers<[2], [1], [1], [2], [0, 0, 0, 1, 1, 2], [0], [0]>} : vector<8x8x16xf32>, vector<8x16x8xf32>, vector<8x8x8xf32> -> vector<8x8x8xf32>
    %569 = vector.extract_strided_slice %568 {offsets = [0, 0, 0], sizes = [1, 8, 8], strides = [1, 1, 1]} : vector<8x8x8xf32> to vector<1x8x8xf32>
    %570 = vector.shape_cast %569 : vector<1x8x8xf32> to vector<8x8xf32>
    %571 = vector.extract_strided_slice %568 {offsets = [1, 0, 0], sizes = [1, 8, 8], strides = [1, 1, 1]} : vector<8x8x8xf32> to vector<1x8x8xf32>
    %572 = vector.shape_cast %571 : vector<1x8x8xf32> to vector<8x8xf32>
    %573 = vector.extract_strided_slice %568 {offsets = [2, 0, 0], sizes = [1, 8, 8], strides = [1, 1, 1]} : vector<8x8x8xf32> to vector<1x8x8xf32>
    %574 = vector.shape_cast %573 : vector<1x8x8xf32> to vector<8x8xf32>
    %575 = vector.extract_strided_slice %568 {offsets = [3, 0, 0], sizes = [1, 8, 8], strides = [1, 1, 1]} : vector<8x8x8xf32> to vector<1x8x8xf32>
    %576 = vector.shape_cast %575 : vector<1x8x8xf32> to vector<8x8xf32>
    %577 = tpu.concatenate %570, %572, %574, %576 in 1 : vector<8x8xf32>, vector<8x8xf32>, vector<8x8xf32>, vector<8x8xf32> -> vector<8x32xf32>
    %578 = vector.extract_strided_slice %568 {offsets = [4, 0, 0], sizes = [1, 8, 8], strides = [1, 1, 1]} : vector<8x8x8xf32> to vector<1x8x8xf32>
    %579 = vector.shape_cast %578 : vector<1x8x8xf32> to vector<8x8xf32>
    %580 = vector.extract_strided_slice %568 {offsets = [5, 0, 0], sizes = [1, 8, 8], strides = [1, 1, 1]} : vector<8x8x8xf32> to vector<1x8x8xf32>
    %581 = vector.shape_cast %580 : vector<1x8x8xf32> to vector<8x8xf32>
    %582 = vector.extract_strided_slice %568 {offsets = [6, 0, 0], sizes = [1, 8, 8], strides = [1, 1, 1]} : vector<8x8x8xf32> to vector<1x8x8xf32>
    %583 = vector.shape_cast %582 : vector<1x8x8xf32> to vector<8x8xf32>
    %584 = vector.extract_strided_slice %568 {offsets = [7, 0, 0], sizes = [1, 8, 8], strides = [1, 1, 1]} : vector<8x8x8xf32> to vector<1x8x8xf32>
    %585 = vector.shape_cast %584 : vector<1x8x8xf32> to vector<8x8xf32>
    %586 = tpu.concatenate %579, %581, %583, %585 in 1 : vector<8x8xf32>, vector<8x8xf32>, vector<8x8xf32>, vector<8x8xf32> -> vector<8x32xf32>
    %587 = tpu.concatenate %577, %586 in 0 : vector<8x32xf32>, vector<8x32xf32> -> vector<16x32xf32>
    %c1_89 = arith.constant 1 : index
    %c0_90 = arith.constant 0 : index
    %c0_91 = arith.constant 0 : index
    %588 = vector.load %arg7[%c1_89, %c0_90, %c0_91] : memref<2x32x32xf32, #tpu.memory_space<vmem>>, vector<1x32x32xf32>
    %589 = vector.shape_cast %588 : vector<1x32x32xf32> to vector<32x32xf32>
    %cst_92 = arith.constant dense<0.000000e+00> : vector<16x32xf32>
    %590 = tpu.matmul %587, %589, %cst_92 {dimension_numbers = #tpu.dot_dimension_numbers<[1], [0], [0], [1], [0, 0, 1, 1], [], []>} : vector<16x32xf32>, vector<32x32xf32>, vector<16x32xf32> -> vector<16x32xf32>
    %591 = vector.extract_strided_slice %338 {offsets = [7, 0], sizes = [1, 32], strides = [1, 1]} : vector<15x32xf32> to vector<1x32xf32>
    %592 = vector.shape_cast %591 : vector<1x32xf32> to vector<32xf32>
    %593 = vector.shape_cast %592 : vector<32xf32> to vector<1x32xf32>
    %594 = vector.broadcast %593 : vector<1x32xf32> to vector<16x32xf32>
    %595 = arith.addf %590, %594 : vector<16x32xf32>
    %596 = arith.addf %481, %595 : vector<16x32xf32>
    %597 = vector.extract_strided_slice %338 {offsets = [11, 0], sizes = [1, 32], strides = [1, 1]} : vector<15x32xf32> to vector<1x32xf32>
    %598 = vector.shape_cast %597 : vector<1x32xf32> to vector<32xf32>
    %599 = vector.extract_strided_slice %338 {offsets = [12, 0], sizes = [1, 32], strides = [1, 1]} : vector<15x32xf32> to vector<1x32xf32>
    %600 = vector.shape_cast %599 : vector<1x32xf32> to vector<32xf32>
    %cst_93 = arith.constant dense<0.000000e+00> : vector<16xf32>
    %601 = vector.multi_reduction <add>, %596, %cst_93 [1] : vector<16x32xf32> to vector<16xf32>
    %602 = vector.shape_cast %601 : vector<16xf32> to vector<16x1xf32>
    %cst_94 = arith.constant 3.200000e+01 : f32
    %603 = vector.broadcast %cst_94 : f32 to vector<16x1xf32>
    %604 = arith.divf %602, %603 : vector<16x1xf32>
    %605 = vector.broadcast %604 : vector<16x1xf32> to vector<16x32xf32>
    %606 = arith.subf %596, %605 : vector<16x32xf32>
    %607 = arith.mulf %606, %606 : vector<16x32xf32>
    %cst_95 = arith.constant dense<0.000000e+00> : vector<16xf32>
    %608 = vector.multi_reduction <add>, %607, %cst_95 [1] : vector<16x32xf32> to vector<16xf32>
    %609 = vector.shape_cast %608 : vector<16xf32> to vector<16x1xf32>
    %cst_96 = arith.constant 3.200000e+01 : f32
    %610 = vector.broadcast %cst_96 : f32 to vector<16x1xf32>
    %611 = arith.divf %609, %610 : vector<16x1xf32>
    %612 = vector.broadcast %604 : vector<16x1xf32> to vector<16x32xf32>
    %613 = arith.subf %596, %612 : vector<16x32xf32>
    %cst_97 = arith.constant 9.99999974E-6 : f32
    %614 = vector.broadcast %cst_97 : f32 to vector<16x1xf32>
    %615 = arith.addf %611, %614 : vector<16x1xf32>
    %616 = math.rsqrt %615 : vector<16x1xf32>
    %617 = vector.broadcast %616 : vector<16x1xf32> to vector<16x32xf32>
    %618 = arith.mulf %613, %617 : vector<16x32xf32>
    %619 = vector.shape_cast %598 : vector<32xf32> to vector<1x32xf32>
    %620 = vector.broadcast %619 : vector<1x32xf32> to vector<16x32xf32>
    %621 = arith.mulf %618, %620 : vector<16x32xf32>
    %622 = vector.shape_cast %600 : vector<32xf32> to vector<1x32xf32>
    %623 = vector.broadcast %622 : vector<1x32xf32> to vector<16x32xf32>
    %624 = arith.addf %621, %623 : vector<16x32xf32>
    %c1_98 = arith.constant 1 : index
    %c0_99 = arith.constant 0 : index
    %c0_100 = arith.constant 0 : index
    %625 = vector.load %arg8[%c1_98, %c0_99, %c0_100] : memref<2x32x64xf32, #tpu.memory_space<vmem>>, vector<1x32x64xf32>
    %626 = vector.shape_cast %625 : vector<1x32x64xf32> to vector<32x64xf32>
    %cst_101 = arith.constant dense<0.000000e+00> : vector<16x64xf32>
    %627 = tpu.matmul %624, %626, %cst_101 {dimension_numbers = #tpu.dot_dimension_numbers<[1], [0], [0], [1], [0, 0, 1, 1], [], []>} : vector<16x32xf32>, vector<32x64xf32>, vector<16x64xf32> -> vector<16x64xf32>
    %c1_102 = arith.constant 1 : index
    %c0_103 = arith.constant 0 : index
    %c0_104 = arith.constant 0 : index
    %628 = vector.load %arg10[%c1_102, %c0_103, %c0_104] : memref<2x1x64xf32, #tpu.memory_space<vmem>>, vector<1x1x64xf32>
    %629 = vector.shape_cast %628 : vector<1x1x64xf32> to vector<1x64xf32>
    %630 = vector.broadcast %629 : vector<1x64xf32> to vector<16x64xf32>
    %631 = arith.addf %627, %630 : vector<16x64xf32>
    %cst_105 = arith.constant 0.000000e+00 : f32
    %632 = vector.broadcast %cst_105 : f32 to vector<16x64xf32>
    %633 = arith.maximumf %631, %632 : vector<16x64xf32>
    %c1_106 = arith.constant 1 : index
    %c0_107 = arith.constant 0 : index
    %c0_108 = arith.constant 0 : index
    %634 = vector.load %arg9[%c1_106, %c0_107, %c0_108] : memref<2x64x32xf32, #tpu.memory_space<vmem>>, vector<1x64x32xf32>
    %635 = vector.shape_cast %634 : vector<1x64x32xf32> to vector<64x32xf32>
    %cst_109 = arith.constant dense<0.000000e+00> : vector<16x32xf32>
    %636 = tpu.matmul %633, %635, %cst_109 {dimension_numbers = #tpu.dot_dimension_numbers<[1], [0], [0], [1], [0, 0, 1, 1], [], []>} : vector<16x64xf32>, vector<64x32xf32>, vector<16x32xf32> -> vector<16x32xf32>
    %637 = vector.extract_strided_slice %338 {offsets = [8, 0], sizes = [1, 32], strides = [1, 1]} : vector<15x32xf32> to vector<1x32xf32>
    %638 = vector.shape_cast %637 : vector<1x32xf32> to vector<32xf32>
    %639 = vector.shape_cast %638 : vector<32xf32> to vector<1x32xf32>
    %640 = vector.broadcast %639 : vector<1x32xf32> to vector<16x32xf32>
    %641 = arith.addf %636, %640 : vector<16x32xf32>
    %642 = arith.addf %624, %641 : vector<16x32xf32>
    %643 = vector.extract_strided_slice %338 {offsets = [13, 0], sizes = [1, 32], strides = [1, 1]} : vector<15x32xf32> to vector<1x32xf32>
    %644 = vector.shape_cast %643 : vector<1x32xf32> to vector<32xf32>
    %645 = vector.extract_strided_slice %338 {offsets = [14, 0], sizes = [1, 32], strides = [1, 1]} : vector<15x32xf32> to vector<1x32xf32>
    %646 = vector.shape_cast %645 : vector<1x32xf32> to vector<32xf32>
    %cst_110 = arith.constant dense<0.000000e+00> : vector<16xf32>
    %647 = vector.multi_reduction <add>, %642, %cst_110 [1] : vector<16x32xf32> to vector<16xf32>
    %648 = vector.shape_cast %647 : vector<16xf32> to vector<16x1xf32>
    %cst_111 = arith.constant 3.200000e+01 : f32
    %649 = vector.broadcast %cst_111 : f32 to vector<16x1xf32>
    %650 = arith.divf %648, %649 : vector<16x1xf32>
    %651 = vector.broadcast %650 : vector<16x1xf32> to vector<16x32xf32>
    %652 = arith.subf %642, %651 : vector<16x32xf32>
    %653 = arith.mulf %652, %652 : vector<16x32xf32>
    %cst_112 = arith.constant dense<0.000000e+00> : vector<16xf32>
    %654 = vector.multi_reduction <add>, %653, %cst_112 [1] : vector<16x32xf32> to vector<16xf32>
    %655 = vector.shape_cast %654 : vector<16xf32> to vector<16x1xf32>
    %cst_113 = arith.constant 3.200000e+01 : f32
    %656 = vector.broadcast %cst_113 : f32 to vector<16x1xf32>
    %657 = arith.divf %655, %656 : vector<16x1xf32>
    %658 = vector.broadcast %650 : vector<16x1xf32> to vector<16x32xf32>
    %659 = arith.subf %642, %658 : vector<16x32xf32>
    %cst_114 = arith.constant 9.99999974E-6 : f32
    %660 = vector.broadcast %cst_114 : f32 to vector<16x1xf32>
    %661 = arith.addf %657, %660 : vector<16x1xf32>
    %662 = math.rsqrt %661 : vector<16x1xf32>
    %663 = vector.broadcast %662 : vector<16x1xf32> to vector<16x32xf32>
    %664 = arith.mulf %659, %663 : vector<16x32xf32>
    %665 = vector.shape_cast %644 : vector<32xf32> to vector<1x32xf32>
    %666 = vector.broadcast %665 : vector<1x32xf32> to vector<16x32xf32>
    %667 = arith.mulf %664, %666 : vector<16x32xf32>
    %668 = vector.shape_cast %646 : vector<32xf32> to vector<1x32xf32>
    %669 = vector.broadcast %668 : vector<1x32xf32> to vector<16x32xf32>
    %670 = arith.addf %667, %669 : vector<16x32xf32>
    %c0_115 = arith.constant 0 : index
    %c0_116 = arith.constant 0 : index
    %671 = vector.load %arg14[%c0_115, %c0_116] : memref<16x32xf32, #tpu.memory_space<vmem>>, vector<16x32xf32>
    tpu.vector_store %arg14[%c0_115, %c0_116], %670 {strides = array<i32>} : memref<16x32xf32, #tpu.memory_space<vmem>>, vector<16x32xf32>,
    %c0_117 = arith.constant 0 : index
    %c0_118 = arith.constant 0 : index
    %672 = vector.load %arg12[%c0_117, %c0_118] : memref<2x32xf32, #tpu.memory_space<vmem>>, vector<1x32xf32>
    %673 = vector.shape_cast %672 : vector<1x32xf32> to vector<32xf32>
    %c1_119 = arith.constant 1 : index
    %c0_120 = arith.constant 0 : index
    %674 = vector.load %arg12[%c1_119, %c0_120] : memref<2x32xf32, #tpu.memory_space<vmem>>, vector<1x32xf32>
    %675 = vector.shape_cast %674 : vector<1x32xf32> to vector<32xf32>
    %cst_121 = arith.constant dense<0.000000e+00> : vector<16xf32>
    %676 = vector.multi_reduction <add>, %670, %cst_121 [1] : vector<16x32xf32> to vector<16xf32>
    %677 = vector.shape_cast %676 : vector<16xf32> to vector<16x1xf32>
    %cst_122 = arith.constant 3.200000e+01 : f32
    %678 = vector.broadcast %cst_122 : f32 to vector<16x1xf32>
    %679 = arith.divf %677, %678 : vector<16x1xf32>
    %680 = vector.broadcast %679 : vector<16x1xf32> to vector<16x32xf32>
    %681 = arith.subf %670, %680 : vector<16x32xf32>
    %682 = arith.mulf %681, %681 : vector<16x32xf32>
    %cst_123 = arith.constant dense<0.000000e+00> : vector<16xf32>
    %683 = vector.multi_reduction <add>, %682, %cst_123 [1] : vector<16x32xf32> to vector<16xf32>
    %684 = vector.shape_cast %683 : vector<16xf32> to vector<16x1xf32>
    %cst_124 = arith.constant 3.200000e+01 : f32
    %685 = vector.broadcast %cst_124 : f32 to vector<16x1xf32>
    %686 = arith.divf %684, %685 : vector<16x1xf32>
    %687 = vector.broadcast %679 : vector<16x1xf32> to vector<16x32xf32>
    %688 = arith.subf %670, %687 : vector<16x32xf32>
    %cst_125 = arith.constant 9.99999974E-6 : f32
    %689 = vector.broadcast %cst_125 : f32 to vector<16x1xf32>
    %690 = arith.addf %686, %689 : vector<16x1xf32>
    %691 = math.rsqrt %690 : vector<16x1xf32>
    %692 = vector.broadcast %691 : vector<16x1xf32> to vector<16x32xf32>
    %693 = arith.mulf %688, %692 : vector<16x32xf32>
    %694 = vector.shape_cast %673 : vector<32xf32> to vector<1x32xf32>
    %695 = vector.broadcast %694 : vector<1x32xf32> to vector<16x32xf32>
    %696 = arith.mulf %693, %695 : vector<16x32xf32>
    %697 = vector.shape_cast %675 : vector<32xf32> to vector<1x32xf32>
    %698 = vector.broadcast %697 : vector<1x32xf32> to vector<16x32xf32>
    %699 = arith.addf %696, %698 : vector<16x32xf32>
    %c0_126 = arith.constant 0 : index
    %c0_127 = arith.constant 0 : index
    %700 = vector.load %arg13[%c0_126, %c0_127] : memref<16x32xf32, #tpu.memory_space<vmem>>, vector<16x32xf32>
    tpu.vector_store %arg13[%c0_126, %c0_127], %699 {strides = array<i32>} : memref<16x32xf32, #tpu.memory_space<vmem>>, vector<16x32xf32>,
    return
  }
  func.func @transform_0(%arg0: i32) -> (i32, i32) {
    %c0_i32 = arith.constant 0 : i32
    %c0_i32_0 = arith.constant 0 : i32
    %c0_i32_1 = arith.constant 0 : i32
    return %c0_i32, %c0_i32_0 : i32, i32
  }
  func.func @transform_1(%arg0: i32) -> (i32, i32) {
    %c0_i32 = arith.constant 0 : i32
    %c0_i32_0 = arith.constant 0 : i32
    %c0_i32_1 = arith.constant 0 : i32
    return %c0_i32, %c0_i32_0 : i32, i32
  }
  func.func @transform_2(%arg0: i32) -> (i32, i32) {
    %c0_i32 = arith.constant 0 : i32
    %c0_i32_0 = arith.constant 0 : i32
    %c0_i32_1 = arith.constant 0 : i32
    return %c0_i32, %c0_i32_0 : i32, i32
  }
  func.func @transform_3(%arg0: i32) -> (i32, i32, i32) {
    %c0_i32 = arith.constant 0 : i32
    %c0_i32_0 = arith.constant 0 : i32
    %c0_i32_1 = arith.constant 0 : i32
    %c0_i32_2 = arith.constant 0 : i32
    return %c0_i32, %c0_i32_0, %c0_i32_1 : i32, i32, i32
  }
  func.func @transform_4(%arg0: i32) -> (i32, i32, i32) {
    %c0_i32 = arith.constant 0 : i32
    %c0_i32_0 = arith.constant 0 : i32
    %c0_i32_1 = arith.constant 0 : i32
    %c0_i32_2 = arith.constant 0 : i32
    return %c0_i32, %c0_i32_0, %c0_i32_1 : i32, i32, i32
  }
  func.func @transform_5(%arg0: i32) -> (i32, i32, i32) {
    %c0_i32 = arith.constant 0 : i32
    %c0_i32_0 = arith.constant 0 : i32
    %c0_i32_1 = arith.constant 0 : i32
    %c0_i32_2 = arith.constant 0 : i32
    return %c0_i32, %c0_i32_0, %c0_i32_1 : i32, i32, i32
  }
  func.func @transform_6(%arg0: i32) -> (i32, i32, i32) {
    %c0_i32 = arith.constant 0 : i32
    %c0_i32_0 = arith.constant 0 : i32
    %c0_i32_1 = arith.constant 0 : i32
    %c0_i32_2 = arith.constant 0 : i32
    return %c0_i32, %c0_i32_0, %c0_i32_1 : i32, i32, i32
  }
  func.func @transform_7(%arg0: i32) -> (i32, i32, i32) {
    %c0_i32 = arith.constant 0 : i32
    %c0_i32_0 = arith.constant 0 : i32
    %c0_i32_1 = arith.constant 0 : i32
    %c0_i32_2 = arith.constant 0 : i32
    return %c0_i32, %c0_i32_0, %c0_i32_1 : i32, i32, i32
  }
  func.func @transform_8(%arg0: i32) -> (i32, i32, i32) {
    %c0_i32 = arith.constant 0 : i32
    %c0_i32_0 = arith.constant 0 : i32
    %c0_i32_1 = arith.constant 0 : i32
    %c0_i32_2 = arith.constant 0 : i32
    return %c0_i32, %c0_i32_0, %c0_i32_1 : i32, i32, i32
  }
  func.func @transform_9(%arg0: i32) -> (i32, i32, i32) {
    %c0_i32 = arith.constant 0 : i32
    %c0_i32_0 = arith.constant 0 : i32
    %c0_i32_1 = arith.constant 0 : i32
    %c0_i32_2 = arith.constant 0 : i32
    return %c0_i32, %c0_i32_0, %c0_i32_1 : i32, i32, i32
  }
  func.func @transform_10(%arg0: i32) -> (i32, i32, i32) {
    %c0_i32 = arith.constant 0 : i32
    %c0_i32_0 = arith.constant 0 : i32
    %c0_i32_1 = arith.constant 0 : i32
    %c0_i32_2 = arith.constant 0 : i32
    return %c0_i32, %c0_i32_0, %c0_i32_1 : i32, i32, i32
  }
  func.func @transform_11(%arg0: i32) -> (i32, i32) {
    %c0_i32 = arith.constant 0 : i32
    %c0_i32_0 = arith.constant 0 : i32
    %c0_i32_1 = arith.constant 0 : i32
    return %c0_i32, %c0_i32_0 : i32, i32
  }
  func.func @transform_12(%arg0: i32) -> (i32, i32) {
    %c0_i32 = arith.constant 0 : i32
    %c0_i32_0 = arith.constant 0 : i32
    %c0_i32_1 = arith.constant 0 : i32
    return %c0_i32, %c0_i32_0 : i32, i32
  }
  func.func @transform_13(%arg0: i32) -> (i32, i32) {
    %c0_i32 = arith.constant 0 : i32
    %c0_i32_0 = arith.constant 0 : i32
    %c0_i32_1 = arith.constant 0 : i32
    return %c0_i32, %c0_i32_0 : i32, i32
  }
}

</mosaic_0001>

<llo_original>
// kernel: tpu_custom_call.1
$region0: #{tpu_custom_call.1}
  #allocation0 [shape = 'u32[]', space=smem, size = 0x4, offset = 0x4, fixed_abs, tag = 'smem constant byte address 0x4 - core index']
  #allocation1 [shape = 'u32[144,128]{1,0:T(1,128)}', space=vmem, size = 0x12000, scoped, tag = 'internal scratch']
  %s0 = inlined_call_operand.hbm [shape: f32[16,32], index: 0, kind: input, shape index: {}]
  %s1 = inlined_call_operand.hbm [shape: f32[16,32], index: 1, kind: input, shape index: {}]
  %s2 = inlined_call_operand.vmem [shape: f32[64,32], index: 2, kind: input, shape index: {}]
  %s3 = inlined_call_operand.vmem [shape: f32[2,32,96], index: 3, kind: input, shape index: {}]
  %s4 = inlined_call_operand.vmem [shape: f32[2,32,32], index: 4, kind: input, shape index: {}]
  %s5 = inlined_call_operand.vmem [shape: f32[2,32,96], index: 5, kind: input, shape index: {}]
  %s6 = inlined_call_operand.vmem [shape: f32[2,32,32], index: 6, kind: input, shape index: {}]
  %s7 = inlined_call_operand.hbm [shape: f32[2,32,64], index: 7, kind: input, shape index: {}]
  %s8 = inlined_call_operand.vmem [shape: f32[2,64,32], index: 8, kind: input, shape index: {}]
  %s9 = inlined_call_operand.vmem [shape: f32[2,1,64], index: 9, kind: input, shape index: {}]
  %s10 = inlined_call_operand.vmem [shape: f32[2,15,32], index: 10, kind: input, shape index: {}]
  %s11 = inlined_call_operand.vmem [shape: f32[2,32], index: 11, kind: input, shape index: {}]
  %s12 = inlined_call_operand.hbm [shape: f32[16,32], index: 12, kind: output, shape index: {0}]
  %s13 = inlined_call_operand.hbm [shape: f32[16,32], index: 13, kind: output, shape index: {1}]
  %14 = xla_tuple %s12, %s13
  %s15 = sld [smem:[#allocation0]]
  $region78: #{tpu_custom_call.1} parent=0
    _
  %s17 = ssub.s32 1, %s15
  %s18 = scalar_select 0, %s17, %s15
  $region1: #{tpu_custom_call.1} parent=0
    #allocation2 [shape = 'u8[8192]{0}', space=vmem, size = 0x2000, scoped, tag = 'input window, operand 0, single buffered']
    #allocation3 [shape = 's32[1]{0}', space=sflag, size = 0x4, scoped, tag = 'scoped memory for tpu_custom_call.1']
    #allocation4 [shape = 's32[1]{0}', space=sflag, size = 0x4, scoped, tag = 'scoped memory for tpu_custom_call.1']
    #allocation5 [shape = 'u8[8192]{0}', space=vmem, size = 0x2000, scoped, tag = 'input window, operand 1, single buffered']
    #allocation6 [shape = 's32[1]{0}', space=sflag, size = 0x4, scoped, tag = 'scoped memory for tpu_custom_call.1']
    #allocation7 [shape = 'u8[32768]{0}', space=vmem, size = 0x8000, scoped, tag = 'input window, operand 7, single buffered']
    #allocation8 [shape = 'u8[8192]{0}', space=vmem, size = 0x2000, scoped, tag = 'output window, operand 0, single buffered']
    #allocation9 [shape = 'u8[8192]{0}', space=vmem, size = 0x2000, scoped, tag = 'output window, operand 1, single buffered']
    #allocation10 [shape = 's32[1]{0}', space=sflag, size = 0x4, scoped, tag = 'scoped memory for tpu_custom_call.1']
    %19 = vsyncpa [#allocation3], 0
    %20 = vsyncpa [#allocation6], 0
    %21 = vsyncpa [#allocation4], 0
    %22 = vsyncpa [#allocation10], 0
    // Predicated region
    $region2: #{tpu_custom_call.1} parent=1 // pred_check
      _
    $region3: #{tpu_custom_call.1} parent=1 // pred_check_branch
      %24 = sbr.rel (0) target = $region5
    $region4: #{tpu_custom_call.1} parent=1 // pred_region
      %s26 = ssub.s32 256, 256
      %27 = vsyncadd [#allocation3], %s26
      %s28 = sshll.u32 [#allocation2], 4
      %s29 = int_to_ptr.vmem [resolvable:$true] %s28
      %34 = dma.hbm_to_vmem [thread:$0]  %s0, 256, %s29, [#allocation3], 128, 128, 8
    $region5: #{tpu_custom_call.1} parent=1 // pred_fallthru
      _
    // Predicated region
    $region6: #{tpu_custom_call.1} parent=1 // pred_check
      _
    $region7: #{tpu_custom_call.1} parent=1 // pred_check_branch
      %36 = sbr.rel (0) target = $region9
    $region8: #{tpu_custom_call.1} parent=1 // pred_region
      %s38 = ssub.s32 256, 256
      %39 = vsyncadd [#allocation6], %s38
      %s40 = sshll.u32 [#allocation5], 4
      %s41 = int_to_ptr.vmem [resolvable:$true] %s40
      %46 = dma.hbm_to_vmem [thread:$0]  %s1, 256, %s41, [#allocation6], 128, 128, 8
    $region9: #{tpu_custom_call.1} parent=1 // pred_fallthru
      _
    // Predicated region
    $region10: #{tpu_custom_call.1} parent=1 // pred_check
      _
    $region11: #{tpu_custom_call.1} parent=1 // pred_check_branch
      %48 = sbr.rel (0) target = $region13
    $region12: #{tpu_custom_call.1} parent=1 // pred_region
      _
    $region13: #{tpu_custom_call.1} parent=1 // pred_fallthru
      _
    // Predicated region
    $region14: #{tpu_custom_call.1} parent=1 // pred_check
      _
    $region15: #{tpu_custom_call.1} parent=1 // pred_check_branch
      %50 = sbr.rel (0) target = $region17
    $region16: #{tpu_custom_call.1} parent=1 // pred_region
      _
    $region17: #{tpu_custom_call.1} parent=1 // pred_fallthru
      _
    // Predicated region
    $region18: #{tpu_custom_call.1} parent=1 // pred_check
      _
    $region19: #{tpu_custom_call.1} parent=1 // pred_check_branch
      %52 = sbr.rel (0) target = $region21
    $region20: #{tpu_custom_call.1} parent=1 // pred_region
      _
    $region21: #{tpu_custom_call.1} parent=1 // pred_fallthru
      _
    // Predicated region
    $region22: #{tpu_custom_call.1} parent=1 // pred_check
      _
    $region23: #{tpu_custom_call.1} parent=1 // pred_check_branch
      %54 = sbr.rel (0) target = $region25
    $region24: #{tpu_custom_call.1} parent=1 // pred_region
      _
    $region25: #{tpu_custom_call.1} parent=1 // pred_fallthru
      _
    // Predicated region
    $region26: #{tpu_custom_call.1} parent=1 // pred_check
      _
    $region27: #{tpu_custom_call.1} parent=1 // pred_check_branch
      %56 = sbr.rel (0) target = $region29
    $region28: #{tpu_custom_call.1} parent=1 // pred_region
      _
    $region29: #{tpu_custom_call.1} parent=1 // pred_fallthru
      _
    // Predicated region
    $region30: #{tpu_custom_call.1} parent=1 // pred_check
      _
    $region31: #{tpu_custom_call.1} parent=1 // pred_check_branch
      %58 = sbr.rel (0) target = $region33
    $region32: #{tpu_custom_call.1} parent=1 // pred_region
      %s60 = ssub.s32 1024, 1024
      %61 = vsyncadd [#allocation6], %s60
      %s62 = sshll.u32 [#allocation7], 4
      %s63 = int_to_ptr.vmem [resolvable:$true] %s62
      %68 = dma.hbm_to_vmem [thread:$0]  %s7, 1024, %s63, [#allocation6], 128, 128, 8
    $region33: #{tpu_custom_call.1} parent=1 // pred_fallthru
      _
    // Predicated region
    $region34: #{tpu_custom_call.1} parent=1 // pred_check
      _
    $region35: #{tpu_custom_call.1} parent=1 // pred_check_branch
      %70 = sbr.rel (0) target = $region37
    $region36: #{tpu_custom_call.1} parent=1 // pred_region
      _
    $region37: #{tpu_custom_call.1} parent=1 // pred_fallthru
      _
    // Predicated region
    $region38: #{tpu_custom_call.1} parent=1 // pred_check
      _
    $region39: #{tpu_custom_call.1} parent=1 // pred_check_branch
      %72 = sbr.rel (0) target = $region41
    $region40: #{tpu_custom_call.1} parent=1 // pred_region
      _
    $region41: #{tpu_custom_call.1} parent=1 // pred_fallthru
      _
    // Predicated region
    $region42: #{tpu_custom_call.1} parent=1 // pred_check
      _
    $region43: #{tpu_custom_call.1} parent=1 // pred_check_branch
      %74 = sbr.rel (0) target = $region45
    $region44: #{tpu_custom_call.1} parent=1 // pred_region
      _
    $region45: #{tpu_custom_call.1} parent=1 // pred_fallthru
      _
    // Predicated region
    $region46: #{tpu_custom_call.1} parent=1 // pred_check
      _
    $region47: #{tpu_custom_call.1} parent=1 // pred_check_branch
      %76 = sbr.rel (0) target = $region49
    $region48: #{tpu_custom_call.1} parent=1 // pred_region
      _
    $region49: #{tpu_custom_call.1} parent=1 // pred_fallthru
      _
    // Predicated region
    $region50: #{tpu_custom_call.1} parent=1 // pred_check
      _
    $region51: #{tpu_custom_call.1} parent=1 // pred_check_branch
      %78 = sbr.rel (0) target = $region53
    $region52: #{tpu_custom_call.1} parent=1 // pred_region
      %79 = dma.done [#allocation3], 256
    $region53: #{tpu_custom_call.1} parent=1 // pred_fallthru
      _
    // Predicated region
    $region54: #{tpu_custom_call.1} parent=1 // pred_check
      _
    $region55: #{tpu_custom_call.1} parent=1 // pred_check_branch
      %81 = sbr.rel (0) target = $region57
    $region56: #{tpu_custom_call.1} parent=1 // pred_region
      %82 = dma.done [#allocation6], 256
    $region57: #{tpu_custom_call.1} parent=1 // pred_fallthru
      _
    // Predicated region
    $region58: #{tpu_custom_call.1} parent=1 // pred_check
      _
    $region59: #{tpu_custom_call.1} parent=1 // pred_check_branch
      %84 = sbr.rel (0) target = $region61
    $region60: #{tpu_custom_call.1} parent=1 // pred_region
      %85 = dma.done [#allocation6], 1024
    $region61: #{tpu_custom_call.1} parent=1 // pred_fallthru
      _
    %v86 = vld [vmem:[#allocation2] sm:$0xff]
    %v87 = vld [vmem:[#allocation2 + $0x8] sm:$0xff]
    %v88 = vld [vmem:[#allocation5] sm:$0xff]
    %v89 = vld [vmem:[#allocation5 + $0x8] sm:$0xff]
    %v90 = vld [vmem:[%s2] sm:$0xff]
    %v91 = vld [vmem:[%s2 + $0x8] sm:$0xff]
    %v92 = vld [vmem:[%s2 + $0x10] sm:$0xff]
    %v93 = vld [vmem:[%s2 + $0x18] sm:$0xff]
    %v94 = vld [vmem:[%s2 + $0x20] sm:$0xff]
    %v95 = vld [vmem:[%s2 + $0x28] sm:$0xff]
    %v96 = vld [vmem:[%s2 + $0x30] sm:$0xff]
    %v97 = vld [vmem:[%s2 + $0x38] sm:$0xff]
    %v98 = vld [vmem:[%s10] sm:$0xff]
    %v99 = vld [vmem:[%s10 + $0x8] sm:$0x7f]
    %v100 = vadd.f32 %v86, %v88
    %v101 = vadd.f32 %v87, %v89
    %v102 = vld [vmem:[%s3] sm:$0xff]
    %v103 = vld [vmem:[%s3 + $0x8] sm:$0xff]
    %v104 = vld [vmem:[%s3 + $0x10] sm:$0xff]
    %v105 = vld [vmem:[%s3 + $0x18] sm:$0xff]
    %vm106 = vcmask 261120
    %v108 = vsel %vm106, %v100, 0
    %v111 = vsel %vm106, %v101, 0
    %v114 = vsel %vm106, %v86, 0
    %v117 = vsel %vm106, %v87, 0
    %119 = vmatprep.subr.mxu0 0.0
    %120 = vmatpush1.msra.mxu0 %v102
    %121 = vmatprep.subr.mxu0 0.0
    %122 = vmatpush1.msra.mxu0 %v103
    %123 = vmatprep.subr.mxu0 0.0
    %124 = vmatpush1.msra.mxu0 %v104
    %125 = vmatprep.subr.mxu0 0.0
    %126 = vmatpush1.msra.mxu0 %v105
    %127 = vmatprep.subr.mxu0 0.0
    %128 = vmatpush1.msra.mxu0 0.0
    %129 = vmatprep.subr.mxu0 0.0
    %130 = vmatpush1.msra.mxu0 0.0
    %131 = vmatprep.subr.mxu0 0.0
    %132 = vmatpush1.msra.mxu0 0.0
    %133 = vmatprep.subr.mxu0 0.0
    %134 = vmatpush1.msra.mxu0 0.0
    %135 = vmatprep.subr.mxu0 0.0
    %136 = vmatpush1.msra.mxu0 0.0
    %137 = vmatprep.subr.mxu0 0.0
    %138 = vmatpush1.msra.mxu0 0.0
    %139 = vmatprep.subr.mxu0 0.0
    %140 = vmatpush1.msra.mxu0 0.0
    %141 = vmatprep.subr.mxu0 0.0
    %142 = vmatpush1.msra.mxu0 0.0
    %143 = vmatprep.subr.mxu0 0.0
    %144 = vmatpush1.msra.mxu0 0.0
    %145 = vmatprep.subr.mxu0 0.0
    %146 = vmatpush1.msra.mxu0 0.0
    %147 = vmatprep.subr.mxu0 0.0
    %148 = vmatpush1.msra.mxu0 0.0
    %149 = vmatprep.subr.mxu0 0.0
    %150 = vmatpush1.msra.mxu0 0.0
    %151 = vmatprep.subr.mxu0 0.0
    %152 = vmatpush1.msra.mxu0 0.0
    %153 = vmatprep.subr.mxu0 0.0
    %154 = vmatpush1.msra.mxu0 0.0
    %155 = vmatprep.subr.mxu0 0.0
    %156 = vmatpush1.msra.mxu0 0.0
    %157 = vmatprep.subr.mxu0 0.0
    %158 = vmatpush1.msra.mxu0 0.0
    %159 = vmatprep.subr.mxu0 0.0
    %160 = vmatpush1.msra.mxu0 0.0
    %161 = vmatprep.subr.mxu0 0.0
    %162 = vmatpush1.msra.mxu0 0.0
    %163 = vmatprep.subr.mxu0 0.0
    %164 = vmatpush1.msra.mxu0 0.0
    %165 = vmatprep.subr.mxu0 0.0
    %166 = vmatpush1.msra.mxu0 0.0
    %167 = vmatprep.subr.mxu0 0.0
    %168 = vmatpush1.msra.mxu0 0.0
    %169 = vmatprep.subr.mxu0 0.0
    %170 = vmatpush1.msra.mxu0 0.0
    %171 = vmatprep.subr.mxu0 0.0
    %172 = vmatpush1.msra.mxu0 0.0
    %173 = vmatprep.subr.mxu0 0.0
    %174 = vmatpush1.msra.mxu0 0.0
    %175 = vmatprep.subr.mxu0 0.0
    %176 = vmatpush1.msra.mxu0 0.0
    %177 = vmatprep.subr.mxu0 0.0
    %178 = vmatpush1.msra.mxu0 0.0
    %179 = vmatprep.subr.mxu0 0.0
    %180 = vmatpush1.msra.mxu0 0.0
    %181 = vmatprep.subr.mxu0 0.0
    %182 = vmatpush1.msra.mxu0 0.0
    %183 = vmatprep.mubr.f32.mxu0 0.0
    %184 = vmatmul.mubr.f32.gmra.mrb[0].mxu0 %v108
    %v185 = vpop.f32.mrb[0].mxu0
    %v186 = vadd.f32 0.0, %v185
    %v187 = vpop.f32.mrb[0].mxu0
    %188 = vmatprep.mubr.f32.mxu0 0.0
    %189 = vmatmul.mubr.f32.gmra.mrb[0].mxu0 %v111
    %v190 = vpop.f32.mrb[0].mxu0
    %v191 = vadd.f32 0.0, %v190
    %v192 = vpop.f32.mrb[0].mxu0
    %193 = vmatprep.mubr.f32.mxu0 0.0
    %194 = vmatmul.mubr.f32.gmra.mrb[0].mxu0 %v114
    %v195 = vpop.f32.mrb[0].mxu0
    %v196 = vadd.f32 0.0, %v195
    %v197 = vpop.f32.mrb[0].mxu0
    %198 = vmatprep.mubr.f32.mxu0 0.0
    %199 = vmatmul.mubr.f32.gmra.mrb[0].mxu0 %v117
    %v200 = vpop.f32.mrb[0].mxu0
    %v201 = vadd.f32 0.0, %v200
    %v202 = vpop.f32.mrb[0].mxu0
    %203 = vdwg.mxu0
    %v204 = vlaneseq
    %v205 = vshrl.u32 %v204, 7
    %v206 = vsub.s32 0, %v205
    %v207 = vrot.slane %v98, %v206
    %v208 = vadd.f32 %v186, %v207
    %v209 = vadd.f32 %v191, %v207
    %v210 = vlaneseq
    %v211 = vshrl.u32 %v210, 7
    %v212 = vsub.s32 1, %v211
    %v213 = vrot.slane %v98, %v212
    %215 = vrot.lane.b32.xlu0 %v213, 32
    %v216 = vpop.permute.xlu0 %215
    %v218 = vadd.f32 %v186, %v216
    %v219 = vadd.f32 %v191, %v216
    %v220 = vlaneseq
    %v221 = vshrl.u32 %v220, 7
    %v222 = vsub.s32 2, %v221
    %v223 = vrot.slane %v98, %v222
    %225 = vrot.lane.b32.xlu0 %v223, 64
    %v226 = vpop.permute.xlu0 %225
    %v228 = vadd.f32 %v196, %v226
    %v229 = vadd.f32 %v201, %v226
    %v230 = vmul.f32 %v208, 0.35355338
    %v231 = vmul.f32 %v209, 0.35355338
    %233 = vrot.lane.b32.xlu0 %v230, 120
    %v234 = vpop.permute.xlu0 %233
    %235 = vrot.lane.b32.xlu0 %v230, 112
    %v236 = vpop.permute.xlu0 %235
    %237 = vrot.lane.b32.xlu0 %v230, 104
    %v238 = vpop.permute.xlu0 %237
    %240 = vrot.lane.b32.xlu0 %v231, 120
    %v241 = vpop.permute.xlu0 %240
    %242 = vrot.lane.b32.xlu0 %v231, 112
    %v243 = vpop.permute.xlu0 %242
    %244 = vrot.lane.b32.xlu0 %v231, 104
    %v245 = vpop.permute.xlu0 %244
    %247 = vrot.lane.b32.xlu0 %v218, 120
    %v248 = vpop.permute.xlu0 %247
    %249 = vrot.lane.b32.xlu0 %v218, 112
    %v250 = vpop.permute.xlu0 %249
    %251 = vrot.lane.b32.xlu0 %v218, 104
    %v252 = vpop.permute.xlu0 %251
    %254 = vrot.lane.b32.xlu0 %v219, 120
    %v255 = vpop.permute.xlu0 %254
    %256 = vrot.lane.b32.xlu0 %v219, 112
    %v257 = vpop.permute.xlu0 %256
    %258 = vrot.lane.b32.xlu0 %v219, 104
    %v259 = vpop.permute.xlu0 %258
    %261 = vrot.lane.b32.xlu0 %v228, 120
    %v262 = vpop.permute.xlu0 %261
    %263 = vrot.lane.b32.xlu0 %v228, 112
    %v264 = vpop.permute.xlu0 %263
    %265 = vrot.lane.b32.xlu0 %v228, 104
    %v266 = vpop.permute.xlu0 %265
    %268 = vrot.lane.b32.xlu0 %v229, 120
    %v269 = vpop.permute.xlu0 %268
    %270 = vrot.lane.b32.xlu0 %v229, 112
    %v271 = vpop.permute.xlu0 %270
    %272 = vrot.lane.b32.xlu0 %v229, 104
    %v273 = vpop.permute.xlu0 %272
    %274 = vrot.lane.b32.xlu0 %v218, 96
    %v275 = vpop.permute.xlu0 %274
    %vm276 = vcmask 64512
    %v277 = vsel %vm276, %v230, 0
    %v279 = vsel %vm276, %v275, 0
    %281 = vmatprep.subr.mxu0 0.0
    %282 = vmatpush1.xpose.msra.mxu0 %v279
    %283 = vmatprep.subr.mxu0 0.0
    %284 = vmatpush1.xpose.msra.mxu0 0.0
    %285 = vmatprep.subr.mxu0 0.0
    %286 = vmatpush1.xpose.msra.mxu0 0.0
    %287 = vmatprep.subr.mxu0 0.0
    %288 = vmatpush1.xpose.msra.mxu0 0.0
    %289 = vmatprep.subr.mxu0 0.0
    %290 = vmatpush1.xpose.msra.mxu0 0.0
    %291 = vmatprep.subr.mxu0 0.0
    %292 = vmatpush1.xpose.msra.mxu0 0.0
    %293 = vmatprep.subr.mxu0 0.0
    %294 = vmatpush1.xpose.msra.mxu0 0.0
    %295 = vmatprep.subr.mxu0 0.0
    %296 = vmatpush1.xpose.msra.mxu0 0.0
    %297 = vmatprep.subr.mxu0 0.0
    %298 = vmatpush1.xpose.msra.mxu0 0.0
    %299 = vmatprep.subr.mxu0 0.0
    %300 = vmatpush1.xpose.msra.mxu0 0.0
    %301 = vmatprep.subr.mxu0 0.0
    %302 = vmatpush1.xpose.msra.mxu0 0.0
    %303 = vmatprep.subr.mxu0 0.0
    %304 = vmatpush1.xpose.msra.mxu0 0.0
    %305 = vmatprep.subr.mxu0 0.0
    %306 = vmatpush1.xpose.msra.mxu0 0.0
    %307 = vmatprep.subr.mxu0 0.0
    %308 = vmatpush1.xpose.msra.mxu0 0.0
    %309 = vmatprep.subr.mxu0 0.0
    %310 = vmatpush1.xpose.msra.mxu0 0.0
    %311 = vmatprep.subr.mxu0 0.0
    %312 = vmatpush1.xpose.msra.mxu0 0.0
    %313 = vmatprep.subr.mxu0 0.0
    %314 = vmatpush1.xpose.msra.mxu0 0.0
    %315 = vmatprep.subr.mxu0 0.0
    %316 = vmatpush1.xpose.msra.mxu0 0.0
    %317 = vmatprep.subr.mxu0 0.0
    %318 = vmatpush1.xpose.msra.mxu0 0.0
    %319 = vmatprep.subr.mxu0 0.0
    %320 = vmatpush1.xpose.msra.mxu0 0.0
    %321 = vmatprep.subr.mxu0 0.0
    %322 = vmatpush1.xpose.msra.mxu0 0.0
    %323 = vmatprep.subr.mxu0 0.0
    %324 = vmatpush1.xpose.msra.mxu0 0.0
    %325 = vmatprep.subr.mxu0 0.0
    %326 = vmatpush1.xpose.msra.mxu0 0.0
    %327 = vmatprep.subr.mxu0 0.0
    %328 = vmatpush1.xpose.msra.mxu0 0.0
    %329 = vmatprep.subr.mxu0 0.0
    %330 = vmatpush1.xpose.msra.mxu0 0.0
    %331 = vmatprep.subr.mxu0 0.0
    %332 = vmatpush1.xpose.msra.mxu0 0.0
    %333 = vmatprep.subr.mxu0 0.0
    %334 = vmatpush1.xpose.msra.mxu0 0.0
    %335 = vmatprep.subr.mxu0 0.0
    %336 = vmatpush1.xpose.msra.mxu0 0.0
    %337 = vmatprep.subr.mxu0 0.0
    %338 = vmatpush1.xpose.msra.mxu0 0.0
    %339 = vmatprep.subr.mxu0 0.0
    %340 = vmatpush1.xpose.msra.mxu0 0.0
    %341 = vmatprep.subr.mxu0 0.0
    %342 = vmatpush1.xpose.msra.mxu0 0.0
    %343 = vmatprep.subr.mxu0 0.0
    %344 = vmatpush1.xpose.msra.mxu0 0.0
    %345 = vmatprep.mubr.f32.mxu0 0.0
    %346 = vmatmul.mubr.f32.gmra.mrb[0].mxu0 %v277
    %v347 = vpop.f32.mrb[0].mxu0
    %v348 = vadd.f32 0.0, %v347
    %v349 = vpop.f32.mrb[0].mxu0
    %350 = vdwg.mxu0
    %351 = vrot.lane.b32.xlu0 %v248, 96
    %v352 = vpop.permute.xlu0 %351
    %v353 = vsel %vm276, %v234, 0
    %v355 = vsel %vm276, %v352, 0
    %357 = vmatprep.subr.mxu0 0.0
    %358 = vmatpush1.xpose.msra.mxu0 %v355
    %359 = vmatprep.subr.mxu0 0.0
    %360 = vmatpush1.xpose.msra.mxu0 0.0
    %361 = vmatprep.subr.mxu0 0.0
    %362 = vmatpush1.xpose.msra.mxu0 0.0
    %363 = vmatprep.subr.mxu0 0.0
    %364 = vmatpush1.xpose.msra.mxu0 0.0
    %365 = vmatprep.subr.mxu0 0.0
    %366 = vmatpush1.xpose.msra.mxu0 0.0
    %367 = vmatprep.subr.mxu0 0.0
    %368 = vmatpush1.xpose.msra.mxu0 0.0
    %369 = vmatprep.subr.mxu0 0.0
    %370 = vmatpush1.xpose.msra.mxu0 0.0
    %371 = vmatprep.subr.mxu0 0.0
    %372 = vmatpush1.xpose.msra.mxu0 0.0
    %373 = vmatprep.subr.mxu0 0.0
    %374 = vmatpush1.xpose.msra.mxu0 0.0
    %375 = vmatprep.subr.mxu0 0.0
    %376 = vmatpush1.xpose.msra.mxu0 0.0
    %377 = vmatprep.subr.mxu0 0.0
    %378 = vmatpush1.xpose.msra.mxu0 0.0
    %379 = vmatprep.subr.mxu0 0.0
    %380 = vmatpush1.xpose.msra.mxu0 0.0
    %381 = vmatprep.subr.mxu0 0.0
    %382 = vmatpush1.xpose.msra.mxu0 0.0
    %383 = vmatprep.subr.mxu0 0.0
    %384 = vmatpush1.xpose.msra.mxu0 0.0
    %385 = vmatprep.subr.mxu0 0.0
    %386 = vmatpush1.xpose.msra.mxu0 0.0
    %387 = vmatprep.subr.mxu0 0.0
    %388 = vmatpush1.xpose.msra.mxu0 0.0
    %389 = vmatprep.subr.mxu0 0.0
    %390 = vmatpush1.xpose.msra.mxu0 0.0
    %391 = vmatprep.subr.mxu0 0.0
    %392 = vmatpush1.xpose.msra.mxu0 0.0
    %393 = vmatprep.subr.mxu0 0.0
    %394 = vmatpush1.xpose.msra.mxu0 0.0
    %395 = vmatprep.subr.mxu0 0.0
    %396 = vmatpush1.xpose.msra.mxu0 0.0
    %397 = vmatprep.subr.mxu0 0.0
    %398 = vmatpush1.xpose.msra.mxu0 0.0
    %399 = vmatprep.subr.mxu0 0.0
    %400 = vmatpush1.xpose.msra.mxu0 0.0
    %401 = vmatprep.subr.mxu0 0.0
    %402 = vmatpush1.xpose.msra.mxu0 0.0
    %403 = vmatprep.subr.mxu0 0.0
    %404 = vmatpush1.xpose.msra.mxu0 0.0
    %405 = vmatprep.subr.mxu0 0.0
    %406 = vmatpush1.xpose.msra.mxu0 0.0
    %407 = vmatprep.subr.mxu0 0.0
    %408 = vmatpush1.xpose.msra.mxu0 0.0
    %409 = vmatprep.subr.mxu0 0.0
    %410 = vmatpush1.xpose.msra.mxu0 0.0
    %411 = vmatprep.subr.mxu0 0.0
    %412 = vmatpush1.xpose.msra.mxu0 0.0
    %413 = vmatprep.subr.mxu0 0.0
    %414 = vmatpush1.xpose.msra.mxu0 0.0
    %415 = vmatprep.subr.mxu0 0.0
    %416 = vmatpush1.xpose.msra.mxu0 0.0
    %417 = vmatprep.subr.mxu0 0.0
    %418 = vmatpush1.xpose.msra.mxu0 0.0
    %419 = vmatprep.subr.mxu0 0.0
    %420 = vmatpush1.xpose.msra.mxu0 0.0
    %421 = vmatprep.mubr.f32.mxu0 0.0
    %422 = vmatmul.mubr.f32.gmra.mrb[0].mxu0 %v353
    %v423 = vpop.f32.mrb[0].mxu0
    %v424 = vadd.f32 0.0, %v423
    %v425 = vpop.f32.mrb[0].mxu0
    %426 = vdwg.mxu0
    %427 = vrot.lane.b32.xlu0 %v250, 96
    %v428 = vpop.permute.xlu0 %427
    %v429 = vsel %vm276, %v236, 0
    %v431 = vsel %vm276, %v428, 0
    %433 = vmatprep.subr.mxu0 0.0
    %434 = vmatpush1.xpose.msra.mxu0 %v431
    %435 = vmatprep.subr.mxu0 0.0
    %436 = vmatpush1.xpose.msra.mxu0 0.0
    %437 = vmatprep.subr.mxu0 0.0
    %438 = vmatpush1.xpose.msra.mxu0 0.0
    %439 = vmatprep.subr.mxu0 0.0
    %440 = vmatpush1.xpose.msra.mxu0 0.0
    %441 = vmatprep.subr.mxu0 0.0
    %442 = vmatpush1.xpose.msra.mxu0 0.0
    %443 = vmatprep.subr.mxu0 0.0
    %444 = vmatpush1.xpose.msra.mxu0 0.0
    %445 = vmatprep.subr.mxu0 0.0
    %446 = vmatpush1.xpose.msra.mxu0 0.0
    %447 = vmatprep.subr.mxu0 0.0
    %448 = vmatpush1.xpose.msra.mxu0 0.0
    %449 = vmatprep.subr.mxu0 0.0
    %450 = vmatpush1.xpose.msra.mxu0 0.0
    %451 = vmatprep.subr.mxu0 0.0
    %452 = vmatpush1.xpose.msra.mxu0 0.0
    %453 = vmatprep.subr.mxu0 0.0
    %454 = vmatpush1.xpose.msra.mxu0 0.0
    %455 = vmatprep.subr.mxu0 0.0
    %456 = vmatpush1.xpose.msra.mxu0 0.0
    %457 = vmatprep.subr.mxu0 0.0
    %458 = vmatpush1.xpose.msra.mxu0 0.0
    %459 = vmatprep.subr.mxu0 0.0
    %460 = vmatpush1.xpose.msra.mxu0 0.0
    %461 = vmatprep.subr.mxu0 0.0
    %462 = vmatpush1.xpose.msra.mxu0 0.0
    %463 = vmatprep.subr.mxu0 0.0
    %464 = vmatpush1.xpose.msra.mxu0 0.0
    %465 = vmatprep.subr.mxu0 0.0
    %466 = vmatpush1.xpose.msra.mxu0 0.0
    %467 = vmatprep.subr.mxu0 0.0
    %468 = vmatpush1.xpose.msra.mxu0 0.0
    %469 = vmatprep.subr.mxu0 0.0
    %470 = vmatpush1.xpose.msra.mxu0 0.0
    %471 = vmatprep.subr.mxu0 0.0
    %472 = vmatpush1.xpose.msra.mxu0 0.0
    %473 = vmatprep.subr.mxu0 0.0
    %474 = vmatpush1.xpose.msra.mxu0 0.0
    %475 = vmatprep.subr.mxu0 0.0
    %476 = vmatpush1.xpose.msra.mxu0 0.0
    %477 = vmatprep.subr.mxu0 0.0
    %478 = vmatpush1.xpose.msra.mxu0 0.0
    %479 = vmatprep.subr.mxu0 0.0
    %480 = vmatpush1.xpose.msra.mxu0 0.0
    %481 = vmatprep.subr.mxu0 0.0
    %482 = vmatpush1.xpose.msra.mxu0 0.0
    %483 = vmatprep.subr.mxu0 0.0
    %484 = vmatpush1.xpose.msra.mxu0 0.0
    %485 = vmatprep.subr.mxu0 0.0
    %486 = vmatpush1.xpose.msra.mxu0 0.0
    %487 = vmatprep.subr.mxu0 0.0
    %488 = vmatpush1.xpose.msra.mxu0 0.0
    %489 = vmatprep.subr.mxu0 0.0
    %490 = vmatpush1.xpose.msra.mxu0 0.0
    %491 = vmatprep.subr.mxu0 0.0
    %492 = vmatpush1.xpose.msra.mxu0 0.0
    %493 = vmatprep.subr.mxu0 0.0
    %494 = vmatpush1.xpose.msra.mxu0 0.0
    %495 = vmatprep.subr.mxu0 0.0
    %496 = vmatpush1.xpose.msra.mxu0 0.0
    %497 = vmatprep.mubr.f32.mxu0 0.0
    %498 = vmatmul.mubr.f32.gmra.mrb[0].mxu0 %v429
    %v499 = vpop.f32.mrb[0].mxu0
    %v500 = vadd.f32 0.0, %v499
    %v501 = vpop.f32.mrb[0].mxu0
    %502 = vdwg.mxu0
    %503 = vrot.lane.b32.xlu0 %v252, 96
    %v504 = vpop.permute.xlu0 %503
    %v505 = vsel %vm276, %v238, 0
    %v507 = vsel %vm276, %v504, 0
    %509 = vmatprep.subr.mxu0 0.0
    %510 = vmatpush1.xpose.msra.mxu0 %v507
    %511 = vmatprep.subr.mxu0 0.0
    %512 = vmatpush1.xpose.msra.mxu0 0.0
    %513 = vmatprep.subr.mxu0 0.0
    %514 = vmatpush1.xpose.msra.mxu0 0.0
    %515 = vmatprep.subr.mxu0 0.0
    %516 = vmatpush1.xpose.msra.mxu0 0.0
    %517 = vmatprep.subr.mxu0 0.0
    %518 = vmatpush1.xpose.msra.mxu0 0.0
    %519 = vmatprep.subr.mxu0 0.0
    %520 = vmatpush1.xpose.msra.mxu0 0.0
    %521 = vmatprep.subr.mxu0 0.0
    %522 = vmatpush1.xpose.msra.mxu0 0.0
    %523 = vmatprep.subr.mxu0 0.0
    %524 = vmatpush1.xpose.msra.mxu0 0.0
    %525 = vmatprep.subr.mxu0 0.0
    %526 = vmatpush1.xpose.msra.mxu0 0.0
    %527 = vmatprep.subr.mxu0 0.0
    %528 = vmatpush1.xpose.msra.mxu0 0.0
    %529 = vmatprep.subr.mxu0 0.0
    %530 = vmatpush1.xpose.msra.mxu0 0.0
    %531 = vmatprep.subr.mxu0 0.0
    %532 = vmatpush1.xpose.msra.mxu0 0.0
    %533 = vmatprep.subr.mxu0 0.0
    %534 = vmatpush1.xpose.msra.mxu0 0.0
    %535 = vmatprep.subr.mxu0 0.0
    %536 = vmatpush1.xpose.msra.mxu0 0.0
    %537 = vmatprep.subr.mxu0 0.0
    %538 = vmatpush1.xpose.msra.mxu0 0.0
    %539 = vmatprep.subr.mxu0 0.0
    %540 = vmatpush1.xpose.msra.mxu0 0.0
    %541 = vmatprep.subr.mxu0 0.0
    %542 = vmatpush1.xpose.msra.mxu0 0.0
    %543 = vmatprep.subr.mxu0 0.0
    %544 = vmatpush1.xpose.msra.mxu0 0.0
    %545 = vmatprep.subr.mxu0 0.0
    %546 = vmatpush1.xpose.msra.mxu0 0.0
    %547 = vmatprep.subr.mxu0 0.0
    %548 = vmatpush1.xpose.msra.mxu0 0.0
    %549 = vmatprep.subr.mxu0 0.0
    %550 = vmatpush1.xpose.msra.mxu0 0.0
    %551 = vmatprep.subr.mxu0 0.0
    %552 = vmatpush1.xpose.msra.mxu0 0.0
    %553 = vmatprep.subr.mxu0 0.0
    %554 = vmatpush1.xpose.msra.mxu0 0.0
    %555 = vmatprep.subr.mxu0 0.0
    %556 = vmatpush1.xpose.msra.mxu0 0.0
    %557 = vmatprep.subr.mxu0 0.0
    %558 = vmatpush1.xpose.msra.mxu0 0.0
    %559 = vmatprep.subr.mxu0 0.0
    %560 = vmatpush1.xpose.msra.mxu0 0.0
    %561 = vmatprep.subr.mxu0 0.0
    %562 = vmatpush1.xpose.msra.mxu0 0.0
    %563 = vmatprep.subr.mxu0 0.0
    %564 = vmatpush1.xpose.msra.mxu0 0.0
    %565 = vmatprep.subr.mxu0 0.0
    %566 = vmatpush1.xpose.msra.mxu0 0.0
    %567 = vmatprep.subr.mxu0 0.0
    %568 = vmatpush1.xpose.msra.mxu0 0.0
    %569 = vmatprep.subr.mxu0 0.0
    %570 = vmatpush1.xpose.msra.mxu0 0.0
    %571 = vmatprep.subr.mxu0 0.0
    %572 = vmatpush1.xpose.msra.mxu0 0.0
    %573 = vmatprep.mubr.f32.mxu0 0.0
    %574 = vmatmul.mubr.f32.gmra.mrb[0].mxu0 %v505
    %v575 = vpop.f32.mrb[0].mxu0
    %v576 = vadd.f32 0.0, %v575
    %v577 = vpop.f32.mrb[0].mxu0
    %578 = vdwg.mxu0
    %579 = vrot.lane.b32.xlu0 %v219, 96
    %v580 = vpop.permute.xlu0 %579
    %v581 = vsel %vm276, %v231, 0
    %v583 = vsel %vm276, %v580, 0
    %585 = vmatprep.subr.mxu0 0.0
    %586 = vmatpush1.xpose.msra.mxu0 %v583
    %587 = vmatprep.subr.mxu0 0.0
    %588 = vmatpush1.xpose.msra.mxu0 0.0
    %589 = vmatprep.subr.mxu0 0.0
    %590 = vmatpush1.xpose.msra.mxu0 0.0
    %591 = vmatprep.subr.mxu0 0.0
    %592 = vmatpush1.xpose.msra.mxu0 0.0
    %593 = vmatprep.subr.mxu0 0.0
    %594 = vmatpush1.xpose.msra.mxu0 0.0
    %595 = vmatprep.subr.mxu0 0.0
    %596 = vmatpush1.xpose.msra.mxu0 0.0
    %597 = vmatprep.subr.mxu0 0.0
    %598 = vmatpush1.xpose.msra.mxu0 0.0
    %599 = vmatprep.subr.mxu0 0.0
    %600 = vmatpush1.xpose.msra.mxu0 0.0
    %601 = vmatprep.subr.mxu0 0.0
    %602 = vmatpush1.xpose.msra.mxu0 0.0
    %603 = vmatprep.subr.mxu0 0.0
    %604 = vmatpush1.xpose.msra.mxu0 0.0
    %605 = vmatprep.subr.mxu0 0.0
    %606 = vmatpush1.xpose.msra.mxu0 0.0
    %607 = vmatprep.subr.mxu0 0.0
    %608 = vmatpush1.xpose.msra.mxu0 0.0
    %609 = vmatprep.subr.mxu0 0.0
    %610 = vmatpush1.xpose.msra.mxu0 0.0
    %611 = vmatprep.subr.mxu0 0.0
    %612 = vmatpush1.xpose.msra.mxu0 0.0
    %613 = vmatprep.subr.mxu0 0.0
    %614 = vmatpush1.xpose.msra.mxu0 0.0
    %615 = vmatprep.subr.mxu0 0.0
    %616 = vmatpush1.xpose.msra.mxu0 0.0
    %617 = vmatprep.subr.mxu0 0.0
    %618 = vmatpush1.xpose.msra.mxu0 0.0
    %619 = vmatprep.subr.mxu0 0.0
    %620 = vmatpush1.xpose.msra.mxu0 0.0
    %621 = vmatprep.subr.mxu0 0.0
    %622 = vmatpush1.xpose.msra.mxu0 0.0
    %623 = vmatprep.subr.mxu0 0.0
    %624 = vmatpush1.xpose.msra.mxu0 0.0
    %625 = vmatprep.subr.mxu0 0.0
    %626 = vmatpush1.xpose.msra.mxu0 0.0
    %627 = vmatprep.subr.mxu0 0.0
    %628 = vmatpush1.xpose.msra.mxu0 0.0
    %629 = vmatprep.subr.mxu0 0.0
    %630 = vmatpush1.xpose.msra.mxu0 0.0
    %631 = vmatprep.subr.mxu0 0.0
    %632 = vmatpush1.xpose.msra.mxu0 0.0
    %633 = vmatprep.subr.mxu0 0.0
    %634 = vmatpush1.xpose.msra.mxu0 0.0
    %635 = vmatprep.subr.mxu0 0.0
    %636 = vmatpush1.xpose.msra.mxu0 0.0
    %637 = vmatprep.subr.mxu0 0.0
    %638 = vmatpush1.xpose.msra.mxu0 0.0
    %639 = vmatprep.subr.mxu0 0.0
    %640 = vmatpush1.xpose.msra.mxu0 0.0
    %641 = vmatprep.subr.mxu0 0.0
    %642 = vmatpush1.xpose.msra.mxu0 0.0
    %643 = vmatprep.subr.mxu0 0.0
    %644 = vmatpush1.xpose.msra.mxu0 0.0
    %645 = vmatprep.subr.mxu0 0.0
    %646 = vmatpush1.xpose.msra.mxu0 0.0
    %647 = vmatprep.subr.mxu0 0.0
    %648 = vmatpush1.xpose.msra.mxu0 0.0
    %649 = vmatprep.mubr.f32.mxu0 0.0
    %650 = vmatmul.mubr.f32.gmra.mrb[0].mxu0 %v581
    %v651 = vpop.f32.mrb[0].mxu0
    %v652 = vadd.f32 0.0, %v651
    %v653 = vpop.f32.mrb[0].mxu0
    %654 = vdwg.mxu0
    %655 = vrot.lane.b32.xlu0 %v255, 96
    %v656 = vpop.permute.xlu0 %655
    %v657 = vsel %vm276, %v241, 0
    %v659 = vsel %vm276, %v656, 0
    %661 = vmatprep.subr.mxu0 0.0
    %662 = vmatpush1.xpose.msra.mxu0 %v659
    %663 = vmatprep.subr.mxu0 0.0
    %664 = vmatpush1.xpose.msra.mxu0 0.0
    %665 = vmatprep.subr.mxu0 0.0
    %666 = vmatpush1.xpose.msra.mxu0 0.0
    %667 = vmatprep.subr.mxu0 0.0
    %668 = vmatpush1.xpose.msra.mxu0 0.0
    %669 = vmatprep.subr.mxu0 0.0
    %670 = vmatpush1.xpose.msra.mxu0 0.0
    %671 = vmatprep.subr.mxu0 0.0
    %672 = vmatpush1.xpose.msra.mxu0 0.0
    %673 = vmatprep.subr.mxu0 0.0
    %674 = vmatpush1.xpose.msra.mxu0 0.0
    %675 = vmatprep.subr.mxu0 0.0
    %676 = vmatpush1.xpose.msra.mxu0 0.0
    %677 = vmatprep.subr.mxu0 0.0
    %678 = vmatpush1.xpose.msra.mxu0 0.0
    %679 = vmatprep.subr.mxu0 0.0
    %680 = vmatpush1.xpose.msra.mxu0 0.0
    %681 = vmatprep.subr.mxu0 0.0
    %682 = vmatpush1.xpose.msra.mxu0 0.0
    %683 = vmatprep.subr.mxu0 0.0
    %684 = vmatpush1.xpose.msra.mxu0 0.0
    %685 = vmatprep.subr.mxu0 0.0
    %686 = vmatpush1.xpose.msra.mxu0 0.0
    %687 = vmatprep.subr.mxu0 0.0
    %688 = vmatpush1.xpose.msra.mxu0 0.0
    %689 = vmatprep.subr.mxu0 0.0
    %690 = vmatpush1.xpose.msra.mxu0 0.0
    %691 = vmatprep.subr.mxu0 0.0
    %692 = vmatpush1.xpose.msra.mxu0 0.0
    %693 = vmatprep.subr.mxu0 0.0
    %694 = vmatpush1.xpose.msra.mxu0 0.0
    %695 = vmatprep.subr.mxu0 0.0
    %696 = vmatpush1.xpose.msra.mxu0 0.0
    %697 = vmatprep.subr.mxu0 0.0
    %698 = vmatpush1.xpose.msra.mxu0 0.0
    %699 = vmatprep.subr.mxu0 0.0
    %700 = vmatpush1.xpose.msra.mxu0 0.0
    %701 = vmatprep.subr.mxu0 0.0
    %702 = vmatpush1.xpose.msra.mxu0 0.0
    %703 = vmatprep.subr.mxu0 0.0
    %704 = vmatpush1.xpose.msra.mxu0 0.0
    %705 = vmatprep.subr.mxu0 0.0
    %706 = vmatpush1.xpose.msra.mxu0 0.0
    %707 = vmatprep.subr.mxu0 0.0
    %708 = vmatpush1.xpose.msra.mxu0 0.0
    %709 = vmatprep.subr.mxu0 0.0
    %710 = vmatpush1.xpose.msra.mxu0 0.0
    %711 = vmatprep.subr.mxu0 0.0
    %712 = vmatpush1.xpose.msra.mxu0 0.0
    %713 = vmatprep.subr.mxu0 0.0
    %714 = vmatpush1.xpose.msra.mxu0 0.0
    %715 = vmatprep.subr.mxu0 0.0
    %716 = vmatpush1.xpose.msra.mxu0 0.0
    %717 = vmatprep.subr.mxu0 0.0
    %718 = vmatpush1.xpose.msra.mxu0 0.0
    %719 = vmatprep.subr.mxu0 0.0
    %720 = vmatpush1.xpose.msra.mxu0 0.0
    %721 = vmatprep.subr.mxu0 0.0
    %722 = vmatpush1.xpose.msra.mxu0 0.0
    %723 = vmatprep.subr.mxu0 0.0
    %724 = vmatpush1.xpose.msra.mxu0 0.0
    %725 = vmatprep.mubr.f32.mxu0 0.0
    %726 = vmatmul.mubr.f32.gmra.mrb[0].mxu0 %v657
    %v727 = vpop.f32.mrb[0].mxu0
    %v728 = vadd.f32 0.0, %v727
    %v729 = vpop.f32.mrb[0].mxu0
    %730 = vdwg.mxu0
    %731 = vrot.lane.b32.xlu0 %v257, 96
    %v732 = vpop.permute.xlu0 %731
    %v733 = vsel %vm276, %v243, 0
    %v735 = vsel %vm276, %v732, 0
    %737 = vmatprep.subr.mxu0 0.0
    %738 = vmatpush1.xpose.msra.mxu0 %v735
    %739 = vmatprep.subr.mxu0 0.0
    %740 = vmatpush1.xpose.msra.mxu0 0.0
    %741 = vmatprep.subr.mxu0 0.0
    %742 = vmatpush1.xpose.msra.mxu0 0.0
    %743 = vmatprep.subr.mxu0 0.0
    %744 = vmatpush1.xpose.msra.mxu0 0.0
    %745 = vmatprep.subr.mxu0 0.0
    %746 = vmatpush1.xpose.msra.mxu0 0.0
    %747 = vmatprep.subr.mxu0 0.0
    %748 = vmatpush1.xpose.msra.mxu0 0.0
    %749 = vmatprep.subr.mxu0 0.0
    %750 = vmatpush1.xpose.msra.mxu0 0.0
    %751 = vmatprep.subr.mxu0 0.0
    %752 = vmatpush1.xpose.msra.mxu0 0.0
    %753 = vmatprep.subr.mxu0 0.0
    %754 = vmatpush1.xpose.msra.mxu0 0.0
    %755 = vmatprep.subr.mxu0 0.0
    %756 = vmatpush1.xpose.msra.mxu0 0.0
    %757 = vmatprep.subr.mxu0 0.0
    %758 = vmatpush1.xpose.msra.mxu0 0.0
    %759 = vmatprep.subr.mxu0 0.0
    %760 = vmatpush1.xpose.msra.mxu0 0.0
    %761 = vmatprep.subr.mxu0 0.0
    %762 = vmatpush1.xpose.msra.mxu0 0.0
    %763 = vmatprep.subr.mxu0 0.0
    %764 = vmatpush1.xpose.msra.mxu0 0.0
    %765 = vmatprep.subr.mxu0 0.0
    %766 = vmatpush1.xpose.msra.mxu0 0.0
    %767 = vmatprep.subr.mxu0 0.0
    %768 = vmatpush1.xpose.msra.mxu0 0.0
    %769 = vmatprep.subr.mxu0 0.0
    %770 = vmatpush1.xpose.msra.mxu0 0.0
    %771 = vmatprep.subr.mxu0 0.0
    %772 = vmatpush1.xpose.msra.mxu0 0.0
    %773 = vmatprep.subr.mxu0 0.0
    %774 = vmatpush1.xpose.msra.mxu0 0.0
    %775 = vmatprep.subr.mxu0 0.0
    %776 = vmatpush1.xpose.msra.mxu0 0.0
    %777 = vmatprep.subr.mxu0 0.0
    %778 = vmatpush1.xpose.msra.mxu0 0.0
    %779 = vmatprep.subr.mxu0 0.0
    %780 = vmatpush1.xpose.msra.mxu0 0.0
    %781 = vmatprep.subr.mxu0 0.0
    %782 = vmatpush1.xpose.msra.mxu0 0.0
    %783 = vmatprep.subr.mxu0 0.0
    %784 = vmatpush1.xpose.msra.mxu0 0.0
    %785 = vmatprep.subr.mxu0 0.0
    %786 = vmatpush1.xpose.msra.mxu0 0.0
    %787 = vmatprep.subr.mxu0 0.0
    %788 = vmatpush1.xpose.msra.mxu0 0.0
    %789 = vmatprep.subr.mxu0 0.0
    %790 = vmatpush1.xpose.msra.mxu0 0.0
    %791 = vmatprep.subr.mxu0 0.0
    %792 = vmatpush1.xpose.msra.mxu0 0.0
    %793 = vmatprep.subr.mxu0 0.0
    %794 = vmatpush1.xpose.msra.mxu0 0.0
    %795 = vmatprep.subr.mxu0 0.0
    %796 = vmatpush1.xpose.msra.mxu0 0.0
    %797 = vmatprep.subr.mxu0 0.0
    %798 = vmatpush1.xpose.msra.mxu0 0.0
    %799 = vmatprep.subr.mxu0 0.0
    %800 = vmatpush1.xpose.msra.mxu0 0.0
    %801 = vmatprep.mubr.f32.mxu0 0.0
    %802 = vmatmul.mubr.f32.gmra.mrb[0].mxu0 %v733
    %v803 = vpop.f32.mrb[0].mxu0
    %v804 = vadd.f32 0.0, %v803
    %v805 = vpop.f32.mrb[0].mxu0
    %806 = vdwg.mxu0
    %807 = vrot.lane.b32.xlu0 %v259, 96
    %v808 = vpop.permute.xlu0 %807
    %v809 = vsel %vm276, %v245, 0
    %v811 = vsel %vm276, %v808, 0
    %813 = vmatprep.subr.mxu0 0.0
    %814 = vmatpush1.xpose.msra.mxu0 %v811
    %815 = vmatprep.subr.mxu0 0.0
    %816 = vmatpush1.xpose.msra.mxu0 0.0
    %817 = vmatprep.subr.mxu0 0.0
    %818 = vmatpush1.xpose.msra.mxu0 0.0
    %819 = vmatprep.subr.mxu0 0.0
    %820 = vmatpush1.xpose.msra.mxu0 0.0
    %821 = vmatprep.subr.mxu0 0.0
    %822 = vmatpush1.xpose.msra.mxu0 0.0
    %823 = vmatprep.subr.mxu0 0.0
    %824 = vmatpush1.xpose.msra.mxu0 0.0
    %825 = vmatprep.subr.mxu0 0.0
    %826 = vmatpush1.xpose.msra.mxu0 0.0
    %827 = vmatprep.subr.mxu0 0.0
    %828 = vmatpush1.xpose.msra.mxu0 0.0
    %829 = vmatprep.subr.mxu0 0.0
    %830 = vmatpush1.xpose.msra.mxu0 0.0
    %831 = vmatprep.subr.mxu0 0.0
    %832 = vmatpush1.xpose.msra.mxu0 0.0
    %833 = vmatprep.subr.mxu0 0.0
    %834 = vmatpush1.xpose.msra.mxu0 0.0
    %835 = vmatprep.subr.mxu0 0.0
    %836 = vmatpush1.xpose.msra.mxu0 0.0
    %837 = vmatprep.subr.mxu0 0.0
    %838 = vmatpush1.xpose.msra.mxu0 0.0
    %839 = vmatprep.subr.mxu0 0.0
    %840 = vmatpush1.xpose.msra.mxu0 0.0
    %841 = vmatprep.subr.mxu0 0.0
    %842 = vmatpush1.xpose.msra.mxu0 0.0
    %843 = vmatprep.subr.mxu0 0.0
    %844 = vmatpush1.xpose.msra.mxu0 0.0
    %845 = vmatprep.subr.mxu0 0.0
    %846 = vmatpush1.xpose.msra.mxu0 0.0
    %847 = vmatprep.subr.mxu0 0.0
    %848 = vmatpush1.xpose.msra.mxu0 0.0
    %849 = vmatprep.subr.mxu0 0.0
    %850 = vmatpush1.xpose.msra.mxu0 0.0
    %851 = vmatprep.subr.mxu0 0.0
    %852 = vmatpush1.xpose.msra.mxu0 0.0
    %853 = vmatprep.subr.mxu0 0.0
    %854 = vmatpush1.xpose.msra.mxu0 0.0
    %855 = vmatprep.subr.mxu0 0.0
    %856 = vmatpush1.xpose.msra.mxu0 0.0
    %857 = vmatprep.subr.mxu0 0.0
    %858 = vmatpush1.xpose.msra.mxu0 0.0
    %859 = vmatprep.subr.mxu0 0.0
    %860 = vmatpush1.xpose.msra.mxu0 0.0
    %861 = vmatprep.subr.mxu0 0.0
    %862 = vmatpush1.xpose.msra.mxu0 0.0
    %863 = vmatprep.subr.mxu0 0.0
    %864 = vmatpush1.xpose.msra.mxu0 0.0
    %865 = vmatprep.subr.mxu0 0.0
    %866 = vmatpush1.xpose.msra.mxu0 0.0
    %867 = vmatprep.subr.mxu0 0.0
    %868 = vmatpush1.xpose.msra.mxu0 0.0
    %869 = vmatprep.subr.mxu0 0.0
    %870 = vmatpush1.xpose.msra.mxu0 0.0
    %871 = vmatprep.subr.mxu0 0.0
    %872 = vmatpush1.xpose.msra.mxu0 0.0
    %873 = vmatprep.subr.mxu0 0.0
    %874 = vmatpush1.xpose.msra.mxu0 0.0
    %875 = vmatprep.subr.mxu0 0.0
    %876 = vmatpush1.xpose.msra.mxu0 0.0
    %877 = vmatprep.mubr.f32.mxu0 0.0
    %878 = vmatmul.mubr.f32.gmra.mrb[0].mxu0 %v809
    %v879 = vpop.f32.mrb[0].mxu0
    %v880 = vadd.f32 0.0, %v879
    %v881 = vpop.f32.mrb[0].mxu0
    %882 = vdwg.mxu0
    %v883 = vsel %vm276, %v348, -inf
    %884 = vmax.xlane.f32.xlu0 %v883
    %v885 = vpop.xlane.xlu0 %884
    %v886 = vsel %vm276, %v424, -inf
    %887 = vmax.xlane.f32.xlu0 %v886
    %v888 = vpop.xlane.xlu0 %887
    %v889 = vsel %vm276, %v500, -inf
    %890 = vmax.xlane.f32.xlu0 %v889
    %v891 = vpop.xlane.xlu0 %890
    %v892 = vsel %vm276, %v576, -inf
    %893 = vmax.xlane.f32.xlu0 %v892
    %v894 = vpop.xlane.xlu0 %893
    %v895 = vsel %vm276, %v652, -inf
    %896 = vmax.xlane.f32.xlu0 %v895
    %v897 = vpop.xlane.xlu0 %896
    %v898 = vsel %vm276, %v728, -inf
    %899 = vmax.xlane.f32.xlu0 %v898
    %v900 = vpop.xlane.xlu0 %899
    %v901 = vsel %vm276, %v804, -inf
    %902 = vmax.xlane.f32.xlu0 %v901
    %v903 = vpop.xlane.xlu0 %902
    %v904 = vsel %vm276, %v880, -inf
    %905 = vmax.xlane.f32.xlu0 %v904
    %v906 = vpop.xlane.xlu0 %905
    %v907 = vsub.f32 %v348, %v885
    %v908 = vsub.f32 %v424, %v888
    %v909 = vsub.f32 %v500, %v891
    %v910 = vsub.f32 %v576, %v894
    %v911 = vsub.f32 %v652, %v897
    %v912 = vsub.f32 %v728, %v900
    %v913 = vsub.f32 %v804, %v903
    %v914 = vsub.f32 %v880, %v906
    %v915 = vmul.f32 %v907, 1.442695
    %v916 = vpow.pop %v915
    %v917 = vmul.f32 %v908, 1.442695
    %v918 = vpow.pop %v917
    %v919 = vmul.f32 %v909, 1.442695
    %v920 = vpow.pop %v919
    %v921 = vmul.f32 %v910, 1.442695
    %v922 = vpow.pop %v921
    %v923 = vmul.f32 %v911, 1.442695
    %v924 = vpow.pop %v923
    %v925 = vmul.f32 %v912, 1.442695
    %v926 = vpow.pop %v925
    %v927 = vmul.f32 %v913, 1.442695
    %v928 = vpow.pop %v927
    %v929 = vmul.f32 %v914, 1.442695
    %v930 = vpow.pop %v929
    %v931 = vsel %vm276, %v916, 0.0
    %932 = vadd.xlane.f32.xlu0 %v931
    %v933 = vpop.xlane.xlu0 %932
    %v934 = vsel %vm276, %v918, 0.0
    %935 = vadd.xlane.f32.xlu0 %v934
    %v936 = vpop.xlane.xlu0 %935
    %v937 = vsel %vm276, %v920, 0.0
    %938 = vadd.xlane.f32.xlu0 %v937
    %v939 = vpop.xlane.xlu0 %938
    %v940 = vsel %vm276, %v922, 0.0
    %941 = vadd.xlane.f32.xlu0 %v940
    %v942 = vpop.xlane.xlu0 %941
    %v943 = vsel %vm276, %v924, 0.0
    %944 = vadd.xlane.f32.xlu0 %v943
    %v945 = vpop.xlane.xlu0 %944
    %v946 = vsel %vm276, %v926, 0.0
    %947 = vadd.xlane.f32.xlu0 %v946
    %v948 = vpop.xlane.xlu0 %947
    %v949 = vsel %vm276, %v928, 0.0
    %950 = vadd.xlane.f32.xlu0 %v949
    %v951 = vpop.xlane.xlu0 %950
    %v952 = vsel %vm276, %v930, 0.0
    %953 = vadd.xlane.f32.xlu0 %v952
    %v954 = vpop.xlane.xlu0 %953
    %v955 = vrcp.pop %v933
    %v956 = vmul.f32 %v916, %v955
    %v957 = vrcp.pop %v936
    %v958 = vmul.f32 %v918, %v957
    %v959 = vrcp.pop %v939
    %v960 = vmul.f32 %v920, %v959
    %v961 = vrcp.pop %v942
    %v962 = vmul.f32 %v922, %v961
    %v963 = vrcp.pop %v945
    %v964 = vmul.f32 %v924, %v963
    %v965 = vrcp.pop %v948
    %v966 = vmul.f32 %v926, %v965
    %v967 = vrcp.pop %v951
    %v968 = vmul.f32 %v928, %v967
    %v969 = vrcp.pop %v954
    %v970 = vmul.f32 %v930, %v969
    %971 = vrot.lane.b32.xlu0 %v228, 64
    %v972 = vpop.permute.xlu0 %971
    %v975 = vsel %vm276, %v956, 0
    %977 = vmatprep.subr.mxu0 0.0
    %978 = vmatpush1.msra.mxu0 %v972
    %979 = vmatprep.subr.mxu0 0.0
    %980 = vmatpush1.msra.mxu0 0.0
    %981 = vmatprep.subr.mxu0 0.0
    %982 = vmatpush1.msra.mxu0 0.0
    %983 = vmatprep.subr.mxu0 0.0
    %984 = vmatpush1.msra.mxu0 0.0
    %985 = vmatprep.subr.mxu0 0.0
    %986 = vmatpush1.msra.mxu0 0.0
    %987 = vmatprep.subr.mxu0 0.0
    %988 = vmatpush1.msra.mxu0 0.0
    %989 = vmatprep.subr.mxu0 0.0
    %990 = vmatpush1.msra.mxu0 0.0
    %991 = vmatprep.subr.mxu0 0.0
    %992 = vmatpush1.msra.mxu0 0.0
    %993 = vmatprep.subr.mxu0 0.0
    %994 = vmatpush1.msra.mxu0 0.0
    %995 = vmatprep.subr.mxu0 0.0
    %996 = vmatpush1.msra.mxu0 0.0
    %997 = vmatprep.subr.mxu0 0.0
    %998 = vmatpush1.msra.mxu0 0.0
    %999 = vmatprep.subr.mxu0 0.0
    %1000 = vmatpush1.msra.mxu0 0.0
    %1001 = vmatprep.subr.mxu0 0.0
    %1002 = vmatpush1.msra.mxu0 0.0
    %1003 = vmatprep.subr.mxu0 0.0
    %1004 = vmatpush1.msra.mxu0 0.0
    %1005 = vmatprep.subr.mxu0 0.0
    %1006 = vmatpush1.msra.mxu0 0.0
    %1007 = vmatprep.subr.mxu0 0.0
    %1008 = vmatpush1.msra.mxu0 0.0
    %1009 = vmatprep.subr.mxu0 0.0
    %1010 = vmatpush1.msra.mxu0 0.0
    %1011 = vmatprep.subr.mxu0 0.0
    %1012 = vmatpush1.msra.mxu0 0.0
    %1013 = vmatprep.subr.mxu0 0.0
    %1014 = vmatpush1.msra.mxu0 0.0
    %1015 = vmatprep.subr.mxu0 0.0
    %1016 = vmatpush1.msra.mxu0 0.0
    %1017 = vmatprep.subr.mxu0 0.0
    %1018 = vmatpush1.msra.mxu0 0.0
    %1019 = vmatprep.subr.mxu0 0.0
    %1020 = vmatpush1.msra.mxu0 0.0
    %1021 = vmatprep.subr.mxu0 0.0
    %1022 = vmatpush1.msra.mxu0 0.0
    %1023 = vmatprep.subr.mxu0 0.0
    %1024 = vmatpush1.msra.mxu0 0.0
    %1025 = vmatprep.subr.mxu0 0.0
    %1026 = vmatpush1.msra.mxu0 0.0
    %1027 = vmatprep.subr.mxu0 0.0
    %1028 = vmatpush1.msra.mxu0 0.0
    %1029 = vmatprep.subr.mxu0 0.0
    %1030 = vmatpush1.msra.mxu0 0.0
    %1031 = vmatprep.subr.mxu0 0.0
    %1032 = vmatpush1.msra.mxu0 0.0
    %1033 = vmatprep.subr.mxu0 0.0
    %1034 = vmatpush1.msra.mxu0 0.0
    %1035 = vmatprep.subr.mxu0 0.0
    %1036 = vmatpush1.msra.mxu0 0.0
    %1037 = vmatprep.subr.mxu0 0.0
    %1038 = vmatpush1.msra.mxu0 0.0
    %1039 = vmatprep.subr.mxu0 0.0
    %1040 = vmatpush1.msra.mxu0 0.0
    %1041 = vmatprep.mubr.f32.mxu0 0.0
    %1042 = vmatmul.mubr.f32.gmra.mrb[0].mxu0 %v975
    %v1043 = vpop.f32.mrb[0].mxu0
    %v1044 = vadd.f32 0.0, %v1043
    %v1045 = vpop.f32.mrb[0].mxu0
    %1046 = vdwg.mxu0
    %1047 = vrot.lane.b32.xlu0 %v262, 64
    %v1048 = vpop.permute.xlu0 %1047
    %v1051 = vsel %vm276, %v958, 0
    %1053 = vmatprep.subr.mxu0 0.0
    %1054 = vmatpush1.msra.mxu0 %v1048
    %1055 = vmatprep.subr.mxu0 0.0
    %1056 = vmatpush1.msra.mxu0 0.0
    %1057 = vmatprep.subr.mxu0 0.0
    %1058 = vmatpush1.msra.mxu0 0.0
    %1059 = vmatprep.subr.mxu0 0.0
    %1060 = vmatpush1.msra.mxu0 0.0
    %1061 = vmatprep.subr.mxu0 0.0
    %1062 = vmatpush1.msra.mxu0 0.0
    %1063 = vmatprep.subr.mxu0 0.0
    %1064 = vmatpush1.msra.mxu0 0.0
    %1065 = vmatprep.subr.mxu0 0.0
    %1066 = vmatpush1.msra.mxu0 0.0
    %1067 = vmatprep.subr.mxu0 0.0
    %1068 = vmatpush1.msra.mxu0 0.0
    %1069 = vmatprep.subr.mxu0 0.0
    %1070 = vmatpush1.msra.mxu0 0.0
    %1071 = vmatprep.subr.mxu0 0.0
    %1072 = vmatpush1.msra.mxu0 0.0
    %1073 = vmatprep.subr.mxu0 0.0
    %1074 = vmatpush1.msra.mxu0 0.0
    %1075 = vmatprep.subr.mxu0 0.0
    %1076 = vmatpush1.msra.mxu0 0.0
    %1077 = vmatprep.subr.mxu0 0.0
    %1078 = vmatpush1.msra.mxu0 0.0
    %1079 = vmatprep.subr.mxu0 0.0
    %1080 = vmatpush1.msra.mxu0 0.0
    %1081 = vmatprep.subr.mxu0 0.0
    %1082 = vmatpush1.msra.mxu0 0.0
    %1083 = vmatprep.subr.mxu0 0.0
    %1084 = vmatpush1.msra.mxu0 0.0
    %1085 = vmatprep.subr.mxu0 0.0
    %1086 = vmatpush1.msra.mxu0 0.0
    %1087 = vmatprep.subr.mxu0 0.0
    %1088 = vmatpush1.msra.mxu0 0.0
    %1089 = vmatprep.subr.mxu0 0.0
    %1090 = vmatpush1.msra.mxu0 0.0
    %1091 = vmatprep.subr.mxu0 0.0
    %1092 = vmatpush1.msra.mxu0 0.0
    %1093 = vmatprep.subr.mxu0 0.0
    %1094 = vmatpush1.msra.mxu0 0.0
    %1095 = vmatprep.subr.mxu0 0.0
    %1096 = vmatpush1.msra.mxu0 0.0
    %1097 = vmatprep.subr.mxu0 0.0
    %1098 = vmatpush1.msra.mxu0 0.0
    %1099 = vmatprep.subr.mxu0 0.0
    %1100 = vmatpush1.msra.mxu0 0.0
    %1101 = vmatprep.subr.mxu0 0.0
    %1102 = vmatpush1.msra.mxu0 0.0
    %1103 = vmatprep.subr.mxu0 0.0
    %1104 = vmatpush1.msra.mxu0 0.0
    %1105 = vmatprep.subr.mxu0 0.0
    %1106 = vmatpush1.msra.mxu0 0.0
    %1107 = vmatprep.subr.mxu0 0.0
    %1108 = vmatpush1.msra.mxu0 0.0
    %1109 = vmatprep.subr.mxu0 0.0
    %1110 = vmatpush1.msra.mxu0 0.0
    %1111 = vmatprep.subr.mxu0 0.0
    %1112 = vmatpush1.msra.mxu0 0.0
    %1113 = vmatprep.subr.mxu0 0.0
    %1114 = vmatpush1.msra.mxu0 0.0
    %1115 = vmatprep.subr.mxu0 0.0
    %1116 = vmatpush1.msra.mxu0 0.0
    %1117 = vmatprep.mubr.f32.mxu0 0.0
    %1118 = vmatmul.mubr.f32.gmra.mrb[0].mxu0 %v1051
    %v1119 = vpop.f32.mrb[0].mxu0
    %v1120 = vadd.f32 0.0, %v1119
    %v1121 = vpop.f32.mrb[0].mxu0
    %1122 = vdwg.mxu0
    %1123 = vrot.lane.b32.xlu0 %v264, 64
    %v1124 = vpop.permute.xlu0 %1123
    %v1127 = vsel %vm276, %v960, 0
    %1129 = vmatprep.subr.mxu0 0.0
    %1130 = vmatpush1.msra.mxu0 %v1124
    %1131 = vmatprep.subr.mxu0 0.0
    %1132 = vmatpush1.msra.mxu0 0.0
    %1133 = vmatprep.subr.mxu0 0.0
    %1134 = vmatpush1.msra.mxu0 0.0
    %1135 = vmatprep.subr.mxu0 0.0
    %1136 = vmatpush1.msra.mxu0 0.0
    %1137 = vmatprep.subr.mxu0 0.0
    %1138 = vmatpush1.msra.mxu0 0.0
    %1139 = vmatprep.subr.mxu0 0.0
    %1140 = vmatpush1.msra.mxu0 0.0
    %1141 = vmatprep.subr.mxu0 0.0
    %1142 = vmatpush1.msra.mxu0 0.0
    %1143 = vmatprep.subr.mxu0 0.0
    %1144 = vmatpush1.msra.mxu0 0.0
    %1145 = vmatprep.subr.mxu0 0.0
    %1146 = vmatpush1.msra.mxu0 0.0
    %1147 = vmatprep.subr.mxu0 0.0
    %1148 = vmatpush1.msra.mxu0 0.0
    %1149 = vmatprep.subr.mxu0 0.0
    %1150 = vmatpush1.msra.mxu0 0.0
    %1151 = vmatprep.subr.mxu0 0.0
    %1152 = vmatpush1.msra.mxu0 0.0
    %1153 = vmatprep.subr.mxu0 0.0
    %1154 = vmatpush1.msra.mxu0 0.0
    %1155 = vmatprep.subr.mxu0 0.0
    %1156 = vmatpush1.msra.mxu0 0.0
    %1157 = vmatprep.subr.mxu0 0.0
    %1158 = vmatpush1.msra.mxu0 0.0
    %1159 = vmatprep.subr.mxu0 0.0
    %1160 = vmatpush1.msra.mxu0 0.0
    %1161 = vmatprep.subr.mxu0 0.0
    %1162 = vmatpush1.msra.mxu0 0.0
    %1163 = vmatprep.subr.mxu0 0.0
    %1164 = vmatpush1.msra.mxu0 0.0
    %1165 = vmatprep.subr.mxu0 0.0
    %1166 = vmatpush1.msra.mxu0 0.0
    %1167 = vmatprep.subr.mxu0 0.0
    %1168 = vmatpush1.msra.mxu0 0.0
    %1169 = vmatprep.subr.mxu0 0.0
    %1170 = vmatpush1.msra.mxu0 0.0
    %1171 = vmatprep.subr.mxu0 0.0
    %1172 = vmatpush1.msra.mxu0 0.0
    %1173 = vmatprep.subr.mxu0 0.0
    %1174 = vmatpush1.msra.mxu0 0.0
    %1175 = vmatprep.subr.mxu0 0.0
    %1176 = vmatpush1.msra.mxu0 0.0
    %1177 = vmatprep.subr.mxu0 0.0
    %1178 = vmatpush1.msra.mxu0 0.0
    %1179 = vmatprep.subr.mxu0 0.0
    %1180 = vmatpush1.msra.mxu0 0.0
    %1181 = vmatprep.subr.mxu0 0.0
    %1182 = vmatpush1.msra.mxu0 0.0
    %1183 = vmatprep.subr.mxu0 0.0
    %1184 = vmatpush1.msra.mxu0 0.0
    %1185 = vmatprep.subr.mxu0 0.0
    %1186 = vmatpush1.msra.mxu0 0.0
    %1187 = vmatprep.subr.mxu0 0.0
    %1188 = vmatpush1.msra.mxu0 0.0
    %1189 = vmatprep.subr.mxu0 0.0
    %1190 = vmatpush1.msra.mxu0 0.0
    %1191 = vmatprep.subr.mxu0 0.0
    %1192 = vmatpush1.msra.mxu0 0.0
    %1193 = vmatprep.mubr.f32.mxu0 0.0
    %1194 = vmatmul.mubr.f32.gmra.mrb[0].mxu0 %v1127
    %v1195 = vpop.f32.mrb[0].mxu0
    %v1196 = vadd.f32 0.0, %v1195
    %v1197 = vpop.f32.mrb[0].mxu0
    %1198 = vdwg.mxu0
    %1199 = vrot.lane.b32.xlu0 %v266, 64
    %v1200 = vpop.permute.xlu0 %1199
    %v1203 = vsel %vm276, %v962, 0
    %1205 = vmatprep.subr.mxu0 0.0
    %1206 = vmatpush1.msra.mxu0 %v1200
    %1207 = vmatprep.subr.mxu0 0.0
    %1208 = vmatpush1.msra.mxu0 0.0
    %1209 = vmatprep.subr.mxu0 0.0
    %1210 = vmatpush1.msra.mxu0 0.0
    %1211 = vmatprep.subr.mxu0 0.0
    %1212 = vmatpush1.msra.mxu0 0.0
    %1213 = vmatprep.subr.mxu0 0.0
    %1214 = vmatpush1.msra.mxu0 0.0
    %1215 = vmatprep.subr.mxu0 0.0
    %1216 = vmatpush1.msra.mxu0 0.0
    %1217 = vmatprep.subr.mxu0 0.0
    %1218 = vmatpush1.msra.mxu0 0.0
    %1219 = vmatprep.subr.mxu0 0.0
    %1220 = vmatpush1.msra.mxu0 0.0
    %1221 = vmatprep.subr.mxu0 0.0
    %1222 = vmatpush1.msra.mxu0 0.0
    %1223 = vmatprep.subr.mxu0 0.0
    %1224 = vmatpush1.msra.mxu0 0.0
    %1225 = vmatprep.subr.mxu0 0.0
    %1226 = vmatpush1.msra.mxu0 0.0
    %1227 = vmatprep.subr.mxu0 0.0
    %1228 = vmatpush1.msra.mxu0 0.0
    %1229 = vmatprep.subr.mxu0 0.0
    %1230 = vmatpush1.msra.mxu0 0.0
    %1231 = vmatprep.subr.mxu0 0.0
    %1232 = vmatpush1.msra.mxu0 0.0
    %1233 = vmatprep.subr.mxu0 0.0
    %1234 = vmatpush1.msra.mxu0 0.0
    %1235 = vmatprep.subr.mxu0 0.0
    %1236 = vmatpush1.msra.mxu0 0.0
    %1237 = vmatprep.subr.mxu0 0.0
    %1238 = vmatpush1.msra.mxu0 0.0
    %1239 = vmatprep.subr.mxu0 0.0
    %1240 = vmatpush1.msra.mxu0 0.0
    %1241 = vmatprep.subr.mxu0 0.0
    %1242 = vmatpush1.msra.mxu0 0.0
    %1243 = vmatprep.subr.mxu0 0.0
    %1244 = vmatpush1.msra.mxu0 0.0
    %1245 = vmatprep.subr.mxu0 0.0
    %1246 = vmatpush1.msra.mxu0 0.0
    %1247 = vmatprep.subr.mxu0 0.0
    %1248 = vmatpush1.msra.mxu0 0.0
    %1249 = vmatprep.subr.mxu0 0.0
    %1250 = vmatpush1.msra.mxu0 0.0
    %1251 = vmatprep.subr.mxu0 0.0
    %1252 = vmatpush1.msra.mxu0 0.0
    %1253 = vmatprep.subr.mxu0 0.0
    %1254 = vmatpush1.msra.mxu0 0.0
    %1255 = vmatprep.subr.mxu0 0.0
    %1256 = vmatpush1.msra.mxu0 0.0
    %1257 = vmatprep.subr.mxu0 0.0
    %1258 = vmatpush1.msra.mxu0 0.0
    %1259 = vmatprep.subr.mxu0 0.0
    %1260 = vmatpush1.msra.mxu0 0.0
    %1261 = vmatprep.subr.mxu0 0.0
    %1262 = vmatpush1.msra.mxu0 0.0
    %1263 = vmatprep.subr.mxu0 0.0
    %1264 = vmatpush1.msra.mxu0 0.0
    %1265 = vmatprep.subr.mxu0 0.0
    %1266 = vmatpush1.msra.mxu0 0.0
    %1267 = vmatprep.subr.mxu0 0.0
    %1268 = vmatpush1.msra.mxu0 0.0
    %1269 = vmatprep.mubr.f32.mxu0 0.0
    %1270 = vmatmul.mubr.f32.gmra.mrb[0].mxu0 %v1203
    %v1271 = vpop.f32.mrb[0].mxu0
    %v1272 = vadd.f32 0.0, %v1271
    %v1273 = vpop.f32.mrb[0].mxu0
    %1274 = vdwg.mxu0
    %1275 = vrot.lane.b32.xlu0 %v229, 64
    %v1276 = vpop.permute.xlu0 %1275
    %v1279 = vsel %vm276, %v964, 0
    %1281 = vmatprep.subr.mxu0 0.0
    %1282 = vmatpush1.msra.mxu0 %v1276
    %1283 = vmatprep.subr.mxu0 0.0
    %1284 = vmatpush1.msra.mxu0 0.0
    %1285 = vmatprep.subr.mxu0 0.0
    %1286 = vmatpush1.msra.mxu0 0.0
    %1287 = vmatprep.subr.mxu0 0.0
    %1288 = vmatpush1.msra.mxu0 0.0
    %1289 = vmatprep.subr.mxu0 0.0
    %1290 = vmatpush1.msra.mxu0 0.0
    %1291 = vmatprep.subr.mxu0 0.0
    %1292 = vmatpush1.msra.mxu0 0.0
    %1293 = vmatprep.subr.mxu0 0.0
    %1294 = vmatpush1.msra.mxu0 0.0
    %1295 = vmatprep.subr.mxu0 0.0
    %1296 = vmatpush1.msra.mxu0 0.0
    %1297 = vmatprep.subr.mxu0 0.0
    %1298 = vmatpush1.msra.mxu0 0.0
    %1299 = vmatprep.subr.mxu0 0.0
    %1300 = vmatpush1.msra.mxu0 0.0
    %1301 = vmatprep.subr.mxu0 0.0
    %1302 = vmatpush1.msra.mxu0 0.0
    %1303 = vmatprep.subr.mxu0 0.0
    %1304 = vmatpush1.msra.mxu0 0.0
    %1305 = vmatprep.subr.mxu0 0.0
    %1306 = vmatpush1.msra.mxu0 0.0
    %1307 = vmatprep.subr.mxu0 0.0
    %1308 = vmatpush1.msra.mxu0 0.0
    %1309 = vmatprep.subr.mxu0 0.0
    %1310 = vmatpush1.msra.mxu0 0.0
    %1311 = vmatprep.subr.mxu0 0.0
    %1312 = vmatpush1.msra.mxu0 0.0
    %1313 = vmatprep.subr.mxu0 0.0
    %1314 = vmatpush1.msra.mxu0 0.0
    %1315 = vmatprep.subr.mxu0 0.0
    %1316 = vmatpush1.msra.mxu0 0.0
    %1317 = vmatprep.subr.mxu0 0.0
    %1318 = vmatpush1.msra.mxu0 0.0
    %1319 = vmatprep.subr.mxu0 0.0
    %1320 = vmatpush1.msra.mxu0 0.0
    %1321 = vmatprep.subr.mxu0 0.0
    %1322 = vmatpush1.msra.mxu0 0.0
    %1323 = vmatprep.subr.mxu0 0.0
    %1324 = vmatpush1.msra.mxu0 0.0
    %1325 = vmatprep.subr.mxu0 0.0
    %1326 = vmatpush1.msra.mxu0 0.0
    %1327 = vmatprep.subr.mxu0 0.0
    %1328 = vmatpush1.msra.mxu0 0.0
    %1329 = vmatprep.subr.mxu0 0.0
    %1330 = vmatpush1.msra.mxu0 0.0
    %1331 = vmatprep.subr.mxu0 0.0
    %1332 = vmatpush1.msra.mxu0 0.0
    %1333 = vmatprep.subr.mxu0 0.0
    %1334 = vmatpush1.msra.mxu0 0.0
    %1335 = vmatprep.subr.mxu0 0.0
    %1336 = vmatpush1.msra.mxu0 0.0
    %1337 = vmatprep.subr.mxu0 0.0
    %1338 = vmatpush1.msra.mxu0 0.0
    %1339 = vmatprep.subr.mxu0 0.0
    %1340 = vmatpush1.msra.mxu0 0.0
    %1341 = vmatprep.subr.mxu0 0.0
    %1342 = vmatpush1.msra.mxu0 0.0
    %1343 = vmatprep.subr.mxu0 0.0
    %1344 = vmatpush1.msra.mxu0 0.0
    %1345 = vmatprep.mubr.f32.mxu0 0.0
    %1346 = vmatmul.mubr.f32.gmra.mrb[0].mxu0 %v1279
    %v1347 = vpop.f32.mrb[0].mxu0
    %v1348 = vadd.f32 0.0, %v1347
    %v1349 = vpop.f32.mrb[0].mxu0
    %1350 = vdwg.mxu0
    %1351 = vrot.lane.b32.xlu0 %v269, 64
    %v1352 = vpop.permute.xlu0 %1351
    %v1355 = vsel %vm276, %v966, 0
    %1357 = vmatprep.subr.mxu0 0.0
    %1358 = vmatpush1.msra.mxu0 %v1352
    %1359 = vmatprep.subr.mxu0 0.0
    %1360 = vmatpush1.msra.mxu0 0.0
    %1361 = vmatprep.subr.mxu0 0.0
    %1362 = vmatpush1.msra.mxu0 0.0
    %1363 = vmatprep.subr.mxu0 0.0
    %1364 = vmatpush1.msra.mxu0 0.0
    %1365 = vmatprep.subr.mxu0 0.0
    %1366 = vmatpush1.msra.mxu0 0.0
    %1367 = vmatprep.subr.mxu0 0.0
    %1368 = vmatpush1.msra.mxu0 0.0
    %1369 = vmatprep.subr.mxu0 0.0
    %1370 = vmatpush1.msra.mxu0 0.0
    %1371 = vmatprep.subr.mxu0 0.0
    %1372 = vmatpush1.msra.mxu0 0.0
    %1373 = vmatprep.subr.mxu0 0.0
    %1374 = vmatpush1.msra.mxu0 0.0
    %1375 = vmatprep.subr.mxu0 0.0
    %1376 = vmatpush1.msra.mxu0 0.0
    %1377 = vmatprep.subr.mxu0 0.0
    %1378 = vmatpush1.msra.mxu0 0.0
    %1379 = vmatprep.subr.mxu0 0.0
    %1380 = vmatpush1.msra.mxu0 0.0
    %1381 = vmatprep.subr.mxu0 0.0
    %1382 = vmatpush1.msra.mxu0 0.0
    %1383 = vmatprep.subr.mxu0 0.0
    %1384 = vmatpush1.msra.mxu0 0.0
    %1385 = vmatprep.subr.mxu0 0.0
    %1386 = vmatpush1.msra.mxu0 0.0
    %1387 = vmatprep.subr.mxu0 0.0
    %1388 = vmatpush1.msra.mxu0 0.0
    %1389 = vmatprep.subr.mxu0 0.0
    %1390 = vmatpush1.msra.mxu0 0.0
    %1391 = vmatprep.subr.mxu0 0.0
    %1392 = vmatpush1.msra.mxu0 0.0
    %1393 = vmatprep.subr.mxu0 0.0
    %1394 = vmatpush1.msra.mxu0 0.0
    %1395 = vmatprep.subr.mxu0 0.0
    %1396 = vmatpush1.msra.mxu0 0.0
    %1397 = vmatprep.subr.mxu0 0.0
    %1398 = vmatpush1.msra.mxu0 0.0
    %1399 = vmatprep.subr.mxu0 0.0
    %1400 = vmatpush1.msra.mxu0 0.0
    %1401 = vmatprep.subr.mxu0 0.0
    %1402 = vmatpush1.msra.mxu0 0.0
    %1403 = vmatprep.subr.mxu0 0.0
    %1404 = vmatpush1.msra.mxu0 0.0
    %1405 = vmatprep.subr.mxu0 0.0
    %1406 = vmatpush1.msra.mxu0 0.0
    %1407 = vmatprep.subr.mxu0 0.0
    %1408 = vmatpush1.msra.mxu0 0.0
    %1409 = vmatprep.subr.mxu0 0.0
    %1410 = vmatpush1.msra.mxu0 0.0
    %1411 = vmatprep.subr.mxu0 0.0
    %1412 = vmatpush1.msra.mxu0 0.0
    %1413 = vmatprep.subr.mxu0 0.0
    %1414 = vmatpush1.msra.mxu0 0.0
    %1415 = vmatprep.subr.mxu0 0.0
    %1416 = vmatpush1.msra.mxu0 0.0
    %1417 = vmatprep.subr.mxu0 0.0
    %1418 = vmatpush1.msra.mxu0 0.0
    %1419 = vmatprep.subr.mxu0 0.0
    %1420 = vmatpush1.msra.mxu0 0.0
    %1421 = vmatprep.mubr.f32.mxu0 0.0
    %1422 = vmatmul.mubr.f32.gmra.mrb[0].mxu0 %v1355
    %v1423 = vpop.f32.mrb[0].mxu0
    %v1424 = vadd.f32 0.0, %v1423
    %v1425 = vpop.f32.mrb[0].mxu0
    %1426 = vdwg.mxu0
    %1427 = vrot.lane.b32.xlu0 %v271, 64
    %v1428 = vpop.permute.xlu0 %1427
    %v1431 = vsel %vm276, %v968, 0
    %1433 = vmatprep.subr.mxu0 0.0
    %1434 = vmatpush1.msra.mxu0 %v1428
    %1435 = vmatprep.subr.mxu0 0.0
    %1436 = vmatpush1.msra.mxu0 0.0
    %1437 = vmatprep.subr.mxu0 0.0
    %1438 = vmatpush1.msra.mxu0 0.0
    %1439 = vmatprep.subr.mxu0 0.0
    %1440 = vmatpush1.msra.mxu0 0.0
    %1441 = vmatprep.subr.mxu0 0.0
    %1442 = vmatpush1.msra.mxu0 0.0
    %1443 = vmatprep.subr.mxu0 0.0
    %1444 = vmatpush1.msra.mxu0 0.0
    %1445 = vmatprep.subr.mxu0 0.0
    %1446 = vmatpush1.msra.mxu0 0.0
    %1447 = vmatprep.subr.mxu0 0.0
    %1448 = vmatpush1.msra.mxu0 0.0
    %1449 = vmatprep.subr.mxu0 0.0
    %1450 = vmatpush1.msra.mxu0 0.0
    %1451 = vmatprep.subr.mxu0 0.0
    %1452 = vmatpush1.msra.mxu0 0.0
    %1453 = vmatprep.subr.mxu0 0.0
    %1454 = vmatpush1.msra.mxu0 0.0
    %1455 = vmatprep.subr.mxu0 0.0
    %1456 = vmatpush1.msra.mxu0 0.0
    %1457 = vmatprep.subr.mxu0 0.0
    %1458 = vmatpush1.msra.mxu0 0.0
    %1459 = vmatprep.subr.mxu0 0.0
    %1460 = vmatpush1.msra.mxu0 0.0
    %1461 = vmatprep.subr.mxu0 0.0
    %1462 = vmatpush1.msra.mxu0 0.0
    %1463 = vmatprep.subr.mxu0 0.0
    %1464 = vmatpush1.msra.mxu0 0.0
    %1465 = vmatprep.subr.mxu0 0.0
    %1466 = vmatpush1.msra.mxu0 0.0
    %1467 = vmatprep.subr.mxu0 0.0
    %1468 = vmatpush1.msra.mxu0 0.0
    %1469 = vmatprep.subr.mxu0 0.0
    %1470 = vmatpush1.msra.mxu0 0.0
    %1471 = vmatprep.subr.mxu0 0.0
    %1472 = vmatpush1.msra.mxu0 0.0
    %1473 = vmatprep.subr.mxu0 0.0
    %1474 = vmatpush1.msra.mxu0 0.0
    %1475 = vmatprep.subr.mxu0 0.0
    %1476 = vmatpush1.msra.mxu0 0.0
    %1477 = vmatprep.subr.mxu0 0.0
    %1478 = vmatpush1.msra.mxu0 0.0
    %1479 = vmatprep.subr.mxu0 0.0
    %1480 = vmatpush1.msra.mxu0 0.0
    %1481 = vmatprep.subr.mxu0 0.0
    %1482 = vmatpush1.msra.mxu0 0.0
    %1483 = vmatprep.subr.mxu0 0.0
    %1484 = vmatpush1.msra.mxu0 0.0
    %1485 = vmatprep.subr.mxu0 0.0
    %1486 = vmatpush1.msra.mxu0 0.0
    %1487 = vmatprep.subr.mxu0 0.0
    %1488 = vmatpush1.msra.mxu0 0.0
    %1489 = vmatprep.subr.mxu0 0.0
    %1490 = vmatpush1.msra.mxu0 0.0
    %1491 = vmatprep.subr.mxu0 0.0
    %1492 = vmatpush1.msra.mxu0 0.0
    %1493 = vmatprep.subr.mxu0 0.0
    %1494 = vmatpush1.msra.mxu0 0.0
    %1495 = vmatprep.subr.mxu0 0.0
    %1496 = vmatpush1.msra.mxu0 0.0
    %1497 = vmatprep.mubr.f32.mxu0 0.0
    %1498 = vmatmul.mubr.f32.gmra.mrb[0].mxu0 %v1431
    %v1499 = vpop.f32.mrb[0].mxu0
    %v1500 = vadd.f32 0.0, %v1499
    %v1501 = vpop.f32.mrb[0].mxu0
    %1502 = vdwg.mxu0
    %1503 = vrot.lane.b32.xlu0 %v273, 64
    %v1504 = vpop.permute.xlu0 %1503
    %v1507 = vsel %vm276, %v970, 0
    %1509 = vmatprep.subr.mxu0 0.0
    %1510 = vmatpush1.msra.mxu0 %v1504
    %1511 = vmatprep.subr.mxu0 0.0
    %1512 = vmatpush1.msra.mxu0 0.0
    %1513 = vmatprep.subr.mxu0 0.0
    %1514 = vmatpush1.msra.mxu0 0.0
    %1515 = vmatprep.subr.mxu0 0.0
    %1516 = vmatpush1.msra.mxu0 0.0
    %1517 = vmatprep.subr.mxu0 0.0
    %1518 = vmatpush1.msra.mxu0 0.0
    %1519 = vmatprep.subr.mxu0 0.0
    %1520 = vmatpush1.msra.mxu0 0.0
    %1521 = vmatprep.subr.mxu0 0.0
    %1522 = vmatpush1.msra.mxu0 0.0
    %1523 = vmatprep.subr.mxu0 0.0
    %1524 = vmatpush1.msra.mxu0 0.0
    %1525 = vmatprep.subr.mxu0 0.0
    %1526 = vmatpush1.msra.mxu0 0.0
    %1527 = vmatprep.subr.mxu0 0.0
    %1528 = vmatpush1.msra.mxu0 0.0
    %1529 = vmatprep.subr.mxu0 0.0
    %1530 = vmatpush1.msra.mxu0 0.0
    %1531 = vmatprep.subr.mxu0 0.0
    %1532 = vmatpush1.msra.mxu0 0.0
    %1533 = vmatprep.subr.mxu0 0.0
    %1534 = vmatpush1.msra.mxu0 0.0
    %1535 = vmatprep.subr.mxu0 0.0
    %1536 = vmatpush1.msra.mxu0 0.0
    %1537 = vmatprep.subr.mxu0 0.0
    %1538 = vmatpush1.msra.mxu0 0.0
    %1539 = vmatprep.subr.mxu0 0.0
    %1540 = vmatpush1.msra.mxu0 0.0
    %1541 = vmatprep.subr.mxu0 0.0
    %1542 = vmatpush1.msra.mxu0 0.0
    %1543 = vmatprep.subr.mxu0 0.0
    %1544 = vmatpush1.msra.mxu0 0.0
    %1545 = vmatprep.subr.mxu0 0.0
    %1546 = vmatpush1.msra.mxu0 0.0
    %1547 = vmatprep.subr.mxu0 0.0
    %1548 = vmatpush1.msra.mxu0 0.0
    %1549 = vmatprep.subr.mxu0 0.0
    %1550 = vmatpush1.msra.mxu0 0.0
    %1551 = vmatprep.subr.mxu0 0.0
    %1552 = vmatpush1.msra.mxu0 0.0
    %1553 = vmatprep.subr.mxu0 0.0
    %1554 = vmatpush1.msra.mxu0 0.0
    %1555 = vmatprep.subr.mxu0 0.0
    %1556 = vmatpush1.msra.mxu0 0.0
    %1557 = vmatprep.subr.mxu0 0.0
    %1558 = vmatpush1.msra.mxu0 0.0
    %1559 = vmatprep.subr.mxu0 0.0
    %1560 = vmatpush1.msra.mxu0 0.0
    %1561 = vmatprep.subr.mxu0 0.0
    %1562 = vmatpush1.msra.mxu0 0.0
    %1563 = vmatprep.subr.mxu0 0.0
    %1564 = vmatpush1.msra.mxu0 0.0
    %1565 = vmatprep.subr.mxu0 0.0
    %1566 = vmatpush1.msra.mxu0 0.0
    %1567 = vmatprep.subr.mxu0 0.0
    %1568 = vmatpush1.msra.mxu0 0.0
    %1569 = vmatprep.subr.mxu0 0.0
    %1570 = vmatpush1.msra.mxu0 0.0
    %1571 = vmatprep.subr.mxu0 0.0
    %1572 = vmatpush1.msra.mxu0 0.0
    %1573 = vmatprep.mubr.f32.mxu0 0.0
    %1574 = vmatmul.mubr.f32.gmra.mrb[0].mxu0 %v1507
    %v1575 = vpop.f32.mrb[0].mxu0
    %v1576 = vadd.f32 0.0, %v1575
    %v1577 = vpop.f32.mrb[0].mxu0
    %1578 = vdwg.mxu0
    %1580 = vrot.lane.b32.xlu0 %v1120, 8
    %v1581 = vpop.permute.xlu0 %1580
    %1584 = vrot.lane.b32.xlu0 %v1196, 16
    %v1585 = vpop.permute.xlu0 %1584
    %1588 = vrot.lane.b32.xlu0 %v1272, 24
    %v1589 = vpop.permute.xlu0 %1588
    %v1591 = vsel %vm276, %v1044, %v1581
    %vm1592 = vcmask 130048
    %v1593 = vsel %vm1592, %v1591, %v1585
    %vm1594 = vcmask 195584
    %v1595 = vsel %vm1594, %v1593, %v1589
    %1597 = vrot.lane.b32.xlu0 %v1424, 8
    %v1598 = vpop.permute.xlu0 %1597
    %1601 = vrot.lane.b32.xlu0 %v1500, 16
    %v1602 = vpop.permute.xlu0 %1601
    %1605 = vrot.lane.b32.xlu0 %v1576, 24
    %v1606 = vpop.permute.xlu0 %1605
    %v1608 = vsel %vm276, %v1348, %v1598
    %v1609 = vsel %vm1592, %v1608, %v1602
    %v1610 = vsel %vm1594, %v1609, %v1606
    %v1611 = vld [vmem:[%s4] sm:$0xff]
    %v1612 = vld [vmem:[%s4 + $0x8] sm:$0xff]
    %v1613 = vld [vmem:[%s4 + $0x10] sm:$0xff]
    %v1614 = vld [vmem:[%s4 + $0x18] sm:$0xff]
    %v1615 = vlaneseq
    %v1616 = vshrl.u32 %v1615, 7
    %v1617 = vsub.s32 3, %v1616
    %v1618 = vrot.slane %v98, %v1617
    %v1620 = vsel %vm106, %v1595, 0
    %v1623 = vsel %vm106, %v1610, 0
    %1625 = vmatprep.subr.mxu0 0.0
    %1626 = vmatpush1.msra.mxu0 %v1611
    %1627 = vmatprep.subr.mxu0 0.0
    %1628 = vmatpush1.msra.mxu0 %v1612
    %1629 = vmatprep.subr.mxu0 0.0
    %1630 = vmatpush1.msra.mxu0 %v1613
    %1631 = vmatprep.subr.mxu0 0.0
    %1632 = vmatpush1.msra.mxu0 %v1614
    %1633 = vmatprep.subr.mxu0 0.0
    %1634 = vmatpush1.msra.mxu0 0.0
    %1635 = vmatprep.subr.mxu0 0.0
    %1636 = vmatpush1.msra.mxu0 0.0
    %1637 = vmatprep.subr.mxu0 0.0
    %1638 = vmatpush1.msra.mxu0 0.0
    %1639 = vmatprep.subr.mxu0 0.0
    %1640 = vmatpush1.msra.mxu0 0.0
    %1641 = vmatprep.subr.mxu0 0.0
    %1642 = vmatpush1.msra.mxu0 0.0
    %1643 = vmatprep.subr.mxu0 0.0
    %1644 = vmatpush1.msra.mxu0 0.0
    %1645 = vmatprep.subr.mxu0 0.0
    %1646 = vmatpush1.msra.mxu0 0.0
    %1647 = vmatprep.subr.mxu0 0.0
    %1648 = vmatpush1.msra.mxu0 0.0
    %1649 = vmatprep.subr.mxu0 0.0
    %1650 = vmatpush1.msra.mxu0 0.0
    %1651 = vmatprep.subr.mxu0 0.0
    %1652 = vmatpush1.msra.mxu0 0.0
    %1653 = vmatprep.subr.mxu0 0.0
    %1654 = vmatpush1.msra.mxu0 0.0
    %1655 = vmatprep.subr.mxu0 0.0
    %1656 = vmatpush1.msra.mxu0 0.0
    %1657 = vmatprep.subr.mxu0 0.0
    %1658 = vmatpush1.msra.mxu0 0.0
    %1659 = vmatprep.subr.mxu0 0.0
    %1660 = vmatpush1.msra.mxu0 0.0
    %1661 = vmatprep.subr.mxu0 0.0
    %1662 = vmatpush1.msra.mxu0 0.0
    %1663 = vmatprep.subr.mxu0 0.0
    %1664 = vmatpush1.msra.mxu0 0.0
    %1665 = vmatprep.subr.mxu0 0.0
    %1666 = vmatpush1.msra.mxu0 0.0
    %1667 = vmatprep.subr.mxu0 0.0
    %1668 = vmatpush1.msra.mxu0 0.0
    %1669 = vmatprep.subr.mxu0 0.0
    %1670 = vmatpush1.msra.mxu0 0.0
    %1671 = vmatprep.subr.mxu0 0.0
    %1672 = vmatpush1.msra.mxu0 0.0
    %1673 = vmatprep.subr.mxu0 0.0
    %1674 = vmatpush1.msra.mxu0 0.0
    %1675 = vmatprep.subr.mxu0 0.0
    %1676 = vmatpush1.msra.mxu0 0.0
    %1677 = vmatprep.subr.mxu0 0.0
    %1678 = vmatpush1.msra.mxu0 0.0
    %1679 = vmatprep.subr.mxu0 0.0
    %1680 = vmatpush1.msra.mxu0 0.0
    %1681 = vmatprep.subr.mxu0 0.0
    %1682 = vmatpush1.msra.mxu0 0.0
    %1683 = vmatprep.subr.mxu0 0.0
    %1684 = vmatpush1.msra.mxu0 0.0
    %1685 = vmatprep.subr.mxu0 0.0
    %1686 = vmatpush1.msra.mxu0 0.0
    %1687 = vmatprep.subr.mxu0 0.0
    %1688 = vmatpush1.msra.mxu0 0.0
    %1689 = vmatprep.mubr.f32.mxu0 0.0
    %1690 = vmatmul.mubr.f32.gmra.mrb[0].mxu0 %v1620
    %v1691 = vpop.f32.mrb[0].mxu0
    %v1692 = vadd.f32 %v1618, %v1691
    %v1693 = vpop.f32.mrb[0].mxu0
    %1694 = vmatprep.mubr.f32.mxu0 0.0
    %1695 = vmatmul.mubr.f32.gmra.mrb[0].mxu0 %v1623
    %v1696 = vpop.f32.mrb[0].mxu0
    %v1697 = vadd.f32 %v1618, %v1696
    %v1698 = vpop.f32.mrb[0].mxu0
    %1699 = vdwg.mxu0
    %v1700 = vadd.f32 %v86, %v1692
    %v1701 = vadd.f32 %v87, %v1697
    %v1702 = vsel %vm106, %v1700, 0.0
    %1703 = vadd.xlane.f32.xlu0 %v1702
    %v1704 = vpop.xlane.xlu0 %1703
    %v1705 = vsel %vm106, %v1701, 0.0
    %1706 = vadd.xlane.f32.xlu0 %v1705
    %v1707 = vpop.xlane.xlu0 %1706
    %v1708 = vrcp.pop 32.0
    %v1709 = vmul.f32 %v1704, %v1708
    %v1710 = vmul.f32 %v1707, %v1708
    %v1711 = vsub.f32 %v1700, %v1709
    %v1712 = vsub.f32 %v1701, %v1710
    %v1713 = vmul.f32 %v1711, %v1711
    %v1714 = vmul.f32 %v1712, %v1712
    %v1715 = vsel %vm106, %v1713, 0.0
    %1716 = vadd.xlane.f32.xlu0 %v1715
    %v1717 = vpop.xlane.xlu0 %1716
    %v1718 = vsel %vm106, %v1714, 0.0
    %1719 = vadd.xlane.f32.xlu0 %v1718
    %v1720 = vpop.xlane.xlu0 %1719
    %v1721 = vmul.f32 %v1717, %v1708
    %v1722 = vmul.f32 %v1720, %v1708
    %v1723 = vadd.f32 %v1721, 1e-05
    %v1724 = vadd.f32 %v1722, 1e-05
    %v1725 = vrsqrt.pop %v1723
    %v1726 = vrsqrt.pop %v1724
    %v1727 = vmul.f32 %v1711, %v1725
    %v1728 = vmul.f32 %v1712, %v1726
    %v1729 = vlaneseq
    %v1730 = vshrl.u32 %v1729, 7
    %v1731 = vsub.s32 1, %v1730
    %v1732 = vrot.slane %v99, %v1731
    %v1733 = vmul.f32 %v1727, %v1732
    %v1734 = vmul.f32 %v1728, %v1732
    %v1735 = vlaneseq
    %v1736 = vshrl.u32 %v1735, 7
    %v1737 = vsub.s32 2, %v1736
    %v1738 = vrot.slane %v99, %v1737
    %v1739 = vadd.f32 %v1733, %v1738
    %v1740 = vadd.f32 %v1734, %v1738
    %v1741 = vadd.f32 %v1739, %v88
    %v1742 = vadd.f32 %v1740, %v89
    %v1743 = vld [vmem:[%s5] sm:$0xff]
    %v1744 = vld [vmem:[%s5 + $0x8] sm:$0xff]
    %v1745 = vld [vmem:[%s5 + $0x10] sm:$0xff]
    %v1746 = vld [vmem:[%s5 + $0x18] sm:$0xff]
    %v1748 = vsel %vm106, %v1741, 0
    %v1751 = vsel %vm106, %v1742, 0
    %v1754 = vsel %vm106, %v90, 0
    %v1757 = vsel %vm106, %v91, 0
    %v1760 = vsel %vm106, %v92, 0
    %v1763 = vsel %vm106, %v93, 0
    %v1766 = vsel %vm106, %v94, 0
    %v1769 = vsel %vm106, %v95, 0
    %v1772 = vsel %vm106, %v96, 0
    %v1775 = vsel %vm106, %v97, 0
    %1777 = vmatprep.subr.mxu0 0.0
    %1778 = vmatpush1.msra.mxu0 %v1743
    %1779 = vmatprep.subr.mxu0 0.0
    %1780 = vmatpush1.msra.mxu0 %v1744
    %1781 = vmatprep.subr.mxu0 0.0
    %1782 = vmatpush1.msra.mxu0 %v1745
    %1783 = vmatprep.subr.mxu0 0.0
    %1784 = vmatpush1.msra.mxu0 %v1746
    %1785 = vmatprep.subr.mxu0 0.0
    %1786 = vmatpush1.msra.mxu0 0.0
    %1787 = vmatprep.subr.mxu0 0.0
    %1788 = vmatpush1.msra.mxu0 0.0
    %1789 = vmatprep.subr.mxu0 0.0
    %1790 = vmatpush1.msra.mxu0 0.0
    %1791 = vmatprep.subr.mxu0 0.0
    %1792 = vmatpush1.msra.mxu0 0.0
    %1793 = vmatprep.subr.mxu0 0.0
    %1794 = vmatpush1.msra.mxu0 0.0
    %1795 = vmatprep.subr.mxu0 0.0
    %1796 = vmatpush1.msra.mxu0 0.0
    %1797 = vmatprep.subr.mxu0 0.0
    %1798 = vmatpush1.msra.mxu0 0.0
    %1799 = vmatprep.subr.mxu0 0.0
    %1800 = vmatpush1.msra.mxu0 0.0
    %1801 = vmatprep.subr.mxu0 0.0
    %1802 = vmatpush1.msra.mxu0 0.0
    %1803 = vmatprep.subr.mxu0 0.0
    %1804 = vmatpush1.msra.mxu0 0.0
    %1805 = vmatprep.subr.mxu0 0.0
    %1806 = vmatpush1.msra.mxu0 0.0
    %1807 = vmatprep.subr.mxu0 0.0
    %1808 = vmatpush1.msra.mxu0 0.0
    %1809 = vmatprep.subr.mxu0 0.0
    %1810 = vmatpush1.msra.mxu0 0.0
    %1811 = vmatprep.subr.mxu0 0.0
    %1812 = vmatpush1.msra.mxu0 0.0
    %1813 = vmatprep.subr.mxu0 0.0
    %1814 = vmatpush1.msra.mxu0 0.0
    %1815 = vmatprep.subr.mxu0 0.0
    %1816 = vmatpush1.msra.mxu0 0.0
    %1817 = vmatprep.subr.mxu0 0.0
    %1818 = vmatpush1.msra.mxu0 0.0
    %1819 = vmatprep.subr.mxu0 0.0
    %1820 = vmatpush1.msra.mxu0 0.0
    %1821 = vmatprep.subr.mxu0 0.0
    %1822 = vmatpush1.msra.mxu0 0.0
    %1823 = vmatprep.subr.mxu0 0.0
    %1824 = vmatpush1.msra.mxu0 0.0
    %1825 = vmatprep.subr.mxu0 0.0
    %1826 = vmatpush1.msra.mxu0 0.0
    %1827 = vmatprep.subr.mxu0 0.0
    %1828 = vmatpush1.msra.mxu0 0.0
    %1829 = vmatprep.subr.mxu0 0.0
    %1830 = vmatpush1.msra.mxu0 0.0
    %1831 = vmatprep.subr.mxu0 0.0
    %1832 = vmatpush1.msra.mxu0 0.0
    %1833 = vmatprep.subr.mxu0 0.0
    %1834 = vmatpush1.msra.mxu0 0.0
    %1835 = vmatprep.subr.mxu0 0.0
    %1836 = vmatpush1.msra.mxu0 0.0
    %1837 = vmatprep.subr.mxu0 0.0
    %1838 = vmatpush1.msra.mxu0 0.0
    %1839 = vmatprep.subr.mxu0 0.0
    %1840 = vmatpush1.msra.mxu0 0.0
    %1841 = vmatprep.mubr.f32.mxu0 0.0
    %1842 = vmatmul.mubr.f32.gmra.mrb[0].mxu0 %v1748
    %v1843 = vpop.f32.mrb[0].mxu0
    %v1844 = vadd.f32 0.0, %v1843
    %v1845 = vpop.f32.mrb[0].mxu0
    %1846 = vmatprep.mubr.f32.mxu0 0.0
    %1847 = vmatmul.mubr.f32.gmra.mrb[0].mxu0 %v1751
    %v1848 = vpop.f32.mrb[0].mxu0
    %v1849 = vadd.f32 0.0, %v1848
    %v1850 = vpop.f32.mrb[0].mxu0
    %1851 = vmatprep.mubr.f32.mxu0 0.0
    %1852 = vmatmul.mubr.f32.gmra.mrb[0].mxu0 %v1754
    %v1853 = vpop.f32.mrb[0].mxu0
    %v1854 = vadd.f32 0.0, %v1853
    %v1855 = vpop.f32.mrb[0].mxu0
    %1856 = vmatprep.mubr.f32.mxu0 0.0
    %1857 = vmatmul.mubr.f32.gmra.mrb[0].mxu0 %v1757
    %v1858 = vpop.f32.mrb[0].mxu0
    %v1859 = vadd.f32 0.0, %v1858
    %v1860 = vpop.f32.mrb[0].mxu0
    %1861 = vmatprep.mubr.f32.mxu0 0.0
    %1862 = vmatmul.mubr.f32.gmra.mrb[0].mxu0 %v1760
    %v1863 = vpop.f32.mrb[0].mxu0
    %v1864 = vadd.f32 0.0, %v1863
    %v1865 = vpop.f32.mrb[0].mxu0
    %1866 = vmatprep.mubr.f32.mxu0 0.0
    %1867 = vmatmul.mubr.f32.gmra.mrb[0].mxu0 %v1763
    %v1868 = vpop.f32.mrb[0].mxu0
    %v1869 = vadd.f32 0.0, %v1868
    %v1870 = vpop.f32.mrb[0].mxu0
    %1871 = vmatprep.mubr.f32.mxu0 0.0
    %1872 = vmatmul.mubr.f32.gmra.mrb[0].mxu0 %v1766
    %v1873 = vpop.f32.mrb[0].mxu0
    %v1874 = vadd.f32 0.0, %v1873
    %v1875 = vpop.f32.mrb[0].mxu0
    %1876 = vmatprep.mubr.f32.mxu0 0.0
    %1877 = vmatmul.mubr.f32.gmra.mrb[0].mxu0 %v1769
    %v1878 = vpop.f32.mrb[0].mxu0
    %v1879 = vadd.f32 0.0, %v1878
    %v1880 = vpop.f32.mrb[0].mxu0
    %1881 = vmatprep.mubr.f32.mxu0 0.0
    %1882 = vmatmul.mubr.f32.gmra.mrb[0].mxu0 %v1772
    %v1883 = vpop.f32.mrb[0].mxu0
    %v1884 = vadd.f32 0.0, %v1883
    %v1885 = vpop.f32.mrb[0].mxu0
    %1886 = vmatprep.mubr.f32.mxu0 0.0
    %1887 = vmatmul.mubr.f32.gmra.mrb[0].mxu0 %v1775
    %v1888 = vpop.f32.mrb[0].mxu0
    %v1889 = vadd.f32 0.0, %v1888
    %v1890 = vpop.f32.mrb[0].mxu0
    %1891 = vdwg.mxu0
    %v1892 = vlaneseq
    %v1893 = vshrl.u32 %v1892, 7
    %v1894 = vsub.s32 4, %v1893
    %v1895 = vrot.slane %v98, %v1894
    %v1896 = vadd.f32 %v1844, %v1895
    %v1897 = vadd.f32 %v1849, %v1895
    %v1898 = vlaneseq
    %v1899 = vshrl.u32 %v1898, 7
    %v1900 = vsub.s32 5, %v1899
    %v1901 = vrot.slane %v98, %v1900
    %1903 = vrot.lane.b32.xlu0 %v1901, 32
    %v1904 = vpop.permute.xlu0 %1903
    %v1906 = vadd.f32 %v1854, %v1904
    %v1907 = vadd.f32 %v1859, %v1904
    %v1908 = vadd.f32 %v1864, %v1904
    %v1909 = vadd.f32 %v1869, %v1904
    %v1910 = vlaneseq
    %v1911 = vshrl.u32 %v1910, 7
    %v1912 = vsub.s32 6, %v1911
    %v1913 = vrot.slane %v98, %v1912
    %1915 = vrot.lane.b32.xlu0 %v1913, 64
    %v1916 = vpop.permute.xlu0 %1915
    %v1918 = vadd.f32 %v1874, %v1916
    %v1919 = vadd.f32 %v1879, %v1916
    %v1920 = vadd.f32 %v1884, %v1916
    %v1921 = vadd.f32 %v1889, %v1916
    %v1922 = vmul.f32 %v1896, 0.35355338
    %v1923 = vmul.f32 %v1897, 0.35355338
    %1925 = vrot.lane.b32.xlu0 %v1922, 120
    %v1926 = vpop.permute.xlu0 %1925
    %1927 = vrot.lane.b32.xlu0 %v1922, 112
    %v1928 = vpop.permute.xlu0 %1927
    %1929 = vrot.lane.b32.xlu0 %v1922, 104
    %v1930 = vpop.permute.xlu0 %1929
    %1932 = vrot.lane.b32.xlu0 %v1923, 120
    %v1933 = vpop.permute.xlu0 %1932
    %1934 = vrot.lane.b32.xlu0 %v1923, 112
    %v1935 = vpop.permute.xlu0 %1934
    %1936 = vrot.lane.b32.xlu0 %v1923, 104
    %v1937 = vpop.permute.xlu0 %1936
    %1940 = vrot.lane.b32.xlu0 %v1906, 120
    %v1941 = vpop.permute.xlu0 %1940
    %1942 = vrot.lane.b32.xlu0 %v1907, 120
    %v1943 = vpop.permute.xlu0 %1942
    %1944 = vrot.lane.b32.xlu0 %v1906, 112
    %v1945 = vpop.permute.xlu0 %1944
    %1946 = vrot.lane.b32.xlu0 %v1907, 112
    %v1947 = vpop.permute.xlu0 %1946
    %1948 = vrot.lane.b32.xlu0 %v1906, 104
    %v1949 = vpop.permute.xlu0 %1948
    %1950 = vrot.lane.b32.xlu0 %v1907, 104
    %v1951 = vpop.permute.xlu0 %1950
    %1954 = vrot.lane.b32.xlu0 %v1908, 120
    %v1955 = vpop.permute.xlu0 %1954
    %1956 = vrot.lane.b32.xlu0 %v1909, 120
    %v1957 = vpop.permute.xlu0 %1956
    %1958 = vrot.lane.b32.xlu0 %v1908, 112
    %v1959 = vpop.permute.xlu0 %1958
    %1960 = vrot.lane.b32.xlu0 %v1909, 112
    %v1961 = vpop.permute.xlu0 %1960
    %1962 = vrot.lane.b32.xlu0 %v1908, 104
    %v1963 = vpop.permute.xlu0 %1962
    %1964 = vrot.lane.b32.xlu0 %v1909, 104
    %v1965 = vpop.permute.xlu0 %1964
    %1968 = vrot.lane.b32.xlu0 %v1918, 120
    %v1969 = vpop.permute.xlu0 %1968
    %1970 = vrot.lane.b32.xlu0 %v1919, 120
    %v1971 = vpop.permute.xlu0 %1970
    %1972 = vrot.lane.b32.xlu0 %v1918, 112
    %v1973 = vpop.permute.xlu0 %1972
    %1974 = vrot.lane.b32.xlu0 %v1919, 112
    %v1975 = vpop.permute.xlu0 %1974
    %1976 = vrot.lane.b32.xlu0 %v1918, 104
    %v1977 = vpop.permute.xlu0 %1976
    %1978 = vrot.lane.b32.xlu0 %v1919, 104
    %v1979 = vpop.permute.xlu0 %1978
    %1982 = vrot.lane.b32.xlu0 %v1920, 120
    %v1983 = vpop.permute.xlu0 %1982
    %1984 = vrot.lane.b32.xlu0 %v1921, 120
    %v1985 = vpop.permute.xlu0 %1984
    %1986 = vrot.lane.b32.xlu0 %v1920, 112
    %v1987 = vpop.permute.xlu0 %1986
    %1988 = vrot.lane.b32.xlu0 %v1921, 112
    %v1989 = vpop.permute.xlu0 %1988
    %1990 = vrot.lane.b32.xlu0 %v1920, 104
    %v1991 = vpop.permute.xlu0 %1990
    %1992 = vrot.lane.b32.xlu0 %v1921, 104
    %v1993 = vpop.permute.xlu0 %1992
    %1994 = vrot.lane.b32.xlu0 %v1906, 96
    %v1995 = vpop.permute.xlu0 %1994
    %1996 = vrot.lane.b32.xlu0 %v1907, 96
    %v1997 = vpop.permute.xlu0 %1996
    %v1998 = vsel %vm276, %v1922, 0
    %v2000 = vsel %vm276, %v1995, 0
    %v2002 = vsel %vm276, %v1997, 0
    %2004 = vmatprep.subr.mxu0 0.0
    %2005 = vmatpush1.xpose.msra.mxu0 %v2000
    %2006 = vmatprep.subr.mxu0 0.0
    %2007 = vmatpush1.xpose.msra.mxu0 %v2002
    %2008 = vmatprep.subr.mxu0 0.0
    %2009 = vmatpush1.xpose.msra.mxu0 0.0
    %2010 = vmatprep.subr.mxu0 0.0
    %2011 = vmatpush1.xpose.msra.mxu0 0.0
    %2012 = vmatprep.subr.mxu0 0.0
    %2013 = vmatpush1.xpose.msra.mxu0 0.0
    %2014 = vmatprep.subr.mxu0 0.0
    %2015 = vmatpush1.xpose.msra.mxu0 0.0
    %2016 = vmatprep.subr.mxu0 0.0
    %2017 = vmatpush1.xpose.msra.mxu0 0.0
    %2018 = vmatprep.subr.mxu0 0.0
    %2019 = vmatpush1.xpose.msra.mxu0 0.0
    %2020 = vmatprep.subr.mxu0 0.0
    %2021 = vmatpush1.xpose.msra.mxu0 0.0
    %2022 = vmatprep.subr.mxu0 0.0
    %2023 = vmatpush1.xpose.msra.mxu0 0.0
    %2024 = vmatprep.subr.mxu0 0.0
    %2025 = vmatpush1.xpose.msra.mxu0 0.0
    %2026 = vmatprep.subr.mxu0 0.0
    %2027 = vmatpush1.xpose.msra.mxu0 0.0
    %2028 = vmatprep.subr.mxu0 0.0
    %2029 = vmatpush1.xpose.msra.mxu0 0.0
    %2030 = vmatprep.subr.mxu0 0.0
    %2031 = vmatpush1.xpose.msra.mxu0 0.0
    %2032 = vmatprep.subr.mxu0 0.0
    %2033 = vmatpush1.xpose.msra.mxu0 0.0
    %2034 = vmatprep.subr.mxu0 0.0
    %2035 = vmatpush1.xpose.msra.mxu0 0.0
    %2036 = vmatprep.subr.mxu0 0.0
    %2037 = vmatpush1.xpose.msra.mxu0 0.0
    %2038 = vmatprep.subr.mxu0 0.0
    %2039 = vmatpush1.xpose.msra.mxu0 0.0
    %2040 = vmatprep.subr.mxu0 0.0
    %2041 = vmatpush1.xpose.msra.mxu0 0.0
    %2042 = vmatprep.subr.mxu0 0.0
    %2043 = vmatpush1.xpose.msra.mxu0 0.0
    %2044 = vmatprep.subr.mxu0 0.0
    %2045 = vmatpush1.xpose.msra.mxu0 0.0
    %2046 = vmatprep.subr.mxu0 0.0
    %2047 = vmatpush1.xpose.msra.mxu0 0.0
    %2048 = vmatprep.subr.mxu0 0.0
    %2049 = vmatpush1.xpose.msra.mxu0 0.0
    %2050 = vmatprep.subr.mxu0 0.0
    %2051 = vmatpush1.xpose.msra.mxu0 0.0
    %2052 = vmatprep.subr.mxu0 0.0
    %2053 = vmatpush1.xpose.msra.mxu0 0.0
    %2054 = vmatprep.subr.mxu0 0.0
    %2055 = vmatpush1.xpose.msra.mxu0 0.0
    %2056 = vmatprep.subr.mxu0 0.0
    %2057 = vmatpush1.xpose.msra.mxu0 0.0
    %2058 = vmatprep.subr.mxu0 0.0
    %2059 = vmatpush1.xpose.msra.mxu0 0.0
    %2060 = vmatprep.subr.mxu0 0.0
    %2061 = vmatpush1.xpose.msra.mxu0 0.0
    %2062 = vmatprep.subr.mxu0 0.0
    %2063 = vmatpush1.xpose.msra.mxu0 0.0
    %2064 = vmatprep.subr.mxu0 0.0
    %2065 = vmatpush1.xpose.msra.mxu0 0.0
    %2066 = vmatprep.subr.mxu0 0.0
    %2067 = vmatpush1.xpose.msra.mxu0 0.0
    %2068 = vmatprep.mubr.f32.mxu0 0.0
    %2069 = vmatmul.mubr.f32.gmra.mrb[0].mxu0 %v1998
    %v2070 = vpop.f32.mrb[0].mxu0
    %v2071 = vadd.f32 0.0, %v2070
    %v2072 = vpop.f32.mrb[0].mxu0
    %2073 = vdwg.mxu0
    %2074 = vrot.lane.b32.xlu0 %v1941, 96
    %v2075 = vpop.permute.xlu0 %2074
    %2076 = vrot.lane.b32.xlu0 %v1943, 96
    %v2077 = vpop.permute.xlu0 %2076
    %v2078 = vsel %vm276, %v1926, 0
    %v2080 = vsel %vm276, %v2075, 0
    %v2082 = vsel %vm276, %v2077, 0
    %2084 = vmatprep.subr.mxu0 0.0
    %2085 = vmatpush1.xpose.msra.mxu0 %v2080
    %2086 = vmatprep.subr.mxu0 0.0
    %2087 = vmatpush1.xpose.msra.mxu0 %v2082
    %2088 = vmatprep.subr.mxu0 0.0
    %2089 = vmatpush1.xpose.msra.mxu0 0.0
    %2090 = vmatprep.subr.mxu0 0.0
    %2091 = vmatpush1.xpose.msra.mxu0 0.0
    %2092 = vmatprep.subr.mxu0 0.0
    %2093 = vmatpush1.xpose.msra.mxu0 0.0
    %2094 = vmatprep.subr.mxu0 0.0
    %2095 = vmatpush1.xpose.msra.mxu0 0.0
    %2096 = vmatprep.subr.mxu0 0.0
    %2097 = vmatpush1.xpose.msra.mxu0 0.0
    %2098 = vmatprep.subr.mxu0 0.0
    %2099 = vmatpush1.xpose.msra.mxu0 0.0
    %2100 = vmatprep.subr.mxu0 0.0
    %2101 = vmatpush1.xpose.msra.mxu0 0.0
    %2102 = vmatprep.subr.mxu0 0.0
    %2103 = vmatpush1.xpose.msra.mxu0 0.0
    %2104 = vmatprep.subr.mxu0 0.0
    %2105 = vmatpush1.xpose.msra.mxu0 0.0
    %2106 = vmatprep.subr.mxu0 0.0
    %2107 = vmatpush1.xpose.msra.mxu0 0.0
    %2108 = vmatprep.subr.mxu0 0.0
    %2109 = vmatpush1.xpose.msra.mxu0 0.0
    %2110 = vmatprep.subr.mxu0 0.0
    %2111 = vmatpush1.xpose.msra.mxu0 0.0
    %2112 = vmatprep.subr.mxu0 0.0
    %2113 = vmatpush1.xpose.msra.mxu0 0.0
    %2114 = vmatprep.subr.mxu0 0.0
    %2115 = vmatpush1.xpose.msra.mxu0 0.0
    %2116 = vmatprep.subr.mxu0 0.0
    %2117 = vmatpush1.xpose.msra.mxu0 0.0
    %2118 = vmatprep.subr.mxu0 0.0
    %2119 = vmatpush1.xpose.msra.mxu0 0.0
    %2120 = vmatprep.subr.mxu0 0.0
    %2121 = vmatpush1.xpose.msra.mxu0 0.0
    %2122 = vmatprep.subr.mxu0 0.0
    %2123 = vmatpush1.xpose.msra.mxu0 0.0
    %2124 = vmatprep.subr.mxu0 0.0
    %2125 = vmatpush1.xpose.msra.mxu0 0.0
    %2126 = vmatprep.subr.mxu0 0.0
    %2127 = vmatpush1.xpose.msra.mxu0 0.0
    %2128 = vmatprep.subr.mxu0 0.0
    %2129 = vmatpush1.xpose.msra.mxu0 0.0
    %2130 = vmatprep.subr.mxu0 0.0
    %2131 = vmatpush1.xpose.msra.mxu0 0.0
    %2132 = vmatprep.subr.mxu0 0.0
    %2133 = vmatpush1.xpose.msra.mxu0 0.0
    %2134 = vmatprep.subr.mxu0 0.0
    %2135 = vmatpush1.xpose.msra.mxu0 0.0
    %2136 = vmatprep.subr.mxu0 0.0
    %2137 = vmatpush1.xpose.msra.mxu0 0.0
    %2138 = vmatprep.subr.mxu0 0.0
    %2139 = vmatpush1.xpose.msra.mxu0 0.0
    %2140 = vmatprep.subr.mxu0 0.0
    %2141 = vmatpush1.xpose.msra.mxu0 0.0
    %2142 = vmatprep.subr.mxu0 0.0
    %2143 = vmatpush1.xpose.msra.mxu0 0.0
    %2144 = vmatprep.subr.mxu0 0.0
    %2145 = vmatpush1.xpose.msra.mxu0 0.0
    %2146 = vmatprep.subr.mxu0 0.0
    %2147 = vmatpush1.xpose.msra.mxu0 0.0
    %2148 = vmatprep.mubr.f32.mxu0 0.0
    %2149 = vmatmul.mubr.f32.gmra.mrb[0].mxu0 %v2078
    %v2150 = vpop.f32.mrb[0].mxu0
    %v2151 = vadd.f32 0.0, %v2150
    %v2152 = vpop.f32.mrb[0].mxu0
    %2153 = vdwg.mxu0
    %2154 = vrot.lane.b32.xlu0 %v1945, 96
    %v2155 = vpop.permute.xlu0 %2154
    %2156 = vrot.lane.b32.xlu0 %v1947, 96
    %v2157 = vpop.permute.xlu0 %2156
    %v2158 = vsel %vm276, %v1928, 0
    %v2160 = vsel %vm276, %v2155, 0
    %v2162 = vsel %vm276, %v2157, 0
    %2164 = vmatprep.subr.mxu0 0.0
    %2165 = vmatpush1.xpose.msra.mxu0 %v2160
    %2166 = vmatprep.subr.mxu0 0.0
    %2167 = vmatpush1.xpose.msra.mxu0 %v2162
    %2168 = vmatprep.subr.mxu0 0.0
    %2169 = vmatpush1.xpose.msra.mxu0 0.0
    %2170 = vmatprep.subr.mxu0 0.0
    %2171 = vmatpush1.xpose.msra.mxu0 0.0
    %2172 = vmatprep.subr.mxu0 0.0
    %2173 = vmatpush1.xpose.msra.mxu0 0.0
    %2174 = vmatprep.subr.mxu0 0.0
    %2175 = vmatpush1.xpose.msra.mxu0 0.0
    %2176 = vmatprep.subr.mxu0 0.0
    %2177 = vmatpush1.xpose.msra.mxu0 0.0
    %2178 = vmatprep.subr.mxu0 0.0
    %2179 = vmatpush1.xpose.msra.mxu0 0.0
    %2180 = vmatprep.subr.mxu0 0.0
    %2181 = vmatpush1.xpose.msra.mxu0 0.0
    %2182 = vmatprep.subr.mxu0 0.0
    %2183 = vmatpush1.xpose.msra.mxu0 0.0
    %2184 = vmatprep.subr.mxu0 0.0
    %2185 = vmatpush1.xpose.msra.mxu0 0.0
    %2186 = vmatprep.subr.mxu0 0.0
    %2187 = vmatpush1.xpose.msra.mxu0 0.0
    %2188 = vmatprep.subr.mxu0 0.0
    %2189 = vmatpush1.xpose.msra.mxu0 0.0
    %2190 = vmatprep.subr.mxu0 0.0
    %2191 = vmatpush1.xpose.msra.mxu0 0.0
    %2192 = vmatprep.subr.mxu0 0.0
    %2193 = vmatpush1.xpose.msra.mxu0 0.0
    %2194 = vmatprep.subr.mxu0 0.0
    %2195 = vmatpush1.xpose.msra.mxu0 0.0
    %2196 = vmatprep.subr.mxu0 0.0
    %2197 = vmatpush1.xpose.msra.mxu0 0.0
    %2198 = vmatprep.subr.mxu0 0.0
    %2199 = vmatpush1.xpose.msra.mxu0 0.0
    %2200 = vmatprep.subr.mxu0 0.0
    %2201 = vmatpush1.xpose.msra.mxu0 0.0
    %2202 = vmatprep.subr.mxu0 0.0
    %2203 = vmatpush1.xpose.msra.mxu0 0.0
    %2204 = vmatprep.subr.mxu0 0.0
    %2205 = vmatpush1.xpose.msra.mxu0 0.0
    %2206 = vmatprep.subr.mxu0 0.0
    %2207 = vmatpush1.xpose.msra.mxu0 0.0
    %2208 = vmatprep.subr.mxu0 0.0
    %2209 = vmatpush1.xpose.msra.mxu0 0.0
    %2210 = vmatprep.subr.mxu0 0.0
    %2211 = vmatpush1.xpose.msra.mxu0 0.0
    %2212 = vmatprep.subr.mxu0 0.0
    %2213 = vmatpush1.xpose.msra.mxu0 0.0
    %2214 = vmatprep.subr.mxu0 0.0
    %2215 = vmatpush1.xpose.msra.mxu0 0.0
    %2216 = vmatprep.subr.mxu0 0.0
    %2217 = vmatpush1.xpose.msra.mxu0 0.0
    %2218 = vmatprep.subr.mxu0 0.0
    %2219 = vmatpush1.xpose.msra.mxu0 0.0
    %2220 = vmatprep.subr.mxu0 0.0
    %2221 = vmatpush1.xpose.msra.mxu0 0.0
    %2222 = vmatprep.subr.mxu0 0.0
    %2223 = vmatpush1.xpose.msra.mxu0 0.0
    %2224 = vmatprep.subr.mxu0 0.0
    %2225 = vmatpush1.xpose.msra.mxu0 0.0
    %2226 = vmatprep.subr.mxu0 0.0
    %2227 = vmatpush1.xpose.msra.mxu0 0.0
    %2228 = vmatprep.mubr.f32.mxu0 0.0
    %2229 = vmatmul.mubr.f32.gmra.mrb[0].mxu0 %v2158
    %v2230 = vpop.f32.mrb[0].mxu0
    %v2231 = vadd.f32 0.0, %v2230
    %v2232 = vpop.f32.mrb[0].mxu0
    %2233 = vdwg.mxu0
    %2234 = vrot.lane.b32.xlu0 %v1949, 96
    %v2235 = vpop.permute.xlu0 %2234
    %2236 = vrot.lane.b32.xlu0 %v1951, 96
    %v2237 = vpop.permute.xlu0 %2236
    %v2238 = vsel %vm276, %v1930, 0
    %v2240 = vsel %vm276, %v2235, 0
    %v2242 = vsel %vm276, %v2237, 0
    %2244 = vmatprep.subr.mxu0 0.0
    %2245 = vmatpush1.xpose.msra.mxu0 %v2240
    %2246 = vmatprep.subr.mxu0 0.0
    %2247 = vmatpush1.xpose.msra.mxu0 %v2242
    %2248 = vmatprep.subr.mxu0 0.0
    %2249 = vmatpush1.xpose.msra.mxu0 0.0
    %2250 = vmatprep.subr.mxu0 0.0
    %2251 = vmatpush1.xpose.msra.mxu0 0.0
    %2252 = vmatprep.subr.mxu0 0.0
    %2253 = vmatpush1.xpose.msra.mxu0 0.0
    %2254 = vmatprep.subr.mxu0 0.0
    %2255 = vmatpush1.xpose.msra.mxu0 0.0
    %2256 = vmatprep.subr.mxu0 0.0
    %2257 = vmatpush1.xpose.msra.mxu0 0.0
    %2258 = vmatprep.subr.mxu0 0.0
    %2259 = vmatpush1.xpose.msra.mxu0 0.0
    %2260 = vmatprep.subr.mxu0 0.0
    %2261 = vmatpush1.xpose.msra.mxu0 0.0
    %2262 = vmatprep.subr.mxu0 0.0
    %2263 = vmatpush1.xpose.msra.mxu0 0.0
    %2264 = vmatprep.subr.mxu0 0.0
    %2265 = vmatpush1.xpose.msra.mxu0 0.0
    %2266 = vmatprep.subr.mxu0 0.0
    %2267 = vmatpush1.xpose.msra.mxu0 0.0
    %2268 = vmatprep.subr.mxu0 0.0
    %2269 = vmatpush1.xpose.msra.mxu0 0.0
    %2270 = vmatprep.subr.mxu0 0.0
    %2271 = vmatpush1.xpose.msra.mxu0 0.0
    %2272 = vmatprep.subr.mxu0 0.0
    %2273 = vmatpush1.xpose.msra.mxu0 0.0
    %2274 = vmatprep.subr.mxu0 0.0
    %2275 = vmatpush1.xpose.msra.mxu0 0.0
    %2276 = vmatprep.subr.mxu0 0.0
    %2277 = vmatpush1.xpose.msra.mxu0 0.0
    %2278 = vmatprep.subr.mxu0 0.0
    %2279 = vmatpush1.xpose.msra.mxu0 0.0
    %2280 = vmatprep.subr.mxu0 0.0
    %2281 = vmatpush1.xpose.msra.mxu0 0.0
    %2282 = vmatprep.subr.mxu0 0.0
    %2283 = vmatpush1.xpose.msra.mxu0 0.0
    %2284 = vmatprep.subr.mxu0 0.0
    %2285 = vmatpush1.xpose.msra.mxu0 0.0
    %2286 = vmatprep.subr.mxu0 0.0
    %2287 = vmatpush1.xpose.msra.mxu0 0.0
    %2288 = vmatprep.subr.mxu0 0.0
    %2289 = vmatpush1.xpose.msra.mxu0 0.0
    %2290 = vmatprep.subr.mxu0 0.0
    %2291 = vmatpush1.xpose.msra.mxu0 0.0
    %2292 = vmatprep.subr.mxu0 0.0
    %2293 = vmatpush1.xpose.msra.mxu0 0.0
    %2294 = vmatprep.subr.mxu0 0.0
    %2295 = vmatpush1.xpose.msra.mxu0 0.0
    %2296 = vmatprep.subr.mxu0 0.0
    %2297 = vmatpush1.xpose.msra.mxu0 0.0
    %2298 = vmatprep.subr.mxu0 0.0
    %2299 = vmatpush1.xpose.msra.mxu0 0.0
    %2300 = vmatprep.subr.mxu0 0.0
    %2301 = vmatpush1.xpose.msra.mxu0 0.0
    %2302 = vmatprep.subr.mxu0 0.0
    %2303 = vmatpush1.xpose.msra.mxu0 0.0
    %2304 = vmatprep.subr.mxu0 0.0
    %2305 = vmatpush1.xpose.msra.mxu0 0.0
    %2306 = vmatprep.subr.mxu0 0.0
    %2307 = vmatpush1.xpose.msra.mxu0 0.0
    %2308 = vmatprep.mubr.f32.mxu0 0.0
    %2309 = vmatmul.mubr.f32.gmra.mrb[0].mxu0 %v2238
    %v2310 = vpop.f32.mrb[0].mxu0
    %v2311 = vadd.f32 0.0, %v2310
    %v2312 = vpop.f32.mrb[0].mxu0
    %2313 = vdwg.mxu0
    %2314 = vrot.lane.b32.xlu0 %v1908, 96
    %v2315 = vpop.permute.xlu0 %2314
    %2316 = vrot.lane.b32.xlu0 %v1909, 96
    %v2317 = vpop.permute.xlu0 %2316
    %v2318 = vsel %vm276, %v1923, 0
    %v2320 = vsel %vm276, %v2315, 0
    %v2322 = vsel %vm276, %v2317, 0
    %2324 = vmatprep.subr.mxu0 0.0
    %2325 = vmatpush1.xpose.msra.mxu0 %v2320
    %2326 = vmatprep.subr.mxu0 0.0
    %2327 = vmatpush1.xpose.msra.mxu0 %v2322
    %2328 = vmatprep.subr.mxu0 0.0
    %2329 = vmatpush1.xpose.msra.mxu0 0.0
    %2330 = vmatprep.subr.mxu0 0.0
    %2331 = vmatpush1.xpose.msra.mxu0 0.0
    %2332 = vmatprep.subr.mxu0 0.0
    %2333 = vmatpush1.xpose.msra.mxu0 0.0
    %2334 = vmatprep.subr.mxu0 0.0
    %2335 = vmatpush1.xpose.msra.mxu0 0.0
    %2336 = vmatprep.subr.mxu0 0.0
    %2337 = vmatpush1.xpose.msra.mxu0 0.0
    %2338 = vmatprep.subr.mxu0 0.0
    %2339 = vmatpush1.xpose.msra.mxu0 0.0
    %2340 = vmatprep.subr.mxu0 0.0
    %2341 = vmatpush1.xpose.msra.mxu0 0.0
    %2342 = vmatprep.subr.mxu0 0.0
    %2343 = vmatpush1.xpose.msra.mxu0 0.0
    %2344 = vmatprep.subr.mxu0 0.0
    %2345 = vmatpush1.xpose.msra.mxu0 0.0
    %2346 = vmatprep.subr.mxu0 0.0
    %2347 = vmatpush1.xpose.msra.mxu0 0.0
    %2348 = vmatprep.subr.mxu0 0.0
    %2349 = vmatpush1.xpose.msra.mxu0 0.0
    %2350 = vmatprep.subr.mxu0 0.0
    %2351 = vmatpush1.xpose.msra.mxu0 0.0
    %2352 = vmatprep.subr.mxu0 0.0
    %2353 = vmatpush1.xpose.msra.mxu0 0.0
    %2354 = vmatprep.subr.mxu0 0.0
    %2355 = vmatpush1.xpose.msra.mxu0 0.0
    %2356 = vmatprep.subr.mxu0 0.0
    %2357 = vmatpush1.xpose.msra.mxu0 0.0
    %2358 = vmatprep.subr.mxu0 0.0
    %2359 = vmatpush1.xpose.msra.mxu0 0.0
    %2360 = vmatprep.subr.mxu0 0.0
    %2361 = vmatpush1.xpose.msra.mxu0 0.0
    %2362 = vmatprep.subr.mxu0 0.0
    %2363 = vmatpush1.xpose.msra.mxu0 0.0
    %2364 = vmatprep.subr.mxu0 0.0
    %2365 = vmatpush1.xpose.msra.mxu0 0.0
    %2366 = vmatprep.subr.mxu0 0.0
    %2367 = vmatpush1.xpose.msra.mxu0 0.0
    %2368 = vmatprep.subr.mxu0 0.0
    %2369 = vmatpush1.xpose.msra.mxu0 0.0
    %2370 = vmatprep.subr.mxu0 0.0
    %2371 = vmatpush1.xpose.msra.mxu0 0.0
    %2372 = vmatprep.subr.mxu0 0.0
    %2373 = vmatpush1.xpose.msra.mxu0 0.0
    %2374 = vmatprep.subr.mxu0 0.0
    %2375 = vmatpush1.xpose.msra.mxu0 0.0
    %2376 = vmatprep.subr.mxu0 0.0
    %2377 = vmatpush1.xpose.msra.mxu0 0.0
    %2378 = vmatprep.subr.mxu0 0.0
    %2379 = vmatpush1.xpose.msra.mxu0 0.0
    %2380 = vmatprep.subr.mxu0 0.0
    %2381 = vmatpush1.xpose.msra.mxu0 0.0
    %2382 = vmatprep.subr.mxu0 0.0
    %2383 = vmatpush1.xpose.msra.mxu0 0.0
    %2384 = vmatprep.subr.mxu0 0.0
    %2385 = vmatpush1.xpose.msra.mxu0 0.0
    %2386 = vmatprep.subr.mxu0 0.0
    %2387 = vmatpush1.xpose.msra.mxu0 0.0
    %2388 = vmatprep.mubr.f32.mxu0 0.0
    %2389 = vmatmul.mubr.f32.gmra.mrb[0].mxu0 %v2318
    %v2390 = vpop.f32.mrb[0].mxu0
    %v2391 = vadd.f32 0.0, %v2390
    %v2392 = vpop.f32.mrb[0].mxu0
    %2393 = vdwg.mxu0
    %2394 = vrot.lane.b32.xlu0 %v1955, 96
    %v2395 = vpop.permute.xlu0 %2394
    %2396 = vrot.lane.b32.xlu0 %v1957, 96
    %v2397 = vpop.permute.xlu0 %2396
    %v2398 = vsel %vm276, %v1933, 0
    %v2400 = vsel %vm276, %v2395, 0
    %v2402 = vsel %vm276, %v2397, 0
    %2404 = vmatprep.subr.mxu0 0.0
    %2405 = vmatpush1.xpose.msra.mxu0 %v2400
    %2406 = vmatprep.subr.mxu0 0.0
    %2407 = vmatpush1.xpose.msra.mxu0 %v2402
    %2408 = vmatprep.subr.mxu0 0.0
    %2409 = vmatpush1.xpose.msra.mxu0 0.0
    %2410 = vmatprep.subr.mxu0 0.0
    %2411 = vmatpush1.xpose.msra.mxu0 0.0
    %2412 = vmatprep.subr.mxu0 0.0
    %2413 = vmatpush1.xpose.msra.mxu0 0.0
    %2414 = vmatprep.subr.mxu0 0.0
    %2415 = vmatpush1.xpose.msra.mxu0 0.0
    %2416 = vmatprep.subr.mxu0 0.0
    %2417 = vmatpush1.xpose.msra.mxu0 0.0
    %2418 = vmatprep.subr.mxu0 0.0
    %2419 = vmatpush1.xpose.msra.mxu0 0.0
    %2420 = vmatprep.subr.mxu0 0.0
    %2421 = vmatpush1.xpose.msra.mxu0 0.0
    %2422 = vmatprep.subr.mxu0 0.0
    %2423 = vmatpush1.xpose.msra.mxu0 0.0
    %2424 = vmatprep.subr.mxu0 0.0
    %2425 = vmatpush1.xpose.msra.mxu0 0.0
    %2426 = vmatprep.subr.mxu0 0.0
    %2427 = vmatpush1.xpose.msra.mxu0 0.0
    %2428 = vmatprep.subr.mxu0 0.0
    %2429 = vmatpush1.xpose.msra.mxu0 0.0
    %2430 = vmatprep.subr.mxu0 0.0
    %2431 = vmatpush1.xpose.msra.mxu0 0.0
    %2432 = vmatprep.subr.mxu0 0.0
    %2433 = vmatpush1.xpose.msra.mxu0 0.0
    %2434 = vmatprep.subr.mxu0 0.0
    %2435 = vmatpush1.xpose.msra.mxu0 0.0
    %2436 = vmatprep.subr.mxu0 0.0
    %2437 = vmatpush1.xpose.msra.mxu0 0.0
    %2438 = vmatprep.subr.mxu0 0.0
    %2439 = vmatpush1.xpose.msra.mxu0 0.0
    %2440 = vmatprep.subr.mxu0 0.0
    %2441 = vmatpush1.xpose.msra.mxu0 0.0
    %2442 = vmatprep.subr.mxu0 0.0
    %2443 = vmatpush1.xpose.msra.mxu0 0.0
    %2444 = vmatprep.subr.mxu0 0.0
    %2445 = vmatpush1.xpose.msra.mxu0 0.0
    %2446 = vmatprep.subr.mxu0 0.0
    %2447 = vmatpush1.xpose.msra.mxu0 0.0
    %2448 = vmatprep.subr.mxu0 0.0
    %2449 = vmatpush1.xpose.msra.mxu0 0.0
    %2450 = vmatprep.subr.mxu0 0.0
    %2451 = vmatpush1.xpose.msra.mxu0 0.0
    %2452 = vmatprep.subr.mxu0 0.0
    %2453 = vmatpush1.xpose.msra.mxu0 0.0
    %2454 = vmatprep.subr.mxu0 0.0
    %2455 = vmatpush1.xpose.msra.mxu0 0.0
    %2456 = vmatprep.subr.mxu0 0.0
    %2457 = vmatpush1.xpose.msra.mxu0 0.0
    %2458 = vmatprep.subr.mxu0 0.0
    %2459 = vmatpush1.xpose.msra.mxu0 0.0
    %2460 = vmatprep.subr.mxu0 0.0
    %2461 = vmatpush1.xpose.msra.mxu0 0.0
    %2462 = vmatprep.subr.mxu0 0.0
    %2463 = vmatpush1.xpose.msra.mxu0 0.0
    %2464 = vmatprep.subr.mxu0 0.0
    %2465 = vmatpush1.xpose.msra.mxu0 0.0
    %2466 = vmatprep.subr.mxu0 0.0
    %2467 = vmatpush1.xpose.msra.mxu0 0.0
    %2468 = vmatprep.mubr.f32.mxu0 0.0
    %2469 = vmatmul.mubr.f32.gmra.mrb[0].mxu0 %v2398
    %v2470 = vpop.f32.mrb[0].mxu0
    %v2471 = vadd.f32 0.0, %v2470
    %v2472 = vpop.f32.mrb[0].mxu0
    %2473 = vdwg.mxu0
    %2474 = vrot.lane.b32.xlu0 %v1959, 96
    %v2475 = vpop.permute.xlu0 %2474
    %2476 = vrot.lane.b32.xlu0 %v1961, 96
    %v2477 = vpop.permute.xlu0 %2476
    %v2478 = vsel %vm276, %v1935, 0
    %v2480 = vsel %vm276, %v2475, 0
    %v2482 = vsel %vm276, %v2477, 0
    %2484 = vmatprep.subr.mxu0 0.0
    %2485 = vmatpush1.xpose.msra.mxu0 %v2480
    %2486 = vmatprep.subr.mxu0 0.0
    %2487 = vmatpush1.xpose.msra.mxu0 %v2482
    %2488 = vmatprep.subr.mxu0 0.0
    %2489 = vmatpush1.xpose.msra.mxu0 0.0
    %2490 = vmatprep.subr.mxu0 0.0
    %2491 = vmatpush1.xpose.msra.mxu0 0.0
    %2492 = vmatprep.subr.mxu0 0.0
    %2493 = vmatpush1.xpose.msra.mxu0 0.0
    %2494 = vmatprep.subr.mxu0 0.0
    %2495 = vmatpush1.xpose.msra.mxu0 0.0
    %2496 = vmatprep.subr.mxu0 0.0
    %2497 = vmatpush1.xpose.msra.mxu0 0.0
    %2498 = vmatprep.subr.mxu0 0.0
    %2499 = vmatpush1.xpose.msra.mxu0 0.0
    %2500 = vmatprep.subr.mxu0 0.0
    %2501 = vmatpush1.xpose.msra.mxu0 0.0
    %2502 = vmatprep.subr.mxu0 0.0
    %2503 = vmatpush1.xpose.msra.mxu0 0.0
    %2504 = vmatprep.subr.mxu0 0.0
    %2505 = vmatpush1.xpose.msra.mxu0 0.0
    %2506 = vmatprep.subr.mxu0 0.0
    %2507 = vmatpush1.xpose.msra.mxu0 0.0
    %2508 = vmatprep.subr.mxu0 0.0
    %2509 = vmatpush1.xpose.msra.mxu0 0.0
    %2510 = vmatprep.subr.mxu0 0.0
    %2511 = vmatpush1.xpose.msra.mxu0 0.0
    %2512 = vmatprep.subr.mxu0 0.0
    %2513 = vmatpush1.xpose.msra.mxu0 0.0
    %2514 = vmatprep.subr.mxu0 0.0
    %2515 = vmatpush1.xpose.msra.mxu0 0.0
    %2516 = vmatprep.subr.mxu0 0.0
    %2517 = vmatpush1.xpose.msra.mxu0 0.0
    %2518 = vmatprep.subr.mxu0 0.0
    %2519 = vmatpush1.xpose.msra.mxu0 0.0
    %2520 = vmatprep.subr.mxu0 0.0
    %2521 = vmatpush1.xpose.msra.mxu0 0.0
    %2522 = vmatprep.subr.mxu0 0.0
    %2523 = vmatpush1.xpose.msra.mxu0 0.0
    %2524 = vmatprep.subr.mxu0 0.0
    %2525 = vmatpush1.xpose.msra.mxu0 0.0
    %2526 = vmatprep.subr.mxu0 0.0
    %2527 = vmatpush1.xpose.msra.mxu0 0.0
    %2528 = vmatprep.subr.mxu0 0.0
    %2529 = vmatpush1.xpose.msra.mxu0 0.0
    %2530 = vmatprep.subr.mxu0 0.0
    %2531 = vmatpush1.xpose.msra.mxu0 0.0
    %2532 = vmatprep.subr.mxu0 0.0
    %2533 = vmatpush1.xpose.msra.mxu0 0.0
    %2534 = vmatprep.subr.mxu0 0.0
    %2535 = vmatpush1.xpose.msra.mxu0 0.0
    %2536 = vmatprep.subr.mxu0 0.0
    %2537 = vmatpush1.xpose.msra.mxu0 0.0
    %2538 = vmatprep.subr.mxu0 0.0
    %2539 = vmatpush1.xpose.msra.mxu0 0.0
    %2540 = vmatprep.subr.mxu0 0.0
    %2541 = vmatpush1.xpose.msra.mxu0 0.0
    %2542 = vmatprep.subr.mxu0 0.0
    %2543 = vmatpush1.xpose.msra.mxu0 0.0
    %2544 = vmatprep.subr.mxu0 0.0
    %2545 = vmatpush1.xpose.msra.mxu0 0.0
    %2546 = vmatprep.subr.mxu0 0.0
    %2547 = vmatpush1.xpose.msra.mxu0 0.0
    %2548 = vmatprep.mubr.f32.mxu0 0.0
    %2549 = vmatmul.mubr.f32.gmra.mrb[0].mxu0 %v2478
    %v2550 = vpop.f32.mrb[0].mxu0
    %v2551 = vadd.f32 0.0, %v2550
    %v2552 = vpop.f32.mrb[0].mxu0
    %2553 = vdwg.mxu0
    %2554 = vrot.lane.b32.xlu0 %v1963, 96
    %v2555 = vpop.permute.xlu0 %2554
    %2556 = vrot.lane.b32.xlu0 %v1965, 96
    %v2557 = vpop.permute.xlu0 %2556
    %v2558 = vsel %vm276, %v1937, 0
    %v2560 = vsel %vm276, %v2555, 0
    %v2562 = vsel %vm276, %v2557, 0
    %2564 = vmatprep.subr.mxu0 0.0
    %2565 = vmatpush1.xpose.msra.mxu0 %v2560
    %2566 = vmatprep.subr.mxu0 0.0
    %2567 = vmatpush1.xpose.msra.mxu0 %v2562
    %2568 = vmatprep.subr.mxu0 0.0
    %2569 = vmatpush1.xpose.msra.mxu0 0.0
    %2570 = vmatprep.subr.mxu0 0.0
    %2571 = vmatpush1.xpose.msra.mxu0 0.0
    %2572 = vmatprep.subr.mxu0 0.0
    %2573 = vmatpush1.xpose.msra.mxu0 0.0
    %2574 = vmatprep.subr.mxu0 0.0
    %2575 = vmatpush1.xpose.msra.mxu0 0.0
    %2576 = vmatprep.subr.mxu0 0.0
    %2577 = vmatpush1.xpose.msra.mxu0 0.0
    %2578 = vmatprep.subr.mxu0 0.0
    %2579 = vmatpush1.xpose.msra.mxu0 0.0
    %2580 = vmatprep.subr.mxu0 0.0
    %2581 = vmatpush1.xpose.msra.mxu0 0.0
    %2582 = vmatprep.subr.mxu0 0.0
    %2583 = vmatpush1.xpose.msra.mxu0 0.0
    %2584 = vmatprep.subr.mxu0 0.0
    %2585 = vmatpush1.xpose.msra.mxu0 0.0
    %2586 = vmatprep.subr.mxu0 0.0
    %2587 = vmatpush1.xpose.msra.mxu0 0.0
    %2588 = vmatprep.subr.mxu0 0.0
    %2589 = vmatpush1.xpose.msra.mxu0 0.0
    %2590 = vmatprep.subr.mxu0 0.0
    %2591 = vmatpush1.xpose.msra.mxu0 0.0
    %2592 = vmatprep.subr.mxu0 0.0
    %2593 = vmatpush1.xpose.msra.mxu0 0.0
    %2594 = vmatprep.subr.mxu0 0.0
    %2595 = vmatpush1.xpose.msra.mxu0 0.0
    %2596 = vmatprep.subr.mxu0 0.0
    %2597 = vmatpush1.xpose.msra.mxu0 0.0
    %2598 = vmatprep.subr.mxu0 0.0
    %2599 = vmatpush1.xpose.msra.mxu0 0.0
    %2600 = vmatprep.subr.mxu0 0.0
    %2601 = vmatpush1.xpose.msra.mxu0 0.0
    %2602 = vmatprep.subr.mxu0 0.0
    %2603 = vmatpush1.xpose.msra.mxu0 0.0
    %2604 = vmatprep.subr.mxu0 0.0
    %2605 = vmatpush1.xpose.msra.mxu0 0.0
    %2606 = vmatprep.subr.mxu0 0.0
    %2607 = vmatpush1.xpose.msra.mxu0 0.0
    %2608 = vmatprep.subr.mxu0 0.0
    %2609 = vmatpush1.xpose.msra.mxu0 0.0
    %2610 = vmatprep.subr.mxu0 0.0
    %2611 = vmatpush1.xpose.msra.mxu0 0.0
    %2612 = vmatprep.subr.mxu0 0.0
    %2613 = vmatpush1.xpose.msra.mxu0 0.0
    %2614 = vmatprep.subr.mxu0 0.0
    %2615 = vmatpush1.xpose.msra.mxu0 0.0
    %2616 = vmatprep.subr.mxu0 0.0
    %2617 = vmatpush1.xpose.msra.mxu0 0.0
    %2618 = vmatprep.subr.mxu0 0.0
    %2619 = vmatpush1.xpose.msra.mxu0 0.0
    %2620 = vmatprep.subr.mxu0 0.0
    %2621 = vmatpush1.xpose.msra.mxu0 0.0
    %2622 = vmatprep.subr.mxu0 0.0
    %2623 = vmatpush1.xpose.msra.mxu0 0.0
    %2624 = vmatprep.subr.mxu0 0.0
    %2625 = vmatpush1.xpose.msra.mxu0 0.0
    %2626 = vmatprep.subr.mxu0 0.0
    %2627 = vmatpush1.xpose.msra.mxu0 0.0
    %2628 = vmatprep.mubr.f32.mxu0 0.0
    %2629 = vmatmul.mubr.f32.gmra.mrb[0].mxu0 %v2558
    %v2630 = vpop.f32.mrb[0].mxu0
    %v2631 = vadd.f32 0.0, %v2630
    %v2632 = vpop.f32.mrb[0].mxu0
    %2633 = vdwg.mxu0
    %v2634 = vsel %vm1592, %v2071, -inf
    %2635 = vmax.xlane.f32.xlu0 %v2634
    %v2636 = vpop.xlane.xlu0 %2635
    %v2637 = vsel %vm1592, %v2151, -inf
    %2638 = vmax.xlane.f32.xlu0 %v2637
    %v2639 = vpop.xlane.xlu0 %2638
    %v2640 = vsel %vm1592, %v2231, -inf
    %2641 = vmax.xlane.f32.xlu0 %v2640
    %v2642 = vpop.xlane.xlu0 %2641
    %v2643 = vsel %vm1592, %v2311, -inf
    %2644 = vmax.xlane.f32.xlu0 %v2643
    %v2645 = vpop.xlane.xlu0 %2644
    %v2646 = vsel %vm1592, %v2391, -inf
    %2647 = vmax.xlane.f32.xlu0 %v2646
    %v2648 = vpop.xlane.xlu0 %2647
    %v2649 = vsel %vm1592, %v2471, -inf
    %2650 = vmax.xlane.f32.xlu0 %v2649
    %v2651 = vpop.xlane.xlu0 %2650
    %v2652 = vsel %vm1592, %v2551, -inf
    %2653 = vmax.xlane.f32.xlu0 %v2652
    %v2654 = vpop.xlane.xlu0 %2653
    %v2655 = vsel %vm1592, %v2631, -inf
    %2656 = vmax.xlane.f32.xlu0 %v2655
    %v2657 = vpop.xlane.xlu0 %2656
    %v2658 = vsub.f32 %v2071, %v2636
    %v2659 = vsub.f32 %v2151, %v2639
    %v2660 = vsub.f32 %v2231, %v2642
    %v2661 = vsub.f32 %v2311, %v2645
    %v2662 = vsub.f32 %v2391, %v2648
    %v2663 = vsub.f32 %v2471, %v2651
    %v2664 = vsub.f32 %v2551, %v2654
    %v2665 = vsub.f32 %v2631, %v2657
    %v2666 = vmul.f32 %v2658, 1.442695
    %v2667 = vpow.pop %v2666
    %v2668 = vmul.f32 %v2659, 1.442695
    %v2669 = vpow.pop %v2668
    %v2670 = vmul.f32 %v2660, 1.442695
    %v2671 = vpow.pop %v2670
    %v2672 = vmul.f32 %v2661, 1.442695
    %v2673 = vpow.pop %v2672
    %v2674 = vmul.f32 %v2662, 1.442695
    %v2675 = vpow.pop %v2674
    %v2676 = vmul.f32 %v2663, 1.442695
    %v2677 = vpow.pop %v2676
    %v2678 = vmul.f32 %v2664, 1.442695
    %v2679 = vpow.pop %v2678
    %v2680 = vmul.f32 %v2665, 1.442695
    %v2681 = vpow.pop %v2680
    %v2682 = vsel %vm1592, %v2667, 0.0
    %2683 = vadd.xlane.f32.xlu0 %v2682
    %v2684 = vpop.xlane.xlu0 %2683
    %v2685 = vsel %vm1592, %v2669, 0.0
    %2686 = vadd.xlane.f32.xlu0 %v2685
    %v2687 = vpop.xlane.xlu0 %2686
    %v2688 = vsel %vm1592, %v2671, 0.0
    %2689 = vadd.xlane.f32.xlu0 %v2688
    %v2690 = vpop.xlane.xlu0 %2689
    %v2691 = vsel %vm1592, %v2673, 0.0
    %2692 = vadd.xlane.f32.xlu0 %v2691
    %v2693 = vpop.xlane.xlu0 %2692
    %v2694 = vsel %vm1592, %v2675, 0.0
    %2695 = vadd.xlane.f32.xlu0 %v2694
    %v2696 = vpop.xlane.xlu0 %2695
    %v2697 = vsel %vm1592, %v2677, 0.0
    %2698 = vadd.xlane.f32.xlu0 %v2697
    %v2699 = vpop.xlane.xlu0 %2698
    %v2700 = vsel %vm1592, %v2679, 0.0
    %2701 = vadd.xlane.f32.xlu0 %v2700
    %v2702 = vpop.xlane.xlu0 %2701
    %v2703 = vsel %vm1592, %v2681, 0.0
    %2704 = vadd.xlane.f32.xlu0 %v2703
    %v2705 = vpop.xlane.xlu0 %2704
    %v2706 = vrcp.pop %v2684
    %v2707 = vmul.f32 %v2667, %v2706
    %v2708 = vrcp.pop %v2687
    %v2709 = vmul.f32 %v2669, %v2708
    %v2710 = vrcp.pop %v2690
    %v2711 = vmul.f32 %v2671, %v2710
    %v2712 = vrcp.pop %v2693
    %v2713 = vmul.f32 %v2673, %v2712
    %v2714 = vrcp.pop %v2696
    %v2715 = vmul.f32 %v2675, %v2714
    %v2716 = vrcp.pop %v2699
    %v2717 = vmul.f32 %v2677, %v2716
    %v2718 = vrcp.pop %v2702
    %v2719 = vmul.f32 %v2679, %v2718
    %v2720 = vrcp.pop %v2705
    %v2721 = vmul.f32 %v2681, %v2720
    %2722 = vrot.lane.b32.xlu0 %v1918, 64
    %v2723 = vpop.permute.xlu0 %2722
    %2724 = vrot.lane.b32.xlu0 %v1919, 64
    %v2725 = vpop.permute.xlu0 %2724
    %v2729 = vsel %vm1592, %v2707, 0
    %2731 = vmatprep.subr.mxu0 0.0
    %2732 = vmatpush1.msra.mxu0 %v2723
    %2733 = vmatprep.subr.mxu0 0.0
    %2734 = vmatpush1.msra.mxu0 %v2725
    %2735 = vmatprep.subr.mxu0 0.0
    %2736 = vmatpush1.msra.mxu0 0.0
    %2737 = vmatprep.subr.mxu0 0.0
    %2738 = vmatpush1.msra.mxu0 0.0
    %2739 = vmatprep.subr.mxu0 0.0
    %2740 = vmatpush1.msra.mxu0 0.0
    %2741 = vmatprep.subr.mxu0 0.0
    %2742 = vmatpush1.msra.mxu0 0.0
    %2743 = vmatprep.subr.mxu0 0.0
    %2744 = vmatpush1.msra.mxu0 0.0
    %2745 = vmatprep.subr.mxu0 0.0
    %2746 = vmatpush1.msra.mxu0 0.0
    %2747 = vmatprep.subr.mxu0 0.0
    %2748 = vmatpush1.msra.mxu0 0.0
    %2749 = vmatprep.subr.mxu0 0.0
    %2750 = vmatpush1.msra.mxu0 0.0
    %2751 = vmatprep.subr.mxu0 0.0
    %2752 = vmatpush1.msra.mxu0 0.0
    %2753 = vmatprep.subr.mxu0 0.0
    %2754 = vmatpush1.msra.mxu0 0.0
    %2755 = vmatprep.subr.mxu0 0.0
    %2756 = vmatpush1.msra.mxu0 0.0
    %2757 = vmatprep.subr.mxu0 0.0
    %2758 = vmatpush1.msra.mxu0 0.0
    %2759 = vmatprep.subr.mxu0 0.0
    %2760 = vmatpush1.msra.mxu0 0.0
    %2761 = vmatprep.subr.mxu0 0.0
    %2762 = vmatpush1.msra.mxu0 0.0
    %2763 = vmatprep.subr.mxu0 0.0
    %2764 = vmatpush1.msra.mxu0 0.0
    %2765 = vmatprep.subr.mxu0 0.0
    %2766 = vmatpush1.msra.mxu0 0.0
    %2767 = vmatprep.subr.mxu0 0.0
    %2768 = vmatpush1.msra.mxu0 0.0
    %2769 = vmatprep.subr.mxu0 0.0
    %2770 = vmatpush1.msra.mxu0 0.0
    %2771 = vmatprep.subr.mxu0 0.0
    %2772 = vmatpush1.msra.mxu0 0.0
    %2773 = vmatprep.subr.mxu0 0.0
    %2774 = vmatpush1.msra.mxu0 0.0
    %2775 = vmatprep.subr.mxu0 0.0
    %2776 = vmatpush1.msra.mxu0 0.0
    %2777 = vmatprep.subr.mxu0 0.0
    %2778 = vmatpush1.msra.mxu0 0.0
    %2779 = vmatprep.subr.mxu0 0.0
    %2780 = vmatpush1.msra.mxu0 0.0
    %2781 = vmatprep.subr.mxu0 0.0
    %2782 = vmatpush1.msra.mxu0 0.0
    %2783 = vmatprep.subr.mxu0 0.0
    %2784 = vmatpush1.msra.mxu0 0.0
    %2785 = vmatprep.subr.mxu0 0.0
    %2786 = vmatpush1.msra.mxu0 0.0
    %2787 = vmatprep.subr.mxu0 0.0
    %2788 = vmatpush1.msra.mxu0 0.0
    %2789 = vmatprep.subr.mxu0 0.0
    %2790 = vmatpush1.msra.mxu0 0.0
    %2791 = vmatprep.subr.mxu0 0.0
    %2792 = vmatpush1.msra.mxu0 0.0
    %2793 = vmatprep.subr.mxu0 0.0
    %2794 = vmatpush1.msra.mxu0 0.0
    %2795 = vmatprep.mubr.f32.mxu0 0.0
    %2796 = vmatmul.mubr.f32.gmra.mrb[0].mxu0 %v2729
    %v2797 = vpop.f32.mrb[0].mxu0
    %v2798 = vadd.f32 0.0, %v2797
    %v2799 = vpop.f32.mrb[0].mxu0
    %2800 = vdwg.mxu0
    %2801 = vrot.lane.b32.xlu0 %v1969, 64
    %v2802 = vpop.permute.xlu0 %2801
    %2803 = vrot.lane.b32.xlu0 %v1971, 64
    %v2804 = vpop.permute.xlu0 %2803
    %v2808 = vsel %vm1592, %v2709, 0
    %2810 = vmatprep.subr.mxu0 0.0
    %2811 = vmatpush1.msra.mxu0 %v2802
    %2812 = vmatprep.subr.mxu0 0.0
    %2813 = vmatpush1.msra.mxu0 %v2804
    %2814 = vmatprep.subr.mxu0 0.0
    %2815 = vmatpush1.msra.mxu0 0.0
    %2816 = vmatprep.subr.mxu0 0.0
    %2817 = vmatpush1.msra.mxu0 0.0
    %2818 = vmatprep.subr.mxu0 0.0
    %2819 = vmatpush1.msra.mxu0 0.0
    %2820 = vmatprep.subr.mxu0 0.0
    %2821 = vmatpush1.msra.mxu0 0.0
    %2822 = vmatprep.subr.mxu0 0.0
    %2823 = vmatpush1.msra.mxu0 0.0
    %2824 = vmatprep.subr.mxu0 0.0
    %2825 = vmatpush1.msra.mxu0 0.0
    %2826 = vmatprep.subr.mxu0 0.0
    %2827 = vmatpush1.msra.mxu0 0.0
    %2828 = vmatprep.subr.mxu0 0.0
    %2829 = vmatpush1.msra.mxu0 0.0
    %2830 = vmatprep.subr.mxu0 0.0
    %2831 = vmatpush1.msra.mxu0 0.0
    %2832 = vmatprep.subr.mxu0 0.0
    %2833 = vmatpush1.msra.mxu0 0.0
    %2834 = vmatprep.subr.mxu0 0.0
    %2835 = vmatpush1.msra.mxu0 0.0
    %2836 = vmatprep.subr.mxu0 0.0
    %2837 = vmatpush1.msra.mxu0 0.0
    %2838 = vmatprep.subr.mxu0 0.0
    %2839 = vmatpush1.msra.mxu0 0.0
    %2840 = vmatprep.subr.mxu0 0.0
    %2841 = vmatpush1.msra.mxu0 0.0
    %2842 = vmatprep.subr.mxu0 0.0
    %2843 = vmatpush1.msra.mxu0 0.0
    %2844 = vmatprep.subr.mxu0 0.0
    %2845 = vmatpush1.msra.mxu0 0.0
    %2846 = vmatprep.subr.mxu0 0.0
    %2847 = vmatpush1.msra.mxu0 0.0
    %2848 = vmatprep.subr.mxu0 0.0
    %2849 = vmatpush1.msra.mxu0 0.0
    %2850 = vmatprep.subr.mxu0 0.0
    %2851 = vmatpush1.msra.mxu0 0.0
    %2852 = vmatprep.subr.mxu0 0.0
    %2853 = vmatpush1.msra.mxu0 0.0
    %2854 = vmatprep.subr.mxu0 0.0
    %2855 = vmatpush1.msra.mxu0 0.0
    %2856 = vmatprep.subr.mxu0 0.0
    %2857 = vmatpush1.msra.mxu0 0.0
    %2858 = vmatprep.subr.mxu0 0.0
    %2859 = vmatpush1.msra.mxu0 0.0
    %2860 = vmatprep.subr.mxu0 0.0
    %2861 = vmatpush1.msra.mxu0 0.0
    %2862 = vmatprep.subr.mxu0 0.0
    %2863 = vmatpush1.msra.mxu0 0.0
    %2864 = vmatprep.subr.mxu0 0.0
    %2865 = vmatpush1.msra.mxu0 0.0
    %2866 = vmatprep.subr.mxu0 0.0
    %2867 = vmatpush1.msra.mxu0 0.0
    %2868 = vmatprep.subr.mxu0 0.0
    %2869 = vmatpush1.msra.mxu0 0.0
    %2870 = vmatprep.subr.mxu0 0.0
    %2871 = vmatpush1.msra.mxu0 0.0
    %2872 = vmatprep.subr.mxu0 0.0
    %2873 = vmatpush1.msra.mxu0 0.0
    %2874 = vmatprep.mubr.f32.mxu0 0.0
    %2875 = vmatmul.mubr.f32.gmra.mrb[0].mxu0 %v2808
    %v2876 = vpop.f32.mrb[0].mxu0
    %v2877 = vadd.f32 0.0, %v2876
    %v2878 = vpop.f32.mrb[0].mxu0
    %2879 = vdwg.mxu0
    %2880 = vrot.lane.b32.xlu0 %v1973, 64
    %v2881 = vpop.permute.xlu0 %2880
    %2882 = vrot.lane.b32.xlu0 %v1975, 64
    %v2883 = vpop.permute.xlu0 %2882
    %v2887 = vsel %vm1592, %v2711, 0
    %2889 = vmatprep.subr.mxu0 0.0
    %2890 = vmatpush1.msra.mxu0 %v2881
    %2891 = vmatprep.subr.mxu0 0.0
    %2892 = vmatpush1.msra.mxu0 %v2883
    %2893 = vmatprep.subr.mxu0 0.0
    %2894 = vmatpush1.msra.mxu0 0.0
    %2895 = vmatprep.subr.mxu0 0.0
    %2896 = vmatpush1.msra.mxu0 0.0
    %2897 = vmatprep.subr.mxu0 0.0
    %2898 = vmatpush1.msra.mxu0 0.0
    %2899 = vmatprep.subr.mxu0 0.0
    %2900 = vmatpush1.msra.mxu0 0.0
    %2901 = vmatprep.subr.mxu0 0.0
    %2902 = vmatpush1.msra.mxu0 0.0
    %2903 = vmatprep.subr.mxu0 0.0
    %2904 = vmatpush1.msra.mxu0 0.0
    %2905 = vmatprep.subr.mxu0 0.0
    %2906 = vmatpush1.msra.mxu0 0.0
    %2907 = vmatprep.subr.mxu0 0.0
    %2908 = vmatpush1.msra.mxu0 0.0
    %2909 = vmatprep.subr.mxu0 0.0
    %2910 = vmatpush1.msra.mxu0 0.0
    %2911 = vmatprep.subr.mxu0 0.0
    %2912 = vmatpush1.msra.mxu0 0.0
    %2913 = vmatprep.subr.mxu0 0.0
    %2914 = vmatpush1.msra.mxu0 0.0
    %2915 = vmatprep.subr.mxu0 0.0
    %2916 = vmatpush1.msra.mxu0 0.0
    %2917 = vmatprep.subr.mxu0 0.0
    %2918 = vmatpush1.msra.mxu0 0.0
    %2919 = vmatprep.subr.mxu0 0.0
    %2920 = vmatpush1.msra.mxu0 0.0
    %2921 = vmatprep.subr.mxu0 0.0
    %2922 = vmatpush1.msra.mxu0 0.0
    %2923 = vmatprep.subr.mxu0 0.0
    %2924 = vmatpush1.msra.mxu0 0.0
    %2925 = vmatprep.subr.mxu0 0.0
    %2926 = vmatpush1.msra.mxu0 0.0
    %2927 = vmatprep.subr.mxu0 0.0
    %2928 = vmatpush1.msra.mxu0 0.0
    %2929 = vmatprep.subr.mxu0 0.0
    %2930 = vmatpush1.msra.mxu0 0.0
    %2931 = vmatprep.subr.mxu0 0.0
    %2932 = vmatpush1.msra.mxu0 0.0
    %2933 = vmatprep.subr.mxu0 0.0
    %2934 = vmatpush1.msra.mxu0 0.0
    %2935 = vmatprep.subr.mxu0 0.0
    %2936 = vmatpush1.msra.mxu0 0.0
    %2937 = vmatprep.subr.mxu0 0.0
    %2938 = vmatpush1.msra.mxu0 0.0
    %2939 = vmatprep.subr.mxu0 0.0
    %2940 = vmatpush1.msra.mxu0 0.0
    %2941 = vmatprep.subr.mxu0 0.0
    %2942 = vmatpush1.msra.mxu0 0.0
    %2943 = vmatprep.subr.mxu0 0.0
    %2944 = vmatpush1.msra.mxu0 0.0
    %2945 = vmatprep.subr.mxu0 0.0
    %2946 = vmatpush1.msra.mxu0 0.0
    %2947 = vmatprep.subr.mxu0 0.0
    %2948 = vmatpush1.msra.mxu0 0.0
    %2949 = vmatprep.subr.mxu0 0.0
    %2950 = vmatpush1.msra.mxu0 0.0
    %2951 = vmatprep.subr.mxu0 0.0
    %2952 = vmatpush1.msra.mxu0 0.0
    %2953 = vmatprep.mubr.f32.mxu0 0.0
    %2954 = vmatmul.mubr.f32.gmra.mrb[0].mxu0 %v2887
    %v2955 = vpop.f32.mrb[0].mxu0
    %v2956 = vadd.f32 0.0, %v2955
    %v2957 = vpop.f32.mrb[0].mxu0
    %2958 = vdwg.mxu0
    %2959 = vrot.lane.b32.xlu0 %v1977, 64
    %v2960 = vpop.permute.xlu0 %2959
    %2961 = vrot.lane.b32.xlu0 %v1979, 64
    %v2962 = vpop.permute.xlu0 %2961
    %v2966 = vsel %vm1592, %v2713, 0
    %2968 = vmatprep.subr.mxu0 0.0
    %2969 = vmatpush1.msra.mxu0 %v2960
    %2970 = vmatprep.subr.mxu0 0.0
    %2971 = vmatpush1.msra.mxu0 %v2962
    %2972 = vmatprep.subr.mxu0 0.0
    %2973 = vmatpush1.msra.mxu0 0.0
    %2974 = vmatprep.subr.mxu0 0.0
    %2975 = vmatpush1.msra.mxu0 0.0
    %2976 = vmatprep.subr.mxu0 0.0
    %2977 = vmatpush1.msra.mxu0 0.0
    %2978 = vmatprep.subr.mxu0 0.0
    %2979 = vmatpush1.msra.mxu0 0.0
    %2980 = vmatprep.subr.mxu0 0.0
    %2981 = vmatpush1.msra.mxu0 0.0
    %2982 = vmatprep.subr.mxu0 0.0
    %2983 = vmatpush1.msra.mxu0 0.0
    %2984 = vmatprep.subr.mxu0 0.0
    %2985 = vmatpush1.msra.mxu0 0.0
    %2986 = vmatprep.subr.mxu0 0.0
    %2987 = vmatpush1.msra.mxu0 0.0
    %2988 = vmatprep.subr.mxu0 0.0
    %2989 = vmatpush1.msra.mxu0 0.0
    %2990 = vmatprep.subr.mxu0 0.0
    %2991 = vmatpush1.msra.mxu0 0.0
    %2992 = vmatprep.subr.mxu0 0.0
    %2993 = vmatpush1.msra.mxu0 0.0
    %2994 = vmatprep.subr.mxu0 0.0
    %2995 = vmatpush1.msra.mxu0 0.0
    %2996 = vmatprep.subr.mxu0 0.0
    %2997 = vmatpush1.msra.mxu0 0.0
    %2998 = vmatprep.subr.mxu0 0.0
    %2999 = vmatpush1.msra.mxu0 0.0
    %3000 = vmatprep.subr.mxu0 0.0
    %3001 = vmatpush1.msra.mxu0 0.0
    %3002 = vmatprep.subr.mxu0 0.0
    %3003 = vmatpush1.msra.mxu0 0.0
    %3004 = vmatprep.subr.mxu0 0.0
    %3005 = vmatpush1.msra.mxu0 0.0
    %3006 = vmatprep.subr.mxu0 0.0
    %3007 = vmatpush1.msra.mxu0 0.0
    %3008 = vmatprep.subr.mxu0 0.0
    %3009 = vmatpush1.msra.mxu0 0.0
    %3010 = vmatprep.subr.mxu0 0.0
    %3011 = vmatpush1.msra.mxu0 0.0
    %3012 = vmatprep.subr.mxu0 0.0
    %3013 = vmatpush1.msra.mxu0 0.0
    %3014 = vmatprep.subr.mxu0 0.0
    %3015 = vmatpush1.msra.mxu0 0.0
    %3016 = vmatprep.subr.mxu0 0.0
    %3017 = vmatpush1.msra.mxu0 0.0
    %3018 = vmatprep.subr.mxu0 0.0
    %3019 = vmatpush1.msra.mxu0 0.0
    %3020 = vmatprep.subr.mxu0 0.0
    %3021 = vmatpush1.msra.mxu0 0.0
    %3022 = vmatprep.subr.mxu0 0.0
    %3023 = vmatpush1.msra.mxu0 0.0
    %3024 = vmatprep.subr.mxu0 0.0
    %3025 = vmatpush1.msra.mxu0 0.0
    %3026 = vmatprep.subr.mxu0 0.0
    %3027 = vmatpush1.msra.mxu0 0.0
    %3028 = vmatprep.subr.mxu0 0.0
    %3029 = vmatpush1.msra.mxu0 0.0
    %3030 = vmatprep.subr.mxu0 0.0
    %3031 = vmatpush1.msra.mxu0 0.0
    %3032 = vmatprep.mubr.f32.mxu0 0.0
    %3033 = vmatmul.mubr.f32.gmra.mrb[0].mxu0 %v2966
    %v3034 = vpop.f32.mrb[0].mxu0
    %v3035 = vadd.f32 0.0, %v3034
    %v3036 = vpop.f32.mrb[0].mxu0
    %3037 = vdwg.mxu0
    %3038 = vrot.lane.b32.xlu0 %v1920, 64
    %v3039 = vpop.permute.xlu0 %3038
    %3040 = vrot.lane.b32.xlu0 %v1921, 64
    %v3041 = vpop.permute.xlu0 %3040
    %v3045 = vsel %vm1592, %v2715, 0
    %3047 = vmatprep.subr.mxu0 0.0
    %3048 = vmatpush1.msra.mxu0 %v3039
    %3049 = vmatprep.subr.mxu0 0.0
    %3050 = vmatpush1.msra.mxu0 %v3041
    %3051 = vmatprep.subr.mxu0 0.0
    %3052 = vmatpush1.msra.mxu0 0.0
    %3053 = vmatprep.subr.mxu0 0.0
    %3054 = vmatpush1.msra.mxu0 0.0
    %3055 = vmatprep.subr.mxu0 0.0
    %3056 = vmatpush1.msra.mxu0 0.0
    %3057 = vmatprep.subr.mxu0 0.0
    %3058 = vmatpush1.msra.mxu0 0.0
    %3059 = vmatprep.subr.mxu0 0.0
    %3060 = vmatpush1.msra.mxu0 0.0
    %3061 = vmatprep.subr.mxu0 0.0
    %3062 = vmatpush1.msra.mxu0 0.0
    %3063 = vmatprep.subr.mxu0 0.0
    %3064 = vmatpush1.msra.mxu0 0.0
    %3065 = vmatprep.subr.mxu0 0.0
    %3066 = vmatpush1.msra.mxu0 0.0
    %3067 = vmatprep.subr.mxu0 0.0
    %3068 = vmatpush1.msra.mxu0 0.0
    %3069 = vmatprep.subr.mxu0 0.0
    %3070 = vmatpush1.msra.mxu0 0.0
    %3071 = vmatprep.subr.mxu0 0.0
    %3072 = vmatpush1.msra.mxu0 0.0
    %3073 = vmatprep.subr.mxu0 0.0
    %3074 = vmatpush1.msra.mxu0 0.0
    %3075 = vmatprep.subr.mxu0 0.0
    %3076 = vmatpush1.msra.mxu0 0.0
    %3077 = vmatprep.subr.mxu0 0.0
    %3078 = vmatpush1.msra.mxu0 0.0
    %3079 = vmatprep.subr.mxu0 0.0
    %3080 = vmatpush1.msra.mxu0 0.0
    %3081 = vmatprep.subr.mxu0 0.0
    %3082 = vmatpush1.msra.mxu0 0.0
    %3083 = vmatprep.subr.mxu0 0.0
    %3084 = vmatpush1.msra.mxu0 0.0
    %3085 = vmatprep.subr.mxu0 0.0
    %3086 = vmatpush1.msra.mxu0 0.0
    %3087 = vmatprep.subr.mxu0 0.0
    %3088 = vmatpush1.msra.mxu0 0.0
    %3089 = vmatprep.subr.mxu0 0.0
    %3090 = vmatpush1.msra.mxu0 0.0
    %3091 = vmatprep.subr.mxu0 0.0
    %3092 = vmatpush1.msra.mxu0 0.0
    %3093 = vmatprep.subr.mxu0 0.0
    %3094 = vmatpush1.msra.mxu0 0.0
    %3095 = vmatprep.subr.mxu0 0.0
    %3096 = vmatpush1.msra.mxu0 0.0
    %3097 = vmatprep.subr.mxu0 0.0
    %3098 = vmatpush1.msra.mxu0 0.0
    %3099 = vmatprep.subr.mxu0 0.0
    %3100 = vmatpush1.msra.mxu0 0.0
    %3101 = vmatprep.subr.mxu0 0.0
    %3102 = vmatpush1.msra.mxu0 0.0
    %3103 = vmatprep.subr.mxu0 0.0
    %3104 = vmatpush1.msra.mxu0 0.0
    %3105 = vmatprep.subr.mxu0 0.0
    %3106 = vmatpush1.msra.mxu0 0.0
    %3107 = vmatprep.subr.mxu0 0.0
    %3108 = vmatpush1.msra.mxu0 0.0
    %3109 = vmatprep.subr.mxu0 0.0
    %3110 = vmatpush1.msra.mxu0 0.0
    %3111 = vmatprep.mubr.f32.mxu0 0.0
    %3112 = vmatmul.mubr.f32.gmra.mrb[0].mxu0 %v3045
    %v3113 = vpop.f32.mrb[0].mxu0
    %v3114 = vadd.f32 0.0, %v3113
    %v3115 = vpop.f32.mrb[0].mxu0
    %3116 = vdwg.mxu0
    %3117 = vrot.lane.b32.xlu0 %v1983, 64
    %v3118 = vpop.permute.xlu0 %3117
    %3119 = vrot.lane.b32.xlu0 %v1985, 64
    %v3120 = vpop.permute.xlu0 %3119
    %v3124 = vsel %vm1592, %v2717, 0
    %3126 = vmatprep.subr.mxu0 0.0
    %3127 = vmatpush1.msra.mxu0 %v3118
    %3128 = vmatprep.subr.mxu0 0.0
    %3129 = vmatpush1.msra.mxu0 %v3120
    %3130 = vmatprep.subr.mxu0 0.0
    %3131 = vmatpush1.msra.mxu0 0.0
    %3132 = vmatprep.subr.mxu0 0.0
    %3133 = vmatpush1.msra.mxu0 0.0
    %3134 = vmatprep.subr.mxu0 0.0
    %3135 = vmatpush1.msra.mxu0 0.0
    %3136 = vmatprep.subr.mxu0 0.0
    %3137 = vmatpush1.msra.mxu0 0.0
    %3138 = vmatprep.subr.mxu0 0.0
    %3139 = vmatpush1.msra.mxu0 0.0
    %3140 = vmatprep.subr.mxu0 0.0
    %3141 = vmatpush1.msra.mxu0 0.0
    %3142 = vmatprep.subr.mxu0 0.0
    %3143 = vmatpush1.msra.mxu0 0.0
    %3144 = vmatprep.subr.mxu0 0.0
    %3145 = vmatpush1.msra.mxu0 0.0
    %3146 = vmatprep.subr.mxu0 0.0
    %3147 = vmatpush1.msra.mxu0 0.0
    %3148 = vmatprep.subr.mxu0 0.0
    %3149 = vmatpush1.msra.mxu0 0.0
    %3150 = vmatprep.subr.mxu0 0.0
    %3151 = vmatpush1.msra.mxu0 0.0
    %3152 = vmatprep.subr.mxu0 0.0
    %3153 = vmatpush1.msra.mxu0 0.0
    %3154 = vmatprep.subr.mxu0 0.0
    %3155 = vmatpush1.msra.mxu0 0.0
    %3156 = vmatprep.subr.mxu0 0.0
    %3157 = vmatpush1.msra.mxu0 0.0
    %3158 = vmatprep.subr.mxu0 0.0
    %3159 = vmatpush1.msra.mxu0 0.0
    %3160 = vmatprep.subr.mxu0 0.0
    %3161 = vmatpush1.msra.mxu0 0.0
    %3162 = vmatprep.subr.mxu0 0.0
    %3163 = vmatpush1.msra.mxu0 0.0
    %3164 = vmatprep.subr.mxu0 0.0
    %3165 = vmatpush1.msra.mxu0 0.0
    %3166 = vmatprep.subr.mxu0 0.0
    %3167 = vmatpush1.msra.mxu0 0.0
    %3168 = vmatprep.subr.mxu0 0.0
    %3169 = vmatpush1.msra.mxu0 0.0
    %3170 = vmatprep.subr.mxu0 0.0
    %3171 = vmatpush1.msra.mxu0 0.0
    %3172 = vmatprep.subr.mxu0 0.0
    %3173 = vmatpush1.msra.mxu0 0.0
    %3174 = vmatprep.subr.mxu0 0.0
    %3175 = vmatpush1.msra.mxu0 0.0
    %3176 = vmatprep.subr.mxu0 0.0
    %3177 = vmatpush1.msra.mxu0 0.0
    %3178 = vmatprep.subr.mxu0 0.0
    %3179 = vmatpush1.msra.mxu0 0.0
    %3180 = vmatprep.subr.mxu0 0.0
    %3181 = vmatpush1.msra.mxu0 0.0
    %3182 = vmatprep.subr.mxu0 0.0
    %3183 = vmatpush1.msra.mxu0 0.0
    %3184 = vmatprep.subr.mxu0 0.0
    %3185 = vmatpush1.msra.mxu0 0.0
    %3186 = vmatprep.subr.mxu0 0.0
    %3187 = vmatpush1.msra.mxu0 0.0
    %3188 = vmatprep.subr.mxu0 0.0
    %3189 = vmatpush1.msra.mxu0 0.0
    %3190 = vmatprep.mubr.f32.mxu0 0.0
    %3191 = vmatmul.mubr.f32.gmra.mrb[0].mxu0 %v3124
    %v3192 = vpop.f32.mrb[0].mxu0
    %v3193 = vadd.f32 0.0, %v3192
    %v3194 = vpop.f32.mrb[0].mxu0
    %3195 = vdwg.mxu0
    %3196 = vrot.lane.b32.xlu0 %v1987, 64
    %v3197 = vpop.permute.xlu0 %3196
    %3198 = vrot.lane.b32.xlu0 %v1989, 64
    %v3199 = vpop.permute.xlu0 %3198
    %v3203 = vsel %vm1592, %v2719, 0
    %3205 = vmatprep.subr.mxu0 0.0
    %3206 = vmatpush1.msra.mxu0 %v3197
    %3207 = vmatprep.subr.mxu0 0.0
    %3208 = vmatpush1.msra.mxu0 %v3199
    %3209 = vmatprep.subr.mxu0 0.0
    %3210 = vmatpush1.msra.mxu0 0.0
    %3211 = vmatprep.subr.mxu0 0.0
    %3212 = vmatpush1.msra.mxu0 0.0
    %3213 = vmatprep.subr.mxu0 0.0
    %3214 = vmatpush1.msra.mxu0 0.0
    %3215 = vmatprep.subr.mxu0 0.0
    %3216 = vmatpush1.msra.mxu0 0.0
    %3217 = vmatprep.subr.mxu0 0.0
    %3218 = vmatpush1.msra.mxu0 0.0
    %3219 = vmatprep.subr.mxu0 0.0
    %3220 = vmatpush1.msra.mxu0 0.0
    %3221 = vmatprep.subr.mxu0 0.0
    %3222 = vmatpush1.msra.mxu0 0.0
    %3223 = vmatprep.subr.mxu0 0.0
    %3224 = vmatpush1.msra.mxu0 0.0
    %3225 = vmatprep.subr.mxu0 0.0
    %3226 = vmatpush1.msra.mxu0 0.0
    %3227 = vmatprep.subr.mxu0 0.0
    %3228 = vmatpush1.msra.mxu0 0.0
    %3229 = vmatprep.subr.mxu0 0.0
    %3230 = vmatpush1.msra.mxu0 0.0
    %3231 = vmatprep.subr.mxu0 0.0
    %3232 = vmatpush1.msra.mxu0 0.0
    %3233 = vmatprep.subr.mxu0 0.0
    %3234 = vmatpush1.msra.mxu0 0.0
    %3235 = vmatprep.subr.mxu0 0.0
    %3236 = vmatpush1.msra.mxu0 0.0
    %3237 = vmatprep.subr.mxu0 0.0
    %3238 = vmatpush1.msra.mxu0 0.0
    %3239 = vmatprep.subr.mxu0 0.0
    %3240 = vmatpush1.msra.mxu0 0.0
    %3241 = vmatprep.subr.mxu0 0.0
    %3242 = vmatpush1.msra.mxu0 0.0
    %3243 = vmatprep.subr.mxu0 0.0
    %3244 = vmatpush1.msra.mxu0 0.0
    %3245 = vmatprep.subr.mxu0 0.0
    %3246 = vmatpush1.msra.mxu0 0.0
    %3247 = vmatprep.subr.mxu0 0.0
    %3248 = vmatpush1.msra.mxu0 0.0
    %3249 = vmatprep.subr.mxu0 0.0
    %3250 = vmatpush1.msra.mxu0 0.0
    %3251 = vmatprep.subr.mxu0 0.0
    %3252 = vmatpush1.msra.mxu0 0.0
    %3253 = vmatprep.subr.mxu0 0.0
    %3254 = vmatpush1.msra.mxu0 0.0
    %3255 = vmatprep.subr.mxu0 0.0
    %3256 = vmatpush1.msra.mxu0 0.0
    %3257 = vmatprep.subr.mxu0 0.0
    %3258 = vmatpush1.msra.mxu0 0.0
    %3259 = vmatprep.subr.mxu0 0.0
    %3260 = vmatpush1.msra.mxu0 0.0
    %3261 = vmatprep.subr.mxu0 0.0
    %3262 = vmatpush1.msra.mxu0 0.0
    %3263 = vmatprep.subr.mxu0 0.0
    %3264 = vmatpush1.msra.mxu0 0.0
    %3265 = vmatprep.subr.mxu0 0.0
    %3266 = vmatpush1.msra.mxu0 0.0
    %3267 = vmatprep.subr.mxu0 0.0
    %3268 = vmatpush1.msra.mxu0 0.0
    %3269 = vmatprep.mubr.f32.mxu0 0.0
    %3270 = vmatmul.mubr.f32.gmra.mrb[0].mxu0 %v3203
    %v3271 = vpop.f32.mrb[0].mxu0
    %v3272 = vadd.f32 0.0, %v3271
    %v3273 = vpop.f32.mrb[0].mxu0
    %3274 = vdwg.mxu0
    %3275 = vrot.lane.b32.xlu0 %v1991, 64
    %v3276 = vpop.permute.xlu0 %3275
    %3277 = vrot.lane.b32.xlu0 %v1993, 64
    %v3278 = vpop.permute.xlu0 %3277
    %v3282 = vsel %vm1592, %v2721, 0
    %3284 = vmatprep.subr.mxu0 0.0
    %3285 = vmatpush1.msra.mxu0 %v3276
    %3286 = vmatprep.subr.mxu0 0.0
    %3287 = vmatpush1.msra.mxu0 %v3278
    %3288 = vmatprep.subr.mxu0 0.0
    %3289 = vmatpush1.msra.mxu0 0.0
    %3290 = vmatprep.subr.mxu0 0.0
    %3291 = vmatpush1.msra.mxu0 0.0
    %3292 = vmatprep.subr.mxu0 0.0
    %3293 = vmatpush1.msra.mxu0 0.0
    %3294 = vmatprep.subr.mxu0 0.0
    %3295 = vmatpush1.msra.mxu0 0.0
    %3296 = vmatprep.subr.mxu0 0.0
    %3297 = vmatpush1.msra.mxu0 0.0
    %3298 = vmatprep.subr.mxu0 0.0
    %3299 = vmatpush1.msra.mxu0 0.0
    %3300 = vmatprep.subr.mxu0 0.0
    %3301 = vmatpush1.msra.mxu0 0.0
    %3302 = vmatprep.subr.mxu0 0.0
    %3303 = vmatpush1.msra.mxu0 0.0
    %3304 = vmatprep.subr.mxu0 0.0
    %3305 = vmatpush1.msra.mxu0 0.0
    %3306 = vmatprep.subr.mxu0 0.0
    %3307 = vmatpush1.msra.mxu0 0.0
    %3308 = vmatprep.subr.mxu0 0.0
    %3309 = vmatpush1.msra.mxu0 0.0
    %3310 = vmatprep.subr.mxu0 0.0
    %3311 = vmatpush1.msra.mxu0 0.0
    %3312 = vmatprep.subr.mxu0 0.0
    %3313 = vmatpush1.msra.mxu0 0.0
    %3314 = vmatprep.subr.mxu0 0.0
    %3315 = vmatpush1.msra.mxu0 0.0
    %3316 = vmatprep.subr.mxu0 0.0
    %3317 = vmatpush1.msra.mxu0 0.0
    %3318 = vmatprep.subr.mxu0 0.0
    %3319 = vmatpush1.msra.mxu0 0.0
    %3320 = vmatprep.subr.mxu0 0.0
    %3321 = vmatpush1.msra.mxu0 0.0
    %3322 = vmatprep.subr.mxu0 0.0
    %3323 = vmatpush1.msra.mxu0 0.0
    %3324 = vmatprep.subr.mxu0 0.0
    %3325 = vmatpush1.msra.mxu0 0.0
    %3326 = vmatprep.subr.mxu0 0.0
    %3327 = vmatpush1.msra.mxu0 0.0
    %3328 = vmatprep.subr.mxu0 0.0
    %3329 = vmatpush1.msra.mxu0 0.0
    %3330 = vmatprep.subr.mxu0 0.0
    %3331 = vmatpush1.msra.mxu0 0.0
    %3332 = vmatprep.subr.mxu0 0.0
    %3333 = vmatpush1.msra.mxu0 0.0
    %3334 = vmatprep.subr.mxu0 0.0
    %3335 = vmatpush1.msra.mxu0 0.0
    %3336 = vmatprep.subr.mxu0 0.0
    %3337 = vmatpush1.msra.mxu0 0.0
    %3338 = vmatprep.subr.mxu0 0.0
    %3339 = vmatpush1.msra.mxu0 0.0
    %3340 = vmatprep.subr.mxu0 0.0
    %3341 = vmatpush1.msra.mxu0 0.0
    %3342 = vmatprep.subr.mxu0 0.0
    %3343 = vmatpush1.msra.mxu0 0.0
    %3344 = vmatprep.subr.mxu0 0.0
    %3345 = vmatpush1.msra.mxu0 0.0
    %3346 = vmatprep.subr.mxu0 0.0
    %3347 = vmatpush1.msra.mxu0 0.0
    %3348 = vmatprep.mubr.f32.mxu0 0.0
    %3349 = vmatmul.mubr.f32.gmra.mrb[0].mxu0 %v3282
    %v3350 = vpop.f32.mrb[0].mxu0
    %v3351 = vadd.f32 0.0, %v3350
    %v3352 = vpop.f32.mrb[0].mxu0
    %3353 = vdwg.mxu0
    %3355 = vrot.lane.b32.xlu0 %v2877, 8
    %v3356 = vpop.permute.xlu0 %3355
    %3359 = vrot.lane.b32.xlu0 %v2956, 16
    %v3360 = vpop.permute.xlu0 %3359
    %3363 = vrot.lane.b32.xlu0 %v3035, 24
    %v3364 = vpop.permute.xlu0 %3363
    %v3366 = vsel %vm276, %v2798, %v3356
    %v3367 = vsel %vm1592, %v3366, %v3360
    %v3368 = vsel %vm1594, %v3367, %v3364
    %3370 = vrot.lane.b32.xlu0 %v3193, 8
    %v3371 = vpop.permute.xlu0 %3370
    %3374 = vrot.lane.b32.xlu0 %v3272, 16
    %v3375 = vpop.permute.xlu0 %3374
    %3378 = vrot.lane.b32.xlu0 %v3351, 24
    %v3379 = vpop.permute.xlu0 %3378
    %v3381 = vsel %vm276, %v3114, %v3371
    %v3382 = vsel %vm1592, %v3381, %v3375
    %v3383 = vsel %vm1594, %v3382, %v3379
    %v3384 = vld [vmem:[%s6] sm:$0xff]
    %v3385 = vld [vmem:[%s6 + $0x8] sm:$0xff]
    %v3386 = vld [vmem:[%s6 + $0x10] sm:$0xff]
    %v3387 = vld [vmem:[%s6 + $0x18] sm:$0xff]
    %v3388 = vlaneseq
    %v3389 = vshrl.u32 %v3388, 7
    %v3390 = vsub.s32 7, %v3389
    %v3391 = vrot.slane %v98, %v3390
    %v3393 = vsel %vm106, %v3368, 0
    %v3396 = vsel %vm106, %v3383, 0
    %3398 = vmatprep.subr.mxu0 0.0
    %3399 = vmatpush1.msra.mxu0 %v3384
    %3400 = vmatprep.subr.mxu0 0.0
    %3401 = vmatpush1.msra.mxu0 %v3385
    %3402 = vmatprep.subr.mxu0 0.0
    %3403 = vmatpush1.msra.mxu0 %v3386
    %3404 = vmatprep.subr.mxu0 0.0
    %3405 = vmatpush1.msra.mxu0 %v3387
    %3406 = vmatprep.subr.mxu0 0.0
    %3407 = vmatpush1.msra.mxu0 0.0
    %3408 = vmatprep.subr.mxu0 0.0
    %3409 = vmatpush1.msra.mxu0 0.0
    %3410 = vmatprep.subr.mxu0 0.0
    %3411 = vmatpush1.msra.mxu0 0.0
    %3412 = vmatprep.subr.mxu0 0.0
    %3413 = vmatpush1.msra.mxu0 0.0
    %3414 = vmatprep.subr.mxu0 0.0
    %3415 = vmatpush1.msra.mxu0 0.0
    %3416 = vmatprep.subr.mxu0 0.0
    %3417 = vmatpush1.msra.mxu0 0.0
    %3418 = vmatprep.subr.mxu0 0.0
    %3419 = vmatpush1.msra.mxu0 0.0
    %3420 = vmatprep.subr.mxu0 0.0
    %3421 = vmatpush1.msra.mxu0 0.0
    %3422 = vmatprep.subr.mxu0 0.0
    %3423 = vmatpush1.msra.mxu0 0.0
    %3424 = vmatprep.subr.mxu0 0.0
    %3425 = vmatpush1.msra.mxu0 0.0
    %3426 = vmatprep.subr.mxu0 0.0
    %3427 = vmatpush1.msra.mxu0 0.0
    %3428 = vmatprep.subr.mxu0 0.0
    %3429 = vmatpush1.msra.mxu0 0.0
    %3430 = vmatprep.subr.mxu0 0.0
    %3431 = vmatpush1.msra.mxu0 0.0
    %3432 = vmatprep.subr.mxu0 0.0
    %3433 = vmatpush1.msra.mxu0 0.0
    %3434 = vmatprep.subr.mxu0 0.0
    %3435 = vmatpush1.msra.mxu0 0.0
    %3436 = vmatprep.subr.mxu0 0.0
    %3437 = vmatpush1.msra.mxu0 0.0
    %3438 = vmatprep.subr.mxu0 0.0
    %3439 = vmatpush1.msra.mxu0 0.0
    %3440 = vmatprep.subr.mxu0 0.0
    %3441 = vmatpush1.msra.mxu0 0.0
    %3442 = vmatprep.subr.mxu0 0.0
    %3443 = vmatpush1.msra.mxu0 0.0
    %3444 = vmatprep.subr.mxu0 0.0
    %3445 = vmatpush1.msra.mxu0 0.0
    %3446 = vmatprep.subr.mxu0 0.0
    %3447 = vmatpush1.msra.mxu0 0.0
    %3448 = vmatprep.subr.mxu0 0.0
    %3449 = vmatpush1.msra.mxu0 0.0
    %3450 = vmatprep.subr.mxu0 0.0
    %3451 = vmatpush1.msra.mxu0 0.0
    %3452 = vmatprep.subr.mxu0 0.0
    %3453 = vmatpush1.msra.mxu0 0.0
    %3454 = vmatprep.subr.mxu0 0.0
    %3455 = vmatpush1.msra.mxu0 0.0
    %3456 = vmatprep.subr.mxu0 0.0
    %3457 = vmatpush1.msra.mxu0 0.0
    %3458 = vmatprep.subr.mxu0 0.0
    %3459 = vmatpush1.msra.mxu0 0.0
    %3460 = vmatprep.subr.mxu0 0.0
    %3461 = vmatpush1.msra.mxu0 0.0
    %3462 = vmatprep.mubr.f32.mxu0 0.0
    %3463 = vmatmul.mubr.f32.gmra.mrb[0].mxu0 %v3393
    %v3464 = vpop.f32.mrb[0].mxu0
    %v3465 = vadd.f32 %v3391, %v3464
    %v3466 = vpop.f32.mrb[0].mxu0
    %3467 = vmatprep.mubr.f32.mxu0 0.0
    %3468 = vmatmul.mubr.f32.gmra.mrb[0].mxu0 %v3396
    %v3469 = vpop.f32.mrb[0].mxu0
    %v3470 = vadd.f32 %v3391, %v3469
    %v3471 = vpop.f32.mrb[0].mxu0
    %3472 = vdwg.mxu0
    %v3473 = vadd.f32 %v1739, %v3465
    %v3474 = vadd.f32 %v1740, %v3470
    %v3475 = vsel %vm106, %v3473, 0.0
    %3476 = vadd.xlane.f32.xlu0 %v3475
    %v3477 = vpop.xlane.xlu0 %3476
    %v3478 = vsel %vm106, %v3474, 0.0
    %3479 = vadd.xlane.f32.xlu0 %v3478
    %v3480 = vpop.xlane.xlu0 %3479
    %v3481 = vmul.f32 %v3477, %v1708
    %v3482 = vmul.f32 %v3480, %v1708
    %v3483 = vsub.f32 %v3473, %v3481
    %v3484 = vsub.f32 %v3474, %v3482
    %v3485 = vmul.f32 %v3483, %v3483
    %v3486 = vmul.f32 %v3484, %v3484
    %v3487 = vsel %vm106, %v3485, 0.0
    %3488 = vadd.xlane.f32.xlu0 %v3487
    %v3489 = vpop.xlane.xlu0 %3488
    %v3490 = vsel %vm106, %v3486, 0.0
    %3491 = vadd.xlane.f32.xlu0 %v3490
    %v3492 = vpop.xlane.xlu0 %3491
    %v3493 = vmul.f32 %v3489, %v1708
    %v3494 = vmul.f32 %v3492, %v1708
    %v3495 = vadd.f32 %v3493, 1e-05
    %v3496 = vadd.f32 %v3494, 1e-05
    %v3497 = vrsqrt.pop %v3495
    %v3498 = vrsqrt.pop %v3496
    %v3499 = vmul.f32 %v3483, %v3497
    %v3500 = vmul.f32 %v3484, %v3498
    %v3501 = vlaneseq
    %v3502 = vshrl.u32 %v3501, 7
    %v3503 = vsub.s32 3, %v3502
    %v3504 = vrot.slane %v99, %v3503
    %v3505 = vmul.f32 %v3499, %v3504
    %v3506 = vmul.f32 %v3500, %v3504
    %v3507 = vlaneseq
    %v3508 = vshrl.u32 %v3507, 7
    %v3509 = vsub.s32 4, %v3508
    %v3510 = vrot.slane %v99, %v3509
    %v3511 = vadd.f32 %v3505, %v3510
    %v3512 = vadd.f32 %v3506, %v3510
    %v3513 = vld [vmem:[#allocation7] sm:$0xff]
    %v3514 = vld [vmem:[#allocation7 + $0x8] sm:$0xff]
    %v3515 = vld [vmem:[#allocation7 + $0x10] sm:$0xff]
    %v3516 = vld [vmem:[#allocation7 + $0x18] sm:$0xff]
    %v3517 = vld [vmem:[%s9] sm:$0x1]
    %v3519 = vlaneseq
    %v3520 = vshrl.u32 %v3519, 7
    %v3521 = vsub.s32 0, %v3520
    %v3522 = vrot.slane %v3517, %v3521
    %v3525 = vsel %vm106, %v3511, 0
    %v3528 = vsel %vm106, %v3512, 0
    %3530 = vmatprep.subr.mxu0 0.0
    %3531 = vmatpush1.msra.mxu0 %v3513
    %3532 = vmatprep.subr.mxu0 0.0
    %3533 = vmatpush1.msra.mxu0 %v3514
    %3534 = vmatprep.subr.mxu0 0.0
    %3535 = vmatpush1.msra.mxu0 %v3515
    %3536 = vmatprep.subr.mxu0 0.0
    %3537 = vmatpush1.msra.mxu0 %v3516
    %3538 = vmatprep.subr.mxu0 0.0
    %3539 = vmatpush1.msra.mxu0 0.0
    %3540 = vmatprep.subr.mxu0 0.0
    %3541 = vmatpush1.msra.mxu0 0.0
    %3542 = vmatprep.subr.mxu0 0.0
    %3543 = vmatpush1.msra.mxu0 0.0
    %3544 = vmatprep.subr.mxu0 0.0
    %3545 = vmatpush1.msra.mxu0 0.0
    %3546 = vmatprep.subr.mxu0 0.0
    %3547 = vmatpush1.msra.mxu0 0.0
    %3548 = vmatprep.subr.mxu0 0.0
    %3549 = vmatpush1.msra.mxu0 0.0
    %3550 = vmatprep.subr.mxu0 0.0
    %3551 = vmatpush1.msra.mxu0 0.0
    %3552 = vmatprep.subr.mxu0 0.0
    %3553 = vmatpush1.msra.mxu0 0.0
    %3554 = vmatprep.subr.mxu0 0.0
    %3555 = vmatpush1.msra.mxu0 0.0
    %3556 = vmatprep.subr.mxu0 0.0
    %3557 = vmatpush1.msra.mxu0 0.0
    %3558 = vmatprep.subr.mxu0 0.0
    %3559 = vmatpush1.msra.mxu0 0.0
    %3560 = vmatprep.subr.mxu0 0.0
    %3561 = vmatpush1.msra.mxu0 0.0
    %3562 = vmatprep.subr.mxu0 0.0
    %3563 = vmatpush1.msra.mxu0 0.0
    %3564 = vmatprep.subr.mxu0 0.0
    %3565 = vmatpush1.msra.mxu0 0.0
    %3566 = vmatprep.subr.mxu0 0.0
    %3567 = vmatpush1.msra.mxu0 0.0
    %3568 = vmatprep.subr.mxu0 0.0
    %3569 = vmatpush1.msra.mxu0 0.0
    %3570 = vmatprep.subr.mxu0 0.0
    %3571 = vmatpush1.msra.mxu0 0.0
    %3572 = vmatprep.subr.mxu0 0.0
    %3573 = vmatpush1.msra.mxu0 0.0
    %3574 = vmatprep.subr.mxu0 0.0
    %3575 = vmatpush1.msra.mxu0 0.0
    %3576 = vmatprep.subr.mxu0 0.0
    %3577 = vmatpush1.msra.mxu0 0.0
    %3578 = vmatprep.subr.mxu0 0.0
    %3579 = vmatpush1.msra.mxu0 0.0
    %3580 = vmatprep.subr.mxu0 0.0
    %3581 = vmatpush1.msra.mxu0 0.0
    %3582 = vmatprep.subr.mxu0 0.0
    %3583 = vmatpush1.msra.mxu0 0.0
    %3584 = vmatprep.subr.mxu0 0.0
    %3585 = vmatpush1.msra.mxu0 0.0
    %3586 = vmatprep.subr.mxu0 0.0
    %3587 = vmatpush1.msra.mxu0 0.0
    %3588 = vmatprep.subr.mxu0 0.0
    %3589 = vmatpush1.msra.mxu0 0.0
    %3590 = vmatprep.subr.mxu0 0.0
    %3591 = vmatpush1.msra.mxu0 0.0
    %3592 = vmatprep.subr.mxu0 0.0
    %3593 = vmatpush1.msra.mxu0 0.0
    %3594 = vmatprep.mubr.f32.mxu0 0.0
    %3595 = vmatmul.mubr.f32.gmra.mrb[0].mxu0 %v3525
    %v3596 = vpop.f32.mrb[0].mxu0
    %v3597 = vadd.f32 %v3522, %v3596
    %v3598 = vpop.f32.mrb[0].mxu0
    %3599 = vmatprep.mubr.f32.mxu0 0.0
    %3600 = vmatmul.mubr.f32.gmra.mrb[0].mxu0 %v3528
    %v3601 = vpop.f32.mrb[0].mxu0
    %v3602 = vadd.f32 %v3522, %v3601
    %v3603 = vpop.f32.mrb[0].mxu0
    %3604 = vdwg.mxu0
    %v3605 = vmax.f32 %v3597, 0.0
    %v3606 = vmax.f32 %v3602, 0.0
    %v3607 = vld [vmem:[%s8] sm:$0xff]
    %v3608 = vld [vmem:[%s8 + $0x8] sm:$0xff]
    %v3609 = vld [vmem:[%s8 + $0x10] sm:$0xff]
    %v3610 = vld [vmem:[%s8 + $0x18] sm:$0xff]
    %v3611 = vld [vmem:[%s8 + $0x20] sm:$0xff]
    %v3612 = vld [vmem:[%s8 + $0x28] sm:$0xff]
    %v3613 = vld [vmem:[%s8 + $0x30] sm:$0xff]
    %v3614 = vld [vmem:[%s8 + $0x38] sm:$0xff]
    %v3615 = vlaneseq
    %v3616 = vshrl.u32 %v3615, 7
    %v3617 = vsub.s32 0, %v3616
    %v3618 = vrot.slane %v99, %v3617
    %vm3619 = vcmask 523264
    %v3621 = vsel %vm3619, %v3605, 0
    %v3624 = vsel %vm3619, %v3606, 0
    %3626 = vmatprep.subr.mxu0 0.0
    %3627 = vmatpush1.msra.mxu0 %v3607
    %3628 = vmatprep.subr.mxu0 0.0
    %3629 = vmatpush1.msra.mxu0 %v3608
    %3630 = vmatprep.subr.mxu0 0.0
    %3631 = vmatpush1.msra.mxu0 %v3609
    %3632 = vmatprep.subr.mxu0 0.0
    %3633 = vmatpush1.msra.mxu0 %v3610
    %3634 = vmatprep.subr.mxu0 0.0
    %3635 = vmatpush1.msra.mxu0 %v3611
    %3636 = vmatprep.subr.mxu0 0.0
    %3637 = vmatpush1.msra.mxu0 %v3612
    %3638 = vmatprep.subr.mxu0 0.0
    %3639 = vmatpush1.msra.mxu0 %v3613
    %3640 = vmatprep.subr.mxu0 0.0
    %3641 = vmatpush1.msra.mxu0 %v3614
    %3642 = vmatprep.subr.mxu0 0.0
    %3643 = vmatpush1.msra.mxu0 0.0
    %3644 = vmatprep.subr.mxu0 0.0
    %3645 = vmatpush1.msra.mxu0 0.0
    %3646 = vmatprep.subr.mxu0 0.0
    %3647 = vmatpush1.msra.mxu0 0.0
    %3648 = vmatprep.subr.mxu0 0.0
    %3649 = vmatpush1.msra.mxu0 0.0
    %3650 = vmatprep.subr.mxu0 0.0
    %3651 = vmatpush1.msra.mxu0 0.0
    %3652 = vmatprep.subr.mxu0 0.0
    %3653 = vmatpush1.msra.mxu0 0.0
    %3654 = vmatprep.subr.mxu0 0.0
    %3655 = vmatpush1.msra.mxu0 0.0
    %3656 = vmatprep.subr.mxu0 0.0
    %3657 = vmatpush1.msra.mxu0 0.0
    %3658 = vmatprep.subr.mxu0 0.0
    %3659 = vmatpush1.msra.mxu0 0.0
    %3660 = vmatprep.subr.mxu0 0.0
    %3661 = vmatpush1.msra.mxu0 0.0
    %3662 = vmatprep.subr.mxu0 0.0
    %3663 = vmatpush1.msra.mxu0 0.0
    %3664 = vmatprep.subr.mxu0 0.0
    %3665 = vmatpush1.msra.mxu0 0.0
    %3666 = vmatprep.subr.mxu0 0.0
    %3667 = vmatpush1.msra.mxu0 0.0
    %3668 = vmatprep.subr.mxu0 0.0
    %3669 = vmatpush1.msra.mxu0 0.0
    %3670 = vmatprep.subr.mxu0 0.0
    %3671 = vmatpush1.msra.mxu0 0.0
    %3672 = vmatprep.subr.mxu0 0.0
    %3673 = vmatpush1.msra.mxu0 0.0
    %3674 = vmatprep.subr.mxu0 0.0
    %3675 = vmatpush1.msra.mxu0 0.0
    %3676 = vmatprep.subr.mxu0 0.0
    %3677 = vmatpush1.msra.mxu0 0.0
    %3678 = vmatprep.subr.mxu0 0.0
    %3679 = vmatpush1.msra.mxu0 0.0
    %3680 = vmatprep.subr.mxu0 0.0
    %3681 = vmatpush1.msra.mxu0 0.0
    %3682 = vmatprep.subr.mxu0 0.0
    %3683 = vmatpush1.msra.mxu0 0.0
    %3684 = vmatprep.subr.mxu0 0.0
    %3685 = vmatpush1.msra.mxu0 0.0
    %3686 = vmatprep.subr.mxu0 0.0
    %3687 = vmatpush1.msra.mxu0 0.0
    %3688 = vmatprep.subr.mxu0 0.0
    %3689 = vmatpush1.msra.mxu0 0.0
    %3690 = vmatprep.mubr.f32.mxu0 0.0
    %3691 = vmatmul.mubr.f32.gmra.mrb[0].mxu0 %v3621
    %v3692 = vpop.f32.mrb[0].mxu0
    %v3693 = vadd.f32 %v3618, %v3692
    %v3694 = vpop.f32.mrb[0].mxu0
    %3695 = vmatprep.mubr.f32.mxu0 0.0
    %3696 = vmatmul.mubr.f32.gmra.mrb[0].mxu0 %v3624
    %v3697 = vpop.f32.mrb[0].mxu0
    %v3698 = vadd.f32 %v3618, %v3697
    %v3699 = vpop.f32.mrb[0].mxu0
    %3700 = vdwg.mxu0
    %v3701 = vadd.f32 %v3511, %v3693
    %v3702 = vadd.f32 %v3512, %v3698
    %v3703 = vsel %vm106, %v3701, 0.0
    %3704 = vadd.xlane.f32.xlu0 %v3703
    %v3705 = vpop.xlane.xlu0 %3704
    %v3706 = vsel %vm106, %v3702, 0.0
    %3707 = vadd.xlane.f32.xlu0 %v3706
    %v3708 = vpop.xlane.xlu0 %3707
    %v3709 = vmul.f32 %v3705, %v1708
    %v3710 = vmul.f32 %v3708, %v1708
    %v3711 = vsub.f32 %v3701, %v3709
    %v3712 = vsub.f32 %v3702, %v3710
    %v3713 = vmul.f32 %v3711, %v3711
    %v3714 = vmul.f32 %v3712, %v3712
    %v3715 = vsel %vm106, %v3713, 0.0
    %3716 = vadd.xlane.f32.xlu0 %v3715
    %v3717 = vpop.xlane.xlu0 %3716
    %v3718 = vsel %vm106, %v3714, 0.0
    %3719 = vadd.xlane.f32.xlu0 %v3718
    %v3720 = vpop.xlane.xlu0 %3719
    %v3721 = vmul.f32 %v3717, %v1708
    %v3722 = vmul.f32 %v3720, %v1708
    %v3723 = vadd.f32 %v3721, 1e-05
    %v3724 = vadd.f32 %v3722, 1e-05
    %v3725 = vrsqrt.pop %v3723
    %v3726 = vrsqrt.pop %v3724
    %v3727 = vmul.f32 %v3711, %v3725
    %v3728 = vmul.f32 %v3712, %v3726
    %v3729 = vlaneseq
    %v3730 = vshrl.u32 %v3729, 7
    %v3731 = vsub.s32 5, %v3730
    %v3732 = vrot.slane %v99, %v3731
    %v3733 = vmul.f32 %v3727, %v3732
    %v3734 = vmul.f32 %v3728, %v3732
    %v3735 = vlaneseq
    %v3736 = vshrl.u32 %v3735, 7
    %v3737 = vsub.s32 6, %v3736
    %v3738 = vrot.slane %v99, %v3737
    %v3739 = vadd.f32 %v3733, %v3738
    %v3740 = vadd.f32 %v3734, %v3738
    %s3741 = scalar_lea.vmem %s10, 16
    %v3742 = vld [vmem:[%s3741] sm:$0xff]
    %v3743 = vld [vmem:[%s3741 + $0x8] sm:$0x7f]
    %v3744 = vadd.f32 %v3739, %v88
    %v3745 = vadd.f32 %v3740, %v89
    %s3746 = scalar_lea.vmem %s3, 32
    %v3747 = vld [vmem:[%s3746] sm:$0xff]
    %v3748 = vld [vmem:[%s3746 + $0x8] sm:$0xff]
    %v3749 = vld [vmem:[%s3746 + $0x10] sm:$0xff]
    %v3750 = vld [vmem:[%s3746 + $0x18] sm:$0xff]
    %v3752 = vsel %vm106, %v3744, 0
    %v3755 = vsel %vm106, %v3745, 0
    %v3758 = vsel %vm106, %v3739, 0
    %v3761 = vsel %vm106, %v3740, 0
    %3763 = vmatprep.subr.mxu0 0.0
    %3764 = vmatpush1.msra.mxu0 %v3747
    %3765 = vmatprep.subr.mxu0 0.0
    %3766 = vmatpush1.msra.mxu0 %v3748
    %3767 = vmatprep.subr.mxu0 0.0
    %3768 = vmatpush1.msra.mxu0 %v3749
    %3769 = vmatprep.subr.mxu0 0.0
    %3770 = vmatpush1.msra.mxu0 %v3750
    %3771 = vmatprep.subr.mxu0 0.0
    %3772 = vmatpush1.msra.mxu0 0.0
    %3773 = vmatprep.subr.mxu0 0.0
    %3774 = vmatpush1.msra.mxu0 0.0
    %3775 = vmatprep.subr.mxu0 0.0
    %3776 = vmatpush1.msra.mxu0 0.0
    %3777 = vmatprep.subr.mxu0 0.0
    %3778 = vmatpush1.msra.mxu0 0.0
    %3779 = vmatprep.subr.mxu0 0.0
    %3780 = vmatpush1.msra.mxu0 0.0
    %3781 = vmatprep.subr.mxu0 0.0
    %3782 = vmatpush1.msra.mxu0 0.0
    %3783 = vmatprep.subr.mxu0 0.0
    %3784 = vmatpush1.msra.mxu0 0.0
    %3785 = vmatprep.subr.mxu0 0.0
    %3786 = vmatpush1.msra.mxu0 0.0
    %3787 = vmatprep.subr.mxu0 0.0
    %3788 = vmatpush1.msra.mxu0 0.0
    %3789 = vmatprep.subr.mxu0 0.0
    %3790 = vmatpush1.msra.mxu0 0.0
    %3791 = vmatprep.subr.mxu0 0.0
    %3792 = vmatpush1.msra.mxu0 0.0
    %3793 = vmatprep.subr.mxu0 0.0
    %3794 = vmatpush1.msra.mxu0 0.0
    %3795 = vmatprep.subr.mxu0 0.0
    %3796 = vmatpush1.msra.mxu0 0.0
    %3797 = vmatprep.subr.mxu0 0.0
    %3798 = vmatpush1.msra.mxu0 0.0
    %3799 = vmatprep.subr.mxu0 0.0
    %3800 = vmatpush1.msra.mxu0 0.0
    %3801 = vmatprep.subr.mxu0 0.0
    %3802 = vmatpush1.msra.mxu0 0.0
    %3803 = vmatprep.subr.mxu0 0.0
    %3804 = vmatpush1.msra.mxu0 0.0
    %3805 = vmatprep.subr.mxu0 0.0
    %3806 = vmatpush1.msra.mxu0 0.0
    %3807 = vmatprep.subr.mxu0 0.0
    %3808 = vmatpush1.msra.mxu0 0.0
    %3809 = vmatprep.subr.mxu0 0.0
    %3810 = vmatpush1.msra.mxu0 0.0
    %3811 = vmatprep.subr.mxu0 0.0
    %3812 = vmatpush1.msra.mxu0 0.0
    %3813 = vmatprep.subr.mxu0 0.0
    %3814 = vmatpush1.msra.mxu0 0.0
    %3815 = vmatprep.subr.mxu0 0.0
    %3816 = vmatpush1.msra.mxu0 0.0
    %3817 = vmatprep.subr.mxu0 0.0
    %3818 = vmatpush1.msra.mxu0 0.0
    %3819 = vmatprep.subr.mxu0 0.0
    %3820 = vmatpush1.msra.mxu0 0.0
    %3821 = vmatprep.subr.mxu0 0.0
    %3822 = vmatpush1.msra.mxu0 0.0
    %3823 = vmatprep.subr.mxu0 0.0
    %3824 = vmatpush1.msra.mxu0 0.0
    %3825 = vmatprep.subr.mxu0 0.0
    %3826 = vmatpush1.msra.mxu0 0.0
    %3827 = vmatprep.mubr.f32.mxu0 0.0
    %3828 = vmatmul.mubr.f32.gmra.mrb[0].mxu0 %v3752
    %v3829 = vpop.f32.mrb[0].mxu0
    %v3830 = vadd.f32 0.0, %v3829
    %v3831 = vpop.f32.mrb[0].mxu0
    %3832 = vmatprep.mubr.f32.mxu0 0.0
    %3833 = vmatmul.mubr.f32.gmra.mrb[0].mxu0 %v3755
    %v3834 = vpop.f32.mrb[0].mxu0
    %v3835 = vadd.f32 0.0, %v3834
    %v3836 = vpop.f32.mrb[0].mxu0
    %3837 = vmatprep.mubr.f32.mxu0 0.0
    %3838 = vmatmul.mubr.f32.gmra.mrb[0].mxu0 %v3758
    %v3839 = vpop.f32.mrb[0].mxu0
    %v3840 = vadd.f32 0.0, %v3839
    %v3841 = vpop.f32.mrb[0].mxu0
    %3842 = vmatprep.mubr.f32.mxu0 0.0
    %3843 = vmatmul.mubr.f32.gmra.mrb[0].mxu0 %v3761
    %v3844 = vpop.f32.mrb[0].mxu0
    %v3845 = vadd.f32 0.0, %v3844
    %v3846 = vpop.f32.mrb[0].mxu0
    %3847 = vdwg.mxu0
    %v3848 = vlaneseq
    %v3849 = vshrl.u32 %v3848, 7
    %v3850 = vsub.s32 0, %v3849
    %v3851 = vrot.slane %v3742, %v3850
    %v3852 = vadd.f32 %v3830, %v3851
    %v3853 = vadd.f32 %v3835, %v3851
    %v3854 = vlaneseq
    %v3855 = vshrl.u32 %v3854, 7
    %v3856 = vsub.s32 1, %v3855
    %v3857 = vrot.slane %v3742, %v3856
    %3859 = vrot.lane.b32.xlu0 %v3857, 32
    %v3860 = vpop.permute.xlu0 %3859
    %v3862 = vadd.f32 %v3830, %v3860
    %v3863 = vadd.f32 %v3835, %v3860
    %v3864 = vlaneseq
    %v3865 = vshrl.u32 %v3864, 7
    %v3866 = vsub.s32 2, %v3865
    %v3867 = vrot.slane %v3742, %v3866
    %3869 = vrot.lane.b32.xlu0 %v3867, 64
    %v3870 = vpop.permute.xlu0 %3869
    %v3872 = vadd.f32 %v3840, %v3870
    %v3873 = vadd.f32 %v3845, %v3870
    %v3874 = vmul.f32 %v3852, 0.35355338
    %v3875 = vmul.f32 %v3853, 0.35355338
    %3877 = vrot.lane.b32.xlu0 %v3874, 120
    %v3878 = vpop.permute.xlu0 %3877
    %3879 = vrot.lane.b32.xlu0 %v3874, 112
    %v3880 = vpop.permute.xlu0 %3879
    %3881 = vrot.lane.b32.xlu0 %v3874, 104
    %v3882 = vpop.permute.xlu0 %3881
    %3884 = vrot.lane.b32.xlu0 %v3875, 120
    %v3885 = vpop.permute.xlu0 %3884
    %3886 = vrot.lane.b32.xlu0 %v3875, 112
    %v3887 = vpop.permute.xlu0 %3886
    %3888 = vrot.lane.b32.xlu0 %v3875, 104
    %v3889 = vpop.permute.xlu0 %3888
    %3891 = vrot.lane.b32.xlu0 %v3862, 120
    %v3892 = vpop.permute.xlu0 %3891
    %3893 = vrot.lane.b32.xlu0 %v3862, 112
    %v3894 = vpop.permute.xlu0 %3893
    %3895 = vrot.lane.b32.xlu0 %v3862, 104
    %v3896 = vpop.permute.xlu0 %3895
    %3898 = vrot.lane.b32.xlu0 %v3863, 120
    %v3899 = vpop.permute.xlu0 %3898
    %3900 = vrot.lane.b32.xlu0 %v3863, 112
    %v3901 = vpop.permute.xlu0 %3900
    %3902 = vrot.lane.b32.xlu0 %v3863, 104
    %v3903 = vpop.permute.xlu0 %3902
    %3905 = vrot.lane.b32.xlu0 %v3872, 120
    %v3906 = vpop.permute.xlu0 %3905
    %3907 = vrot.lane.b32.xlu0 %v3872, 112
    %v3908 = vpop.permute.xlu0 %3907
    %3909 = vrot.lane.b32.xlu0 %v3872, 104
    %v3910 = vpop.permute.xlu0 %3909
    %3912 = vrot.lane.b32.xlu0 %v3873, 120
    %v3913 = vpop.permute.xlu0 %3912
    %3914 = vrot.lane.b32.xlu0 %v3873, 112
    %v3915 = vpop.permute.xlu0 %3914
    %3916 = vrot.lane.b32.xlu0 %v3873, 104
    %v3917 = vpop.permute.xlu0 %3916
    %3918 = vrot.lane.b32.xlu0 %v3862, 96
    %v3919 = vpop.permute.xlu0 %3918
    %v3920 = vsel %vm276, %v3874, 0
    %v3922 = vsel %vm276, %v3919, 0
    %3924 = vmatprep.subr.mxu0 0.0
    %3925 = vmatpush1.xpose.msra.mxu0 %v3922
    %3926 = vmatprep.subr.mxu0 0.0
    %3927 = vmatpush1.xpose.msra.mxu0 0.0
    %3928 = vmatprep.subr.mxu0 0.0
    %3929 = vmatpush1.xpose.msra.mxu0 0.0
    %3930 = vmatprep.subr.mxu0 0.0
    %3931 = vmatpush1.xpose.msra.mxu0 0.0
    %3932 = vmatprep.subr.mxu0 0.0
    %3933 = vmatpush1.xpose.msra.mxu0 0.0
    %3934 = vmatprep.subr.mxu0 0.0
    %3935 = vmatpush1.xpose.msra.mxu0 0.0
    %3936 = vmatprep.subr.mxu0 0.0
    %3937 = vmatpush1.xpose.msra.mxu0 0.0
    %3938 = vmatprep.subr.mxu0 0.0
    %3939 = vmatpush1.xpose.msra.mxu0 0.0
    %3940 = vmatprep.subr.mxu0 0.0
    %3941 = vmatpush1.xpose.msra.mxu0 0.0
    %3942 = vmatprep.subr.mxu0 0.0
    %3943 = vmatpush1.xpose.msra.mxu0 0.0
    %3944 = vmatprep.subr.mxu0 0.0
    %3945 = vmatpush1.xpose.msra.mxu0 0.0
    %3946 = vmatprep.subr.mxu0 0.0
    %3947 = vmatpush1.xpose.msra.mxu0 0.0
    %3948 = vmatprep.subr.mxu0 0.0
    %3949 = vmatpush1.xpose.msra.mxu0 0.0
    %3950 = vmatprep.subr.mxu0 0.0
    %3951 = vmatpush1.xpose.msra.mxu0 0.0
    %3952 = vmatprep.subr.mxu0 0.0
    %3953 = vmatpush1.xpose.msra.mxu0 0.0
    %3954 = vmatprep.subr.mxu0 0.0
    %3955 = vmatpush1.xpose.msra.mxu0 0.0
    %3956 = vmatprep.subr.mxu0 0.0
    %3957 = vmatpush1.xpose.msra.mxu0 0.0
    %3958 = vmatprep.subr.mxu0 0.0
    %3959 = vmatpush1.xpose.msra.mxu0 0.0
    %3960 = vmatprep.subr.mxu0 0.0
    %3961 = vmatpush1.xpose.msra.mxu0 0.0
    %3962 = vmatprep.subr.mxu0 0.0
    %3963 = vmatpush1.xpose.msra.mxu0 0.0
    %3964 = vmatprep.subr.mxu0 0.0
    %3965 = vmatpush1.xpose.msra.mxu0 0.0
    %3966 = vmatprep.subr.mxu0 0.0
    %3967 = vmatpush1.xpose.msra.mxu0 0.0
    %3968 = vmatprep.subr.mxu0 0.0
    %3969 = vmatpush1.xpose.msra.mxu0 0.0
    %3970 = vmatprep.subr.mxu0 0.0
    %3971 = vmatpush1.xpose.msra.mxu0 0.0
    %3972 = vmatprep.subr.mxu0 0.0
    %3973 = vmatpush1.xpose.msra.mxu0 0.0
    %3974 = vmatprep.subr.mxu0 0.0
    %3975 = vmatpush1.xpose.msra.mxu0 0.0
    %3976 = vmatprep.subr.mxu0 0.0
    %3977 = vmatpush1.xpose.msra.mxu0 0.0
    %3978 = vmatprep.subr.mxu0 0.0
    %3979 = vmatpush1.xpose.msra.mxu0 0.0
    %3980 = vmatprep.subr.mxu0 0.0
    %3981 = vmatpush1.xpose.msra.mxu0 0.0
    %3982 = vmatprep.subr.mxu0 0.0
    %3983 = vmatpush1.xpose.msra.mxu0 0.0
    %3984 = vmatprep.subr.mxu0 0.0
    %3985 = vmatpush1.xpose.msra.mxu0 0.0
    %3986 = vmatprep.subr.mxu0 0.0
    %3987 = vmatpush1.xpose.msra.mxu0 0.0
    %3988 = vmatprep.mubr.f32.mxu0 0.0
    %3989 = vmatmul.mubr.f32.gmra.mrb[0].mxu0 %v3920
    %v3990 = vpop.f32.mrb[0].mxu0
    %v3991 = vadd.f32 0.0, %v3990
    %v3992 = vpop.f32.mrb[0].mxu0
    %3993 = vdwg.mxu0
    %3994 = vrot.lane.b32.xlu0 %v3892, 96
    %v3995 = vpop.permute.xlu0 %3994
    %v3996 = vsel %vm276, %v3878, 0
    %v3998 = vsel %vm276, %v3995, 0
    %4000 = vmatprep.subr.mxu0 0.0
    %4001 = vmatpush1.xpose.msra.mxu0 %v3998
    %4002 = vmatprep.subr.mxu0 0.0
    %4003 = vmatpush1.xpose.msra.mxu0 0.0
    %4004 = vmatprep.subr.mxu0 0.0
    %4005 = vmatpush1.xpose.msra.mxu0 0.0
    %4006 = vmatprep.subr.mxu0 0.0
    %4007 = vmatpush1.xpose.msra.mxu0 0.0
    %4008 = vmatprep.subr.mxu0 0.0
    %4009 = vmatpush1.xpose.msra.mxu0 0.0
    %4010 = vmatprep.subr.mxu0 0.0
    %4011 = vmatpush1.xpose.msra.mxu0 0.0
    %4012 = vmatprep.subr.mxu0 0.0
    %4013 = vmatpush1.xpose.msra.mxu0 0.0
    %4014 = vmatprep.subr.mxu0 0.0
    %4015 = vmatpush1.xpose.msra.mxu0 0.0
    %4016 = vmatprep.subr.mxu0 0.0
    %4017 = vmatpush1.xpose.msra.mxu0 0.0
    %4018 = vmatprep.subr.mxu0 0.0
    %4019 = vmatpush1.xpose.msra.mxu0 0.0
    %4020 = vmatprep.subr.mxu0 0.0
    %4021 = vmatpush1.xpose.msra.mxu0 0.0
    %4022 = vmatprep.subr.mxu0 0.0
    %4023 = vmatpush1.xpose.msra.mxu0 0.0
    %4024 = vmatprep.subr.mxu0 0.0
    %4025 = vmatpush1.xpose.msra.mxu0 0.0
    %4026 = vmatprep.subr.mxu0 0.0
    %4027 = vmatpush1.xpose.msra.mxu0 0.0
    %4028 = vmatprep.subr.mxu0 0.0
    %4029 = vmatpush1.xpose.msra.mxu0 0.0
    %4030 = vmatprep.subr.mxu0 0.0
    %4031 = vmatpush1.xpose.msra.mxu0 0.0
    %4032 = vmatprep.subr.mxu0 0.0
    %4033 = vmatpush1.xpose.msra.mxu0 0.0
    %4034 = vmatprep.subr.mxu0 0.0
    %4035 = vmatpush1.xpose.msra.mxu0 0.0
    %4036 = vmatprep.subr.mxu0 0.0
    %4037 = vmatpush1.xpose.msra.mxu0 0.0
    %4038 = vmatprep.subr.mxu0 0.0
    %4039 = vmatpush1.xpose.msra.mxu0 0.0
    %4040 = vmatprep.subr.mxu0 0.0
    %4041 = vmatpush1.xpose.msra.mxu0 0.0
    %4042 = vmatprep.subr.mxu0 0.0
    %4043 = vmatpush1.xpose.msra.mxu0 0.0
    %4044 = vmatprep.subr.mxu0 0.0
    %4045 = vmatpush1.xpose.msra.mxu0 0.0
    %4046 = vmatprep.subr.mxu0 0.0
    %4047 = vmatpush1.xpose.msra.mxu0 0.0
    %4048 = vmatprep.subr.mxu0 0.0
    %4049 = vmatpush1.xpose.msra.mxu0 0.0
    %4050 = vmatprep.subr.mxu0 0.0
    %4051 = vmatpush1.xpose.msra.mxu0 0.0
    %4052 = vmatprep.subr.mxu0 0.0
    %4053 = vmatpush1.xpose.msra.mxu0 0.0
    %4054 = vmatprep.subr.mxu0 0.0
    %4055 = vmatpush1.xpose.msra.mxu0 0.0
    %4056 = vmatprep.subr.mxu0 0.0
    %4057 = vmatpush1.xpose.msra.mxu0 0.0
    %4058 = vmatprep.subr.mxu0 0.0
    %4059 = vmatpush1.xpose.msra.mxu0 0.0
    %4060 = vmatprep.subr.mxu0 0.0
    %4061 = vmatpush1.xpose.msra.mxu0 0.0
    %4062 = vmatprep.subr.mxu0 0.0
    %4063 = vmatpush1.xpose.msra.mxu0 0.0
    %4064 = vmatprep.mubr.f32.mxu0 0.0
    %4065 = vmatmul.mubr.f32.gmra.mrb[0].mxu0 %v3996
    %v4066 = vpop.f32.mrb[0].mxu0
    %v4067 = vadd.f32 0.0, %v4066
    %v4068 = vpop.f32.mrb[0].mxu0
    %4069 = vdwg.mxu0
    %4070 = vrot.lane.b32.xlu0 %v3894, 96
    %v4071 = vpop.permute.xlu0 %4070
    %v4072 = vsel %vm276, %v3880, 0
    %v4074 = vsel %vm276, %v4071, 0
    %4076 = vmatprep.subr.mxu0 0.0
    %4077 = vmatpush1.xpose.msra.mxu0 %v4074
    %4078 = vmatprep.subr.mxu0 0.0
    %4079 = vmatpush1.xpose.msra.mxu0 0.0
    %4080 = vmatprep.subr.mxu0 0.0
    %4081 = vmatpush1.xpose.msra.mxu0 0.0
    %4082 = vmatprep.subr.mxu0 0.0
    %4083 = vmatpush1.xpose.msra.mxu0 0.0
    %4084 = vmatprep.subr.mxu0 0.0
    %4085 = vmatpush1.xpose.msra.mxu0 0.0
    %4086 = vmatprep.subr.mxu0 0.0
    %4087 = vmatpush1.xpose.msra.mxu0 0.0
    %4088 = vmatprep.subr.mxu0 0.0
    %4089 = vmatpush1.xpose.msra.mxu0 0.0
    %4090 = vmatprep.subr.mxu0 0.0
    %4091 = vmatpush1.xpose.msra.mxu0 0.0
    %4092 = vmatprep.subr.mxu0 0.0
    %4093 = vmatpush1.xpose.msra.mxu0 0.0
    %4094 = vmatprep.subr.mxu0 0.0
    %4095 = vmatpush1.xpose.msra.mxu0 0.0
    %4096 = vmatprep.subr.mxu0 0.0
    %4097 = vmatpush1.xpose.msra.mxu0 0.0
    %4098 = vmatprep.subr.mxu0 0.0
    %4099 = vmatpush1.xpose.msra.mxu0 0.0
    %4100 = vmatprep.subr.mxu0 0.0
    %4101 = vmatpush1.xpose.msra.mxu0 0.0
    %4102 = vmatprep.subr.mxu0 0.0
    %4103 = vmatpush1.xpose.msra.mxu0 0.0
    %4104 = vmatprep.subr.mxu0 0.0
    %4105 = vmatpush1.xpose.msra.mxu0 0.0
    %4106 = vmatprep.subr.mxu0 0.0
    %4107 = vmatpush1.xpose.msra.mxu0 0.0
    %4108 = vmatprep.subr.mxu0 0.0
    %4109 = vmatpush1.xpose.msra.mxu0 0.0
    %4110 = vmatprep.subr.mxu0 0.0
    %4111 = vmatpush1.xpose.msra.mxu0 0.0
    %4112 = vmatprep.subr.mxu0 0.0
    %4113 = vmatpush1.xpose.msra.mxu0 0.0
    %4114 = vmatprep.subr.mxu0 0.0
    %4115 = vmatpush1.xpose.msra.mxu0 0.0
    %4116 = vmatprep.subr.mxu0 0.0
    %4117 = vmatpush1.xpose.msra.mxu0 0.0
    %4118 = vmatprep.subr.mxu0 0.0
    %4119 = vmatpush1.xpose.msra.mxu0 0.0
    %4120 = vmatprep.subr.mxu0 0.0
    %4121 = vmatpush1.xpose.msra.mxu0 0.0
    %4122 = vmatprep.subr.mxu0 0.0
    %4123 = vmatpush1.xpose.msra.mxu0 0.0
    %4124 = vmatprep.subr.mxu0 0.0
    %4125 = vmatpush1.xpose.msra.mxu0 0.0
    %4126 = vmatprep.subr.mxu0 0.0
    %4127 = vmatpush1.xpose.msra.mxu0 0.0
    %4128 = vmatprep.subr.mxu0 0.0
    %4129 = vmatpush1.xpose.msra.mxu0 0.0
    %4130 = vmatprep.subr.mxu0 0.0
    %4131 = vmatpush1.xpose.msra.mxu0 0.0
    %4132 = vmatprep.subr.mxu0 0.0
    %4133 = vmatpush1.xpose.msra.mxu0 0.0
    %4134 = vmatprep.subr.mxu0 0.0
    %4135 = vmatpush1.xpose.msra.mxu0 0.0
    %4136 = vmatprep.subr.mxu0 0.0
    %4137 = vmatpush1.xpose.msra.mxu0 0.0
    %4138 = vmatprep.subr.mxu0 0.0
    %4139 = vmatpush1.xpose.msra.mxu0 0.0
    %4140 = vmatprep.mubr.f32.mxu0 0.0
    %4141 = vmatmul.mubr.f32.gmra.mrb[0].mxu0 %v4072
    %v4142 = vpop.f32.mrb[0].mxu0
    %v4143 = vadd.f32 0.0, %v4142
    %v4144 = vpop.f32.mrb[0].mxu0
    %4145 = vdwg.mxu0
    %4146 = vrot.lane.b32.xlu0 %v3896, 96
    %v4147 = vpop.permute.xlu0 %4146
    %v4148 = vsel %vm276, %v3882, 0
    %v4150 = vsel %vm276, %v4147, 0
    %4152 = vmatprep.subr.mxu0 0.0
    %4153 = vmatpush1.xpose.msra.mxu0 %v4150
    %4154 = vmatprep.subr.mxu0 0.0
    %4155 = vmatpush1.xpose.msra.mxu0 0.0
    %4156 = vmatprep.subr.mxu0 0.0
    %4157 = vmatpush1.xpose.msra.mxu0 0.0
    %4158 = vmatprep.subr.mxu0 0.0
    %4159 = vmatpush1.xpose.msra.mxu0 0.0
    %4160 = vmatprep.subr.mxu0 0.0
    %4161 = vmatpush1.xpose.msra.mxu0 0.0
    %4162 = vmatprep.subr.mxu0 0.0
    %4163 = vmatpush1.xpose.msra.mxu0 0.0
    %4164 = vmatprep.subr.mxu0 0.0
    %4165 = vmatpush1.xpose.msra.mxu0 0.0
    %4166 = vmatprep.subr.mxu0 0.0
    %4167 = vmatpush1.xpose.msra.mxu0 0.0
    %4168 = vmatprep.subr.mxu0 0.0
    %4169 = vmatpush1.xpose.msra.mxu0 0.0
    %4170 = vmatprep.subr.mxu0 0.0
    %4171 = vmatpush1.xpose.msra.mxu0 0.0
    %4172 = vmatprep.subr.mxu0 0.0
    %4173 = vmatpush1.xpose.msra.mxu0 0.0
    %4174 = vmatprep.subr.mxu0 0.0
    %4175 = vmatpush1.xpose.msra.mxu0 0.0
    %4176 = vmatprep.subr.mxu0 0.0
    %4177 = vmatpush1.xpose.msra.mxu0 0.0
    %4178 = vmatprep.subr.mxu0 0.0
    %4179 = vmatpush1.xpose.msra.mxu0 0.0
    %4180 = vmatprep.subr.mxu0 0.0
    %4181 = vmatpush1.xpose.msra.mxu0 0.0
    %4182 = vmatprep.subr.mxu0 0.0
    %4183 = vmatpush1.xpose.msra.mxu0 0.0
    %4184 = vmatprep.subr.mxu0 0.0
    %4185 = vmatpush1.xpose.msra.mxu0 0.0
    %4186 = vmatprep.subr.mxu0 0.0
    %4187 = vmatpush1.xpose.msra.mxu0 0.0
    %4188 = vmatprep.subr.mxu0 0.0
    %4189 = vmatpush1.xpose.msra.mxu0 0.0
    %4190 = vmatprep.subr.mxu0 0.0
    %4191 = vmatpush1.xpose.msra.mxu0 0.0
    %4192 = vmatprep.subr.mxu0 0.0
    %4193 = vmatpush1.xpose.msra.mxu0 0.0
    %4194 = vmatprep.subr.mxu0 0.0
    %4195 = vmatpush1.xpose.msra.mxu0 0.0
    %4196 = vmatprep.subr.mxu0 0.0
    %4197 = vmatpush1.xpose.msra.mxu0 0.0
    %4198 = vmatprep.subr.mxu0 0.0
    %4199 = vmatpush1.xpose.msra.mxu0 0.0
    %4200 = vmatprep.subr.mxu0 0.0
    %4201 = vmatpush1.xpose.msra.mxu0 0.0
    %4202 = vmatprep.subr.mxu0 0.0
    %4203 = vmatpush1.xpose.msra.mxu0 0.0
    %4204 = vmatprep.subr.mxu0 0.0
    %4205 = vmatpush1.xpose.msra.mxu0 0.0
    %4206 = vmatprep.subr.mxu0 0.0
    %4207 = vmatpush1.xpose.msra.mxu0 0.0
    %4208 = vmatprep.subr.mxu0 0.0
    %4209 = vmatpush1.xpose.msra.mxu0 0.0
    %4210 = vmatprep.subr.mxu0 0.0
    %4211 = vmatpush1.xpose.msra.mxu0 0.0
    %4212 = vmatprep.subr.mxu0 0.0
    %4213 = vmatpush1.xpose.msra.mxu0 0.0
    %4214 = vmatprep.subr.mxu0 0.0
    %4215 = vmatpush1.xpose.msra.mxu0 0.0
    %4216 = vmatprep.mubr.f32.mxu0 0.0
    %4217 = vmatmul.mubr.f32.gmra.mrb[0].mxu0 %v4148
    %v4218 = vpop.f32.mrb[0].mxu0
    %v4219 = vadd.f32 0.0, %v4218
    %v4220 = vpop.f32.mrb[0].mxu0
    %4221 = vdwg.mxu0
    %4222 = vrot.lane.b32.xlu0 %v3863, 96
    %v4223 = vpop.permute.xlu0 %4222
    %v4224 = vsel %vm276, %v3875, 0
    %v4226 = vsel %vm276, %v4223, 0
    %4228 = vmatprep.subr.mxu0 0.0
    %4229 = vmatpush1.xpose.msra.mxu0 %v4226
    %4230 = vmatprep.subr.mxu0 0.0
    %4231 = vmatpush1.xpose.msra.mxu0 0.0
    %4232 = vmatprep.subr.mxu0 0.0
    %4233 = vmatpush1.xpose.msra.mxu0 0.0
    %4234 = vmatprep.subr.mxu0 0.0
    %4235 = vmatpush1.xpose.msra.mxu0 0.0
    %4236 = vmatprep.subr.mxu0 0.0
    %4237 = vmatpush1.xpose.msra.mxu0 0.0
    %4238 = vmatprep.subr.mxu0 0.0
    %4239 = vmatpush1.xpose.msra.mxu0 0.0
    %4240 = vmatprep.subr.mxu0 0.0
    %4241 = vmatpush1.xpose.msra.mxu0 0.0
    %4242 = vmatprep.subr.mxu0 0.0
    %4243 = vmatpush1.xpose.msra.mxu0 0.0
    %4244 = vmatprep.subr.mxu0 0.0
    %4245 = vmatpush1.xpose.msra.mxu0 0.0
    %4246 = vmatprep.subr.mxu0 0.0
    %4247 = vmatpush1.xpose.msra.mxu0 0.0
    %4248 = vmatprep.subr.mxu0 0.0
    %4249 = vmatpush1.xpose.msra.mxu0 0.0
    %4250 = vmatprep.subr.mxu0 0.0
    %4251 = vmatpush1.xpose.msra.mxu0 0.0
    %4252 = vmatprep.subr.mxu0 0.0
    %4253 = vmatpush1.xpose.msra.mxu0 0.0
    %4254 = vmatprep.subr.mxu0 0.0
    %4255 = vmatpush1.xpose.msra.mxu0 0.0
    %4256 = vmatprep.subr.mxu0 0.0
    %4257 = vmatpush1.xpose.msra.mxu0 0.0
    %4258 = vmatprep.subr.mxu0 0.0
    %4259 = vmatpush1.xpose.msra.mxu0 0.0
    %4260 = vmatprep.subr.mxu0 0.0
    %4261 = vmatpush1.xpose.msra.mxu0 0.0
    %4262 = vmatprep.subr.mxu0 0.0
    %4263 = vmatpush1.xpose.msra.mxu0 0.0
    %4264 = vmatprep.subr.mxu0 0.0
    %4265 = vmatpush1.xpose.msra.mxu0 0.0
    %4266 = vmatprep.subr.mxu0 0.0
    %4267 = vmatpush1.xpose.msra.mxu0 0.0
    %4268 = vmatprep.subr.mxu0 0.0
    %4269 = vmatpush1.xpose.msra.mxu0 0.0
    %4270 = vmatprep.subr.mxu0 0.0
    %4271 = vmatpush1.xpose.msra.mxu0 0.0
    %4272 = vmatprep.subr.mxu0 0.0
    %4273 = vmatpush1.xpose.msra.mxu0 0.0
    %4274 = vmatprep.subr.mxu0 0.0
    %4275 = vmatpush1.xpose.msra.mxu0 0.0
    %4276 = vmatprep.subr.mxu0 0.0
    %4277 = vmatpush1.xpose.msra.mxu0 0.0
    %4278 = vmatprep.subr.mxu0 0.0
    %4279 = vmatpush1.xpose.msra.mxu0 0.0
    %4280 = vmatprep.subr.mxu0 0.0
    %4281 = vmatpush1.xpose.msra.mxu0 0.0
    %4282 = vmatprep.subr.mxu0 0.0
    %4283 = vmatpush1.xpose.msra.mxu0 0.0
    %4284 = vmatprep.subr.mxu0 0.0
    %4285 = vmatpush1.xpose.msra.mxu0 0.0
    %4286 = vmatprep.subr.mxu0 0.0
    %4287 = vmatpush1.xpose.msra.mxu0 0.0
    %4288 = vmatprep.subr.mxu0 0.0
    %4289 = vmatpush1.xpose.msra.mxu0 0.0
    %4290 = vmatprep.subr.mxu0 0.0
    %4291 = vmatpush1.xpose.msra.mxu0 0.0
    %4292 = vmatprep.mubr.f32.mxu0 0.0
    %4293 = vmatmul.mubr.f32.gmra.mrb[0].mxu0 %v4224
    %v4294 = vpop.f32.mrb[0].mxu0
    %v4295 = vadd.f32 0.0, %v4294
    %v4296 = vpop.f32.mrb[0].mxu0
    %4297 = vdwg.mxu0
    %4298 = vrot.lane.b32.xlu0 %v3899, 96
    %v4299 = vpop.permute.xlu0 %4298
    %v4300 = vsel %vm276, %v3885, 0
    %v4302 = vsel %vm276, %v4299, 0
    %4304 = vmatprep.subr.mxu0 0.0
    %4305 = vmatpush1.xpose.msra.mxu0 %v4302
    %4306 = vmatprep.subr.mxu0 0.0
    %4307 = vmatpush1.xpose.msra.mxu0 0.0
    %4308 = vmatprep.subr.mxu0 0.0
    %4309 = vmatpush1.xpose.msra.mxu0 0.0
    %4310 = vmatprep.subr.mxu0 0.0
    %4311 = vmatpush1.xpose.msra.mxu0 0.0
    %4312 = vmatprep.subr.mxu0 0.0
    %4313 = vmatpush1.xpose.msra.mxu0 0.0
    %4314 = vmatprep.subr.mxu0 0.0
    %4315 = vmatpush1.xpose.msra.mxu0 0.0
    %4316 = vmatprep.subr.mxu0 0.0
    %4317 = vmatpush1.xpose.msra.mxu0 0.0
    %4318 = vmatprep.subr.mxu0 0.0
    %4319 = vmatpush1.xpose.msra.mxu0 0.0
    %4320 = vmatprep.subr.mxu0 0.0
    %4321 = vmatpush1.xpose.msra.mxu0 0.0
    %4322 = vmatprep.subr.mxu0 0.0
    %4323 = vmatpush1.xpose.msra.mxu0 0.0
    %4324 = vmatprep.subr.mxu0 0.0
    %4325 = vmatpush1.xpose.msra.mxu0 0.0
    %4326 = vmatprep.subr.mxu0 0.0
    %4327 = vmatpush1.xpose.msra.mxu0 0.0
    %4328 = vmatprep.subr.mxu0 0.0
    %4329 = vmatpush1.xpose.msra.mxu0 0.0
    %4330 = vmatprep.subr.mxu0 0.0
    %4331 = vmatpush1.xpose.msra.mxu0 0.0
    %4332 = vmatprep.subr.mxu0 0.0
    %4333 = vmatpush1.xpose.msra.mxu0 0.0
    %4334 = vmatprep.subr.mxu0 0.0
    %4335 = vmatpush1.xpose.msra.mxu0 0.0
    %4336 = vmatprep.subr.mxu0 0.0
    %4337 = vmatpush1.xpose.msra.mxu0 0.0
    %4338 = vmatprep.subr.mxu0 0.0
    %4339 = vmatpush1.xpose.msra.mxu0 0.0
    %4340 = vmatprep.subr.mxu0 0.0
    %4341 = vmatpush1.xpose.msra.mxu0 0.0
    %4342 = vmatprep.subr.mxu0 0.0
    %4343 = vmatpush1.xpose.msra.mxu0 0.0
    %4344 = vmatprep.subr.mxu0 0.0
    %4345 = vmatpush1.xpose.msra.mxu0 0.0
    %4346 = vmatprep.subr.mxu0 0.0
    %4347 = vmatpush1.xpose.msra.mxu0 0.0
    %4348 = vmatprep.subr.mxu0 0.0
    %4349 = vmatpush1.xpose.msra.mxu0 0.0
    %4350 = vmatprep.subr.mxu0 0.0
    %4351 = vmatpush1.xpose.msra.mxu0 0.0
    %4352 = vmatprep.subr.mxu0 0.0
    %4353 = vmatpush1.xpose.msra.mxu0 0.0
    %4354 = vmatprep.subr.mxu0 0.0
    %4355 = vmatpush1.xpose.msra.mxu0 0.0
    %4356 = vmatprep.subr.mxu0 0.0
    %4357 = vmatpush1.xpose.msra.mxu0 0.0
    %4358 = vmatprep.subr.mxu0 0.0
    %4359 = vmatpush1.xpose.msra.mxu0 0.0
    %4360 = vmatprep.subr.mxu0 0.0
    %4361 = vmatpush1.xpose.msra.mxu0 0.0
    %4362 = vmatprep.subr.mxu0 0.0
    %4363 = vmatpush1.xpose.msra.mxu0 0.0
    %4364 = vmatprep.subr.mxu0 0.0
    %4365 = vmatpush1.xpose.msra.mxu0 0.0
    %4366 = vmatprep.subr.mxu0 0.0
    %4367 = vmatpush1.xpose.msra.mxu0 0.0
    %4368 = vmatprep.mubr.f32.mxu0 0.0
    %4369 = vmatmul.mubr.f32.gmra.mrb[0].mxu0 %v4300
    %v4370 = vpop.f32.mrb[0].mxu0
    %v4371 = vadd.f32 0.0, %v4370
    %v4372 = vpop.f32.mrb[0].mxu0
    %4373 = vdwg.mxu0
    %4374 = vrot.lane.b32.xlu0 %v3901, 96
    %v4375 = vpop.permute.xlu0 %4374
    %v4376 = vsel %vm276, %v3887, 0
    %v4378 = vsel %vm276, %v4375, 0
    %4380 = vmatprep.subr.mxu0 0.0
    %4381 = vmatpush1.xpose.msra.mxu0 %v4378
    %4382 = vmatprep.subr.mxu0 0.0
    %4383 = vmatpush1.xpose.msra.mxu0 0.0
    %4384 = vmatprep.subr.mxu0 0.0
    %4385 = vmatpush1.xpose.msra.mxu0 0.0
    %4386 = vmatprep.subr.mxu0 0.0
    %4387 = vmatpush1.xpose.msra.mxu0 0.0
    %4388 = vmatprep.subr.mxu0 0.0
    %4389 = vmatpush1.xpose.msra.mxu0 0.0
    %4390 = vmatprep.subr.mxu0 0.0
    %4391 = vmatpush1.xpose.msra.mxu0 0.0
    %4392 = vmatprep.subr.mxu0 0.0
    %4393 = vmatpush1.xpose.msra.mxu0 0.0
    %4394 = vmatprep.subr.mxu0 0.0
    %4395 = vmatpush1.xpose.msra.mxu0 0.0
    %4396 = vmatprep.subr.mxu0 0.0
    %4397 = vmatpush1.xpose.msra.mxu0 0.0
    %4398 = vmatprep.subr.mxu0 0.0
    %4399 = vmatpush1.xpose.msra.mxu0 0.0
    %4400 = vmatprep.subr.mxu0 0.0
    %4401 = vmatpush1.xpose.msra.mxu0 0.0
    %4402 = vmatprep.subr.mxu0 0.0
    %4403 = vmatpush1.xpose.msra.mxu0 0.0
    %4404 = vmatprep.subr.mxu0 0.0
    %4405 = vmatpush1.xpose.msra.mxu0 0.0
    %4406 = vmatprep.subr.mxu0 0.0
    %4407 = vmatpush1.xpose.msra.mxu0 0.0
    %4408 = vmatprep.subr.mxu0 0.0
    %4409 = vmatpush1.xpose.msra.mxu0 0.0
    %4410 = vmatprep.subr.mxu0 0.0
    %4411 = vmatpush1.xpose.msra.mxu0 0.0
    %4412 = vmatprep.subr.mxu0 0.0
    %4413 = vmatpush1.xpose.msra.mxu0 0.0
    %4414 = vmatprep.subr.mxu0 0.0
    %4415 = vmatpush1.xpose.msra.mxu0 0.0
    %4416 = vmatprep.subr.mxu0 0.0
    %4417 = vmatpush1.xpose.msra.mxu0 0.0
    %4418 = vmatprep.subr.mxu0 0.0
    %4419 = vmatpush1.xpose.msra.mxu0 0.0
    %4420 = vmatprep.subr.mxu0 0.0
    %4421 = vmatpush1.xpose.msra.mxu0 0.0
    %4422 = vmatprep.subr.mxu0 0.0
    %4423 = vmatpush1.xpose.msra.mxu0 0.0
    %4424 = vmatprep.subr.mxu0 0.0
    %4425 = vmatpush1.xpose.msra.mxu0 0.0
    %4426 = vmatprep.subr.mxu0 0.0
    %4427 = vmatpush1.xpose.msra.mxu0 0.0
    %4428 = vmatprep.subr.mxu0 0.0
    %4429 = vmatpush1.xpose.msra.mxu0 0.0
    %4430 = vmatprep.subr.mxu0 0.0
    %4431 = vmatpush1.xpose.msra.mxu0 0.0
    %4432 = vmatprep.subr.mxu0 0.0
    %4433 = vmatpush1.xpose.msra.mxu0 0.0
    %4434 = vmatprep.subr.mxu0 0.0
    %4435 = vmatpush1.xpose.msra.mxu0 0.0
    %4436 = vmatprep.subr.mxu0 0.0
    %4437 = vmatpush1.xpose.msra.mxu0 0.0
    %4438 = vmatprep.subr.mxu0 0.0
    %4439 = vmatpush1.xpose.msra.mxu0 0.0
    %4440 = vmatprep.subr.mxu0 0.0
    %4441 = vmatpush1.xpose.msra.mxu0 0.0
    %4442 = vmatprep.subr.mxu0 0.0
    %4443 = vmatpush1.xpose.msra.mxu0 0.0
    %4444 = vmatprep.mubr.f32.mxu0 0.0
    %4445 = vmatmul.mubr.f32.gmra.mrb[0].mxu0 %v4376
    %v4446 = vpop.f32.mrb[0].mxu0
    %v4447 = vadd.f32 0.0, %v4446
    %v4448 = vpop.f32.mrb[0].mxu0
    %4449 = vdwg.mxu0
    %4450 = vrot.lane.b32.xlu0 %v3903, 96
    %v4451 = vpop.permute.xlu0 %4450
    %v4452 = vsel %vm276, %v3889, 0
    %v4454 = vsel %vm276, %v4451, 0
    %4456 = vmatprep.subr.mxu0 0.0
    %4457 = vmatpush1.xpose.msra.mxu0 %v4454
    %4458 = vmatprep.subr.mxu0 0.0
    %4459 = vmatpush1.xpose.msra.mxu0 0.0
    %4460 = vmatprep.subr.mxu0 0.0
    %4461 = vmatpush1.xpose.msra.mxu0 0.0
    %4462 = vmatprep.subr.mxu0 0.0
    %4463 = vmatpush1.xpose.msra.mxu0 0.0
    %4464 = vmatprep.subr.mxu0 0.0
    %4465 = vmatpush1.xpose.msra.mxu0 0.0
    %4466 = vmatprep.subr.mxu0 0.0
    %4467 = vmatpush1.xpose.msra.mxu0 0.0
    %4468 = vmatprep.subr.mxu0 0.0
    %4469 = vmatpush1.xpose.msra.mxu0 0.0
    %4470 = vmatprep.subr.mxu0 0.0
    %4471 = vmatpush1.xpose.msra.mxu0 0.0
    %4472 = vmatprep.subr.mxu0 0.0
    %4473 = vmatpush1.xpose.msra.mxu0 0.0
    %4474 = vmatprep.subr.mxu0 0.0
    %4475 = vmatpush1.xpose.msra.mxu0 0.0
    %4476 = vmatprep.subr.mxu0 0.0
    %4477 = vmatpush1.xpose.msra.mxu0 0.0
    %4478 = vmatprep.subr.mxu0 0.0
    %4479 = vmatpush1.xpose.msra.mxu0 0.0
    %4480 = vmatprep.subr.mxu0 0.0
    %4481 = vmatpush1.xpose.msra.mxu0 0.0
    %4482 = vmatprep.subr.mxu0 0.0
    %4483 = vmatpush1.xpose.msra.mxu0 0.0
    %4484 = vmatprep.subr.mxu0 0.0
    %4485 = vmatpush1.xpose.msra.mxu0 0.0
    %4486 = vmatprep.subr.mxu0 0.0
    %4487 = vmatpush1.xpose.msra.mxu0 0.0
    %4488 = vmatprep.subr.mxu0 0.0
    %4489 = vmatpush1.xpose.msra.mxu0 0.0
    %4490 = vmatprep.subr.mxu0 0.0
    %4491 = vmatpush1.xpose.msra.mxu0 0.0
    %4492 = vmatprep.subr.mxu0 0.0
    %4493 = vmatpush1.xpose.msra.mxu0 0.0
    %4494 = vmatprep.subr.mxu0 0.0
    %4495 = vmatpush1.xpose.msra.mxu0 0.0
    %4496 = vmatprep.subr.mxu0 0.0
    %4497 = vmatpush1.xpose.msra.mxu0 0.0
    %4498 = vmatprep.subr.mxu0 0.0
    %4499 = vmatpush1.xpose.msra.mxu0 0.0
    %4500 = vmatprep.subr.mxu0 0.0
    %4501 = vmatpush1.xpose.msra.mxu0 0.0
    %4502 = vmatprep.subr.mxu0 0.0
    %4503 = vmatpush1.xpose.msra.mxu0 0.0
    %4504 = vmatprep.subr.mxu0 0.0
    %4505 = vmatpush1.xpose.msra.mxu0 0.0
    %4506 = vmatprep.subr.mxu0 0.0
    %4507 = vmatpush1.xpose.msra.mxu0 0.0
    %4508 = vmatprep.subr.mxu0 0.0
    %4509 = vmatpush1.xpose.msra.mxu0 0.0
    %4510 = vmatprep.subr.mxu0 0.0
    %4511 = vmatpush1.xpose.msra.mxu0 0.0
    %4512 = vmatprep.subr.mxu0 0.0
    %4513 = vmatpush1.xpose.msra.mxu0 0.0
    %4514 = vmatprep.subr.mxu0 0.0
    %4515 = vmatpush1.xpose.msra.mxu0 0.0
    %4516 = vmatprep.subr.mxu0 0.0
    %4517 = vmatpush1.xpose.msra.mxu0 0.0
    %4518 = vmatprep.subr.mxu0 0.0
    %4519 = vmatpush1.xpose.msra.mxu0 0.0
    %4520 = vmatprep.mubr.f32.mxu0 0.0
    %4521 = vmatmul.mubr.f32.gmra.mrb[0].mxu0 %v4452
    %v4522 = vpop.f32.mrb[0].mxu0
    %v4523 = vadd.f32 0.0, %v4522
    %v4524 = vpop.f32.mrb[0].mxu0
    %4525 = vdwg.mxu0
    %v4526 = vsel %vm276, %v3991, -inf
    %4527 = vmax.xlane.f32.xlu0 %v4526
    %v4528 = vpop.xlane.xlu0 %4527
    %v4529 = vsel %vm276, %v4067, -inf
    %4530 = vmax.xlane.f32.xlu0 %v4529
    %v4531 = vpop.xlane.xlu0 %4530
    %v4532 = vsel %vm276, %v4143, -inf
    %4533 = vmax.xlane.f32.xlu0 %v4532
    %v4534 = vpop.xlane.xlu0 %4533
    %v4535 = vsel %vm276, %v4219, -inf
    %4536 = vmax.xlane.f32.xlu0 %v4535
    %v4537 = vpop.xlane.xlu0 %4536
    %v4538 = vsel %vm276, %v4295, -inf
    %4539 = vmax.xlane.f32.xlu0 %v4538
    %v4540 = vpop.xlane.xlu0 %4539
    %v4541 = vsel %vm276, %v4371, -inf
    %4542 = vmax.xlane.f32.xlu0 %v4541
    %v4543 = vpop.xlane.xlu0 %4542
    %v4544 = vsel %vm276, %v4447, -inf
    %4545 = vmax.xlane.f32.xlu0 %v4544
    %v4546 = vpop.xlane.xlu0 %4545
    %v4547 = vsel %vm276, %v4523, -inf
    %4548 = vmax.xlane.f32.xlu0 %v4547
    %v4549 = vpop.xlane.xlu0 %4548
    %v4550 = vsub.f32 %v3991, %v4528
    %v4551 = vsub.f32 %v4067, %v4531
    %v4552 = vsub.f32 %v4143, %v4534
    %v4553 = vsub.f32 %v4219, %v4537
    %v4554 = vsub.f32 %v4295, %v4540
    %v4555 = vsub.f32 %v4371, %v4543
    %v4556 = vsub.f32 %v4447, %v4546
    %v4557 = vsub.f32 %v4523, %v4549
    %v4558 = vmul.f32 %v4550, 1.442695
    %v4559 = vpow.pop %v4558
    %v4560 = vmul.f32 %v4551, 1.442695
    %v4561 = vpow.pop %v4560
    %v4562 = vmul.f32 %v4552, 1.442695
    %v4563 = vpow.pop %v4562
    %v4564 = vmul.f32 %v4553, 1.442695
    %v4565 = vpow.pop %v4564
    %v4566 = vmul.f32 %v4554, 1.442695
    %v4567 = vpow.pop %v4566
    %v4568 = vmul.f32 %v4555, 1.442695
    %v4569 = vpow.pop %v4568
    %v4570 = vmul.f32 %v4556, 1.442695
    %v4571 = vpow.pop %v4570
    %v4572 = vmul.f32 %v4557, 1.442695
    %v4573 = vpow.pop %v4572
    %v4574 = vsel %vm276, %v4559, 0.0
    %4575 = vadd.xlane.f32.xlu0 %v4574
    %v4576 = vpop.xlane.xlu0 %4575
    %v4577 = vsel %vm276, %v4561, 0.0
    %4578 = vadd.xlane.f32.xlu0 %v4577
    %v4579 = vpop.xlane.xlu0 %4578
    %v4580 = vsel %vm276, %v4563, 0.0
    %4581 = vadd.xlane.f32.xlu0 %v4580
    %v4582 = vpop.xlane.xlu0 %4581
    %v4583 = vsel %vm276, %v4565, 0.0
    %4584 = vadd.xlane.f32.xlu0 %v4583
    %v4585 = vpop.xlane.xlu0 %4584
    %v4586 = vsel %vm276, %v4567, 0.0
    %4587 = vadd.xlane.f32.xlu0 %v4586
    %v4588 = vpop.xlane.xlu0 %4587
    %v4589 = vsel %vm276, %v4569, 0.0
    %4590 = vadd.xlane.f32.xlu0 %v4589
    %v4591 = vpop.xlane.xlu0 %4590
    %v4592 = vsel %vm276, %v4571, 0.0
    %4593 = vadd.xlane.f32.xlu0 %v4592
    %v4594 = vpop.xlane.xlu0 %4593
    %v4595 = vsel %vm276, %v4573, 0.0
    %4596 = vadd.xlane.f32.xlu0 %v4595
    %v4597 = vpop.xlane.xlu0 %4596
    %v4598 = vrcp.pop %v4576
    %v4599 = vmul.f32 %v4559, %v4598
    %v4600 = vrcp.pop %v4579
    %v4601 = vmul.f32 %v4561, %v4600
    %v4602 = vrcp.pop %v4582
    %v4603 = vmul.f32 %v4563, %v4602
    %v4604 = vrcp.pop %v4585
    %v4605 = vmul.f32 %v4565, %v4604
    %v4606 = vrcp.pop %v4588
    %v4607 = vmul.f32 %v4567, %v4606
    %v4608 = vrcp.pop %v4591
    %v4609 = vmul.f32 %v4569, %v4608
    %v4610 = vrcp.pop %v4594
    %v4611 = vmul.f32 %v4571, %v4610
    %v4612 = vrcp.pop %v4597
    %v4613 = vmul.f32 %v4573, %v4612
    %4614 = vrot.lane.b32.xlu0 %v3872, 64
    %v4615 = vpop.permute.xlu0 %4614
    %v4618 = vsel %vm276, %v4599, 0
    %4620 = vmatprep.subr.mxu0 0.0
    %4621 = vmatpush1.msra.mxu0 %v4615
    %4622 = vmatprep.subr.mxu0 0.0
    %4623 = vmatpush1.msra.mxu0 0.0
    %4624 = vmatprep.subr.mxu0 0.0
    %4625 = vmatpush1.msra.mxu0 0.0
    %4626 = vmatprep.subr.mxu0 0.0
    %4627 = vmatpush1.msra.mxu0 0.0
    %4628 = vmatprep.subr.mxu0 0.0
    %4629 = vmatpush1.msra.mxu0 0.0
    %4630 = vmatprep.subr.mxu0 0.0
    %4631 = vmatpush1.msra.mxu0 0.0
    %4632 = vmatprep.subr.mxu0 0.0
    %4633 = vmatpush1.msra.mxu0 0.0
    %4634 = vmatprep.subr.mxu0 0.0
    %4635 = vmatpush1.msra.mxu0 0.0
    %4636 = vmatprep.subr.mxu0 0.0
    %4637 = vmatpush1.msra.mxu0 0.0
    %4638 = vmatprep.subr.mxu0 0.0
    %4639 = vmatpush1.msra.mxu0 0.0
    %4640 = vmatprep.subr.mxu0 0.0
    %4641 = vmatpush1.msra.mxu0 0.0
    %4642 = vmatprep.subr.mxu0 0.0
    %4643 = vmatpush1.msra.mxu0 0.0
    %4644 = vmatprep.subr.mxu0 0.0
    %4645 = vmatpush1.msra.mxu0 0.0
    %4646 = vmatprep.subr.mxu0 0.0
    %4647 = vmatpush1.msra.mxu0 0.0
    %4648 = vmatprep.subr.mxu0 0.0
    %4649 = vmatpush1.msra.mxu0 0.0
    %4650 = vmatprep.subr.mxu0 0.0
    %4651 = vmatpush1.msra.mxu0 0.0
    %4652 = vmatprep.subr.mxu0 0.0
    %4653 = vmatpush1.msra.mxu0 0.0
    %4654 = vmatprep.subr.mxu0 0.0
    %4655 = vmatpush1.msra.mxu0 0.0
    %4656 = vmatprep.subr.mxu0 0.0
    %4657 = vmatpush1.msra.mxu0 0.0
    %4658 = vmatprep.subr.mxu0 0.0
    %4659 = vmatpush1.msra.mxu0 0.0
    %4660 = vmatprep.subr.mxu0 0.0
    %4661 = vmatpush1.msra.mxu0 0.0
    %4662 = vmatprep.subr.mxu0 0.0
    %4663 = vmatpush1.msra.mxu0 0.0
    %4664 = vmatprep.subr.mxu0 0.0
    %4665 = vmatpush1.msra.mxu0 0.0
    %4666 = vmatprep.subr.mxu0 0.0
    %4667 = vmatpush1.msra.mxu0 0.0
    %4668 = vmatprep.subr.mxu0 0.0
    %4669 = vmatpush1.msra.mxu0 0.0
    %4670 = vmatprep.subr.mxu0 0.0
    %4671 = vmatpush1.msra.mxu0 0.0
    %4672 = vmatprep.subr.mxu0 0.0
    %4673 = vmatpush1.msra.mxu0 0.0
    %4674 = vmatprep.subr.mxu0 0.0
    %4675 = vmatpush1.msra.mxu0 0.0
    %4676 = vmatprep.subr.mxu0 0.0
    %4677 = vmatpush1.msra.mxu0 0.0
    %4678 = vmatprep.subr.mxu0 0.0
    %4679 = vmatpush1.msra.mxu0 0.0
    %4680 = vmatprep.subr.mxu0 0.0
    %4681 = vmatpush1.msra.mxu0 0.0
    %4682 = vmatprep.subr.mxu0 0.0
    %4683 = vmatpush1.msra.mxu0 0.0
    %4684 = vmatprep.mubr.f32.mxu0 0.0
    %4685 = vmatmul.mubr.f32.gmra.mrb[0].mxu0 %v4618
    %v4686 = vpop.f32.mrb[0].mxu0
    %v4687 = vadd.f32 0.0, %v4686
    %v4688 = vpop.f32.mrb[0].mxu0
    %4689 = vdwg.mxu0
    %4690 = vrot.lane.b32.xlu0 %v3906, 64
    %v4691 = vpop.permute.xlu0 %4690
    %v4694 = vsel %vm276, %v4601, 0
    %4696 = vmatprep.subr.mxu0 0.0
    %4697 = vmatpush1.msra.mxu0 %v4691
    %4698 = vmatprep.subr.mxu0 0.0
    %4699 = vmatpush1.msra.mxu0 0.0
    %4700 = vmatprep.subr.mxu0 0.0
    %4701 = vmatpush1.msra.mxu0 0.0
    %4702 = vmatprep.subr.mxu0 0.0
    %4703 = vmatpush1.msra.mxu0 0.0
    %4704 = vmatprep.subr.mxu0 0.0
    %4705 = vmatpush1.msra.mxu0 0.0
    %4706 = vmatprep.subr.mxu0 0.0
    %4707 = vmatpush1.msra.mxu0 0.0
    %4708 = vmatprep.subr.mxu0 0.0
    %4709 = vmatpush1.msra.mxu0 0.0
    %4710 = vmatprep.subr.mxu0 0.0
    %4711 = vmatpush1.msra.mxu0 0.0
    %4712 = vmatprep.subr.mxu0 0.0
    %4713 = vmatpush1.msra.mxu0 0.0
    %4714 = vmatprep.subr.mxu0 0.0
    %4715 = vmatpush1.msra.mxu0 0.0
    %4716 = vmatprep.subr.mxu0 0.0
    %4717 = vmatpush1.msra.mxu0 0.0
    %4718 = vmatprep.subr.mxu0 0.0
    %4719 = vmatpush1.msra.mxu0 0.0
    %4720 = vmatprep.subr.mxu0 0.0
    %4721 = vmatpush1.msra.mxu0 0.0
    %4722 = vmatprep.subr.mxu0 0.0
    %4723 = vmatpush1.msra.mxu0 0.0
    %4724 = vmatprep.subr.mxu0 0.0
    %4725 = vmatpush1.msra.mxu0 0.0
    %4726 = vmatprep.subr.mxu0 0.0
    %4727 = vmatpush1.msra.mxu0 0.0
    %4728 = vmatprep.subr.mxu0 0.0
    %4729 = vmatpush1.msra.mxu0 0.0
    %4730 = vmatprep.subr.mxu0 0.0
    %4731 = vmatpush1.msra.mxu0 0.0
    %4732 = vmatprep.subr.mxu0 0.0
    %4733 = vmatpush1.msra.mxu0 0.0
    %4734 = vmatprep.subr.mxu0 0.0
    %4735 = vmatpush1.msra.mxu0 0.0
    %4736 = vmatprep.subr.mxu0 0.0
    %4737 = vmatpush1.msra.mxu0 0.0
    %4738 = vmatprep.subr.mxu0 0.0
    %4739 = vmatpush1.msra.mxu0 0.0
    %4740 = vmatprep.subr.mxu0 0.0
    %4741 = vmatpush1.msra.mxu0 0.0
    %4742 = vmatprep.subr.mxu0 0.0
    %4743 = vmatpush1.msra.mxu0 0.0
    %4744 = vmatprep.subr.mxu0 0.0
    %4745 = vmatpush1.msra.mxu0 0.0
    %4746 = vmatprep.subr.mxu0 0.0
    %4747 = vmatpush1.msra.mxu0 0.0
    %4748 = vmatprep.subr.mxu0 0.0
    %4749 = vmatpush1.msra.mxu0 0.0
    %4750 = vmatprep.subr.mxu0 0.0
    %4751 = vmatpush1.msra.mxu0 0.0
    %4752 = vmatprep.subr.mxu0 0.0
    %4753 = vmatpush1.msra.mxu0 0.0
    %4754 = vmatprep.subr.mxu0 0.0
    %4755 = vmatpush1.msra.mxu0 0.0
    %4756 = vmatprep.subr.mxu0 0.0
    %4757 = vmatpush1.msra.mxu0 0.0
    %4758 = vmatprep.subr.mxu0 0.0
    %4759 = vmatpush1.msra.mxu0 0.0
    %4760 = vmatprep.mubr.f32.mxu0 0.0
    %4761 = vmatmul.mubr.f32.gmra.mrb[0].mxu0 %v4694
    %v4762 = vpop.f32.mrb[0].mxu0
    %v4763 = vadd.f32 0.0, %v4762
    %v4764 = vpop.f32.mrb[0].mxu0
    %4765 = vdwg.mxu0
    %4766 = vrot.lane.b32.xlu0 %v3908, 64
    %v4767 = vpop.permute.xlu0 %4766
    %v4770 = vsel %vm276, %v4603, 0
    %4772 = vmatprep.subr.mxu0 0.0
    %4773 = vmatpush1.msra.mxu0 %v4767
    %4774 = vmatprep.subr.mxu0 0.0
    %4775 = vmatpush1.msra.mxu0 0.0
    %4776 = vmatprep.subr.mxu0 0.0
    %4777 = vmatpush1.msra.mxu0 0.0
    %4778 = vmatprep.subr.mxu0 0.0
    %4779 = vmatpush1.msra.mxu0 0.0
    %4780 = vmatprep.subr.mxu0 0.0
    %4781 = vmatpush1.msra.mxu0 0.0
    %4782 = vmatprep.subr.mxu0 0.0
    %4783 = vmatpush1.msra.mxu0 0.0
    %4784 = vmatprep.subr.mxu0 0.0
    %4785 = vmatpush1.msra.mxu0 0.0
    %4786 = vmatprep.subr.mxu0 0.0
    %4787 = vmatpush1.msra.mxu0 0.0
    %4788 = vmatprep.subr.mxu0 0.0
    %4789 = vmatpush1.msra.mxu0 0.0
    %4790 = vmatprep.subr.mxu0 0.0
    %4791 = vmatpush1.msra.mxu0 0.0
    %4792 = vmatprep.subr.mxu0 0.0
    %4793 = vmatpush1.msra.mxu0 0.0
    %4794 = vmatprep.subr.mxu0 0.0
    %4795 = vmatpush1.msra.mxu0 0.0
    %4796 = vmatprep.subr.mxu0 0.0
    %4797 = vmatpush1.msra.mxu0 0.0
    %4798 = vmatprep.subr.mxu0 0.0
    %4799 = vmatpush1.msra.mxu0 0.0
    %4800 = vmatprep.subr.mxu0 0.0
    %4801 = vmatpush1.msra.mxu0 0.0
    %4802 = vmatprep.subr.mxu0 0.0
    %4803 = vmatpush1.msra.mxu0 0.0
    %4804 = vmatprep.subr.mxu0 0.0
    %4805 = vmatpush1.msra.mxu0 0.0
    %4806 = vmatprep.subr.mxu0 0.0
    %4807 = vmatpush1.msra.mxu0 0.0
    %4808 = vmatprep.subr.mxu0 0.0
    %4809 = vmatpush1.msra.mxu0 0.0
    %4810 = vmatprep.subr.mxu0 0.0
    %4811 = vmatpush1.msra.mxu0 0.0
    %4812 = vmatprep.subr.mxu0 0.0
    %4813 = vmatpush1.msra.mxu0 0.0
    %4814 = vmatprep.subr.mxu0 0.0
    %4815 = vmatpush1.msra.mxu0 0.0
    %4816 = vmatprep.subr.mxu0 0.0
    %4817 = vmatpush1.msra.mxu0 0.0
    %4818 = vmatprep.subr.mxu0 0.0
    %4819 = vmatpush1.msra.mxu0 0.0
    %4820 = vmatprep.subr.mxu0 0.0
    %4821 = vmatpush1.msra.mxu0 0.0
    %4822 = vmatprep.subr.mxu0 0.0
    %4823 = vmatpush1.msra.mxu0 0.0
    %4824 = vmatprep.subr.mxu0 0.0
    %4825 = vmatpush1.msra.mxu0 0.0
    %4826 = vmatprep.subr.mxu0 0.0
    %4827 = vmatpush1.msra.mxu0 0.0
    %4828 = vmatprep.subr.mxu0 0.0
    %4829 = vmatpush1.msra.mxu0 0.0
    %4830 = vmatprep.subr.mxu0 0.0
    %4831 = vmatpush1.msra.mxu0 0.0
    %4832 = vmatprep.subr.mxu0 0.0
    %4833 = vmatpush1.msra.mxu0 0.0
    %4834 = vmatprep.subr.mxu0 0.0
    %4835 = vmatpush1.msra.mxu0 0.0
    %4836 = vmatprep.mubr.f32.mxu0 0.0
    %4837 = vmatmul.mubr.f32.gmra.mrb[0].mxu0 %v4770
    %v4838 = vpop.f32.mrb[0].mxu0
    %v4839 = vadd.f32 0.0, %v4838
    %v4840 = vpop.f32.mrb[0].mxu0
    %4841 = vdwg.mxu0
    %4842 = vrot.lane.b32.xlu0 %v3910, 64
    %v4843 = vpop.permute.xlu0 %4842
    %v4846 = vsel %vm276, %v4605, 0
    %4848 = vmatprep.subr.mxu0 0.0
    %4849 = vmatpush1.msra.mxu0 %v4843
    %4850 = vmatprep.subr.mxu0 0.0
    %4851 = vmatpush1.msra.mxu0 0.0
    %4852 = vmatprep.subr.mxu0 0.0
    %4853 = vmatpush1.msra.mxu0 0.0
    %4854 = vmatprep.subr.mxu0 0.0
    %4855 = vmatpush1.msra.mxu0 0.0
    %4856 = vmatprep.subr.mxu0 0.0
    %4857 = vmatpush1.msra.mxu0 0.0
    %4858 = vmatprep.subr.mxu0 0.0
    %4859 = vmatpush1.msra.mxu0 0.0
    %4860 = vmatprep.subr.mxu0 0.0
    %4861 = vmatpush1.msra.mxu0 0.0
    %4862 = vmatprep.subr.mxu0 0.0
    %4863 = vmatpush1.msra.mxu0 0.0
    %4864 = vmatprep.subr.mxu0 0.0
    %4865 = vmatpush1.msra.mxu0 0.0
    %4866 = vmatprep.subr.mxu0 0.0
    %4867 = vmatpush1.msra.mxu0 0.0
    %4868 = vmatprep.subr.mxu0 0.0
    %4869 = vmatpush1.msra.mxu0 0.0
    %4870 = vmatprep.subr.mxu0 0.0
    %4871 = vmatpush1.msra.mxu0 0.0
    %4872 = vmatprep.subr.mxu0 0.0
    %4873 = vmatpush1.msra.mxu0 0.0
    %4874 = vmatprep.subr.mxu0 0.0
    %4875 = vmatpush1.msra.mxu0 0.0
    %4876 = vmatprep.subr.mxu0 0.0
    %4877 = vmatpush1.msra.mxu0 0.0
    %4878 = vmatprep.subr.mxu0 0.0
    %4879 = vmatpush1.msra.mxu0 0.0
    %4880 = vmatprep.subr.mxu0 0.0
    %4881 = vmatpush1.msra.mxu0 0.0
    %4882 = vmatprep.subr.mxu0 0.0
    %4883 = vmatpush1.msra.mxu0 0.0
    %4884 = vmatprep.subr.mxu0 0.0
    %4885 = vmatpush1.msra.mxu0 0.0
    %4886 = vmatprep.subr.mxu0 0.0
    %4887 = vmatpush1.msra.mxu0 0.0
    %4888 = vmatprep.subr.mxu0 0.0
    %4889 = vmatpush1.msra.mxu0 0.0
    %4890 = vmatprep.subr.mxu0 0.0
    %4891 = vmatpush1.msra.mxu0 0.0
    %4892 = vmatprep.subr.mxu0 0.0
    %4893 = vmatpush1.msra.mxu0 0.0
    %4894 = vmatprep.subr.mxu0 0.0
    %4895 = vmatpush1.msra.mxu0 0.0
    %4896 = vmatprep.subr.mxu0 0.0
    %4897 = vmatpush1.msra.mxu0 0.0
    %4898 = vmatprep.subr.mxu0 0.0
    %4899 = vmatpush1.msra.mxu0 0.0
    %4900 = vmatprep.subr.mxu0 0.0
    %4901 = vmatpush1.msra.mxu0 0.0
    %4902 = vmatprep.subr.mxu0 0.0
    %4903 = vmatpush1.msra.mxu0 0.0
    %4904 = vmatprep.subr.mxu0 0.0
    %4905 = vmatpush1.msra.mxu0 0.0
    %4906 = vmatprep.subr.mxu0 0.0
    %4907 = vmatpush1.msra.mxu0 0.0
    %4908 = vmatprep.subr.mxu0 0.0
    %4909 = vmatpush1.msra.mxu0 0.0
    %4910 = vmatprep.subr.mxu0 0.0
    %4911 = vmatpush1.msra.mxu0 0.0
    %4912 = vmatprep.mubr.f32.mxu0 0.0
    %4913 = vmatmul.mubr.f32.gmra.mrb[0].mxu0 %v4846
    %v4914 = vpop.f32.mrb[0].mxu0
    %v4915 = vadd.f32 0.0, %v4914
    %v4916 = vpop.f32.mrb[0].mxu0
    %4917 = vdwg.mxu0
    %4918 = vrot.lane.b32.xlu0 %v3873, 64
    %v4919 = vpop.permute.xlu0 %4918
    %v4922 = vsel %vm276, %v4607, 0
    %4924 = vmatprep.subr.mxu0 0.0
    %4925 = vmatpush1.msra.mxu0 %v4919
    %4926 = vmatprep.subr.mxu0 0.0
    %4927 = vmatpush1.msra.mxu0 0.0
    %4928 = vmatprep.subr.mxu0 0.0
    %4929 = vmatpush1.msra.mxu0 0.0
    %4930 = vmatprep.subr.mxu0 0.0
    %4931 = vmatpush1.msra.mxu0 0.0
    %4932 = vmatprep.subr.mxu0 0.0
    %4933 = vmatpush1.msra.mxu0 0.0
    %4934 = vmatprep.subr.mxu0 0.0
    %4935 = vmatpush1.msra.mxu0 0.0
    %4936 = vmatprep.subr.mxu0 0.0
    %4937 = vmatpush1.msra.mxu0 0.0
    %4938 = vmatprep.subr.mxu0 0.0
    %4939 = vmatpush1.msra.mxu0 0.0
    %4940 = vmatprep.subr.mxu0 0.0
    %4941 = vmatpush1.msra.mxu0 0.0
    %4942 = vmatprep.subr.mxu0 0.0
    %4943 = vmatpush1.msra.mxu0 0.0
    %4944 = vmatprep.subr.mxu0 0.0
    %4945 = vmatpush1.msra.mxu0 0.0
    %4946 = vmatprep.subr.mxu0 0.0
    %4947 = vmatpush1.msra.mxu0 0.0
    %4948 = vmatprep.subr.mxu0 0.0
    %4949 = vmatpush1.msra.mxu0 0.0
    %4950 = vmatprep.subr.mxu0 0.0
    %4951 = vmatpush1.msra.mxu0 0.0
    %4952 = vmatprep.subr.mxu0 0.0
    %4953 = vmatpush1.msra.mxu0 0.0
    %4954 = vmatprep.subr.mxu0 0.0
    %4955 = vmatpush1.msra.mxu0 0.0
    %4956 = vmatprep.subr.mxu0 0.0
    %4957 = vmatpush1.msra.mxu0 0.0
    %4958 = vmatprep.subr.mxu0 0.0
    %4959 = vmatpush1.msra.mxu0 0.0
    %4960 = vmatprep.subr.mxu0 0.0
    %4961 = vmatpush1.msra.mxu0 0.0
    %4962 = vmatprep.subr.mxu0 0.0
    %4963 = vmatpush1.msra.mxu0 0.0
    %4964 = vmatprep.subr.mxu0 0.0
    %4965 = vmatpush1.msra.mxu0 0.0
    %4966 = vmatprep.subr.mxu0 0.0
    %4967 = vmatpush1.msra.mxu0 0.0
    %4968 = vmatprep.subr.mxu0 0.0
    %4969 = vmatpush1.msra.mxu0 0.0
    %4970 = vmatprep.subr.mxu0 0.0
    %4971 = vmatpush1.msra.mxu0 0.0
    %4972 = vmatprep.subr.mxu0 0.0
    %4973 = vmatpush1.msra.mxu0 0.0
    %4974 = vmatprep.subr.mxu0 0.0
    %4975 = vmatpush1.msra.mxu0 0.0
    %4976 = vmatprep.subr.mxu0 0.0
    %4977 = vmatpush1.msra.mxu0 0.0
    %4978 = vmatprep.subr.mxu0 0.0
    %4979 = vmatpush1.msra.mxu0 0.0
    %4980 = vmatprep.subr.mxu0 0.0
    %4981 = vmatpush1.msra.mxu0 0.0
    %4982 = vmatprep.subr.mxu0 0.0
    %4983 = vmatpush1.msra.mxu0 0.0
    %4984 = vmatprep.subr.mxu0 0.0
    %4985 = vmatpush1.msra.mxu0 0.0
    %4986 = vmatprep.subr.mxu0 0.0
    %4987 = vmatpush1.msra.mxu0 0.0
    %4988 = vmatprep.mubr.f32.mxu0 0.0
    %4989 = vmatmul.mubr.f32.gmra.mrb[0].mxu0 %v4922
    %v4990 = vpop.f32.mrb[0].mxu0
    %v4991 = vadd.f32 0.0, %v4990
    %v4992 = vpop.f32.mrb[0].mxu0
    %4993 = vdwg.mxu0
    %4994 = vrot.lane.b32.xlu0 %v3913, 64
    %v4995 = vpop.permute.xlu0 %4994
    %v4998 = vsel %vm276, %v4609, 0
    %5000 = vmatprep.subr.mxu0 0.0
    %5001 = vmatpush1.msra.mxu0 %v4995
    %5002 = vmatprep.subr.mxu0 0.0
    %5003 = vmatpush1.msra.mxu0 0.0
    %5004 = vmatprep.subr.mxu0 0.0
    %5005 = vmatpush1.msra.mxu0 0.0
    %5006 = vmatprep.subr.mxu0 0.0
    %5007 = vmatpush1.msra.mxu0 0.0
    %5008 = vmatprep.subr.mxu0 0.0
    %5009 = vmatpush1.msra.mxu0 0.0
    %5010 = vmatprep.subr.mxu0 0.0
    %5011 = vmatpush1.msra.mxu0 0.0
    %5012 = vmatprep.subr.mxu0 0.0
    %5013 = vmatpush1.msra.mxu0 0.0
    %5014 = vmatprep.subr.mxu0 0.0
    %5015 = vmatpush1.msra.mxu0 0.0
    %5016 = vmatprep.subr.mxu0 0.0
    %5017 = vmatpush1.msra.mxu0 0.0
    %5018 = vmatprep.subr.mxu0 0.0
    %5019 = vmatpush1.msra.mxu0 0.0
    %5020 = vmatprep.subr.mxu0 0.0
    %5021 = vmatpush1.msra.mxu0 0.0
    %5022 = vmatprep.subr.mxu0 0.0
    %5023 = vmatpush1.msra.mxu0 0.0
    %5024 = vmatprep.subr.mxu0 0.0
    %5025 = vmatpush1.msra.mxu0 0.0
    %5026 = vmatprep.subr.mxu0 0.0
    %5027 = vmatpush1.msra.mxu0 0.0
    %5028 = vmatprep.subr.mxu0 0.0
    %5029 = vmatpush1.msra.mxu0 0.0
    %5030 = vmatprep.subr.mxu0 0.0
    %5031 = vmatpush1.msra.mxu0 0.0
    %5032 = vmatprep.subr.mxu0 0.0
    %5033 = vmatpush1.msra.mxu0 0.0
    %5034 = vmatprep.subr.mxu0 0.0
    %5035 = vmatpush1.msra.mxu0 0.0
    %5036 = vmatprep.subr.mxu0 0.0
    %5037 = vmatpush1.msra.mxu0 0.0
    %5038 = vmatprep.subr.mxu0 0.0
    %5039 = vmatpush1.msra.mxu0 0.0
    %5040 = vmatprep.subr.mxu0 0.0
    %5041 = vmatpush1.msra.mxu0 0.0
    %5042 = vmatprep.subr.mxu0 0.0
    %5043 = vmatpush1.msra.mxu0 0.0
    %5044 = vmatprep.subr.mxu0 0.0
    %5045 = vmatpush1.msra.mxu0 0.0
    %5046 = vmatprep.subr.mxu0 0.0
    %5047 = vmatpush1.msra.mxu0 0.0
    %5048 = vmatprep.subr.mxu0 0.0
    %5049 = vmatpush1.msra.mxu0 0.0
    %5050 = vmatprep.subr.mxu0 0.0
    %5051 = vmatpush1.msra.mxu0 0.0
    %5052 = vmatprep.subr.mxu0 0.0
    %5053 = vmatpush1.msra.mxu0 0.0
    %5054 = vmatprep.subr.mxu0 0.0
    %5055 = vmatpush1.msra.mxu0 0.0
    %5056 = vmatprep.subr.mxu0 0.0
    %5057 = vmatpush1.msra.mxu0 0.0
    %5058 = vmatprep.subr.mxu0 0.0
    %5059 = vmatpush1.msra.mxu0 0.0
    %5060 = vmatprep.subr.mxu0 0.0
    %5061 = vmatpush1.msra.mxu0 0.0
    %5062 = vmatprep.subr.mxu0 0.0
    %5063 = vmatpush1.msra.mxu0 0.0
    %5064 = vmatprep.mubr.f32.mxu0 0.0
    %5065 = vmatmul.mubr.f32.gmra.mrb[0].mxu0 %v4998
    %v5066 = vpop.f32.mrb[0].mxu0
    %v5067 = vadd.f32 0.0, %v5066
    %v5068 = vpop.f32.mrb[0].mxu0
    %5069 = vdwg.mxu0
    %5070 = vrot.lane.b32.xlu0 %v3915, 64
    %v5071 = vpop.permute.xlu0 %5070
    %v5074 = vsel %vm276, %v4611, 0
    %5076 = vmatprep.subr.mxu0 0.0
    %5077 = vmatpush1.msra.mxu0 %v5071
    %5078 = vmatprep.subr.mxu0 0.0
    %5079 = vmatpush1.msra.mxu0 0.0
    %5080 = vmatprep.subr.mxu0 0.0
    %5081 = vmatpush1.msra.mxu0 0.0
    %5082 = vmatprep.subr.mxu0 0.0
    %5083 = vmatpush1.msra.mxu0 0.0
    %5084 = vmatprep.subr.mxu0 0.0
    %5085 = vmatpush1.msra.mxu0 0.0
    %5086 = vmatprep.subr.mxu0 0.0
    %5087 = vmatpush1.msra.mxu0 0.0
    %5088 = vmatprep.subr.mxu0 0.0
    %5089 = vmatpush1.msra.mxu0 0.0
    %5090 = vmatprep.subr.mxu0 0.0
    %5091 = vmatpush1.msra.mxu0 0.0
    %5092 = vmatprep.subr.mxu0 0.0
    %5093 = vmatpush1.msra.mxu0 0.0
    %5094 = vmatprep.subr.mxu0 0.0
    %5095 = vmatpush1.msra.mxu0 0.0
    %5096 = vmatprep.subr.mxu0 0.0
    %5097 = vmatpush1.msra.mxu0 0.0
    %5098 = vmatprep.subr.mxu0 0.0
    %5099 = vmatpush1.msra.mxu0 0.0
    %5100 = vmatprep.subr.mxu0 0.0
    %5101 = vmatpush1.msra.mxu0 0.0
    %5102 = vmatprep.subr.mxu0 0.0
    %5103 = vmatpush1.msra.mxu0 0.0
    %5104 = vmatprep.subr.mxu0 0.0
    %5105 = vmatpush1.msra.mxu0 0.0
    %5106 = vmatprep.subr.mxu0 0.0
    %5107 = vmatpush1.msra.mxu0 0.0
    %5108 = vmatprep.subr.mxu0 0.0
    %5109 = vmatpush1.msra.mxu0 0.0
    %5110 = vmatprep.subr.mxu0 0.0
    %5111 = vmatpush1.msra.mxu0 0.0
    %5112 = vmatprep.subr.mxu0 0.0
    %5113 = vmatpush1.msra.mxu0 0.0
    %5114 = vmatprep.subr.mxu0 0.0
    %5115 = vmatpush1.msra.mxu0 0.0
    %5116 = vmatprep.subr.mxu0 0.0
    %5117 = vmatpush1.msra.mxu0 0.0
    %5118 = vmatprep.subr.mxu0 0.0
    %5119 = vmatpush1.msra.mxu0 0.0
    %5120 = vmatprep.subr.mxu0 0.0
    %5121 = vmatpush1.msra.mxu0 0.0
    %5122 = vmatprep.subr.mxu0 0.0
    %5123 = vmatpush1.msra.mxu0 0.0
    %5124 = vmatprep.subr.mxu0 0.0
    %5125 = vmatpush1.msra.mxu0 0.0
    %5126 = vmatprep.subr.mxu0 0.0
    %5127 = vmatpush1.msra.mxu0 0.0
    %5128 = vmatprep.subr.mxu0 0.0
    %5129 = vmatpush1.msra.mxu0 0.0
    %5130 = vmatprep.subr.mxu0 0.0
    %5131 = vmatpush1.msra.mxu0 0.0
    %5132 = vmatprep.subr.mxu0 0.0
    %5133 = vmatpush1.msra.mxu0 0.0
    %5134 = vmatprep.subr.mxu0 0.0
    %5135 = vmatpush1.msra.mxu0 0.0
    %5136 = vmatprep.subr.mxu0 0.0
    %5137 = vmatpush1.msra.mxu0 0.0
    %5138 = vmatprep.subr.mxu0 0.0
    %5139 = vmatpush1.msra.mxu0 0.0
    %5140 = vmatprep.mubr.f32.mxu0 0.0
    %5141 = vmatmul.mubr.f32.gmra.mrb[0].mxu0 %v5074
    %v5142 = vpop.f32.mrb[0].mxu0
    %v5143 = vadd.f32 0.0, %v5142
    %v5144 = vpop.f32.mrb[0].mxu0
    %5145 = vdwg.mxu0
    %5146 = vrot.lane.b32.xlu0 %v3917, 64
    %v5147 = vpop.permute.xlu0 %5146
    %v5150 = vsel %vm276, %v4613, 0
    %5152 = vmatprep.subr.mxu0 0.0
    %5153 = vmatpush1.msra.mxu0 %v5147
    %5154 = vmatprep.subr.mxu0 0.0
    %5155 = vmatpush1.msra.mxu0 0.0
    %5156 = vmatprep.subr.mxu0 0.0
    %5157 = vmatpush1.msra.mxu0 0.0
    %5158 = vmatprep.subr.mxu0 0.0
    %5159 = vmatpush1.msra.mxu0 0.0
    %5160 = vmatprep.subr.mxu0 0.0
    %5161 = vmatpush1.msra.mxu0 0.0
    %5162 = vmatprep.subr.mxu0 0.0
    %5163 = vmatpush1.msra.mxu0 0.0
    %5164 = vmatprep.subr.mxu0 0.0
    %5165 = vmatpush1.msra.mxu0 0.0
    %5166 = vmatprep.subr.mxu0 0.0
    %5167 = vmatpush1.msra.mxu0 0.0
    %5168 = vmatprep.subr.mxu0 0.0
    %5169 = vmatpush1.msra.mxu0 0.0
    %5170 = vmatprep.subr.mxu0 0.0
    %5171 = vmatpush1.msra.mxu0 0.0
    %5172 = vmatprep.subr.mxu0 0.0
    %5173 = vmatpush1.msra.mxu0 0.0
    %5174 = vmatprep.subr.mxu0 0.0
    %5175 = vmatpush1.msra.mxu0 0.0
    %5176 = vmatprep.subr.mxu0 0.0
    %5177 = vmatpush1.msra.mxu0 0.0
    %5178 = vmatprep.subr.mxu0 0.0
    %5179 = vmatpush1.msra.mxu0 0.0
    %5180 = vmatprep.subr.mxu0 0.0
    %5181 = vmatpush1.msra.mxu0 0.0
    %5182 = vmatprep.subr.mxu0 0.0
    %5183 = vmatpush1.msra.mxu0 0.0
    %5184 = vmatprep.subr.mxu0 0.0
    %5185 = vmatpush1.msra.mxu0 0.0
    %5186 = vmatprep.subr.mxu0 0.0
    %5187 = vmatpush1.msra.mxu0 0.0
    %5188 = vmatprep.subr.mxu0 0.0
    %5189 = vmatpush1.msra.mxu0 0.0
    %5190 = vmatprep.subr.mxu0 0.0
    %5191 = vmatpush1.msra.mxu0 0.0
    %5192 = vmatprep.subr.mxu0 0.0
    %5193 = vmatpush1.msra.mxu0 0.0
    %5194 = vmatprep.subr.mxu0 0.0
    %5195 = vmatpush1.msra.mxu0 0.0
    %5196 = vmatprep.subr.mxu0 0.0
    %5197 = vmatpush1.msra.mxu0 0.0
    %5198 = vmatprep.subr.mxu0 0.0
    %5199 = vmatpush1.msra.mxu0 0.0
    %5200 = vmatprep.subr.mxu0 0.0
    %5201 = vmatpush1.msra.mxu0 0.0
    %5202 = vmatprep.subr.mxu0 0.0
    %5203 = vmatpush1.msra.mxu0 0.0
    %5204 = vmatprep.subr.mxu0 0.0
    %5205 = vmatpush1.msra.mxu0 0.0
    %5206 = vmatprep.subr.mxu0 0.0
    %5207 = vmatpush1.msra.mxu0 0.0
    %5208 = vmatprep.subr.mxu0 0.0
    %5209 = vmatpush1.msra.mxu0 0.0
    %5210 = vmatprep.subr.mxu0 0.0
    %5211 = vmatpush1.msra.mxu0 0.0
    %5212 = vmatprep.subr.mxu0 0.0
    %5213 = vmatpush1.msra.mxu0 0.0
    %5214 = vmatprep.subr.mxu0 0.0
    %5215 = vmatpush1.msra.mxu0 0.0
    %5216 = vmatprep.mubr.f32.mxu0 0.0
    %5217 = vmatmul.mubr.f32.gmra.mrb[0].mxu0 %v5150
    %v5218 = vpop.f32.mrb[0].mxu0
    %v5219 = vadd.f32 0.0, %v5218
    %v5220 = vpop.f32.mrb[0].mxu0
    %5221 = vdwg.mxu0
    %5223 = vrot.lane.b32.xlu0 %v4763, 8
    %v5224 = vpop.permute.xlu0 %5223
    %5227 = vrot.lane.b32.xlu0 %v4839, 16
    %v5228 = vpop.permute.xlu0 %5227
    %5231 = vrot.lane.b32.xlu0 %v4915, 24
    %v5232 = vpop.permute.xlu0 %5231
    %v5234 = vsel %vm276, %v4687, %v5224
    %v5235 = vsel %vm1592, %v5234, %v5228
    %v5236 = vsel %vm1594, %v5235, %v5232
    %5238 = vrot.lane.b32.xlu0 %v5067, 8
    %v5239 = vpop.permute.xlu0 %5238
    %5242 = vrot.lane.b32.xlu0 %v5143, 16
    %v5243 = vpop.permute.xlu0 %5242
    %5246 = vrot.lane.b32.xlu0 %v5219, 24
    %v5247 = vpop.permute.xlu0 %5246
    %v5249 = vsel %vm276, %v4991, %v5239
    %v5250 = vsel %vm1592, %v5249, %v5243
    %v5251 = vsel %vm1594, %v5250, %v5247
    %s5252 = scalar_lea.vmem %s4, 32
    %v5253 = vld [vmem:[%s5252] sm:$0xff]
    %v5254 = vld [vmem:[%s5252 + $0x8] sm:$0xff]
    %v5255 = vld [vmem:[%s5252 + $0x10] sm:$0xff]
    %v5256 = vld [vmem:[%s5252 + $0x18] sm:$0xff]
    %v5257 = vlaneseq
    %v5258 = vshrl.u32 %v5257, 7
    %v5259 = vsub.s32 3, %v5258
    %v5260 = vrot.slane %v3742, %v5259
    %v5262 = vsel %vm106, %v5236, 0
    %v5265 = vsel %vm106, %v5251, 0
    %5267 = vmatprep.subr.mxu0 0.0
    %5268 = vmatpush1.msra.mxu0 %v5253
    %5269 = vmatprep.subr.mxu0 0.0
    %5270 = vmatpush1.msra.mxu0 %v5254
    %5271 = vmatprep.subr.mxu0 0.0
    %5272 = vmatpush1.msra.mxu0 %v5255
    %5273 = vmatprep.subr.mxu0 0.0
    %5274 = vmatpush1.msra.mxu0 %v5256
    %5275 = vmatprep.subr.mxu0 0.0
    %5276 = vmatpush1.msra.mxu0 0.0
    %5277 = vmatprep.subr.mxu0 0.0
    %5278 = vmatpush1.msra.mxu0 0.0
    %5279 = vmatprep.subr.mxu0 0.0
    %5280 = vmatpush1.msra.mxu0 0.0
    %5281 = vmatprep.subr.mxu0 0.0
    %5282 = vmatpush1.msra.mxu0 0.0
    %5283 = vmatprep.subr.mxu0 0.0
    %5284 = vmatpush1.msra.mxu0 0.0
    %5285 = vmatprep.subr.mxu0 0.0
    %5286 = vmatpush1.msra.mxu0 0.0
    %5287 = vmatprep.subr.mxu0 0.0
    %5288 = vmatpush1.msra.mxu0 0.0
    %5289 = vmatprep.subr.mxu0 0.0
    %5290 = vmatpush1.msra.mxu0 0.0
    %5291 = vmatprep.subr.mxu0 0.0
    %5292 = vmatpush1.msra.mxu0 0.0
    %5293 = vmatprep.subr.mxu0 0.0
    %5294 = vmatpush1.msra.mxu0 0.0
    %5295 = vmatprep.subr.mxu0 0.0
    %5296 = vmatpush1.msra.mxu0 0.0
    %5297 = vmatprep.subr.mxu0 0.0
    %5298 = vmatpush1.msra.mxu0 0.0
    %5299 = vmatprep.subr.mxu0 0.0
    %5300 = vmatpush1.msra.mxu0 0.0
    %5301 = vmatprep.subr.mxu0 0.0
    %5302 = vmatpush1.msra.mxu0 0.0
    %5303 = vmatprep.subr.mxu0 0.0
    %5304 = vmatpush1.msra.mxu0 0.0
    %5305 = vmatprep.subr.mxu0 0.0
    %5306 = vmatpush1.msra.mxu0 0.0
    %5307 = vmatprep.subr.mxu0 0.0
    %5308 = vmatpush1.msra.mxu0 0.0
    %5309 = vmatprep.subr.mxu0 0.0
    %5310 = vmatpush1.msra.mxu0 0.0
    %5311 = vmatprep.subr.mxu0 0.0
    %5312 = vmatpush1.msra.mxu0 0.0
    %5313 = vmatprep.subr.mxu0 0.0
    %5314 = vmatpush1.msra.mxu0 0.0
    %5315 = vmatprep.subr.mxu0 0.0
    %5316 = vmatpush1.msra.mxu0 0.0
    %5317 = vmatprep.subr.mxu0 0.0
    %5318 = vmatpush1.msra.mxu0 0.0
    %5319 = vmatprep.subr.mxu0 0.0
    %5320 = vmatpush1.msra.mxu0 0.0
    %5321 = vmatprep.subr.mxu0 0.0
    %5322 = vmatpush1.msra.mxu0 0.0
    %5323 = vmatprep.subr.mxu0 0.0
    %5324 = vmatpush1.msra.mxu0 0.0
    %5325 = vmatprep.subr.mxu0 0.0
    %5326 = vmatpush1.msra.mxu0 0.0
    %5327 = vmatprep.subr.mxu0 0.0
    %5328 = vmatpush1.msra.mxu0 0.0
    %5329 = vmatprep.subr.mxu0 0.0
    %5330 = vmatpush1.msra.mxu0 0.0
    %5331 = vmatprep.mubr.f32.mxu0 0.0
    %5332 = vmatmul.mubr.f32.gmra.mrb[0].mxu0 %v5262
    %v5333 = vpop.f32.mrb[0].mxu0
    %v5334 = vadd.f32 %v5260, %v5333
    %v5335 = vpop.f32.mrb[0].mxu0
    %5336 = vmatprep.mubr.f32.mxu0 0.0
    %5337 = vmatmul.mubr.f32.gmra.mrb[0].mxu0 %v5265
    %v5338 = vpop.f32.mrb[0].mxu0
    %v5339 = vadd.f32 %v5260, %v5338
    %v5340 = vpop.f32.mrb[0].mxu0
    %5341 = vdwg.mxu0
    %v5342 = vadd.f32 %v3739, %v5334
    %v5343 = vadd.f32 %v3740, %v5339
    %v5344 = vsel %vm106, %v5342, 0.0
    %5345 = vadd.xlane.f32.xlu0 %v5344
    %v5346 = vpop.xlane.xlu0 %5345
    %v5347 = vsel %vm106, %v5343, 0.0
    %5348 = vadd.xlane.f32.xlu0 %v5347
    %v5349 = vpop.xlane.xlu0 %5348
    %v5350 = vmul.f32 %v5346, %v1708
    %v5351 = vmul.f32 %v5349, %v1708
    %v5352 = vsub.f32 %v5342, %v5350
    %v5353 = vsub.f32 %v5343, %v5351
    %v5354 = vmul.f32 %v5352, %v5352
    %v5355 = vmul.f32 %v5353, %v5353
    %v5356 = vsel %vm106, %v5354, 0.0
    %5357 = vadd.xlane.f32.xlu0 %v5356
    %v5358 = vpop.xlane.xlu0 %5357
    %v5359 = vsel %vm106, %v5355, 0.0
    %5360 = vadd.xlane.f32.xlu0 %v5359
    %v5361 = vpop.xlane.xlu0 %5360
    %v5362 = vmul.f32 %v5358, %v1708
    %v5363 = vmul.f32 %v5361, %v1708
    %v5364 = vadd.f32 %v5362, 1e-05
    %v5365 = vadd.f32 %v5363, 1e-05
    %v5366 = vrsqrt.pop %v5364
    %v5367 = vrsqrt.pop %v5365
    %v5368 = vmul.f32 %v5352, %v5366
    %v5369 = vmul.f32 %v5353, %v5367
    %v5370 = vlaneseq
    %v5371 = vshrl.u32 %v5370, 7
    %v5372 = vsub.s32 1, %v5371
    %v5373 = vrot.slane %v3743, %v5372
    %v5374 = vmul.f32 %v5368, %v5373
    %v5375 = vmul.f32 %v5369, %v5373
    %v5376 = vlaneseq
    %v5377 = vshrl.u32 %v5376, 7
    %v5378 = vsub.s32 2, %v5377
    %v5379 = vrot.slane %v3743, %v5378
    %v5380 = vadd.f32 %v5374, %v5379
    %v5381 = vadd.f32 %v5375, %v5379
    %v5382 = vadd.f32 %v5380, %v88
    %v5383 = vadd.f32 %v5381, %v89
    %s5384 = scalar_lea.vmem %s5, 32
    %v5385 = vld [vmem:[%s5384] sm:$0xff]
    %v5386 = vld [vmem:[%s5384 + $0x8] sm:$0xff]
    %v5387 = vld [vmem:[%s5384 + $0x10] sm:$0xff]
    %v5388 = vld [vmem:[%s5384 + $0x18] sm:$0xff]
    %v5390 = vsel %vm106, %v5382, 0
    %v5393 = vsel %vm106, %v5383, 0
    %5395 = vmatprep.subr.mxu0 0.0
    %5396 = vmatpush1.msra.mxu0 %v5385
    %5397 = vmatprep.subr.mxu0 0.0
    %5398 = vmatpush1.msra.mxu0 %v5386
    %5399 = vmatprep.subr.mxu0 0.0
    %5400 = vmatpush1.msra.mxu0 %v5387
    %5401 = vmatprep.subr.mxu0 0.0
    %5402 = vmatpush1.msra.mxu0 %v5388
    %5403 = vmatprep.subr.mxu0 0.0
    %5404 = vmatpush1.msra.mxu0 0.0
    %5405 = vmatprep.subr.mxu0 0.0
    %5406 = vmatpush1.msra.mxu0 0.0
    %5407 = vmatprep.subr.mxu0 0.0
    %5408 = vmatpush1.msra.mxu0 0.0
    %5409 = vmatprep.subr.mxu0 0.0
    %5410 = vmatpush1.msra.mxu0 0.0
    %5411 = vmatprep.subr.mxu0 0.0
    %5412 = vmatpush1.msra.mxu0 0.0
    %5413 = vmatprep.subr.mxu0 0.0
    %5414 = vmatpush1.msra.mxu0 0.0
    %5415 = vmatprep.subr.mxu0 0.0
    %5416 = vmatpush1.msra.mxu0 0.0
    %5417 = vmatprep.subr.mxu0 0.0
    %5418 = vmatpush1.msra.mxu0 0.0
    %5419 = vmatprep.subr.mxu0 0.0
    %5420 = vmatpush1.msra.mxu0 0.0
    %5421 = vmatprep.subr.mxu0 0.0
    %5422 = vmatpush1.msra.mxu0 0.0
    %5423 = vmatprep.subr.mxu0 0.0
    %5424 = vmatpush1.msra.mxu0 0.0
    %5425 = vmatprep.subr.mxu0 0.0
    %5426 = vmatpush1.msra.mxu0 0.0
    %5427 = vmatprep.subr.mxu0 0.0
    %5428 = vmatpush1.msra.mxu0 0.0
    %5429 = vmatprep.subr.mxu0 0.0
    %5430 = vmatpush1.msra.mxu0 0.0
    %5431 = vmatprep.subr.mxu0 0.0
    %5432 = vmatpush1.msra.mxu0 0.0
    %5433 = vmatprep.subr.mxu0 0.0
    %5434 = vmatpush1.msra.mxu0 0.0
    %5435 = vmatprep.subr.mxu0 0.0
    %5436 = vmatpush1.msra.mxu0 0.0
    %5437 = vmatprep.subr.mxu0 0.0
    %5438 = vmatpush1.msra.mxu0 0.0
    %5439 = vmatprep.subr.mxu0 0.0
    %5440 = vmatpush1.msra.mxu0 0.0
    %5441 = vmatprep.subr.mxu0 0.0
    %5442 = vmatpush1.msra.mxu0 0.0
    %5443 = vmatprep.subr.mxu0 0.0
    %5444 = vmatpush1.msra.mxu0 0.0
    %5445 = vmatprep.subr.mxu0 0.0
    %5446 = vmatpush1.msra.mxu0 0.0
    %5447 = vmatprep.subr.mxu0 0.0
    %5448 = vmatpush1.msra.mxu0 0.0
    %5449 = vmatprep.subr.mxu0 0.0
    %5450 = vmatpush1.msra.mxu0 0.0
    %5451 = vmatprep.subr.mxu0 0.0
    %5452 = vmatpush1.msra.mxu0 0.0
    %5453 = vmatprep.subr.mxu0 0.0
    %5454 = vmatpush1.msra.mxu0 0.0
    %5455 = vmatprep.subr.mxu0 0.0
    %5456 = vmatpush1.msra.mxu0 0.0
    %5457 = vmatprep.subr.mxu0 0.0
    %5458 = vmatpush1.msra.mxu0 0.0
    %5459 = vmatprep.mubr.f32.mxu0 0.0
    %5460 = vmatmul.mubr.f32.gmra.mrb[0].mxu0 %v5390
    %v5461 = vpop.f32.mrb[0].mxu0
    %v5462 = vadd.f32 0.0, %v5461
    %v5463 = vpop.f32.mrb[0].mxu0
    %5464 = vmatprep.mubr.f32.mxu0 0.0
    %5465 = vmatmul.mubr.f32.gmra.mrb[0].mxu0 %v5393
    %v5466 = vpop.f32.mrb[0].mxu0
    %v5467 = vadd.f32 0.0, %v5466
    %v5468 = vpop.f32.mrb[0].mxu0
    %5469 = vmatprep.mubr.f32.mxu0 0.0
    %5470 = vmatmul.mubr.f32.gmra.mrb[0].mxu0 %v1754
    %v5471 = vpop.f32.mrb[0].mxu0
    %v5472 = vadd.f32 0.0, %v5471
    %v5473 = vpop.f32.mrb[0].mxu0
    %5474 = vmatprep.mubr.f32.mxu0 0.0
    %5475 = vmatmul.mubr.f32.gmra.mrb[0].mxu0 %v1757
    %v5476 = vpop.f32.mrb[0].mxu0
    %v5477 = vadd.f32 0.0, %v5476
    %v5478 = vpop.f32.mrb[0].mxu0
    %5479 = vmatprep.mubr.f32.mxu0 0.0
    %5480 = vmatmul.mubr.f32.gmra.mrb[0].mxu0 %v1760
    %v5481 = vpop.f32.mrb[0].mxu0
    %v5482 = vadd.f32 0.0, %v5481
    %v5483 = vpop.f32.mrb[0].mxu0
    %5484 = vmatprep.mubr.f32.mxu0 0.0
    %5485 = vmatmul.mubr.f32.gmra.mrb[0].mxu0 %v1763
    %v5486 = vpop.f32.mrb[0].mxu0
    %v5487 = vadd.f32 0.0, %v5486
    %v5488 = vpop.f32.mrb[0].mxu0
    %5489 = vmatprep.mubr.f32.mxu0 0.0
    %5490 = vmatmul.mubr.f32.gmra.mrb[0].mxu0 %v1766
    %v5491 = vpop.f32.mrb[0].mxu0
    %v5492 = vadd.f32 0.0, %v5491
    %v5493 = vpop.f32.mrb[0].mxu0
    %5494 = vmatprep.mubr.f32.mxu0 0.0
    %5495 = vmatmul.mubr.f32.gmra.mrb[0].mxu0 %v1769
    %v5496 = vpop.f32.mrb[0].mxu0
    %v5497 = vadd.f32 0.0, %v5496
    %v5498 = vpop.f32.mrb[0].mxu0
    %5499 = vmatprep.mubr.f32.mxu0 0.0
    %5500 = vmatmul.mubr.f32.gmra.mrb[0].mxu0 %v1772
    %v5501 = vpop.f32.mrb[0].mxu0
    %v5502 = vadd.f32 0.0, %v5501
    %v5503 = vpop.f32.mrb[0].mxu0
    %5504 = vmatprep.mubr.f32.mxu0 0.0
    %5505 = vmatmul.mubr.f32.gmra.mrb[0].mxu0 %v1775
    %v5506 = vpop.f32.mrb[0].mxu0
    %v5507 = vadd.f32 0.0, %v5506
    %v5508 = vpop.f32.mrb[0].mxu0
    %5509 = vdwg.mxu0
    %v5510 = vlaneseq
    %v5511 = vshrl.u32 %v5510, 7
    %v5512 = vsub.s32 4, %v5511
    %v5513 = vrot.slane %v3742, %v5512
    %v5514 = vadd.f32 %v5462, %v5513
    %v5515 = vadd.f32 %v5467, %v5513
    %v5516 = vlaneseq
    %v5517 = vshrl.u32 %v5516, 7
    %v5518 = vsub.s32 5, %v5517
    %v5519 = vrot.slane %v3742, %v5518
    %5521 = vrot.lane.b32.xlu0 %v5519, 32
    %v5522 = vpop.permute.xlu0 %5521
    %v5524 = vadd.f32 %v5472, %v5522
    %v5525 = vadd.f32 %v5477, %v5522
    %v5526 = vadd.f32 %v5482, %v5522
    %v5527 = vadd.f32 %v5487, %v5522
    %v5528 = vlaneseq
    %v5529 = vshrl.u32 %v5528, 7
    %v5530 = vsub.s32 6, %v5529
    %v5531 = vrot.slane %v3742, %v5530
    %5533 = vrot.lane.b32.xlu0 %v5531, 64
    %v5534 = vpop.permute.xlu0 %5533
    %v5536 = vadd.f32 %v5492, %v5534
    %v5537 = vadd.f32 %v5497, %v5534
    %v5538 = vadd.f32 %v5502, %v5534
    %v5539 = vadd.f32 %v5507, %v5534
    %v5540 = vmul.f32 %v5514, 0.35355338
    %v5541 = vmul.f32 %v5515, 0.35355338
    %5543 = vrot.lane.b32.xlu0 %v5540, 120
    %v5544 = vpop.permute.xlu0 %5543
    %5545 = vrot.lane.b32.xlu0 %v5540, 112
    %v5546 = vpop.permute.xlu0 %5545
    %5547 = vrot.lane.b32.xlu0 %v5540, 104
    %v5548 = vpop.permute.xlu0 %5547
    %5550 = vrot.lane.b32.xlu0 %v5541, 120
    %v5551 = vpop.permute.xlu0 %5550
    %5552 = vrot.lane.b32.xlu0 %v5541, 112
    %v5553 = vpop.permute.xlu0 %5552
    %5554 = vrot.lane.b32.xlu0 %v5541, 104
    %v5555 = vpop.permute.xlu0 %5554
    %5558 = vrot.lane.b32.xlu0 %v5524, 120
    %v5559 = vpop.permute.xlu0 %5558
    %5560 = vrot.lane.b32.xlu0 %v5525, 120
    %v5561 = vpop.permute.xlu0 %5560
    %5562 = vrot.lane.b32.xlu0 %v5524, 112
    %v5563 = vpop.permute.xlu0 %5562
    %5564 = vrot.lane.b32.xlu0 %v5525, 112
    %v5565 = vpop.permute.xlu0 %5564
    %5566 = vrot.lane.b32.xlu0 %v5524, 104
    %v5567 = vpop.permute.xlu0 %5566
    %5568 = vrot.lane.b32.xlu0 %v5525, 104
    %v5569 = vpop.permute.xlu0 %5568
    %5572 = vrot.lane.b32.xlu0 %v5526, 120
    %v5573 = vpop.permute.xlu0 %5572
    %5574 = vrot.lane.b32.xlu0 %v5527, 120
    %v5575 = vpop.permute.xlu0 %5574
    %5576 = vrot.lane.b32.xlu0 %v5526, 112
    %v5577 = vpop.permute.xlu0 %5576
    %5578 = vrot.lane.b32.xlu0 %v5527, 112
    %v5579 = vpop.permute.xlu0 %5578
    %5580 = vrot.lane.b32.xlu0 %v5526, 104
    %v5581 = vpop.permute.xlu0 %5580
    %5582 = vrot.lane.b32.xlu0 %v5527, 104
    %v5583 = vpop.permute.xlu0 %5582
    %5586 = vrot.lane.b32.xlu0 %v5536, 120
    %v5587 = vpop.permute.xlu0 %5586
    %5588 = vrot.lane.b32.xlu0 %v5537, 120
    %v5589 = vpop.permute.xlu0 %5588
    %5590 = vrot.lane.b32.xlu0 %v5536, 112
    %v5591 = vpop.permute.xlu0 %5590
    %5592 = vrot.lane.b32.xlu0 %v5537, 112
    %v5593 = vpop.permute.xlu0 %5592
    %5594 = vrot.lane.b32.xlu0 %v5536, 104
    %v5595 = vpop.permute.xlu0 %5594
    %5596 = vrot.lane.b32.xlu0 %v5537, 104
    %v5597 = vpop.permute.xlu0 %5596
    %5600 = vrot.lane.b32.xlu0 %v5538, 120
    %v5601 = vpop.permute.xlu0 %5600
    %5602 = vrot.lane.b32.xlu0 %v5539, 120
    %v5603 = vpop.permute.xlu0 %5602
    %5604 = vrot.lane.b32.xlu0 %v5538, 112
    %v5605 = vpop.permute.xlu0 %5604
    %5606 = vrot.lane.b32.xlu0 %v5539, 112
    %v5607 = vpop.permute.xlu0 %5606
    %5608 = vrot.lane.b32.xlu0 %v5538, 104
    %v5609 = vpop.permute.xlu0 %5608
    %5610 = vrot.lane.b32.xlu0 %v5539, 104
    %v5611 = vpop.permute.xlu0 %5610
    %5612 = vrot.lane.b32.xlu0 %v5524, 96
    %v5613 = vpop.permute.xlu0 %5612
    %5614 = vrot.lane.b32.xlu0 %v5525, 96
    %v5615 = vpop.permute.xlu0 %5614
    %v5616 = vsel %vm276, %v5540, 0
    %v5618 = vsel %vm276, %v5613, 0
    %v5620 = vsel %vm276, %v5615, 0
    %5622 = vmatprep.subr.mxu0 0.0
    %5623 = vmatpush1.xpose.msra.mxu0 %v5618
    %5624 = vmatprep.subr.mxu0 0.0
    %5625 = vmatpush1.xpose.msra.mxu0 %v5620
    %5626 = vmatprep.subr.mxu0 0.0
    %5627 = vmatpush1.xpose.msra.mxu0 0.0
    %5628 = vmatprep.subr.mxu0 0.0
    %5629 = vmatpush1.xpose.msra.mxu0 0.0
    %5630 = vmatprep.subr.mxu0 0.0
    %5631 = vmatpush1.xpose.msra.mxu0 0.0
    %5632 = vmatprep.subr.mxu0 0.0
    %5633 = vmatpush1.xpose.msra.mxu0 0.0
    %5634 = vmatprep.subr.mxu0 0.0
    %5635 = vmatpush1.xpose.msra.mxu0 0.0
    %5636 = vmatprep.subr.mxu0 0.0
    %5637 = vmatpush1.xpose.msra.mxu0 0.0
    %5638 = vmatprep.subr.mxu0 0.0
    %5639 = vmatpush1.xpose.msra.mxu0 0.0
    %5640 = vmatprep.subr.mxu0 0.0
    %5641 = vmatpush1.xpose.msra.mxu0 0.0
    %5642 = vmatprep.subr.mxu0 0.0
    %5643 = vmatpush1.xpose.msra.mxu0 0.0
    %5644 = vmatprep.subr.mxu0 0.0
    %5645 = vmatpush1.xpose.msra.mxu0 0.0
    %5646 = vmatprep.subr.mxu0 0.0
    %5647 = vmatpush1.xpose.msra.mxu0 0.0
    %5648 = vmatprep.subr.mxu0 0.0
    %5649 = vmatpush1.xpose.msra.mxu0 0.0
    %5650 = vmatprep.subr.mxu0 0.0
    %5651 = vmatpush1.xpose.msra.mxu0 0.0
    %5652 = vmatprep.subr.mxu0 0.0
    %5653 = vmatpush1.xpose.msra.mxu0 0.0
    %5654 = vmatprep.subr.mxu0 0.0
    %5655 = vmatpush1.xpose.msra.mxu0 0.0
    %5656 = vmatprep.subr.mxu0 0.0
    %5657 = vmatpush1.xpose.msra.mxu0 0.0
    %5658 = vmatprep.subr.mxu0 0.0
    %5659 = vmatpush1.xpose.msra.mxu0 0.0
    %5660 = vmatprep.subr.mxu0 0.0
    %5661 = vmatpush1.xpose.msra.mxu0 0.0
    %5662 = vmatprep.subr.mxu0 0.0
    %5663 = vmatpush1.xpose.msra.mxu0 0.0
    %5664 = vmatprep.subr.mxu0 0.0
    %5665 = vmatpush1.xpose.msra.mxu0 0.0
    %5666 = vmatprep.subr.mxu0 0.0
    %5667 = vmatpush1.xpose.msra.mxu0 0.0
    %5668 = vmatprep.subr.mxu0 0.0
    %5669 = vmatpush1.xpose.msra.mxu0 0.0
    %5670 = vmatprep.subr.mxu0 0.0
    %5671 = vmatpush1.xpose.msra.mxu0 0.0
    %5672 = vmatprep.subr.mxu0 0.0
    %5673 = vmatpush1.xpose.msra.mxu0 0.0
    %5674 = vmatprep.subr.mxu0 0.0
    %5675 = vmatpush1.xpose.msra.mxu0 0.0
    %5676 = vmatprep.subr.mxu0 0.0
    %5677 = vmatpush1.xpose.msra.mxu0 0.0
    %5678 = vmatprep.subr.mxu0 0.0
    %5679 = vmatpush1.xpose.msra.mxu0 0.0
    %5680 = vmatprep.subr.mxu0 0.0
    %5681 = vmatpush1.xpose.msra.mxu0 0.0
    %5682 = vmatprep.subr.mxu0 0.0
    %5683 = vmatpush1.xpose.msra.mxu0 0.0
    %5684 = vmatprep.subr.mxu0 0.0
    %5685 = vmatpush1.xpose.msra.mxu0 0.0
    %5686 = vmatprep.mubr.f32.mxu0 0.0
    %5687 = vmatmul.mubr.f32.gmra.mrb[0].mxu0 %v5616
    %v5688 = vpop.f32.mrb[0].mxu0
    %v5689 = vadd.f32 0.0, %v5688
    %v5690 = vpop.f32.mrb[0].mxu0
    %5691 = vdwg.mxu0
    %5692 = vrot.lane.b32.xlu0 %v5559, 96
    %v5693 = vpop.permute.xlu0 %5692
    %5694 = vrot.lane.b32.xlu0 %v5561, 96
    %v5695 = vpop.permute.xlu0 %5694
    %v5696 = vsel %vm276, %v5544, 0
    %v5698 = vsel %vm276, %v5693, 0
    %v5700 = vsel %vm276, %v5695, 0
    %5702 = vmatprep.subr.mxu0 0.0
    %5703 = vmatpush1.xpose.msra.mxu0 %v5698
    %5704 = vmatprep.subr.mxu0 0.0
    %5705 = vmatpush1.xpose.msra.mxu0 %v5700
    %5706 = vmatprep.subr.mxu0 0.0
    %5707 = vmatpush1.xpose.msra.mxu0 0.0
    %5708 = vmatprep.subr.mxu0 0.0
    %5709 = vmatpush1.xpose.msra.mxu0 0.0
    %5710 = vmatprep.subr.mxu0 0.0
    %5711 = vmatpush1.xpose.msra.mxu0 0.0
    %5712 = vmatprep.subr.mxu0 0.0
    %5713 = vmatpush1.xpose.msra.mxu0 0.0
    %5714 = vmatprep.subr.mxu0 0.0
    %5715 = vmatpush1.xpose.msra.mxu0 0.0
    %5716 = vmatprep.subr.mxu0 0.0
    %5717 = vmatpush1.xpose.msra.mxu0 0.0
    %5718 = vmatprep.subr.mxu0 0.0
    %5719 = vmatpush1.xpose.msra.mxu0 0.0
    %5720 = vmatprep.subr.mxu0 0.0
    %5721 = vmatpush1.xpose.msra.mxu0 0.0
    %5722 = vmatprep.subr.mxu0 0.0
    %5723 = vmatpush1.xpose.msra.mxu0 0.0
    %5724 = vmatprep.subr.mxu0 0.0
    %5725 = vmatpush1.xpose.msra.mxu0 0.0
    %5726 = vmatprep.subr.mxu0 0.0
    %5727 = vmatpush1.xpose.msra.mxu0 0.0
    %5728 = vmatprep.subr.mxu0 0.0
    %5729 = vmatpush1.xpose.msra.mxu0 0.0
    %5730 = vmatprep.subr.mxu0 0.0
    %5731 = vmatpush1.xpose.msra.mxu0 0.0
    %5732 = vmatprep.subr.mxu0 0.0
    %5733 = vmatpush1.xpose.msra.mxu0 0.0
    %5734 = vmatprep.subr.mxu0 0.0
    %5735 = vmatpush1.xpose.msra.mxu0 0.0
    %5736 = vmatprep.subr.mxu0 0.0
    %5737 = vmatpush1.xpose.msra.mxu0 0.0
    %5738 = vmatprep.subr.mxu0 0.0
    %5739 = vmatpush1.xpose.msra.mxu0 0.0
    %5740 = vmatprep.subr.mxu0 0.0
    %5741 = vmatpush1.xpose.msra.mxu0 0.0
    %5742 = vmatprep.subr.mxu0 0.0
    %5743 = vmatpush1.xpose.msra.mxu0 0.0
    %5744 = vmatprep.subr.mxu0 0.0
    %5745 = vmatpush1.xpose.msra.mxu0 0.0
    %5746 = vmatprep.subr.mxu0 0.0
    %5747 = vmatpush1.xpose.msra.mxu0 0.0
    %5748 = vmatprep.subr.mxu0 0.0
    %5749 = vmatpush1.xpose.msra.mxu0 0.0
    %5750 = vmatprep.subr.mxu0 0.0
    %5751 = vmatpush1.xpose.msra.mxu0 0.0
    %5752 = vmatprep.subr.mxu0 0.0
    %5753 = vmatpush1.xpose.msra.mxu0 0.0
    %5754 = vmatprep.subr.mxu0 0.0
    %5755 = vmatpush1.xpose.msra.mxu0 0.0
    %5756 = vmatprep.subr.mxu0 0.0
    %5757 = vmatpush1.xpose.msra.mxu0 0.0
    %5758 = vmatprep.subr.mxu0 0.0
    %5759 = vmatpush1.xpose.msra.mxu0 0.0
    %5760 = vmatprep.subr.mxu0 0.0
    %5761 = vmatpush1.xpose.msra.mxu0 0.0
    %5762 = vmatprep.subr.mxu0 0.0
    %5763 = vmatpush1.xpose.msra.mxu0 0.0
    %5764 = vmatprep.subr.mxu0 0.0
    %5765 = vmatpush1.xpose.msra.mxu0 0.0
    %5766 = vmatprep.mubr.f32.mxu0 0.0
    %5767 = vmatmul.mubr.f32.gmra.mrb[0].mxu0 %v5696
    %v5768 = vpop.f32.mrb[0].mxu0
    %v5769 = vadd.f32 0.0, %v5768
    %v5770 = vpop.f32.mrb[0].mxu0
    %5771 = vdwg.mxu0
    %5772 = vrot.lane.b32.xlu0 %v5563, 96
    %v5773 = vpop.permute.xlu0 %5772
    %5774 = vrot.lane.b32.xlu0 %v5565, 96
    %v5775 = vpop.permute.xlu0 %5774
    %v5776 = vsel %vm276, %v5546, 0
    %v5778 = vsel %vm276, %v5773, 0
    %v5780 = vsel %vm276, %v5775, 0
    %5782 = vmatprep.subr.mxu0 0.0
    %5783 = vmatpush1.xpose.msra.mxu0 %v5778
    %5784 = vmatprep.subr.mxu0 0.0
    %5785 = vmatpush1.xpose.msra.mxu0 %v5780
    %5786 = vmatprep.subr.mxu0 0.0
    %5787 = vmatpush1.xpose.msra.mxu0 0.0
    %5788 = vmatprep.subr.mxu0 0.0
    %5789 = vmatpush1.xpose.msra.mxu0 0.0
    %5790 = vmatprep.subr.mxu0 0.0
    %5791 = vmatpush1.xpose.msra.mxu0 0.0
    %5792 = vmatprep.subr.mxu0 0.0
    %5793 = vmatpush1.xpose.msra.mxu0 0.0
    %5794 = vmatprep.subr.mxu0 0.0
    %5795 = vmatpush1.xpose.msra.mxu0 0.0
    %5796 = vmatprep.subr.mxu0 0.0
    %5797 = vmatpush1.xpose.msra.mxu0 0.0
    %5798 = vmatprep.subr.mxu0 0.0
    %5799 = vmatpush1.xpose.msra.mxu0 0.0
    %5800 = vmatprep.subr.mxu0 0.0
    %5801 = vmatpush1.xpose.msra.mxu0 0.0
    %5802 = vmatprep.subr.mxu0 0.0
    %5803 = vmatpush1.xpose.msra.mxu0 0.0
    %5804 = vmatprep.subr.mxu0 0.0
    %5805 = vmatpush1.xpose.msra.mxu0 0.0
    %5806 = vmatprep.subr.mxu0 0.0
    %5807 = vmatpush1.xpose.msra.mxu0 0.0
    %5808 = vmatprep.subr.mxu0 0.0
    %5809 = vmatpush1.xpose.msra.mxu0 0.0
    %5810 = vmatprep.subr.mxu0 0.0
    %5811 = vmatpush1.xpose.msra.mxu0 0.0
    %5812 = vmatprep.subr.mxu0 0.0
    %5813 = vmatpush1.xpose.msra.mxu0 0.0
    %5814 = vmatprep.subr.mxu0 0.0
    %5815 = vmatpush1.xpose.msra.mxu0 0.0
    %5816 = vmatprep.subr.mxu0 0.0
    %5817 = vmatpush1.xpose.msra.mxu0 0.0
    %5818 = vmatprep.subr.mxu0 0.0
    %5819 = vmatpush1.xpose.msra.mxu0 0.0
    %5820 = vmatprep.subr.mxu0 0.0
    %5821 = vmatpush1.xpose.msra.mxu0 0.0
    %5822 = vmatprep.subr.mxu0 0.0
    %5823 = vmatpush1.xpose.msra.mxu0 0.0
    %5824 = vmatprep.subr.mxu0 0.0
    %5825 = vmatpush1.xpose.msra.mxu0 0.0
    %5826 = vmatprep.subr.mxu0 0.0
    %5827 = vmatpush1.xpose.msra.mxu0 0.0
    %5828 = vmatprep.subr.mxu0 0.0
    %5829 = vmatpush1.xpose.msra.mxu0 0.0
    %5830 = vmatprep.subr.mxu0 0.0
    %5831 = vmatpush1.xpose.msra.mxu0 0.0
    %5832 = vmatprep.subr.mxu0 0.0
    %5833 = vmatpush1.xpose.msra.mxu0 0.0
    %5834 = vmatprep.subr.mxu0 0.0
    %5835 = vmatpush1.xpose.msra.mxu0 0.0
    %5836 = vmatprep.subr.mxu0 0.0
    %5837 = vmatpush1.xpose.msra.mxu0 0.0
    %5838 = vmatprep.subr.mxu0 0.0
    %5839 = vmatpush1.xpose.msra.mxu0 0.0
    %5840 = vmatprep.subr.mxu0 0.0
    %5841 = vmatpush1.xpose.msra.mxu0 0.0
    %5842 = vmatprep.subr.mxu0 0.0
    %5843 = vmatpush1.xpose.msra.mxu0 0.0
    %5844 = vmatprep.subr.mxu0 0.0
    %5845 = vmatpush1.xpose.msra.mxu0 0.0
    %5846 = vmatprep.mubr.f32.mxu0 0.0
    %5847 = vmatmul.mubr.f32.gmra.mrb[0].mxu0 %v5776
    %v5848 = vpop.f32.mrb[0].mxu0
    %v5849 = vadd.f32 0.0, %v5848
    %v5850 = vpop.f32.mrb[0].mxu0
    %5851 = vdwg.mxu0
    %5852 = vrot.lane.b32.xlu0 %v5567, 96
    %v5853 = vpop.permute.xlu0 %5852
    %5854 = vrot.lane.b32.xlu0 %v5569, 96
    %v5855 = vpop.permute.xlu0 %5854
    %v5856 = vsel %vm276, %v5548, 0
    %v5858 = vsel %vm276, %v5853, 0
    %v5860 = vsel %vm276, %v5855, 0
    %5862 = vmatprep.subr.mxu0 0.0
    %5863 = vmatpush1.xpose.msra.mxu0 %v5858
    %5864 = vmatprep.subr.mxu0 0.0
    %5865 = vmatpush1.xpose.msra.mxu0 %v5860
    %5866 = vmatprep.subr.mxu0 0.0
    %5867 = vmatpush1.xpose.msra.mxu0 0.0
    %5868 = vmatprep.subr.mxu0 0.0
    %5869 = vmatpush1.xpose.msra.mxu0 0.0
    %5870 = vmatprep.subr.mxu0 0.0
    %5871 = vmatpush1.xpose.msra.mxu0 0.0
    %5872 = vmatprep.subr.mxu0 0.0
    %5873 = vmatpush1.xpose.msra.mxu0 0.0
    %5874 = vmatprep.subr.mxu0 0.0
    %5875 = vmatpush1.xpose.msra.mxu0 0.0
    %5876 = vmatprep.subr.mxu0 0.0
    %5877 = vmatpush1.xpose.msra.mxu0 0.0
    %5878 = vmatprep.subr.mxu0 0.0
    %5879 = vmatpush1.xpose.msra.mxu0 0.0
    %5880 = vmatprep.subr.mxu0 0.0
    %5881 = vmatpush1.xpose.msra.mxu0 0.0
    %5882 = vmatprep.subr.mxu0 0.0
    %5883 = vmatpush1.xpose.msra.mxu0 0.0
    %5884 = vmatprep.subr.mxu0 0.0
    %5885 = vmatpush1.xpose.msra.mxu0 0.0
    %5886 = vmatprep.subr.mxu0 0.0
    %5887 = vmatpush1.xpose.msra.mxu0 0.0
    %5888 = vmatprep.subr.mxu0 0.0
    %5889 = vmatpush1.xpose.msra.mxu0 0.0
    %5890 = vmatprep.subr.mxu0 0.0
    %5891 = vmatpush1.xpose.msra.mxu0 0.0
    %5892 = vmatprep.subr.mxu0 0.0
    %5893 = vmatpush1.xpose.msra.mxu0 0.0
    %5894 = vmatprep.subr.mxu0 0.0
    %5895 = vmatpush1.xpose.msra.mxu0 0.0
    %5896 = vmatprep.subr.mxu0 0.0
    %5897 = vmatpush1.xpose.msra.mxu0 0.0
    %5898 = vmatprep.subr.mxu0 0.0
    %5899 = vmatpush1.xpose.msra.mxu0 0.0
    %5900 = vmatprep.subr.mxu0 0.0
    %5901 = vmatpush1.xpose.msra.mxu0 0.0
    %5902 = vmatprep.subr.mxu0 0.0
    %5903 = vmatpush1.xpose.msra.mxu0 0.0
    %5904 = vmatprep.subr.mxu0 0.0
    %5905 = vmatpush1.xpose.msra.mxu0 0.0
    %5906 = vmatprep.subr.mxu0 0.0
    %5907 = vmatpush1.xpose.msra.mxu0 0.0
    %5908 = vmatprep.subr.mxu0 0.0
    %5909 = vmatpush1.xpose.msra.mxu0 0.0
    %5910 = vmatprep.subr.mxu0 0.0
    %5911 = vmatpush1.xpose.msra.mxu0 0.0
    %5912 = vmatprep.subr.mxu0 0.0
    %5913 = vmatpush1.xpose.msra.mxu0 0.0
    %5914 = vmatprep.subr.mxu0 0.0
    %5915 = vmatpush1.xpose.msra.mxu0 0.0
    %5916 = vmatprep.subr.mxu0 0.0
    %5917 = vmatpush1.xpose.msra.mxu0 0.0
    %5918 = vmatprep.subr.mxu0 0.0
    %5919 = vmatpush1.xpose.msra.mxu0 0.0
    %5920 = vmatprep.subr.mxu0 0.0
    %5921 = vmatpush1.xpose.msra.mxu0 0.0
    %5922 = vmatprep.subr.mxu0 0.0
    %5923 = vmatpush1.xpose.msra.mxu0 0.0
    %5924 = vmatprep.subr.mxu0 0.0
    %5925 = vmatpush1.xpose.msra.mxu0 0.0
    %5926 = vmatprep.mubr.f32.mxu0 0.0
    %5927 = vmatmul.mubr.f32.gmra.mrb[0].mxu0 %v5856
    %v5928 = vpop.f32.mrb[0].mxu0
    %v5929 = vadd.f32 0.0, %v5928
    %v5930 = vpop.f32.mrb[0].mxu0
    %5931 = vdwg.mxu0
    %5932 = vrot.lane.b32.xlu0 %v5526, 96
    %v5933 = vpop.permute.xlu0 %5932
    %5934 = vrot.lane.b32.xlu0 %v5527, 96
    %v5935 = vpop.permute.xlu0 %5934
    %v5936 = vsel %vm276, %v5541, 0
    %v5938 = vsel %vm276, %v5933, 0
    %v5940 = vsel %vm276, %v5935, 0
    %5942 = vmatprep.subr.mxu0 0.0
    %5943 = vmatpush1.xpose.msra.mxu0 %v5938
    %5944 = vmatprep.subr.mxu0 0.0
    %5945 = vmatpush1.xpose.msra.mxu0 %v5940
    %5946 = vmatprep.subr.mxu0 0.0
    %5947 = vmatpush1.xpose.msra.mxu0 0.0
    %5948 = vmatprep.subr.mxu0 0.0
    %5949 = vmatpush1.xpose.msra.mxu0 0.0
    %5950 = vmatprep.subr.mxu0 0.0
    %5951 = vmatpush1.xpose.msra.mxu0 0.0
    %5952 = vmatprep.subr.mxu0 0.0
    %5953 = vmatpush1.xpose.msra.mxu0 0.0
    %5954 = vmatprep.subr.mxu0 0.0
    %5955 = vmatpush1.xpose.msra.mxu0 0.0
    %5956 = vmatprep.subr.mxu0 0.0
    %5957 = vmatpush1.xpose.msra.mxu0 0.0
    %5958 = vmatprep.subr.mxu0 0.0
    %5959 = vmatpush1.xpose.msra.mxu0 0.0
    %5960 = vmatprep.subr.mxu0 0.0
    %5961 = vmatpush1.xpose.msra.mxu0 0.0
    %5962 = vmatprep.subr.mxu0 0.0
    %5963 = vmatpush1.xpose.msra.mxu0 0.0
    %5964 = vmatprep.subr.mxu0 0.0
    %5965 = vmatpush1.xpose.msra.mxu0 0.0
    %5966 = vmatprep.subr.mxu0 0.0
    %5967 = vmatpush1.xpose.msra.mxu0 0.0
    %5968 = vmatprep.subr.mxu0 0.0
    %5969 = vmatpush1.xpose.msra.mxu0 0.0
    %5970 = vmatprep.subr.mxu0 0.0
    %5971 = vmatpush1.xpose.msra.mxu0 0.0
    %5972 = vmatprep.subr.mxu0 0.0
    %5973 = vmatpush1.xpose.msra.mxu0 0.0
    %5974 = vmatprep.subr.mxu0 0.0
    %5975 = vmatpush1.xpose.msra.mxu0 0.0
    %5976 = vmatprep.subr.mxu0 0.0
    %5977 = vmatpush1.xpose.msra.mxu0 0.0
    %5978 = vmatprep.subr.mxu0 0.0
    %5979 = vmatpush1.xpose.msra.mxu0 0.0
    %5980 = vmatprep.subr.mxu0 0.0
    %5981 = vmatpush1.xpose.msra.mxu0 0.0
    %5982 = vmatprep.subr.mxu0 0.0
    %5983 = vmatpush1.xpose.msra.mxu0 0.0
    %5984 = vmatprep.subr.mxu0 0.0
    %5985 = vmatpush1.xpose.msra.mxu0 0.0
    %5986 = vmatprep.subr.mxu0 0.0
    %5987 = vmatpush1.xpose.msra.mxu0 0.0
    %5988 = vmatprep.subr.mxu0 0.0
    %5989 = vmatpush1.xpose.msra.mxu0 0.0
    %5990 = vmatprep.subr.mxu0 0.0
    %5991 = vmatpush1.xpose.msra.mxu0 0.0
    %5992 = vmatprep.subr.mxu0 0.0
    %5993 = vmatpush1.xpose.msra.mxu0 0.0
    %5994 = vmatprep.subr.mxu0 0.0
    %5995 = vmatpush1.xpose.msra.mxu0 0.0
    %5996 = vmatprep.subr.mxu0 0.0
    %5997 = vmatpush1.xpose.msra.mxu0 0.0
    %5998 = vmatprep.subr.mxu0 0.0
    %5999 = vmatpush1.xpose.msra.mxu0 0.0
    %6000 = vmatprep.subr.mxu0 0.0
    %6001 = vmatpush1.xpose.msra.mxu0 0.0
    %6002 = vmatprep.subr.mxu0 0.0
    %6003 = vmatpush1.xpose.msra.mxu0 0.0
    %6004 = vmatprep.subr.mxu0 0.0
    %6005 = vmatpush1.xpose.msra.mxu0 0.0
    %6006 = vmatprep.mubr.f32.mxu0 0.0
    %6007 = vmatmul.mubr.f32.gmra.mrb[0].mxu0 %v5936
    %v6008 = vpop.f32.mrb[0].mxu0
    %v6009 = vadd.f32 0.0, %v6008
    %v6010 = vpop.f32.mrb[0].mxu0
    %6011 = vdwg.mxu0
    %6012 = vrot.lane.b32.xlu0 %v5573, 96
    %v6013 = vpop.permute.xlu0 %6012
    %6014 = vrot.lane.b32.xlu0 %v5575, 96
    %v6015 = vpop.permute.xlu0 %6014
    %v6016 = vsel %vm276, %v5551, 0
    %v6018 = vsel %vm276, %v6013, 0
    %v6020 = vsel %vm276, %v6015, 0
    %6022 = vmatprep.subr.mxu0 0.0
    %6023 = vmatpush1.xpose.msra.mxu0 %v6018
    %6024 = vmatprep.subr.mxu0 0.0
    %6025 = vmatpush1.xpose.msra.mxu0 %v6020
    %6026 = vmatprep.subr.mxu0 0.0
    %6027 = vmatpush1.xpose.msra.mxu0 0.0
    %6028 = vmatprep.subr.mxu0 0.0
    %6029 = vmatpush1.xpose.msra.mxu0 0.0
    %6030 = vmatprep.subr.mxu0 0.0
    %6031 = vmatpush1.xpose.msra.mxu0 0.0
    %6032 = vmatprep.subr.mxu0 0.0
    %6033 = vmatpush1.xpose.msra.mxu0 0.0
    %6034 = vmatprep.subr.mxu0 0.0
    %6035 = vmatpush1.xpose.msra.mxu0 0.0
    %6036 = vmatprep.subr.mxu0 0.0
    %6037 = vmatpush1.xpose.msra.mxu0 0.0
    %6038 = vmatprep.subr.mxu0 0.0
    %6039 = vmatpush1.xpose.msra.mxu0 0.0
    %6040 = vmatprep.subr.mxu0 0.0
    %6041 = vmatpush1.xpose.msra.mxu0 0.0
    %6042 = vmatprep.subr.mxu0 0.0
    %6043 = vmatpush1.xpose.msra.mxu0 0.0
    %6044 = vmatprep.subr.mxu0 0.0
    %6045 = vmatpush1.xpose.msra.mxu0 0.0
    %6046 = vmatprep.subr.mxu0 0.0
    %6047 = vmatpush1.xpose.msra.mxu0 0.0
    %6048 = vmatprep.subr.mxu0 0.0
    %6049 = vmatpush1.xpose.msra.mxu0 0.0
    %6050 = vmatprep.subr.mxu0 0.0
    %6051 = vmatpush1.xpose.msra.mxu0 0.0
    %6052 = vmatprep.subr.mxu0 0.0
    %6053 = vmatpush1.xpose.msra.mxu0 0.0
    %6054 = vmatprep.subr.mxu0 0.0
    %6055 = vmatpush1.xpose.msra.mxu0 0.0
    %6056 = vmatprep.subr.mxu0 0.0
    %6057 = vmatpush1.xpose.msra.mxu0 0.0
    %6058 = vmatprep.subr.mxu0 0.0
    %6059 = vmatpush1.xpose.msra.mxu0 0.0
    %6060 = vmatprep.subr.mxu0 0.0
    %6061 = vmatpush1.xpose.msra.mxu0 0.0
    %6062 = vmatprep.subr.mxu0 0.0
    %6063 = vmatpush1.xpose.msra.mxu0 0.0
    %6064 = vmatprep.subr.mxu0 0.0
    %6065 = vmatpush1.xpose.msra.mxu0 0.0
    %6066 = vmatprep.subr.mxu0 0.0
    %6067 = vmatpush1.xpose.msra.mxu0 0.0
    %6068 = vmatprep.subr.mxu0 0.0
    %6069 = vmatpush1.xpose.msra.mxu0 0.0
    %6070 = vmatprep.subr.mxu0 0.0
    %6071 = vmatpush1.xpose.msra.mxu0 0.0
    %6072 = vmatprep.subr.mxu0 0.0
    %6073 = vmatpush1.xpose.msra.mxu0 0.0
    %6074 = vmatprep.subr.mxu0 0.0
    %6075 = vmatpush1.xpose.msra.mxu0 0.0
    %6076 = vmatprep.subr.mxu0 0.0
    %6077 = vmatpush1.xpose.msra.mxu0 0.0
    %6078 = vmatprep.subr.mxu0 0.0
    %6079 = vmatpush1.xpose.msra.mxu0 0.0
    %6080 = vmatprep.subr.mxu0 0.0
    %6081 = vmatpush1.xpose.msra.mxu0 0.0
    %6082 = vmatprep.subr.mxu0 0.0
    %6083 = vmatpush1.xpose.msra.mxu0 0.0
    %6084 = vmatprep.subr.mxu0 0.0
    %6085 = vmatpush1.xpose.msra.mxu0 0.0
    %6086 = vmatprep.mubr.f32.mxu0 0.0
    %6087 = vmatmul.mubr.f32.gmra.mrb[0].mxu0 %v6016
    %v6088 = vpop.f32.mrb[0].mxu0
    %v6089 = vadd.f32 0.0, %v6088
    %v6090 = vpop.f32.mrb[0].mxu0
    %6091 = vdwg.mxu0
    %6092 = vrot.lane.b32.xlu0 %v5577, 96
    %v6093 = vpop.permute.xlu0 %6092
    %6094 = vrot.lane.b32.xlu0 %v5579, 96
    %v6095 = vpop.permute.xlu0 %6094
    %v6096 = vsel %vm276, %v5553, 0
    %v6098 = vsel %vm276, %v6093, 0
    %v6100 = vsel %vm276, %v6095, 0
    %6102 = vmatprep.subr.mxu0 0.0
    %6103 = vmatpush1.xpose.msra.mxu0 %v6098
    %6104 = vmatprep.subr.mxu0 0.0
    %6105 = vmatpush1.xpose.msra.mxu0 %v6100
    %6106 = vmatprep.subr.mxu0 0.0
    %6107 = vmatpush1.xpose.msra.mxu0 0.0
    %6108 = vmatprep.subr.mxu0 0.0
    %6109 = vmatpush1.xpose.msra.mxu0 0.0
    %6110 = vmatprep.subr.mxu0 0.0
    %6111 = vmatpush1.xpose.msra.mxu0 0.0
    %6112 = vmatprep.subr.mxu0 0.0
    %6113 = vmatpush1.xpose.msra.mxu0 0.0
    %6114 = vmatprep.subr.mxu0 0.0
    %6115 = vmatpush1.xpose.msra.mxu0 0.0
    %6116 = vmatprep.subr.mxu0 0.0
    %6117 = vmatpush1.xpose.msra.mxu0 0.0
    %6118 = vmatprep.subr.mxu0 0.0
    %6119 = vmatpush1.xpose.msra.mxu0 0.0
    %6120 = vmatprep.subr.mxu0 0.0
    %6121 = vmatpush1.xpose.msra.mxu0 0.0
    %6122 = vmatprep.subr.mxu0 0.0
    %6123 = vmatpush1.xpose.msra.mxu0 0.0
    %6124 = vmatprep.subr.mxu0 0.0
    %6125 = vmatpush1.xpose.msra.mxu0 0.0
    %6126 = vmatprep.subr.mxu0 0.0
    %6127 = vmatpush1.xpose.msra.mxu0 0.0
    %6128 = vmatprep.subr.mxu0 0.0
    %6129 = vmatpush1.xpose.msra.mxu0 0.0
    %6130 = vmatprep.subr.mxu0 0.0
    %6131 = vmatpush1.xpose.msra.mxu0 0.0
    %6132 = vmatprep.subr.mxu0 0.0
    %6133 = vmatpush1.xpose.msra.mxu0 0.0
    %6134 = vmatprep.subr.mxu0 0.0
    %6135 = vmatpush1.xpose.msra.mxu0 0.0
    %6136 = vmatprep.subr.mxu0 0.0
    %6137 = vmatpush1.xpose.msra.mxu0 0.0
    %6138 = vmatprep.subr.mxu0 0.0
    %6139 = vmatpush1.xpose.msra.mxu0 0.0
    %6140 = vmatprep.subr.mxu0 0.0
    %6141 = vmatpush1.xpose.msra.mxu0 0.0
    %6142 = vmatprep.subr.mxu0 0.0
    %6143 = vmatpush1.xpose.msra.mxu0 0.0
    %6144 = vmatprep.subr.mxu0 0.0
    %6145 = vmatpush1.xpose.msra.mxu0 0.0
    %6146 = vmatprep.subr.mxu0 0.0
    %6147 = vmatpush1.xpose.msra.mxu0 0.0
    %6148 = vmatprep.subr.mxu0 0.0
    %6149 = vmatpush1.xpose.msra.mxu0 0.0
    %6150 = vmatprep.subr.mxu0 0.0
    %6151 = vmatpush1.xpose.msra.mxu0 0.0
    %6152 = vmatprep.subr.mxu0 0.0
    %6153 = vmatpush1.xpose.msra.mxu0 0.0
    %6154 = vmatprep.subr.mxu0 0.0
    %6155 = vmatpush1.xpose.msra.mxu0 0.0
    %6156 = vmatprep.subr.mxu0 0.0
    %6157 = vmatpush1.xpose.msra.mxu0 0.0
    %6158 = vmatprep.subr.mxu0 0.0
    %6159 = vmatpush1.xpose.msra.mxu0 0.0
    %6160 = vmatprep.subr.mxu0 0.0
    %6161 = vmatpush1.xpose.msra.mxu0 0.0
    %6162 = vmatprep.subr.mxu0 0.0
    %6163 = vmatpush1.xpose.msra.mxu0 0.0
    %6164 = vmatprep.subr.mxu0 0.0
    %6165 = vmatpush1.xpose.msra.mxu0 0.0
    %6166 = vmatprep.mubr.f32.mxu0 0.0
    %6167 = vmatmul.mubr.f32.gmra.mrb[0].mxu0 %v6096
    %v6168 = vpop.f32.mrb[0].mxu0
    %v6169 = vadd.f32 0.0, %v6168
    %v6170 = vpop.f32.mrb[0].mxu0
    %6171 = vdwg.mxu0
    %6172 = vrot.lane.b32.xlu0 %v5581, 96
    %v6173 = vpop.permute.xlu0 %6172
    %6174 = vrot.lane.b32.xlu0 %v5583, 96
    %v6175 = vpop.permute.xlu0 %6174
    %v6176 = vsel %vm276, %v5555, 0
    %v6178 = vsel %vm276, %v6173, 0
    %v6180 = vsel %vm276, %v6175, 0
    %6182 = vmatprep.subr.mxu0 0.0
    %6183 = vmatpush1.xpose.msra.mxu0 %v6178
    %6184 = vmatprep.subr.mxu0 0.0
    %6185 = vmatpush1.xpose.msra.mxu0 %v6180
    %6186 = vmatprep.subr.mxu0 0.0
    %6187 = vmatpush1.xpose.msra.mxu0 0.0
    %6188 = vmatprep.subr.mxu0 0.0
    %6189 = vmatpush1.xpose.msra.mxu0 0.0
    %6190 = vmatprep.subr.mxu0 0.0
    %6191 = vmatpush1.xpose.msra.mxu0 0.0
    %6192 = vmatprep.subr.mxu0 0.0
    %6193 = vmatpush1.xpose.msra.mxu0 0.0
    %6194 = vmatprep.subr.mxu0 0.0
    %6195 = vmatpush1.xpose.msra.mxu0 0.0
    %6196 = vmatprep.subr.mxu0 0.0
    %6197 = vmatpush1.xpose.msra.mxu0 0.0
    %6198 = vmatprep.subr.mxu0 0.0
    %6199 = vmatpush1.xpose.msra.mxu0 0.0
    %6200 = vmatprep.subr.mxu0 0.0
    %6201 = vmatpush1.xpose.msra.mxu0 0.0
    %6202 = vmatprep.subr.mxu0 0.0
    %6203 = vmatpush1.xpose.msra.mxu0 0.0
    %6204 = vmatprep.subr.mxu0 0.0
    %6205 = vmatpush1.xpose.msra.mxu0 0.0
    %6206 = vmatprep.subr.mxu0 0.0
    %6207 = vmatpush1.xpose.msra.mxu0 0.0
    %6208 = vmatprep.subr.mxu0 0.0
    %6209 = vmatpush1.xpose.msra.mxu0 0.0
    %6210 = vmatprep.subr.mxu0 0.0
    %6211 = vmatpush1.xpose.msra.mxu0 0.0
    %6212 = vmatprep.subr.mxu0 0.0
    %6213 = vmatpush1.xpose.msra.mxu0 0.0
    %6214 = vmatprep.subr.mxu0 0.0
    %6215 = vmatpush1.xpose.msra.mxu0 0.0
    %6216 = vmatprep.subr.mxu0 0.0
    %6217 = vmatpush1.xpose.msra.mxu0 0.0
    %6218 = vmatprep.subr.mxu0 0.0
    %6219 = vmatpush1.xpose.msra.mxu0 0.0
    %6220 = vmatprep.subr.mxu0 0.0
    %6221 = vmatpush1.xpose.msra.mxu0 0.0
    %6222 = vmatprep.subr.mxu0 0.0
    %6223 = vmatpush1.xpose.msra.mxu0 0.0
    %6224 = vmatprep.subr.mxu0 0.0
    %6225 = vmatpush1.xpose.msra.mxu0 0.0
    %6226 = vmatprep.subr.mxu0 0.0
    %6227 = vmatpush1.xpose.msra.mxu0 0.0
    %6228 = vmatprep.subr.mxu0 0.0
    %6229 = vmatpush1.xpose.msra.mxu0 0.0
    %6230 = vmatprep.subr.mxu0 0.0
    %6231 = vmatpush1.xpose.msra.mxu0 0.0
    %6232 = vmatprep.subr.mxu0 0.0
    %6233 = vmatpush1.xpose.msra.mxu0 0.0
    %6234 = vmatprep.subr.mxu0 0.0
    %6235 = vmatpush1.xpose.msra.mxu0 0.0
    %6236 = vmatprep.subr.mxu0 0.0
    %6237 = vmatpush1.xpose.msra.mxu0 0.0
    %6238 = vmatprep.subr.mxu0 0.0
    %6239 = vmatpush1.xpose.msra.mxu0 0.0
    %6240 = vmatprep.subr.mxu0 0.0
    %6241 = vmatpush1.xpose.msra.mxu0 0.0
    %6242 = vmatprep.subr.mxu0 0.0
    %6243 = vmatpush1.xpose.msra.mxu0 0.0
    %6244 = vmatprep.subr.mxu0 0.0
    %6245 = vmatpush1.xpose.msra.mxu0 0.0
    %6246 = vmatprep.mubr.f32.mxu0 0.0
    %6247 = vmatmul.mubr.f32.gmra.mrb[0].mxu0 %v6176
    %v6248 = vpop.f32.mrb[0].mxu0
    %v6249 = vadd.f32 0.0, %v6248
    %v6250 = vpop.f32.mrb[0].mxu0
    %6251 = vdwg.mxu0
    %v6252 = vsel %vm1592, %v5689, -inf
    %6253 = vmax.xlane.f32.xlu0 %v6252
    %v6254 = vpop.xlane.xlu0 %6253
    %v6255 = vsel %vm1592, %v5769, -inf
    %6256 = vmax.xlane.f32.xlu0 %v6255
    %v6257 = vpop.xlane.xlu0 %6256
    %v6258 = vsel %vm1592, %v5849, -inf
    %6259 = vmax.xlane.f32.xlu0 %v6258
    %v6260 = vpop.xlane.xlu0 %6259
    %v6261 = vsel %vm1592, %v5929, -inf
    %6262 = vmax.xlane.f32.xlu0 %v6261
    %v6263 = vpop.xlane.xlu0 %6262
    %v6264 = vsel %vm1592, %v6009, -inf
    %6265 = vmax.xlane.f32.xlu0 %v6264
    %v6266 = vpop.xlane.xlu0 %6265
    %v6267 = vsel %vm1592, %v6089, -inf
    %6268 = vmax.xlane.f32.xlu0 %v6267
    %v6269 = vpop.xlane.xlu0 %6268
    %v6270 = vsel %vm1592, %v6169, -inf
    %6271 = vmax.xlane.f32.xlu0 %v6270
    %v6272 = vpop.xlane.xlu0 %6271
    %v6273 = vsel %vm1592, %v6249, -inf
    %6274 = vmax.xlane.f32.xlu0 %v6273
    %v6275 = vpop.xlane.xlu0 %6274
    %v6276 = vsub.f32 %v5689, %v6254
    %v6277 = vsub.f32 %v5769, %v6257
    %v6278 = vsub.f32 %v5849, %v6260
    %v6279 = vsub.f32 %v5929, %v6263
    %v6280 = vsub.f32 %v6009, %v6266
    %v6281 = vsub.f32 %v6089, %v6269
    %v6282 = vsub.f32 %v6169, %v6272
    %v6283 = vsub.f32 %v6249, %v6275
    %v6284 = vmul.f32 %v6276, 1.442695
    %v6285 = vpow.pop %v6284
    %v6286 = vmul.f32 %v6277, 1.442695
    %v6287 = vpow.pop %v6286
    %v6288 = vmul.f32 %v6278, 1.442695
    %v6289 = vpow.pop %v6288
    %v6290 = vmul.f32 %v6279, 1.442695
    %v6291 = vpow.pop %v6290
    %v6292 = vmul.f32 %v6280, 1.442695
    %v6293 = vpow.pop %v6292
    %v6294 = vmul.f32 %v6281, 1.442695
    %v6295 = vpow.pop %v6294
    %v6296 = vmul.f32 %v6282, 1.442695
    %v6297 = vpow.pop %v6296
    %v6298 = vmul.f32 %v6283, 1.442695
    %v6299 = vpow.pop %v6298
    %v6300 = vsel %vm1592, %v6285, 0.0
    %6301 = vadd.xlane.f32.xlu0 %v6300
    %v6302 = vpop.xlane.xlu0 %6301
    %v6303 = vsel %vm1592, %v6287, 0.0
    %6304 = vadd.xlane.f32.xlu0 %v6303
    %v6305 = vpop.xlane.xlu0 %6304
    %v6306 = vsel %vm1592, %v6289, 0.0
    %6307 = vadd.xlane.f32.xlu0 %v6306
    %v6308 = vpop.xlane.xlu0 %6307
    %v6309 = vsel %vm1592, %v6291, 0.0
    %6310 = vadd.xlane.f32.xlu0 %v6309
    %v6311 = vpop.xlane.xlu0 %6310
    %v6312 = vsel %vm1592, %v6293, 0.0
    %6313 = vadd.xlane.f32.xlu0 %v6312
    %v6314 = vpop.xlane.xlu0 %6313
    %v6315 = vsel %vm1592, %v6295, 0.0
    %6316 = vadd.xlane.f32.xlu0 %v6315
    %v6317 = vpop.xlane.xlu0 %6316
    %v6318 = vsel %vm1592, %v6297, 0.0
    %6319 = vadd.xlane.f32.xlu0 %v6318
    %v6320 = vpop.xlane.xlu0 %6319
    %v6321 = vsel %vm1592, %v6299, 0.0
    %6322 = vadd.xlane.f32.xlu0 %v6321
    %v6323 = vpop.xlane.xlu0 %6322
    %v6324 = vrcp.pop %v6302
    %v6325 = vmul.f32 %v6285, %v6324
    %v6326 = vrcp.pop %v6305
    %v6327 = vmul.f32 %v6287, %v6326
    %v6328 = vrcp.pop %v6308
    %v6329 = vmul.f32 %v6289, %v6328
    %v6330 = vrcp.pop %v6311
    %v6331 = vmul.f32 %v6291, %v6330
    %v6332 = vrcp.pop %v6314
    %v6333 = vmul.f32 %v6293, %v6332
    %v6334 = vrcp.pop %v6317
    %v6335 = vmul.f32 %v6295, %v6334
    %v6336 = vrcp.pop %v6320
    %v6337 = vmul.f32 %v6297, %v6336
    %v6338 = vrcp.pop %v6323
    %v6339 = vmul.f32 %v6299, %v6338
    %6340 = vrot.lane.b32.xlu0 %v5536, 64
    %v6341 = vpop.permute.xlu0 %6340
    %6342 = vrot.lane.b32.xlu0 %v5537, 64
    %v6343 = vpop.permute.xlu0 %6342
    %v6347 = vsel %vm1592, %v6325, 0
    %6349 = vmatprep.subr.mxu0 0.0
    %6350 = vmatpush1.msra.mxu0 %v6341
    %6351 = vmatprep.subr.mxu0 0.0
    %6352 = vmatpush1.msra.mxu0 %v6343
    %6353 = vmatprep.subr.mxu0 0.0
    %6354 = vmatpush1.msra.mxu0 0.0
    %6355 = vmatprep.subr.mxu0 0.0
    %6356 = vmatpush1.msra.mxu0 0.0
    %6357 = vmatprep.subr.mxu0 0.0
    %6358 = vmatpush1.msra.mxu0 0.0
    %6359 = vmatprep.subr.mxu0 0.0
    %6360 = vmatpush1.msra.mxu0 0.0
    %6361 = vmatprep.subr.mxu0 0.0
    %6362 = vmatpush1.msra.mxu0 0.0
    %6363 = vmatprep.subr.mxu0 0.0
    %6364 = vmatpush1.msra.mxu0 0.0
    %6365 = vmatprep.subr.mxu0 0.0
    %6366 = vmatpush1.msra.mxu0 0.0
    %6367 = vmatprep.subr.mxu0 0.0
    %6368 = vmatpush1.msra.mxu0 0.0
    %6369 = vmatprep.subr.mxu0 0.0
    %6370 = vmatpush1.msra.mxu0 0.0
    %6371 = vmatprep.subr.mxu0 0.0
    %6372 = vmatpush1.msra.mxu0 0.0
    %6373 = vmatprep.subr.mxu0 0.0
    %6374 = vmatpush1.msra.mxu0 0.0
    %6375 = vmatprep.subr.mxu0 0.0
    %6376 = vmatpush1.msra.mxu0 0.0
    %6377 = vmatprep.subr.mxu0 0.0
    %6378 = vmatpush1.msra.mxu0 0.0
    %6379 = vmatprep.subr.mxu0 0.0
    %6380 = vmatpush1.msra.mxu0 0.0
    %6381 = vmatprep.subr.mxu0 0.0
    %6382 = vmatpush1.msra.mxu0 0.0
    %6383 = vmatprep.subr.mxu0 0.0
    %6384 = vmatpush1.msra.mxu0 0.0
    %6385 = vmatprep.subr.mxu0 0.0
    %6386 = vmatpush1.msra.mxu0 0.0
    %6387 = vmatprep.subr.mxu0 0.0
    %6388 = vmatpush1.msra.mxu0 0.0
    %6389 = vmatprep.subr.mxu0 0.0
    %6390 = vmatpush1.msra.mxu0 0.0
    %6391 = vmatprep.subr.mxu0 0.0
    %6392 = vmatpush1.msra.mxu0 0.0
    %6393 = vmatprep.subr.mxu0 0.0
    %6394 = vmatpush1.msra.mxu0 0.0
    %6395 = vmatprep.subr.mxu0 0.0
    %6396 = vmatpush1.msra.mxu0 0.0
    %6397 = vmatprep.subr.mxu0 0.0
    %6398 = vmatpush1.msra.mxu0 0.0
    %6399 = vmatprep.subr.mxu0 0.0
    %6400 = vmatpush1.msra.mxu0 0.0
    %6401 = vmatprep.subr.mxu0 0.0
    %6402 = vmatpush1.msra.mxu0 0.0
    %6403 = vmatprep.subr.mxu0 0.0
    %6404 = vmatpush1.msra.mxu0 0.0
    %6405 = vmatprep.subr.mxu0 0.0
    %6406 = vmatpush1.msra.mxu0 0.0
    %6407 = vmatprep.subr.mxu0 0.0
    %6408 = vmatpush1.msra.mxu0 0.0
    %6409 = vmatprep.subr.mxu0 0.0
    %6410 = vmatpush1.msra.mxu0 0.0
    %6411 = vmatprep.subr.mxu0 0.0
    %6412 = vmatpush1.msra.mxu0 0.0
    %6413 = vmatprep.mubr.f32.mxu0 0.0
    %6414 = vmatmul.mubr.f32.gmra.mrb[0].mxu0 %v6347
    %v6415 = vpop.f32.mrb[0].mxu0
    %v6416 = vadd.f32 0.0, %v6415
    %v6417 = vpop.f32.mrb[0].mxu0
    %6418 = vdwg.mxu0
    %6419 = vrot.lane.b32.xlu0 %v5587, 64
    %v6420 = vpop.permute.xlu0 %6419
    %6421 = vrot.lane.b32.xlu0 %v5589, 64
    %v6422 = vpop.permute.xlu0 %6421
    %v6426 = vsel %vm1592, %v6327, 0
    %6428 = vmatprep.subr.mxu0 0.0
    %6429 = vmatpush1.msra.mxu0 %v6420
    %6430 = vmatprep.subr.mxu0 0.0
    %6431 = vmatpush1.msra.mxu0 %v6422
    %6432 = vmatprep.subr.mxu0 0.0
    %6433 = vmatpush1.msra.mxu0 0.0
    %6434 = vmatprep.subr.mxu0 0.0
    %6435 = vmatpush1.msra.mxu0 0.0
    %6436 = vmatprep.subr.mxu0 0.0
    %6437 = vmatpush1.msra.mxu0 0.0
    %6438 = vmatprep.subr.mxu0 0.0
    %6439 = vmatpush1.msra.mxu0 0.0
    %6440 = vmatprep.subr.mxu0 0.0
    %6441 = vmatpush1.msra.mxu0 0.0
    %6442 = vmatprep.subr.mxu0 0.0
    %6443 = vmatpush1.msra.mxu0 0.0
    %6444 = vmatprep.subr.mxu0 0.0
    %6445 = vmatpush1.msra.mxu0 0.0
    %6446 = vmatprep.subr.mxu0 0.0
    %6447 = vmatpush1.msra.mxu0 0.0
    %6448 = vmatprep.subr.mxu0 0.0
    %6449 = vmatpush1.msra.mxu0 0.0
    %6450 = vmatprep.subr.mxu0 0.0
    %6451 = vmatpush1.msra.mxu0 0.0
    %6452 = vmatprep.subr.mxu0 0.0
    %6453 = vmatpush1.msra.mxu0 0.0
    %6454 = vmatprep.subr.mxu0 0.0
    %6455 = vmatpush1.msra.mxu0 0.0
    %6456 = vmatprep.subr.mxu0 0.0
    %6457 = vmatpush1.msra.mxu0 0.0
    %6458 = vmatprep.subr.mxu0 0.0
    %6459 = vmatpush1.msra.mxu0 0.0
    %6460 = vmatprep.subr.mxu0 0.0
    %6461 = vmatpush1.msra.mxu0 0.0
    %6462 = vmatprep.subr.mxu0 0.0
    %6463 = vmatpush1.msra.mxu0 0.0
    %6464 = vmatprep.subr.mxu0 0.0
    %6465 = vmatpush1.msra.mxu0 0.0
    %6466 = vmatprep.subr.mxu0 0.0
    %6467 = vmatpush1.msra.mxu0 0.0
    %6468 = vmatprep.subr.mxu0 0.0
    %6469 = vmatpush1.msra.mxu0 0.0
    %6470 = vmatprep.subr.mxu0 0.0
    %6471 = vmatpush1.msra.mxu0 0.0
    %6472 = vmatprep.subr.mxu0 0.0
    %6473 = vmatpush1.msra.mxu0 0.0
    %6474 = vmatprep.subr.mxu0 0.0
    %6475 = vmatpush1.msra.mxu0 0.0
    %6476 = vmatprep.subr.mxu0 0.0
    %6477 = vmatpush1.msra.mxu0 0.0
    %6478 = vmatprep.subr.mxu0 0.0
    %6479 = vmatpush1.msra.mxu0 0.0
    %6480 = vmatprep.subr.mxu0 0.0
    %6481 = vmatpush1.msra.mxu0 0.0
    %6482 = vmatprep.subr.mxu0 0.0
    %6483 = vmatpush1.msra.mxu0 0.0
    %6484 = vmatprep.subr.mxu0 0.0
    %6485 = vmatpush1.msra.mxu0 0.0
    %6486 = vmatprep.subr.mxu0 0.0
    %6487 = vmatpush1.msra.mxu0 0.0
    %6488 = vmatprep.subr.mxu0 0.0
    %6489 = vmatpush1.msra.mxu0 0.0
    %6490 = vmatprep.subr.mxu0 0.0
    %6491 = vmatpush1.msra.mxu0 0.0
    %6492 = vmatprep.mubr.f32.mxu0 0.0
    %6493 = vmatmul.mubr.f32.gmra.mrb[0].mxu0 %v6426
    %v6494 = vpop.f32.mrb[0].mxu0
    %v6495 = vadd.f32 0.0, %v6494
    %v6496 = vpop.f32.mrb[0].mxu0
    %6497 = vdwg.mxu0
    %6498 = vrot.lane.b32.xlu0 %v5591, 64
    %v6499 = vpop.permute.xlu0 %6498
    %6500 = vrot.lane.b32.xlu0 %v5593, 64
    %v6501 = vpop.permute.xlu0 %6500
    %v6505 = vsel %vm1592, %v6329, 0
    %6507 = vmatprep.subr.mxu0 0.0
    %6508 = vmatpush1.msra.mxu0 %v6499
    %6509 = vmatprep.subr.mxu0 0.0
    %6510 = vmatpush1.msra.mxu0 %v6501
    %6511 = vmatprep.subr.mxu0 0.0
    %6512 = vmatpush1.msra.mxu0 0.0
    %6513 = vmatprep.subr.mxu0 0.0
    %6514 = vmatpush1.msra.mxu0 0.0
    %6515 = vmatprep.subr.mxu0 0.0
    %6516 = vmatpush1.msra.mxu0 0.0
    %6517 = vmatprep.subr.mxu0 0.0
    %6518 = vmatpush1.msra.mxu0 0.0
    %6519 = vmatprep.subr.mxu0 0.0
    %6520 = vmatpush1.msra.mxu0 0.0
    %6521 = vmatprep.subr.mxu0 0.0
    %6522 = vmatpush1.msra.mxu0 0.0
    %6523 = vmatprep.subr.mxu0 0.0
    %6524 = vmatpush1.msra.mxu0 0.0
    %6525 = vmatprep.subr.mxu0 0.0
    %6526 = vmatpush1.msra.mxu0 0.0
    %6527 = vmatprep.subr.mxu0 0.0
    %6528 = vmatpush1.msra.mxu0 0.0
    %6529 = vmatprep.subr.mxu0 0.0
    %6530 = vmatpush1.msra.mxu0 0.0
    %6531 = vmatprep.subr.mxu0 0.0
    %6532 = vmatpush1.msra.mxu0 0.0
    %6533 = vmatprep.subr.mxu0 0.0
    %6534 = vmatpush1.msra.mxu0 0.0
    %6535 = vmatprep.subr.mxu0 0.0
    %6536 = vmatpush1.msra.mxu0 0.0
    %6537 = vmatprep.subr.mxu0 0.0
    %6538 = vmatpush1.msra.mxu0 0.0
    %6539 = vmatprep.subr.mxu0 0.0
    %6540 = vmatpush1.msra.mxu0 0.0
    %6541 = vmatprep.subr.mxu0 0.0
    %6542 = vmatpush1.msra.mxu0 0.0
    %6543 = vmatprep.subr.mxu0 0.0
    %6544 = vmatpush1.msra.mxu0 0.0
    %6545 = vmatprep.subr.mxu0 0.0
    %6546 = vmatpush1.msra.mxu0 0.0
    %6547 = vmatprep.subr.mxu0 0.0
    %6548 = vmatpush1.msra.mxu0 0.0
    %6549 = vmatprep.subr.mxu0 0.0
    %6550 = vmatpush1.msra.mxu0 0.0
    %6551 = vmatprep.subr.mxu0 0.0
    %6552 = vmatpush1.msra.mxu0 0.0
    %6553 = vmatprep.subr.mxu0 0.0
    %6554 = vmatpush1.msra.mxu0 0.0
    %6555 = vmatprep.subr.mxu0 0.0
    %6556 = vmatpush1.msra.mxu0 0.0
    %6557 = vmatprep.subr.mxu0 0.0
    %6558 = vmatpush1.msra.mxu0 0.0
    %6559 = vmatprep.subr.mxu0 0.0
    %6560 = vmatpush1.msra.mxu0 0.0
    %6561 = vmatprep.subr.mxu0 0.0
    %6562 = vmatpush1.msra.mxu0 0.0
    %6563 = vmatprep.subr.mxu0 0.0
    %6564 = vmatpush1.msra.mxu0 0.0
    %6565 = vmatprep.subr.mxu0 0.0
    %6566 = vmatpush1.msra.mxu0 0.0
    %6567 = vmatprep.subr.mxu0 0.0
    %6568 = vmatpush1.msra.mxu0 0.0
    %6569 = vmatprep.subr.mxu0 0.0
    %6570 = vmatpush1.msra.mxu0 0.0
    %6571 = vmatprep.mubr.f32.mxu0 0.0
    %6572 = vmatmul.mubr.f32.gmra.mrb[0].mxu0 %v6505
    %v6573 = vpop.f32.mrb[0].mxu0
    %v6574 = vadd.f32 0.0, %v6573
    %v6575 = vpop.f32.mrb[0].mxu0
    %6576 = vdwg.mxu0
    %6577 = vrot.lane.b32.xlu0 %v5595, 64
    %v6578 = vpop.permute.xlu0 %6577
    %6579 = vrot.lane.b32.xlu0 %v5597, 64
    %v6580 = vpop.permute.xlu0 %6579
    %v6584 = vsel %vm1592, %v6331, 0
    %6586 = vmatprep.subr.mxu0 0.0
    %6587 = vmatpush1.msra.mxu0 %v6578
    %6588 = vmatprep.subr.mxu0 0.0
    %6589 = vmatpush1.msra.mxu0 %v6580
    %6590 = vmatprep.subr.mxu0 0.0
    %6591 = vmatpush1.msra.mxu0 0.0
    %6592 = vmatprep.subr.mxu0 0.0
    %6593 = vmatpush1.msra.mxu0 0.0
    %6594 = vmatprep.subr.mxu0 0.0
    %6595 = vmatpush1.msra.mxu0 0.0
    %6596 = vmatprep.subr.mxu0 0.0
    %6597 = vmatpush1.msra.mxu0 0.0
    %6598 = vmatprep.subr.mxu0 0.0
    %6599 = vmatpush1.msra.mxu0 0.0
    %6600 = vmatprep.subr.mxu0 0.0
    %6601 = vmatpush1.msra.mxu0 0.0
    %6602 = vmatprep.subr.mxu0 0.0
    %6603 = vmatpush1.msra.mxu0 0.0
    %6604 = vmatprep.subr.mxu0 0.0
    %6605 = vmatpush1.msra.mxu0 0.0
    %6606 = vmatprep.subr.mxu0 0.0
    %6607 = vmatpush1.msra.mxu0 0.0
    %6608 = vmatprep.subr.mxu0 0.0
    %6609 = vmatpush1.msra.mxu0 0.0
    %6610 = vmatprep.subr.mxu0 0.0
    %6611 = vmatpush1.msra.mxu0 0.0
    %6612 = vmatprep.subr.mxu0 0.0
    %6613 = vmatpush1.msra.mxu0 0.0
    %6614 = vmatprep.subr.mxu0 0.0
    %6615 = vmatpush1.msra.mxu0 0.0
    %6616 = vmatprep.subr.mxu0 0.0
    %6617 = vmatpush1.msra.mxu0 0.0
    %6618 = vmatprep.subr.mxu0 0.0
    %6619 = vmatpush1.msra.mxu0 0.0
    %6620 = vmatprep.subr.mxu0 0.0
    %6621 = vmatpush1.msra.mxu0 0.0
    %6622 = vmatprep.subr.mxu0 0.0
    %6623 = vmatpush1.msra.mxu0 0.0
    %6624 = vmatprep.subr.mxu0 0.0
    %6625 = vmatpush1.msra.mxu0 0.0
    %6626 = vmatprep.subr.mxu0 0.0
    %6627 = vmatpush1.msra.mxu0 0.0
    %6628 = vmatprep.subr.mxu0 0.0
    %6629 = vmatpush1.msra.mxu0 0.0
    %6630 = vmatprep.subr.mxu0 0.0
    %6631 = vmatpush1.msra.mxu0 0.0
    %6632 = vmatprep.subr.mxu0 0.0
    %6633 = vmatpush1.msra.mxu0 0.0
    %6634 = vmatprep.subr.mxu0 0.0
    %6635 = vmatpush1.msra.mxu0 0.0
    %6636 = vmatprep.subr.mxu0 0.0
    %6637 = vmatpush1.msra.mxu0 0.0
    %6638 = vmatprep.subr.mxu0 0.0
    %6639 = vmatpush1.msra.mxu0 0.0
    %6640 = vmatprep.subr.mxu0 0.0
    %6641 = vmatpush1.msra.mxu0 0.0
    %6642 = vmatprep.subr.mxu0 0.0
    %6643 = vmatpush1.msra.mxu0 0.0
    %6644 = vmatprep.subr.mxu0 0.0
    %6645 = vmatpush1.msra.mxu0 0.0
    %6646 = vmatprep.subr.mxu0 0.0
    %6647 = vmatpush1.msra.mxu0 0.0
    %6648 = vmatprep.subr.mxu0 0.0
    %6649 = vmatpush1.msra.mxu0 0.0
    %6650 = vmatprep.mubr.f32.mxu0 0.0
    %6651 = vmatmul.mubr.f32.gmra.mrb[0].mxu0 %v6584
    %v6652 = vpop.f32.mrb[0].mxu0
    %v6653 = vadd.f32 0.0, %v6652
    %v6654 = vpop.f32.mrb[0].mxu0
    %6655 = vdwg.mxu0
    %6656 = vrot.lane.b32.xlu0 %v5538, 64
    %v6657 = vpop.permute.xlu0 %6656
    %6658 = vrot.lane.b32.xlu0 %v5539, 64
    %v6659 = vpop.permute.xlu0 %6658
    %v6663 = vsel %vm1592, %v6333, 0
    %6665 = vmatprep.subr.mxu0 0.0
    %6666 = vmatpush1.msra.mxu0 %v6657
    %6667 = vmatprep.subr.mxu0 0.0
    %6668 = vmatpush1.msra.mxu0 %v6659
    %6669 = vmatprep.subr.mxu0 0.0
    %6670 = vmatpush1.msra.mxu0 0.0
    %6671 = vmatprep.subr.mxu0 0.0
    %6672 = vmatpush1.msra.mxu0 0.0
    %6673 = vmatprep.subr.mxu0 0.0
    %6674 = vmatpush1.msra.mxu0 0.0
    %6675 = vmatprep.subr.mxu0 0.0
    %6676 = vmatpush1.msra.mxu0 0.0
    %6677 = vmatprep.subr.mxu0 0.0
    %6678 = vmatpush1.msra.mxu0 0.0
    %6679 = vmatprep.subr.mxu0 0.0
    %6680 = vmatpush1.msra.mxu0 0.0
    %6681 = vmatprep.subr.mxu0 0.0
    %6682 = vmatpush1.msra.mxu0 0.0
    %6683 = vmatprep.subr.mxu0 0.0
    %6684 = vmatpush1.msra.mxu0 0.0
    %6685 = vmatprep.subr.mxu0 0.0
    %6686 = vmatpush1.msra.mxu0 0.0
    %6687 = vmatprep.subr.mxu0 0.0
    %6688 = vmatpush1.msra.mxu0 0.0
    %6689 = vmatprep.subr.mxu0 0.0
    %6690 = vmatpush1.msra.mxu0 0.0
    %6691 = vmatprep.subr.mxu0 0.0
    %6692 = vmatpush1.msra.mxu0 0.0
    %6693 = vmatprep.subr.mxu0 0.0
    %6694 = vmatpush1.msra.mxu0 0.0
    %6695 = vmatprep.subr.mxu0 0.0
    %6696 = vmatpush1.msra.mxu0 0.0
    %6697 = vmatprep.subr.mxu0 0.0
    %6698 = vmatpush1.msra.mxu0 0.0
    %6699 = vmatprep.subr.mxu0 0.0
    %6700 = vmatpush1.msra.mxu0 0.0
    %6701 = vmatprep.subr.mxu0 0.0
    %6702 = vmatpush1.msra.mxu0 0.0
    %6703 = vmatprep.subr.mxu0 0.0
    %6704 = vmatpush1.msra.mxu0 0.0
    %6705 = vmatprep.subr.mxu0 0.0
    %6706 = vmatpush1.msra.mxu0 0.0
    %6707 = vmatprep.subr.mxu0 0.0
    %6708 = vmatpush1.msra.mxu0 0.0
    %6709 = vmatprep.subr.mxu0 0.0
    %6710 = vmatpush1.msra.mxu0 0.0
    %6711 = vmatprep.subr.mxu0 0.0
    %6712 = vmatpush1.msra.mxu0 0.0
    %6713 = vmatprep.subr.mxu0 0.0
    %6714 = vmatpush1.msra.mxu0 0.0
    %6715 = vmatprep.subr.mxu0 0.0
    %6716 = vmatpush1.msra.mxu0 0.0
    %6717 = vmatprep.subr.mxu0 0.0
    %6718 = vmatpush1.msra.mxu0 0.0
    %6719 = vmatprep.subr.mxu0 0.0
    %6720 = vmatpush1.msra.mxu0 0.0
    %6721 = vmatprep.subr.mxu0 0.0
    %6722 = vmatpush1.msra.mxu0 0.0
    %6723 = vmatprep.subr.mxu0 0.0
    %6724 = vmatpush1.msra.mxu0 0.0
    %6725 = vmatprep.subr.mxu0 0.0
    %6726 = vmatpush1.msra.mxu0 0.0
    %6727 = vmatprep.subr.mxu0 0.0
    %6728 = vmatpush1.msra.mxu0 0.0
    %6729 = vmatprep.mubr.f32.mxu0 0.0
    %6730 = vmatmul.mubr.f32.gmra.mrb[0].mxu0 %v6663
    %v6731 = vpop.f32.mrb[0].mxu0
    %v6732 = vadd.f32 0.0, %v6731
    %v6733 = vpop.f32.mrb[0].mxu0
    %6734 = vdwg.mxu0
    %6735 = vrot.lane.b32.xlu0 %v5601, 64
    %v6736 = vpop.permute.xlu0 %6735
    %6737 = vrot.lane.b32.xlu0 %v5603, 64
    %v6738 = vpop.permute.xlu0 %6737
    %v6742 = vsel %vm1592, %v6335, 0
    %6744 = vmatprep.subr.mxu0 0.0
    %6745 = vmatpush1.msra.mxu0 %v6736
    %6746 = vmatprep.subr.mxu0 0.0
    %6747 = vmatpush1.msra.mxu0 %v6738
    %6748 = vmatprep.subr.mxu0 0.0
    %6749 = vmatpush1.msra.mxu0 0.0
    %6750 = vmatprep.subr.mxu0 0.0
    %6751 = vmatpush1.msra.mxu0 0.0
    %6752 = vmatprep.subr.mxu0 0.0
    %6753 = vmatpush1.msra.mxu0 0.0
    %6754 = vmatprep.subr.mxu0 0.0
    %6755 = vmatpush1.msra.mxu0 0.0
    %6756 = vmatprep.subr.mxu0 0.0
    %6757 = vmatpush1.msra.mxu0 0.0
    %6758 = vmatprep.subr.mxu0 0.0
    %6759 = vmatpush1.msra.mxu0 0.0
    %6760 = vmatprep.subr.mxu0 0.0
    %6761 = vmatpush1.msra.mxu0 0.0
    %6762 = vmatprep.subr.mxu0 0.0
    %6763 = vmatpush1.msra.mxu0 0.0
    %6764 = vmatprep.subr.mxu0 0.0
    %6765 = vmatpush1.msra.mxu0 0.0
    %6766 = vmatprep.subr.mxu0 0.0
    %6767 = vmatpush1.msra.mxu0 0.0
    %6768 = vmatprep.subr.mxu0 0.0
    %6769 = vmatpush1.msra.mxu0 0.0
    %6770 = vmatprep.subr.mxu0 0.0
    %6771 = vmatpush1.msra.mxu0 0.0
    %6772 = vmatprep.subr.mxu0 0.0
    %6773 = vmatpush1.msra.mxu0 0.0
    %6774 = vmatprep.subr.mxu0 0.0
    %6775 = vmatpush1.msra.mxu0 0.0
    %6776 = vmatprep.subr.mxu0 0.0
    %6777 = vmatpush1.msra.mxu0 0.0
    %6778 = vmatprep.subr.mxu0 0.0
    %6779 = vmatpush1.msra.mxu0 0.0
    %6780 = vmatprep.subr.mxu0 0.0
    %6781 = vmatpush1.msra.mxu0 0.0
    %6782 = vmatprep.subr.mxu0 0.0
    %6783 = vmatpush1.msra.mxu0 0.0
    %6784 = vmatprep.subr.mxu0 0.0
    %6785 = vmatpush1.msra.mxu0 0.0
    %6786 = vmatprep.subr.mxu0 0.0
    %6787 = vmatpush1.msra.mxu0 0.0
    %6788 = vmatprep.subr.mxu0 0.0
    %6789 = vmatpush1.msra.mxu0 0.0
    %6790 = vmatprep.subr.mxu0 0.0
    %6791 = vmatpush1.msra.mxu0 0.0
    %6792 = vmatprep.subr.mxu0 0.0
    %6793 = vmatpush1.msra.mxu0 0.0
    %6794 = vmatprep.subr.mxu0 0.0
    %6795 = vmatpush1.msra.mxu0 0.0
    %6796 = vmatprep.subr.mxu0 0.0
    %6797 = vmatpush1.msra.mxu0 0.0
    %6798 = vmatprep.subr.mxu0 0.0
    %6799 = vmatpush1.msra.mxu0 0.0
    %6800 = vmatprep.subr.mxu0 0.0
    %6801 = vmatpush1.msra.mxu0 0.0
    %6802 = vmatprep.subr.mxu0 0.0
    %6803 = vmatpush1.msra.mxu0 0.0
    %6804 = vmatprep.subr.mxu0 0.0
    %6805 = vmatpush1.msra.mxu0 0.0
    %6806 = vmatprep.subr.mxu0 0.0
    %6807 = vmatpush1.msra.mxu0 0.0
    %6808 = vmatprep.mubr.f32.mxu0 0.0
    %6809 = vmatmul.mubr.f32.gmra.mrb[0].mxu0 %v6742
    %v6810 = vpop.f32.mrb[0].mxu0
    %v6811 = vadd.f32 0.0, %v6810
    %v6812 = vpop.f32.mrb[0].mxu0
    %6813 = vdwg.mxu0
    %6814 = vrot.lane.b32.xlu0 %v5605, 64
    %v6815 = vpop.permute.xlu0 %6814
    %6816 = vrot.lane.b32.xlu0 %v5607, 64
    %v6817 = vpop.permute.xlu0 %6816
    %v6821 = vsel %vm1592, %v6337, 0
    %6823 = vmatprep.subr.mxu0 0.0
    %6824 = vmatpush1.msra.mxu0 %v6815
    %6825 = vmatprep.subr.mxu0 0.0
    %6826 = vmatpush1.msra.mxu0 %v6817
    %6827 = vmatprep.subr.mxu0 0.0
    %6828 = vmatpush1.msra.mxu0 0.0
    %6829 = vmatprep.subr.mxu0 0.0
    %6830 = vmatpush1.msra.mxu0 0.0
    %6831 = vmatprep.subr.mxu0 0.0
    %6832 = vmatpush1.msra.mxu0 0.0
    %6833 = vmatprep.subr.mxu0 0.0
    %6834 = vmatpush1.msra.mxu0 0.0
    %6835 = vmatprep.subr.mxu0 0.0
    %6836 = vmatpush1.msra.mxu0 0.0
    %6837 = vmatprep.subr.mxu0 0.0
    %6838 = vmatpush1.msra.mxu0 0.0
    %6839 = vmatprep.subr.mxu0 0.0
    %6840 = vmatpush1.msra.mxu0 0.0
    %6841 = vmatprep.subr.mxu0 0.0
    %6842 = vmatpush1.msra.mxu0 0.0
    %6843 = vmatprep.subr.mxu0 0.0
    %6844 = vmatpush1.msra.mxu0 0.0
    %6845 = vmatprep.subr.mxu0 0.0
    %6846 = vmatpush1.msra.mxu0 0.0
    %6847 = vmatprep.subr.mxu0 0.0
    %6848 = vmatpush1.msra.mxu0 0.0
    %6849 = vmatprep.subr.mxu0 0.0
    %6850 = vmatpush1.msra.mxu0 0.0
    %6851 = vmatprep.subr.mxu0 0.0
    %6852 = vmatpush1.msra.mxu0 0.0
    %6853 = vmatprep.subr.mxu0 0.0
    %6854 = vmatpush1.msra.mxu0 0.0
    %6855 = vmatprep.subr.mxu0 0.0
    %6856 = vmatpush1.msra.mxu0 0.0
    %6857 = vmatprep.subr.mxu0 0.0
    %6858 = vmatpush1.msra.mxu0 0.0
    %6859 = vmatprep.subr.mxu0 0.0
    %6860 = vmatpush1.msra.mxu0 0.0
    %6861 = vmatprep.subr.mxu0 0.0
    %6862 = vmatpush1.msra.mxu0 0.0
    %6863 = vmatprep.subr.mxu0 0.0
    %6864 = vmatpush1.msra.mxu0 0.0
    %6865 = vmatprep.subr.mxu0 0.0
    %6866 = vmatpush1.msra.mxu0 0.0
    %6867 = vmatprep.subr.mxu0 0.0
    %6868 = vmatpush1.msra.mxu0 0.0
    %6869 = vmatprep.subr.mxu0 0.0
    %6870 = vmatpush1.msra.mxu0 0.0
    %6871 = vmatprep.subr.mxu0 0.0
    %6872 = vmatpush1.msra.mxu0 0.0
    %6873 = vmatprep.subr.mxu0 0.0
    %6874 = vmatpush1.msra.mxu0 0.0
    %6875 = vmatprep.subr.mxu0 0.0
    %6876 = vmatpush1.msra.mxu0 0.0
    %6877 = vmatprep.subr.mxu0 0.0
    %6878 = vmatpush1.msra.mxu0 0.0
    %6879 = vmatprep.subr.mxu0 0.0
    %6880 = vmatpush1.msra.mxu0 0.0
    %6881 = vmatprep.subr.mxu0 0.0
    %6882 = vmatpush1.msra.mxu0 0.0
    %6883 = vmatprep.subr.mxu0 0.0
    %6884 = vmatpush1.msra.mxu0 0.0
    %6885 = vmatprep.subr.mxu0 0.0
    %6886 = vmatpush1.msra.mxu0 0.0
    %6887 = vmatprep.mubr.f32.mxu0 0.0
    %6888 = vmatmul.mubr.f32.gmra.mrb[0].mxu0 %v6821
    %v6889 = vpop.f32.mrb[0].mxu0
    %v6890 = vadd.f32 0.0, %v6889
    %v6891 = vpop.f32.mrb[0].mxu0
    %6892 = vdwg.mxu0
    %6893 = vrot.lane.b32.xlu0 %v5609, 64
    %v6894 = vpop.permute.xlu0 %6893
    %6895 = vrot.lane.b32.xlu0 %v5611, 64
    %v6896 = vpop.permute.xlu0 %6895
    %v6900 = vsel %vm1592, %v6339, 0
    %6902 = vmatprep.subr.mxu0 0.0
    %6903 = vmatpush1.msra.mxu0 %v6894
    %6904 = vmatprep.subr.mxu0 0.0
    %6905 = vmatpush1.msra.mxu0 %v6896
    %6906 = vmatprep.subr.mxu0 0.0
    %6907 = vmatpush1.msra.mxu0 0.0
    %6908 = vmatprep.subr.mxu0 0.0
    %6909 = vmatpush1.msra.mxu0 0.0
    %6910 = vmatprep.subr.mxu0 0.0
    %6911 = vmatpush1.msra.mxu0 0.0
    %6912 = vmatprep.subr.mxu0 0.0
    %6913 = vmatpush1.msra.mxu0 0.0
    %6914 = vmatprep.subr.mxu0 0.0
    %6915 = vmatpush1.msra.mxu0 0.0
    %6916 = vmatprep.subr.mxu0 0.0
    %6917 = vmatpush1.msra.mxu0 0.0
    %6918 = vmatprep.subr.mxu0 0.0
    %6919 = vmatpush1.msra.mxu0 0.0
    %6920 = vmatprep.subr.mxu0 0.0
    %6921 = vmatpush1.msra.mxu0 0.0
    %6922 = vmatprep.subr.mxu0 0.0
    %6923 = vmatpush1.msra.mxu0 0.0
    %6924 = vmatprep.subr.mxu0 0.0
    %6925 = vmatpush1.msra.mxu0 0.0
    %6926 = vmatprep.subr.mxu0 0.0
    %6927 = vmatpush1.msra.mxu0 0.0
    %6928 = vmatprep.subr.mxu0 0.0
    %6929 = vmatpush1.msra.mxu0 0.0
    %6930 = vmatprep.subr.mxu0 0.0
    %6931 = vmatpush1.msra.mxu0 0.0
    %6932 = vmatprep.subr.mxu0 0.0
    %6933 = vmatpush1.msra.mxu0 0.0
    %6934 = vmatprep.subr.mxu0 0.0
    %6935 = vmatpush1.msra.mxu0 0.0
    %6936 = vmatprep.subr.mxu0 0.0
    %6937 = vmatpush1.msra.mxu0 0.0
    %6938 = vmatprep.subr.mxu0 0.0
    %6939 = vmatpush1.msra.mxu0 0.0
    %6940 = vmatprep.subr.mxu0 0.0
    %6941 = vmatpush1.msra.mxu0 0.0
    %6942 = vmatprep.subr.mxu0 0.0
    %6943 = vmatpush1.msra.mxu0 0.0
    %6944 = vmatprep.subr.mxu0 0.0
    %6945 = vmatpush1.msra.mxu0 0.0
    %6946 = vmatprep.subr.mxu0 0.0
    %6947 = vmatpush1.msra.mxu0 0.0
    %6948 = vmatprep.subr.mxu0 0.0
    %6949 = vmatpush1.msra.mxu0 0.0
    %6950 = vmatprep.subr.mxu0 0.0
    %6951 = vmatpush1.msra.mxu0 0.0
    %6952 = vmatprep.subr.mxu0 0.0
    %6953 = vmatpush1.msra.mxu0 0.0
    %6954 = vmatprep.subr.mxu0 0.0
    %6955 = vmatpush1.msra.mxu0 0.0
    %6956 = vmatprep.subr.mxu0 0.0
    %6957 = vmatpush1.msra.mxu0 0.0
    %6958 = vmatprep.subr.mxu0 0.0
    %6959 = vmatpush1.msra.mxu0 0.0
    %6960 = vmatprep.subr.mxu0 0.0
    %6961 = vmatpush1.msra.mxu0 0.0
    %6962 = vmatprep.subr.mxu0 0.0
    %6963 = vmatpush1.msra.mxu0 0.0
    %6964 = vmatprep.subr.mxu0 0.0
    %6965 = vmatpush1.msra.mxu0 0.0
    %6966 = vmatprep.mubr.f32.mxu0 0.0
    %6967 = vmatmul.mubr.f32.gmra.mrb[0].mxu0 %v6900
    %v6968 = vpop.f32.mrb[0].mxu0
    %v6969 = vadd.f32 0.0, %v6968
    %v6970 = vpop.f32.mrb[0].mxu0
    %6971 = vdwg.mxu0
    %6973 = vrot.lane.b32.xlu0 %v6495, 8
    %v6974 = vpop.permute.xlu0 %6973
    %6977 = vrot.lane.b32.xlu0 %v6574, 16
    %v6978 = vpop.permute.xlu0 %6977
    %6981 = vrot.lane.b32.xlu0 %v6653, 24
    %v6982 = vpop.permute.xlu0 %6981
    %v6984 = vsel %vm276, %v6416, %v6974
    %v6985 = vsel %vm1592, %v6984, %v6978
    %v6986 = vsel %vm1594, %v6985, %v6982
    %6988 = vrot.lane.b32.xlu0 %v6811, 8
    %v6989 = vpop.permute.xlu0 %6988
    %6992 = vrot.lane.b32.xlu0 %v6890, 16
    %v6993 = vpop.permute.xlu0 %6992
    %6996 = vrot.lane.b32.xlu0 %v6969, 24
    %v6997 = vpop.permute.xlu0 %6996
    %v6999 = vsel %vm276, %v6732, %v6989
    %v7000 = vsel %vm1592, %v6999, %v6993
    %v7001 = vsel %vm1594, %v7000, %v6997
    %s7002 = scalar_lea.vmem %s6, 32
    %v7003 = vld [vmem:[%s7002] sm:$0xff]
    %v7004 = vld [vmem:[%s7002 + $0x8] sm:$0xff]
    %v7005 = vld [vmem:[%s7002 + $0x10] sm:$0xff]
    %v7006 = vld [vmem:[%s7002 + $0x18] sm:$0xff]
    %v7007 = vlaneseq
    %v7008 = vshrl.u32 %v7007, 7
    %v7009 = vsub.s32 7, %v7008
    %v7010 = vrot.slane %v3742, %v7009
    %v7012 = vsel %vm106, %v6986, 0
    %v7015 = vsel %vm106, %v7001, 0
    %7017 = vmatprep.subr.mxu0 0.0
    %7018 = vmatpush1.msra.mxu0 %v7003
    %7019 = vmatprep.subr.mxu0 0.0
    %7020 = vmatpush1.msra.mxu0 %v7004
    %7021 = vmatprep.subr.mxu0 0.0
    %7022 = vmatpush1.msra.mxu0 %v7005
    %7023 = vmatprep.subr.mxu0 0.0
    %7024 = vmatpush1.msra.mxu0 %v7006
    %7025 = vmatprep.subr.mxu0 0.0
    %7026 = vmatpush1.msra.mxu0 0.0
    %7027 = vmatprep.subr.mxu0 0.0
    %7028 = vmatpush1.msra.mxu0 0.0
    %7029 = vmatprep.subr.mxu0 0.0
    %7030 = vmatpush1.msra.mxu0 0.0
    %7031 = vmatprep.subr.mxu0 0.0
    %7032 = vmatpush1.msra.mxu0 0.0
    %7033 = vmatprep.subr.mxu0 0.0
    %7034 = vmatpush1.msra.mxu0 0.0
    %7035 = vmatprep.subr.mxu0 0.0
    %7036 = vmatpush1.msra.mxu0 0.0
    %7037 = vmatprep.subr.mxu0 0.0
    %7038 = vmatpush1.msra.mxu0 0.0
    %7039 = vmatprep.subr.mxu0 0.0
    %7040 = vmatpush1.msra.mxu0 0.0
    %7041 = vmatprep.subr.mxu0 0.0
    %7042 = vmatpush1.msra.mxu0 0.0
    %7043 = vmatprep.subr.mxu0 0.0
    %7044 = vmatpush1.msra.mxu0 0.0
    %7045 = vmatprep.subr.mxu0 0.0
    %7046 = vmatpush1.msra.mxu0 0.0
    %7047 = vmatprep.subr.mxu0 0.0
    %7048 = vmatpush1.msra.mxu0 0.0
    %7049 = vmatprep.subr.mxu0 0.0
    %7050 = vmatpush1.msra.mxu0 0.0
    %7051 = vmatprep.subr.mxu0 0.0
    %7052 = vmatpush1.msra.mxu0 0.0
    %7053 = vmatprep.subr.mxu0 0.0
    %7054 = vmatpush1.msra.mxu0 0.0
    %7055 = vmatprep.subr.mxu0 0.0
    %7056 = vmatpush1.msra.mxu0 0.0
    %7057 = vmatprep.subr.mxu0 0.0
    %7058 = vmatpush1.msra.mxu0 0.0
    %7059 = vmatprep.subr.mxu0 0.0
    %7060 = vmatpush1.msra.mxu0 0.0
    %7061 = vmatprep.subr.mxu0 0.0
    %7062 = vmatpush1.msra.mxu0 0.0
    %7063 = vmatprep.subr.mxu0 0.0
    %7064 = vmatpush1.msra.mxu0 0.0
    %7065 = vmatprep.subr.mxu0 0.0
    %7066 = vmatpush1.msra.mxu0 0.0
    %7067 = vmatprep.subr.mxu0 0.0
    %7068 = vmatpush1.msra.mxu0 0.0
    %7069 = vmatprep.subr.mxu0 0.0
    %7070 = vmatpush1.msra.mxu0 0.0
    %7071 = vmatprep.subr.mxu0 0.0
    %7072 = vmatpush1.msra.mxu0 0.0
    %7073 = vmatprep.subr.mxu0 0.0
    %7074 = vmatpush1.msra.mxu0 0.0
    %7075 = vmatprep.subr.mxu0 0.0
    %7076 = vmatpush1.msra.mxu0 0.0
    %7077 = vmatprep.subr.mxu0 0.0
    %7078 = vmatpush1.msra.mxu0 0.0
    %7079 = vmatprep.subr.mxu0 0.0
    %7080 = vmatpush1.msra.mxu0 0.0
    %7081 = vmatprep.mubr.f32.mxu0 0.0
    %7082 = vmatmul.mubr.f32.gmra.mrb[0].mxu0 %v7012
    %v7083 = vpop.f32.mrb[0].mxu0
    %v7084 = vadd.f32 %v7010, %v7083
    %v7085 = vpop.f32.mrb[0].mxu0
    %7086 = vmatprep.mubr.f32.mxu0 0.0
    %7087 = vmatmul.mubr.f32.gmra.mrb[0].mxu0 %v7015
    %v7088 = vpop.f32.mrb[0].mxu0
    %v7089 = vadd.f32 %v7010, %v7088
    %v7090 = vpop.f32.mrb[0].mxu0
    %7091 = vdwg.mxu0
    %v7092 = vadd.f32 %v5380, %v7084
    %v7093 = vadd.f32 %v5381, %v7089
    %v7094 = vsel %vm106, %v7092, 0.0
    %7095 = vadd.xlane.f32.xlu0 %v7094
    %v7096 = vpop.xlane.xlu0 %7095
    %v7097 = vsel %vm106, %v7093, 0.0
    %7098 = vadd.xlane.f32.xlu0 %v7097
    %v7099 = vpop.xlane.xlu0 %7098
    %v7100 = vmul.f32 %v7096, %v1708
    %v7101 = vmul.f32 %v7099, %v1708
    %v7102 = vsub.f32 %v7092, %v7100
    %v7103 = vsub.f32 %v7093, %v7101
    %v7104 = vmul.f32 %v7102, %v7102
    %v7105 = vmul.f32 %v7103, %v7103
    %v7106 = vsel %vm106, %v7104, 0.0
    %7107 = vadd.xlane.f32.xlu0 %v7106
    %v7108 = vpop.xlane.xlu0 %7107
    %v7109 = vsel %vm106, %v7105, 0.0
    %7110 = vadd.xlane.f32.xlu0 %v7109
    %v7111 = vpop.xlane.xlu0 %7110
    %v7112 = vmul.f32 %v7108, %v1708
    %v7113 = vmul.f32 %v7111, %v1708
    %v7114 = vadd.f32 %v7112, 1e-05
    %v7115 = vadd.f32 %v7113, 1e-05
    %v7116 = vrsqrt.pop %v7114
    %v7117 = vrsqrt.pop %v7115
    %v7118 = vmul.f32 %v7102, %v7116
    %v7119 = vmul.f32 %v7103, %v7117
    %v7120 = vlaneseq
    %v7121 = vshrl.u32 %v7120, 7
    %v7122 = vsub.s32 3, %v7121
    %v7123 = vrot.slane %v3743, %v7122
    %v7124 = vmul.f32 %v7118, %v7123
    %v7125 = vmul.f32 %v7119, %v7123
    %v7126 = vlaneseq
    %v7127 = vshrl.u32 %v7126, 7
    %v7128 = vsub.s32 4, %v7127
    %v7129 = vrot.slane %v3743, %v7128
    %v7130 = vadd.f32 %v7124, %v7129
    %v7131 = vadd.f32 %v7125, %v7129
    %s7132 = scalar_lea.vmem [#allocation7], 32
    %v7133 = vld [vmem:[%s7132] sm:$0xff]
    %v7134 = vld [vmem:[%s7132 + $0x8] sm:$0xff]
    %v7135 = vld [vmem:[%s7132 + $0x10] sm:$0xff]
    %v7136 = vld [vmem:[%s7132 + $0x18] sm:$0xff]
    %s7137 = scalar_lea.vmem %s9, 1
    %v7138 = vld [vmem:[%s7137] sm:$0x1]
    %v7140 = vlaneseq
    %v7141 = vshrl.u32 %v7140, 7
    %v7142 = vsub.s32 0, %v7141
    %v7143 = vrot.slane %v7138, %v7142
    %v7146 = vsel %vm106, %v7130, 0
    %v7149 = vsel %vm106, %v7131, 0
    %7151 = vmatprep.subr.mxu0 0.0
    %7152 = vmatpush1.msra.mxu0 %v7133
    %7153 = vmatprep.subr.mxu0 0.0
    %7154 = vmatpush1.msra.mxu0 %v7134
    %7155 = vmatprep.subr.mxu0 0.0
    %7156 = vmatpush1.msra.mxu0 %v7135
    %7157 = vmatprep.subr.mxu0 0.0
    %7158 = vmatpush1.msra.mxu0 %v7136
    %7159 = vmatprep.subr.mxu0 0.0
    %7160 = vmatpush1.msra.mxu0 0.0
    %7161 = vmatprep.subr.mxu0 0.0
    %7162 = vmatpush1.msra.mxu0 0.0
    %7163 = vmatprep.subr.mxu0 0.0
    %7164 = vmatpush1.msra.mxu0 0.0
    %7165 = vmatprep.subr.mxu0 0.0
    %7166 = vmatpush1.msra.mxu0 0.0
    %7167 = vmatprep.subr.mxu0 0.0
    %7168 = vmatpush1.msra.mxu0 0.0
    %7169 = vmatprep.subr.mxu0 0.0
    %7170 = vmatpush1.msra.mxu0 0.0
    %7171 = vmatprep.subr.mxu0 0.0
    %7172 = vmatpush1.msra.mxu0 0.0
    %7173 = vmatprep.subr.mxu0 0.0
    %7174 = vmatpush1.msra.mxu0 0.0
    %7175 = vmatprep.subr.mxu0 0.0
    %7176 = vmatpush1.msra.mxu0 0.0
    %7177 = vmatprep.subr.mxu0 0.0
    %7178 = vmatpush1.msra.mxu0 0.0
    %7179 = vmatprep.subr.mxu0 0.0
    %7180 = vmatpush1.msra.mxu0 0.0
    %7181 = vmatprep.subr.mxu0 0.0
    %7182 = vmatpush1.msra.mxu0 0.0
    %7183 = vmatprep.subr.mxu0 0.0
    %7184 = vmatpush1.msra.mxu0 0.0
    %7185 = vmatprep.subr.mxu0 0.0
    %7186 = vmatpush1.msra.mxu0 0.0
    %7187 = vmatprep.subr.mxu0 0.0
    %7188 = vmatpush1.msra.mxu0 0.0
    %7189 = vmatprep.subr.mxu0 0.0
    %7190 = vmatpush1.msra.mxu0 0.0
    %7191 = vmatprep.subr.mxu0 0.0
    %7192 = vmatpush1.msra.mxu0 0.0
    %7193 = vmatprep.subr.mxu0 0.0
    %7194 = vmatpush1.msra.mxu0 0.0
    %7195 = vmatprep.subr.mxu0 0.0
    %7196 = vmatpush1.msra.mxu0 0.0
    %7197 = vmatprep.subr.mxu0 0.0
    %7198 = vmatpush1.msra.mxu0 0.0
    %7199 = vmatprep.subr.mxu0 0.0
    %7200 = vmatpush1.msra.mxu0 0.0
    %7201 = vmatprep.subr.mxu0 0.0
    %7202 = vmatpush1.msra.mxu0 0.0
    %7203 = vmatprep.subr.mxu0 0.0
    %7204 = vmatpush1.msra.mxu0 0.0
    %7205 = vmatprep.subr.mxu0 0.0
    %7206 = vmatpush1.msra.mxu0 0.0
    %7207 = vmatprep.subr.mxu0 0.0
    %7208 = vmatpush1.msra.mxu0 0.0
    %7209 = vmatprep.subr.mxu0 0.0
    %7210 = vmatpush1.msra.mxu0 0.0
    %7211 = vmatprep.subr.mxu0 0.0
    %7212 = vmatpush1.msra.mxu0 0.0
    %7213 = vmatprep.subr.mxu0 0.0
    %7214 = vmatpush1.msra.mxu0 0.0
    %7215 = vmatprep.mubr.f32.mxu0 0.0
    %7216 = vmatmul.mubr.f32.gmra.mrb[0].mxu0 %v7146
    %v7217 = vpop.f32.mrb[0].mxu0
    %v7218 = vadd.f32 %v7143, %v7217
    %v7219 = vpop.f32.mrb[0].mxu0
    %7220 = vmatprep.mubr.f32.mxu0 0.0
    %7221 = vmatmul.mubr.f32.gmra.mrb[0].mxu0 %v7149
    %v7222 = vpop.f32.mrb[0].mxu0
    %v7223 = vadd.f32 %v7143, %v7222
    %v7224 = vpop.f32.mrb[0].mxu0
    %7225 = vdwg.mxu0
    %v7226 = vmax.f32 %v7218, 0.0
    %v7227 = vmax.f32 %v7223, 0.0
    %s7228 = scalar_lea.vmem %s8, 64
    %v7229 = vld [vmem:[%s7228] sm:$0xff]
    %v7230 = vld [vmem:[%s7228 + $0x8] sm:$0xff]
    %v7231 = vld [vmem:[%s7228 + $0x10] sm:$0xff]
    %v7232 = vld [vmem:[%s7228 + $0x18] sm:$0xff]
    %v7233 = vld [vmem:[%s7228 + $0x20] sm:$0xff]
    %v7234 = vld [vmem:[%s7228 + $0x28] sm:$0xff]
    %v7235 = vld [vmem:[%s7228 + $0x30] sm:$0xff]
    %v7236 = vld [vmem:[%s7228 + $0x38] sm:$0xff]
    %v7237 = vlaneseq
    %v7238 = vshrl.u32 %v7237, 7
    %v7239 = vsub.s32 0, %v7238
    %v7240 = vrot.slane %v3743, %v7239
    %v7242 = vsel %vm3619, %v7226, 0
    %v7245 = vsel %vm3619, %v7227, 0
    %7247 = vmatprep.subr.mxu0 0.0
    %7248 = vmatpush1.msra.mxu0 %v7229
    %7249 = vmatprep.subr.mxu0 0.0
    %7250 = vmatpush1.msra.mxu0 %v7230
    %7251 = vmatprep.subr.mxu0 0.0
    %7252 = vmatpush1.msra.mxu0 %v7231
    %7253 = vmatprep.subr.mxu0 0.0
    %7254 = vmatpush1.msra.mxu0 %v7232
    %7255 = vmatprep.subr.mxu0 0.0
    %7256 = vmatpush1.msra.mxu0 %v7233
    %7257 = vmatprep.subr.mxu0 0.0
    %7258 = vmatpush1.msra.mxu0 %v7234
    %7259 = vmatprep.subr.mxu0 0.0
    %7260 = vmatpush1.msra.mxu0 %v7235
    %7261 = vmatprep.subr.mxu0 0.0
    %7262 = vmatpush1.msra.mxu0 %v7236
    %7263 = vmatprep.subr.mxu0 0.0
    %7264 = vmatpush1.msra.mxu0 0.0
    %7265 = vmatprep.subr.mxu0 0.0
    %7266 = vmatpush1.msra.mxu0 0.0
    %7267 = vmatprep.subr.mxu0 0.0
    %7268 = vmatpush1.msra.mxu0 0.0
    %7269 = vmatprep.subr.mxu0 0.0
    %7270 = vmatpush1.msra.mxu0 0.0
    %7271 = vmatprep.subr.mxu0 0.0
    %7272 = vmatpush1.msra.mxu0 0.0
    %7273 = vmatprep.subr.mxu0 0.0
    %7274 = vmatpush1.msra.mxu0 0.0
    %7275 = vmatprep.subr.mxu0 0.0
    %7276 = vmatpush1.msra.mxu0 0.0
    %7277 = vmatprep.subr.mxu0 0.0
    %7278 = vmatpush1.msra.mxu0 0.0
    %7279 = vmatprep.subr.mxu0 0.0
    %7280 = vmatpush1.msra.mxu0 0.0
    %7281 = vmatprep.subr.mxu0 0.0
    %7282 = vmatpush1.msra.mxu0 0.0
    %7283 = vmatprep.subr.mxu0 0.0
    %7284 = vmatpush1.msra.mxu0 0.0
    %7285 = vmatprep.subr.mxu0 0.0
    %7286 = vmatpush1.msra.mxu0 0.0
    %7287 = vmatprep.subr.mxu0 0.0
    %7288 = vmatpush1.msra.mxu0 0.0
    %7289 = vmatprep.subr.mxu0 0.0
    %7290 = vmatpush1.msra.mxu0 0.0
    %7291 = vmatprep.subr.mxu0 0.0
    %7292 = vmatpush1.msra.mxu0 0.0
    %7293 = vmatprep.subr.mxu0 0.0
    %7294 = vmatpush1.msra.mxu0 0.0
    %7295 = vmatprep.subr.mxu0 0.0
    %7296 = vmatpush1.msra.mxu0 0.0
    %7297 = vmatprep.subr.mxu0 0.0
    %7298 = vmatpush1.msra.mxu0 0.0
    %7299 = vmatprep.subr.mxu0 0.0
    %7300 = vmatpush1.msra.mxu0 0.0
    %7301 = vmatprep.subr.mxu0 0.0
    %7302 = vmatpush1.msra.mxu0 0.0
    %7303 = vmatprep.subr.mxu0 0.0
    %7304 = vmatpush1.msra.mxu0 0.0
    %7305 = vmatprep.subr.mxu0 0.0
    %7306 = vmatpush1.msra.mxu0 0.0
    %7307 = vmatprep.subr.mxu0 0.0
    %7308 = vmatpush1.msra.mxu0 0.0
    %7309 = vmatprep.subr.mxu0 0.0
    %7310 = vmatpush1.msra.mxu0 0.0
    %7311 = vmatprep.mubr.f32.mxu0 0.0
    %7312 = vmatmul.mubr.f32.gmra.mrb[0].mxu0 %v7242
    %v7313 = vpop.f32.mrb[0].mxu0
    %v7314 = vadd.f32 %v7240, %v7313
    %v7315 = vpop.f32.mrb[0].mxu0
    %7316 = vmatprep.mubr.f32.mxu0 0.0
    %7317 = vmatmul.mubr.f32.gmra.mrb[0].mxu0 %v7245
    %v7318 = vpop.f32.mrb[0].mxu0
    %v7319 = vadd.f32 %v7240, %v7318
    %v7320 = vpop.f32.mrb[0].mxu0
    %7321 = vdwg.mxu0
    %v7322 = vadd.f32 %v7130, %v7314
    %v7323 = vadd.f32 %v7131, %v7319
    %v7324 = vsel %vm106, %v7322, 0.0
    %7325 = vadd.xlane.f32.xlu0 %v7324
    %v7326 = vpop.xlane.xlu0 %7325
    %v7327 = vsel %vm106, %v7323, 0.0
    %7328 = vadd.xlane.f32.xlu0 %v7327
    %v7329 = vpop.xlane.xlu0 %7328
    %v7330 = vmul.f32 %v7326, %v1708
    %v7331 = vmul.f32 %v7329, %v1708
    %v7332 = vsub.f32 %v7322, %v7330
    %v7333 = vsub.f32 %v7323, %v7331
    %v7334 = vmul.f32 %v7332, %v7332
    %v7335 = vmul.f32 %v7333, %v7333
    %v7336 = vsel %vm106, %v7334, 0.0
    %7337 = vadd.xlane.f32.xlu0 %v7336
    %v7338 = vpop.xlane.xlu0 %7337
    %v7339 = vsel %vm106, %v7335, 0.0
    %7340 = vadd.xlane.f32.xlu0 %v7339
    %v7341 = vpop.xlane.xlu0 %7340
    %v7342 = vmul.f32 %v7338, %v1708
    %v7343 = vmul.f32 %v7341, %v1708
    %v7344 = vadd.f32 %v7342, 1e-05
    %v7345 = vadd.f32 %v7343, 1e-05
    %v7346 = vrsqrt.pop %v7344
    %v7347 = vrsqrt.pop %v7345
    %v7348 = vmul.f32 %v7332, %v7346
    %v7349 = vmul.f32 %v7333, %v7347
    %v7350 = vlaneseq
    %v7351 = vshrl.u32 %v7350, 7
    %v7352 = vsub.s32 5, %v7351
    %v7353 = vrot.slane %v3743, %v7352
    %v7354 = vmul.f32 %v7348, %v7353
    %v7355 = vmul.f32 %v7349, %v7353
    %v7356 = vlaneseq
    %v7357 = vshrl.u32 %v7356, 7
    %v7358 = vsub.s32 6, %v7357
    %v7359 = vrot.slane %v3743, %v7358
    %v7360 = vadd.f32 %v7354, %v7359
    %v7361 = vadd.f32 %v7355, %v7359
    %7362 = vst.msk [vmem:[#allocation9] sm:$0xff] %vm106, %v7360
    %7363 = vst.msk [vmem:[#allocation9 + $0x8] sm:$0xff] %vm106, %v7361
    %v7364 = vld [vmem:[%s11] sm:$0x1]
    %v7365 = vld [vmem:[%s11 + $0x1] sm:$0x1]
    %v7366 = vsel %vm106, %v7360, 0.0
    %7367 = vadd.xlane.f32.xlu0 %v7366
    %v7368 = vpop.xlane.xlu0 %7367
    %v7369 = vsel %vm106, %v7361, 0.0
    %7370 = vadd.xlane.f32.xlu0 %v7369
    %v7371 = vpop.xlane.xlu0 %7370
    %v7372 = vmul.f32 %v7368, %v1708
    %v7373 = vmul.f32 %v7371, %v1708
    %v7374 = vsub.f32 %v7360, %v7372
    %v7375 = vsub.f32 %v7361, %v7373
    %v7376 = vmul.f32 %v7374, %v7374
    %v7377 = vmul.f32 %v7375, %v7375
    %v7378 = vsel %vm106, %v7376, 0.0
    %7379 = vadd.xlane.f32.xlu0 %v7378
    %v7380 = vpop.xlane.xlu0 %7379
    %v7381 = vsel %vm106, %v7377, 0.0
    %7382 = vadd.xlane.f32.xlu0 %v7381
    %v7383 = vpop.xlane.xlu0 %7382
    %v7384 = vmul.f32 %v7380, %v1708
    %v7385 = vmul.f32 %v7383, %v1708
    %v7386 = vadd.f32 %v7384, 1e-05
    %v7387 = vadd.f32 %v7385, 1e-05
    %v7388 = vrsqrt.pop %v7386
    %v7389 = vrsqrt.pop %v7387
    %v7390 = vmul.f32 %v7374, %v7388
    %v7391 = vmul.f32 %v7375, %v7389
    %v7392 = vlaneseq
    %v7393 = vshrl.u32 %v7392, 7
    %v7394 = vsub.s32 0, %v7393
    %v7395 = vrot.slane %v7364, %v7394
    %v7396 = vmul.f32 %v7390, %v7395
    %v7397 = vmul.f32 %v7391, %v7395
    %v7398 = vlaneseq
    %v7399 = vshrl.u32 %v7398, 7
    %v7400 = vsub.s32 0, %v7399
    %v7401 = vrot.slane %v7365, %v7400
    %v7402 = vadd.f32 %v7396, %v7401
    %v7403 = vadd.f32 %v7397, %v7401
    %7404 = vst.msk [vmem:[#allocation8] sm:$0xff] %vm106, %v7402
    %7405 = vst.msk [vmem:[#allocation8 + $0x8] sm:$0xff] %vm106, %v7403
    // Predicated region
    $region62: #{tpu_custom_call.1} parent=1 // pred_check
      _
    $region63: #{tpu_custom_call.1} parent=1 // pred_check_branch
      %7407 = sbr.rel (0) target = $region65
    $region64: #{tpu_custom_call.1} parent=1 // pred_region
      %s7409 = ssub.s32 256, 256
      %7410 = vsyncadd [#allocation4], %s7409
      %s7411 = sshll.u32 [#allocation8], 4
      %s7412 = int_to_ptr.vmem [resolvable:$true] %s7411
      %7417 = dma.vmem_to_hbm [thread:$0]  %s7412, 256, %s12, [#allocation4], 128, 128, 8
    $region65: #{tpu_custom_call.1} parent=1 // pred_fallthru
      _
    // Predicated region
    $region66: #{tpu_custom_call.1} parent=1 // pred_check
      _
    $region67: #{tpu_custom_call.1} parent=1 // pred_check_branch
      %7419 = sbr.rel (0) target = $region69
    $region68: #{tpu_custom_call.1} parent=1 // pred_region
      %s7421 = ssub.s32 256, 256
      %7422 = vsyncadd [#allocation10], %s7421
      %s7423 = sshll.u32 [#allocation9], 4
      %s7424 = int_to_ptr.vmem [resolvable:$true] %s7423
      %7429 = dma.vmem_to_hbm [thread:$0]  %s7424, 256, %s13, [#allocation10], 128, 128, 8
    $region69: #{tpu_custom_call.1} parent=1 // pred_fallthru
      _
    // Predicated region
    $region70: #{tpu_custom_call.1} parent=1 // pred_check
      _
    $region71: #{tpu_custom_call.1} parent=1 // pred_check_branch
      %7431 = sbr.rel (0) target = $region73
    $region72: #{tpu_custom_call.1} parent=1 // pred_region
      %7432 = dma.done [#allocation4], 256
    $region73: #{tpu_custom_call.1} parent=1 // pred_fallthru
      _
    // Predicated region
    $region74: #{tpu_custom_call.1} parent=1 // pred_check
      _
    $region75: #{tpu_custom_call.1} parent=1 // pred_check_branch
      %7434 = sbr.rel (0) target = $region77
    $region76: #{tpu_custom_call.1} parent=1 // pred_region
      %7435 = dma.done [#allocation10], 256
    $region77: #{tpu_custom_call.1} parent=1 // pred_fallthru
      _
    %7436 = vsyncpa [#allocation3], 1
    %7437 = vsyncpa [#allocation6], 1
    %7438 = vsyncpa [#allocation4], 1
    %7439 = vsyncpa [#allocation10], 1

</llo_original>
